<compile_context>
chip_gen: v7x
topology: tpu7x:2x2x1
jax: 0.10.0
libtpu: 0.0.40
codegen_flags: <defaults>
</compile_context>

<pallas_src>
import functools
import math

import jax
import jax.numpy as jnp
import numpy as np
from jax.experimental import pallas as pl
from jax.experimental.pallas import tpu as pltpu


# ---------------------------------------------------------------------------
# In-kernel helpers (traced inside the Pallas kernel body)
# ---------------------------------------------------------------------------
def _layer_norm_f32(x, gamma, beta, eps=1e-5):
    # x: (M, C) f32; gamma/beta: (1, C) f32.  Statistics kept in f32.
    mu = jnp.mean(x, axis=-1, keepdims=True)
    xc = x - mu
    var = jnp.mean(xc * xc, axis=-1, keepdims=True)
    inv = jax.lax.rsqrt(var + eps)
    return xc * inv * gamma + beta


def _gelu(x, approx):
    if approx:
        # tanh approximation -> EUP slot (cheaper on v5e; not bit-exact)
        return jax.nn.gelu(x, approximate=True)
    # torch.nn.GELU default: exact erf formulation
    return 0.5 * x * (1.0 + jax.lax.erf(x * (1.0 / math.sqrt(2.0))))


def _pick_head_group(num_heads, head_dim):
    """Smallest head group whose combined width is a multiple of 128 lanes."""
    for g in range(1, num_heads + 1):
        if num_heads % g == 0 and (head_dim * g) % 128 == 0:
            return g
    return 1


# ---------------------------------------------------------------------------
# One transformer Block as a single fused Pallas kernel
# ---------------------------------------------------------------------------
def _block_kernel(x_ref, pos_ref,
                  g1_ref, b1_ref,
                  wqkv_ref,
                  wproj_ref, bproj_ref,
                  g2_ref, b2_ref,
                  wfc1_ref, bfc1_ref,
                  wfc2_ref, bfc2_ref,
                  o_ref,
                  qkv_s, attn_s,
                  *, num_heads, approx_gelu, kv_chunk, h_chunk):
    TB, N, C = x_ref.shape
    M = TB * N
    hd = C // num_heads
    H = wfc1_ref.shape[1]
    cdt = wqkv_ref.dtype                       # MXU input dtype (bf16)
    hg = _pick_head_group(num_heads, hd)       # heads per 128-lane group
    gw = hg * hd

    # residual stream stays f32; pos broadcasts if it is (1, N, C)
    x = (x_ref[...] + pos_ref[...]).reshape(M, C)

    # ---- attention branch ---------------------------------------------------
    xn = _layer_norm_f32(x, g1_ref[...], b1_ref[...]).astype(cdt)   # norm1
    # Q, K, V projections written straight into the bf16 VMEM slab
    # (attention scale is already folded into the Q columns of w_qkv).
    for j in range(3):
        qkv_s[:, j * C:(j + 1) * C] = jnp.dot(
            xn, wqkv_ref[:, j * C:(j + 1) * C],
            preferred_element_type=jnp.float32).astype(cdt)

    kvc = min(N, kv_chunk)
    n_kv = -(-N // kvc)                        # 1 => dense softmax path

    for gi in range(num_heads // hg):          # static head-group loop
        glo = gi * gw
        # 128-lane-aligned group loads from the QKV slab
        q_g = qkv_s[:, glo:glo + gw].reshape(TB, N, gw)
        k_g = qkv_s[:, C + glo:C + glo + gw].reshape(TB, N, gw)
        v_g = qkv_s[:, 2 * C + glo:2 * C + glo + gw].reshape(TB, N, gw)

        outs = []
        for hj in range(hg):
            lo = hj * hd
            qh = q_g[:, :, lo:lo + hd]
            kh = k_g[:, :, lo:lo + hd]
            vh = v_g[:, :, lo:lo + hd]

            if n_kv == 1:
                # dense softmax (small N)
                s = jnp.einsum('bqd,bkd->bqk', qh, kh,
                               preferred_element_type=jnp.float32)
                s = s - jnp.max(s, axis=-1, keepdims=True)
                p = jnp.exp(s)
                p = p * pl.reciprocal(jnp.sum(p, axis=-1, keepdims=True),
                                      approx=True)
                oh = jnp.einsum('bqk,bkd->bqd', p.astype(cdt), vh,
                                preferred_element_type=jnp.float32)
            else:
                # flash-style online softmax over KV chunks (large N):
                # bounds live score state to (TB, N, kvc).
                m_i = jnp.full((TB, N, 1), -jnp.inf, jnp.float32)
                l_i = jnp.zeros((TB, N, 1), jnp.float32)
                acc = jnp.zeros((TB, N, hd), jnp.float32)
                for ci in range(n_kv):
                    klo = ci * kvc
                    kw = min(kvc, N - klo)
                    kc = kh[:, klo:klo + kw, :]
                    vc = vh[:, klo:klo + kw, :]
                    s = jnp.einsum('bqd,bkd->bqk', qh, kc,
                                   preferred_element_type=jnp.float32)
                    m_new = jnp.maximum(m_i, jnp.max(s, axis=-1, keepdims=True))
                    a = jnp.exp(m_i - m_new)
                    p = jnp.exp(s - m_new)
                    l_i = a * l_i + jnp.sum(p, axis=-1, keepdims=True)
                    acc = a * acc + jnp.einsum(
                        'bqk,bkd->bqd', p.astype(cdt), vc,
                        preferred_element_type=jnp.float32)
                    m_i = m_new
                oh = acc * pl.reciprocal(l_i, approx=True)
            outs.append(oh)

        og = outs[0] if hg == 1 else jnp.concatenate(outs, axis=-1)
        # one aligned, group-wide store into the bf16 attention slab
        attn_s[:, glo:glo + gw] = og.reshape(M, gw).astype(cdt)

    attn_out = jnp.dot(attn_s[...], wproj_ref[...],
                       preferred_element_type=jnp.float32) + bproj_ref[...]
    x = x + attn_out                                         # residual 1

    # ---- MLP branch (hidden dim chunked) -------------------------------------
    xn2 = _layer_norm_f32(x, g2_ref[...], b2_ref[...]).astype(cdt)   # norm2
    hc = min(H, h_chunk)
    n_h = -(-H // hc)
    for ci in range(n_h):
        lo = ci * hc
        w = min(hc, H - lo)
        h1 = jnp.dot(xn2, wfc1_ref[:, lo:lo + w],
                     preferred_element_type=jnp.float32) + bfc1_ref[:, lo:lo + w]
        h1 = _gelu(h1, approx_gelu)
        x = x + jnp.dot(h1.astype(cdt), wfc2_ref[lo:lo + w, :],
                        preferred_element_type=jnp.float32)
    x = x + bfc2_ref[...]                                    # residual 2 + bias

    o_ref[...] = x.reshape(TB, N, C).astype(o_ref.dtype)


# ---------------------------------------------------------------------------
# Wrapper: VMEM budget, batch tiling, BlockSpecs
# ---------------------------------------------------------------------------
def _vmem_capacity_bytes():
    try:
        return int(pltpu.get_tpu_info().vmem_capacity_bytes)
    except Exception:
        return 64 << 20            # conservative: v7x per-TensorCore VMEM


def _estimate_vmem_bytes(TB, N, C, H, wbytes, csize, kv_chunk, h_chunk,
                         pos_per_batch, weight_mult):
    """Rough upper bound of the kernel's resident VMEM."""
    M = TB * N
    kvc = min(N, kv_chunk)
    hc = min(H, h_chunk)
    act_tile = TB * N * C * 4
    tiles = 2 * act_tile * 2                                    # x, out (2-buf)
    tiles += 2 * act_tile if pos_per_batch else 2 * N * C * 4   # pos
    scratch = M * 3 * C * csize + M * C * csize                 # qkv / attn slabs
    live = (5 * M * C * 4                                       # residual / norms
            + 3 * TB * N * kvc * 4                              # score temporaries
            + 2 * M * hc * 4)                                   # MLP hidden chunk
    return weight_mult * wbytes + tiles + scratch + live


def _pick_batch_tile(B, N, C, H, wbytes, csize, kv_chunk, h_chunk,
                     pos_per_batch, budget, target_rows):
    """Largest batch tile that fits the VMEM budget, preferring >=2 grid steps."""
    divs = sorted(d for d in range(1, B + 1) if B % d == 0)
    cands = [d for d in divs if B // d >= 2] or divs
    best = cands[0]
    for tb in cands:
        if tb * N > target_rows:
            continue
        est = _estimate_vmem_bytes(tb, N, C, H, wbytes, csize, kv_chunk,
                                   h_chunk, pos_per_batch, 1)
        if est <= budget:
            best = max(best, tb)
    return best


def _run_block(x, pos, p, num_heads, *, approx_gelu=False,
               kv_chunk=512, h_chunk=1024):
    B, N, C = x.shape
    H = p["w_fc1"].shape[1]
    csize = jnp.dtype(p["w_qkv"].dtype).itemsize
    pos_per_batch = pos.shape[0] != 1

    wbytes = sum(int(np.prod(p[k].shape)) * jnp.dtype(p[k].dtype).itemsize
                 for k in ("w_qkv", "w_proj", "w_fc1", "w_fc2",
                           "g1", "b1", "b_proj", "g2", "b2", "b_fc1", "b_fc2"))

    cap = _vmem_capacity_bytes()
    target_rows = 1024 if cap >= (96 << 20) else 512   # v5e/v6e vs v7x tiles
    budget = int(cap * 0.85)

    TB = _pick_batch_tile(B, N, C, H, wbytes, csize, kv_chunk, h_chunk,
                          pos_per_batch, budget, target_rows)
    M = TB * N

    kernel = functools.partial(_block_kernel, num_heads=num_heads,
                               approx_gelu=approx_gelu,
                               kv_chunk=kv_chunk, h_chunk=h_chunk)

    per_batch = pl.BlockSpec((TB, N, C), lambda b: (b, 0, 0))

    def build(single_buffer_weights):
        def const_spec(shape):
            imap = lambda b, _s=shape: (0,) * len(_s)
            if single_buffer_weights:
                # grid-invariant block: one DMA, one buffer
                return pl.BlockSpec(shape, imap, pipeline_mode=pl.Buffered(1))
            return pl.BlockSpec(shape, imap)

        pos_spec = per_batch if pos_per_batch else const_spec((1, N, C))

        wmult = 1 if single_buffer_weights else 2
        est = _estimate_vmem_bytes(TB, N, C, H, wbytes, csize, kv_chunk,
                                   h_chunk, pos_per_batch, wmult)
        vmem_limit = int(min(max(est + (8 << 20), 32 << 20), cap))

        return pl.pallas_call(
            kernel,
            out_shape=jax.ShapeDtypeStruct((B, N, C), x.dtype),
            grid_spec=pltpu.PrefetchScalarGridSpec(
                num_scalar_prefetch=0,
                grid=(B // TB,),
                in_specs=[
                    per_batch,                                 # x
                    pos_spec,                                  # pos
                    const_spec((1, C)), const_spec((1, C)),    # norm1 gamma/beta
                    const_spec((C, 3 * C)),                    # qkv weight (Q pre-scaled)
                    const_spec((C, C)), const_spec((1, C)),    # proj weight / bias
                    const_spec((1, C)), const_spec((1, C)),    # norm2 gamma/beta
                    const_spec((C, H)), const_spec((1, H)),    # fc1 weight / bias
                    const_spec((H, C)), const_spec((1, C)),    # fc2 weight / bias
                ],
                out_specs=per_batch,
                scratch_shapes=[
                    pltpu.VMEM((M, 3 * C), p["w_qkv"].dtype),  # QKV slab (bf16)
                    pltpu.VMEM((M, C), p["w_qkv"].dtype),      # attn-out slab (bf16)
                ],
            ),
            compiler_params=pltpu.CompilerParams(
                dimension_semantics=("parallel",),
                vmem_limit_bytes=vmem_limit),
        )

    args = (x, pos,
            p["g1"], p["b1"],
            p["w_qkv"],
            p["w_proj"], p["b_proj"],
            p["g2"], p["b2"],
            p["w_fc1"], p["b_fc1"],
            p["w_fc2"], p["b_fc2"])

    if hasattr(pl, "Buffered"):
        try:
            return build(True)(*args)
        except Exception:
            pass   # fall back to default double-buffered weight specs
    return build(False)(*args)


# ---------------------------------------------------------------------------
# Parameter preparation (done ONCE, outside the per-forward path)
# ---------------------------------------------------------------------------
def _prep_block_params(p, num_heads, compute_dtype):
    C = p["w_qkv"].shape[0]
    scale = (C // num_heads) ** (-0.5)
    # fold the attention scale into the Q columns of W_qkv (zero run-time cost)
    w_qkv = p["w_qkv"].astype(jnp.float32).at[:, :C].multiply(scale)
    return {
        "g1": p["g1"].astype(jnp.float32),
        "b1": p["b1"].astype(jnp.float32),
        "w_qkv": w_qkv.astype(compute_dtype),
        "w_proj": p["w_proj"].astype(compute_dtype),
        "b_proj": p["b_proj"].astype(jnp.float32),
        "g2": p["g2"].astype(jnp.float32),
        "b2": p["b2"].astype(jnp.float32),
        "w_fc1": p["w_fc1"].astype(compute_dtype),
        "b_fc1": p["b_fc1"].astype(jnp.float32),
        "w_fc2": p["w_fc2"].astype(compute_dtype),
        "b_fc2": p["b_fc2"].astype(jnp.float32),
    }


def prepare_encoder_params(params, num_heads, compute_dtype=jnp.bfloat16):
    """Scale-fold + cast weights once; re-prepping per forward would re-stream
    every f32 weight through HBM for nothing."""
    return [_prep_block_params(p, num_heads, compute_dtype) for p in params]


def transformer_encoder(x, pos, prepped_params, num_heads, *, approx_gelu=False):
    # module forward: for each block, x = block(x + pos); pos added in-kernel
    for p in prepped_params:
        x = _run_block(x, pos, p, num_heads, approx_gelu=approx_gelu)
    return x


# ---------------------------------------------------------------------------
# Pure-JAX f32 reference (sanity check of the forward-pass semantics)
# ---------------------------------------------------------------------------
def _ref_block(x, pos, p, num_heads):
    B, N, C = x.shape
    hd = C // num_heads
    scale = hd ** (-0.5)

    def ln(z, g, b):
        mu = jnp.mean(z, -1, keepdims=True)
        var = jnp.mean((z - mu) ** 2, -1, keepdims=True)
        return (z - mu) / jnp.sqrt(var + 1e-5) * g + b

    x = x + pos
    xn = ln(x, p["g1"], p["b1"])
    qkv = xn @ p["w_qkv"]
    qkv = qkv.reshape(B, N, 3, num_heads, hd).transpose(2, 0, 3, 1, 4)
    q, k, v = qkv[0], qkv[1], qkv[2]
    attn = (q @ jnp.swapaxes(k, -2, -1)) * scale
    attn = jax.nn.softmax(attn, axis=-1)
    o = (attn @ v).transpose(0, 2, 1, 3).reshape(B, N, C)
    o = o @ p["w_proj"] + p["b_proj"]
    x = x + o
    xn2 = ln(x, p["g2"], p["b2"])
    h = jax.nn.gelu(xn2 @ p["w_fc1"] + p["b_fc1"], approximate=False)
    h = h @ p["w_fc2"] + p["b_fc2"]
    return x + h


def _ref_encoder(x, pos, params, num_heads):
    for p in params:
        x = _ref_block(x, pos, p, num_heads)
    return x


# ---------------------------------------------------------------------------
# Deterministic parameter construction (PyTorch-like f32 parameters)
# ---------------------------------------------------------------------------
def make_params(key, depth, dim, num_heads, mlp_ratio):
    hidden = int(dim * mlp_ratio)
    params = []
    for _ in range(depth):
        key, *ks = jax.random.split(key, 6)
        params.append({
            "g1": jnp.ones((1, dim), jnp.float32),
            "b1": jnp.zeros((1, dim), jnp.float32),
            # qkv_bias=False in the module default -> no qkv bias
            "w_qkv": 0.02 * jax.random.normal(ks[0], (dim, 3 * dim), jnp.float32),
            "w_proj": 0.02 * jax.random.normal(ks[1], (dim, dim), jnp.float32),
            "b_proj": 0.01 * jax.random.normal(ks[2], (1, dim), jnp.float32),
            "g2": jnp.ones((1, dim), jnp.float32),
            "b2": jnp.zeros((1, dim), jnp.float32),
            "w_fc1": 0.02 * jax.random.normal(ks[3], (dim, hidden), jnp.float32),
            "b_fc1": jnp.zeros((1, hidden), jnp.float32),
            "w_fc2": 0.02 * jax.random.normal(ks[4], (hidden, dim), jnp.float32),
            "b_fc2": jnp.zeros((1, dim), jnp.float32),
        })
    return params


if __name__ == "__main__":
    # Small shapes consistent with the module; C is a multiple of 128 so the
    # channel (lane) axis gives unmasked, lane-dense loads/stores (the
    # production embed_dim=768 satisfies this too).
    B, N, C = 4, 16, 128
    depth, num_heads, mlp_ratio = 2, 4, 4.0

    key = jax.random.PRNGKey(0)
    k_x, k_pos, k_p = jax.random.split(key, 3)
    x = jax.random.normal(k_x, (B, N, C), jnp.float32)
    pos = jax.random.normal(k_pos, (B, N, C), jnp.float32)
    params = make_params(k_p, depth, C, num_heads, mlp_ratio)

    prepped = prepare_encoder_params(params, num_heads)   # once, not per call
    out = jax.block_until_ready(transformer_encoder(x, pos, prepped, num_heads))
    ref = jax.block_until_ready(_ref_encoder(x, pos, params, num_heads))

    # bf16 matmul inputs with f32 accumulation -> relaxed tolerance vs f32 ref
    np.testing.assert_allclose(np.asarray(out), np.asarray(ref),
                               rtol=2e-2, atol=2e-2)
    print("KERNEL_OK")
</pallas_src>

<mosaic_0001>
module attributes {stable_mosaic.version = 11 : i64} {
  func.func @_block_kernel(%arg0: i32, %arg1: memref<2x16x128xf32, #tpu.memory_space<vmem>>, %arg2: memref<2x16x128xf32, #tpu.memory_space<vmem>>, %arg3: memref<1x128xf32, #tpu.memory_space<vmem>>, %arg4: memref<1x128xf32, #tpu.memory_space<vmem>>, %arg5: memref<128x384xbf16, #tpu.memory_space<vmem>>, %arg6: memref<128x128xbf16, #tpu.memory_space<vmem>>, %arg7: memref<1x128xf32, #tpu.memory_space<vmem>>, %arg8: memref<1x128xf32, #tpu.memory_space<vmem>>, %arg9: memref<1x128xf32, #tpu.memory_space<vmem>>, %arg10: memref<128x512xbf16, #tpu.memory_space<vmem>>, %arg11: memref<1x512xf32, #tpu.memory_space<vmem>>, %arg12: memref<512x128xbf16, #tpu.memory_space<vmem>>, %arg13: memref<1x128xf32, #tpu.memory_space<vmem>>, %arg14: memref<2x16x128xf32, #tpu.memory_space<vmem>>, %arg15: memref<32x384xbf16, #tpu.memory_space<vmem>>, %arg16: memref<32x128xbf16, #tpu.memory_space<vmem>>) attributes {dimension_semantics = [#tpu.dimension_semantics<parallel>], iteration_bounds = array<i64: 2>, scalar_prefetch = 0 : i64, scratch_operands = 2 : i64, tpu.core_type = #tpu.core_type<tc>, window_params = [{transform_indices = @transform_0, window_bounds = array<i64: 2, 16, 128>}, {transform_indices = @transform_1, window_bounds = array<i64: 2, 16, 128>}, {pipeline_mode = #tpu.pipeline_mode<synchronous>, transform_indices = @transform_2, window_bounds = array<i64: 1, 128>}, {pipeline_mode = #tpu.pipeline_mode<synchronous>, transform_indices = @transform_3, window_bounds = array<i64: 1, 128>}, {pipeline_mode = #tpu.pipeline_mode<synchronous>, transform_indices = @transform_4, window_bounds = array<i64: 128, 384>}, {pipeline_mode = #tpu.pipeline_mode<synchronous>, transform_indices = @transform_5, window_bounds = array<i64: 128, 128>}, {pipeline_mode = #tpu.pipeline_mode<synchronous>, transform_indices = @transform_6, window_bounds = array<i64: 1, 128>}, {pipeline_mode = #tpu.pipeline_mode<synchronous>, transform_indices = @transform_7, window_bounds = array<i64: 1, 128>}, {pipeline_mode = #tpu.pipeline_mode<synchronous>, transform_indices = @transform_8, window_bounds = array<i64: 1, 128>}, {pipeline_mode = #tpu.pipeline_mode<synchronous>, transform_indices = @transform_9, window_bounds = array<i64: 128, 512>}, {pipeline_mode = #tpu.pipeline_mode<synchronous>, transform_indices = @transform_10, window_bounds = array<i64: 1, 512>}, {pipeline_mode = #tpu.pipeline_mode<synchronous>, transform_indices = @transform_11, window_bounds = array<i64: 512, 128>}, {pipeline_mode = #tpu.pipeline_mode<synchronous>, transform_indices = @transform_12, window_bounds = array<i64: 1, 128>}, {transform_indices = @transform_13, window_bounds = array<i64: 2, 16, 128>}]} {
    %c0 = arith.constant 0 : index
    %c0_0 = arith.constant 0 : index
    %c0_1 = arith.constant 0 : index
    %0 = vector.load %arg1[%c0, %c0_0, %c0_1] : memref<2x16x128xf32, #tpu.memory_space<vmem>>, vector<2x16x128xf32>
    %c0_2 = arith.constant 0 : index
    %c0_3 = arith.constant 0 : index
    %c0_4 = arith.constant 0 : index
    %1 = vector.load %arg2[%c0_2, %c0_3, %c0_4] : memref<2x16x128xf32, #tpu.memory_space<vmem>>, vector<2x16x128xf32>
    %2 = arith.addf %0, %1 : vector<2x16x128xf32>
    %3 = vector.shape_cast %2 : vector<2x16x128xf32> to vector<32x128xf32>
    %c0_5 = arith.constant 0 : index
    %c0_6 = arith.constant 0 : index
    %4 = vector.load %arg3[%c0_5, %c0_6] : memref<1x128xf32, #tpu.memory_space<vmem>>, vector<1x128xf32>
    %c0_7 = arith.constant 0 : index
    %c0_8 = arith.constant 0 : index
    %5 = vector.load %arg4[%c0_7, %c0_8] : memref<1x128xf32, #tpu.memory_space<vmem>>, vector<1x128xf32>
    %cst = arith.constant dense<0.000000e+00> : vector<32xf32>
    %6 = vector.multi_reduction <add>, %3, %cst [1] : vector<32x128xf32> to vector<32xf32>
    %7 = vector.shape_cast %6 : vector<32xf32> to vector<32x1xf32>
    %cst_9 = arith.constant 1.280000e+02 : f32
    %8 = vector.broadcast %cst_9 : f32 to vector<32x1xf32>
    %9 = arith.divf %7, %8 : vector<32x1xf32>
    %10 = vector.broadcast %9 : vector<32x1xf32> to vector<32x128xf32>
    %11 = arith.subf %3, %10 : vector<32x128xf32>
    %12 = arith.mulf %11, %11 : vector<32x128xf32>
    %cst_10 = arith.constant dense<0.000000e+00> : vector<32xf32>
    %13 = vector.multi_reduction <add>, %12, %cst_10 [1] : vector<32x128xf32> to vector<32xf32>
    %14 = vector.shape_cast %13 : vector<32xf32> to vector<32x1xf32>
    %cst_11 = arith.constant 1.280000e+02 : f32
    %15 = vector.broadcast %cst_11 : f32 to vector<32x1xf32>
    %16 = arith.divf %14, %15 : vector<32x1xf32>
    %cst_12 = arith.constant 9.99999974E-6 : f32
    %17 = vector.broadcast %cst_12 : f32 to vector<32x1xf32>
    %18 = arith.addf %16, %17 : vector<32x1xf32>
    %19 = math.rsqrt %18 : vector<32x1xf32>
    %20 = vector.broadcast %19 : vector<32x1xf32> to vector<32x128xf32>
    %21 = arith.mulf %11, %20 : vector<32x128xf32>
    %22 = vector.broadcast %4 : vector<1x128xf32> to vector<32x128xf32>
    %23 = arith.mulf %21, %22 : vector<32x128xf32>
    %24 = vector.broadcast %5 : vector<1x128xf32> to vector<32x128xf32>
    %25 = arith.addf %23, %24 : vector<32x128xf32>
    %26 = arith.truncf %25 : vector<32x128xf32> to vector<32x128xbf16>
    %c0_13 = arith.constant 0 : index
    %c0_14 = arith.constant 0 : index
    %27 = vector.load %arg5[%c0_13, %c0_14] : memref<128x384xbf16, #tpu.memory_space<vmem>>, vector<128x128xbf16>
    %cst_15 = arith.constant dense<0.000000e+00> : vector<32x128xf32>
    %28 = tpu.matmul %26, %27, %cst_15 {dimension_numbers = #tpu.dot_dimension_numbers<[1], [0], [0], [1], [0, 0, 1, 1], [], []>} : vector<32x128xbf16>, vector<128x128xbf16>, vector<32x128xf32> -> vector<32x128xf32>
    %29 = arith.truncf %28 : vector<32x128xf32> to vector<32x128xbf16>
    %c0_16 = arith.constant 0 : index
    %c0_17 = arith.constant 0 : index
    %30 = vector.load %arg15[%c0_16, %c0_17] : memref<32x384xbf16, #tpu.memory_space<vmem>>, vector<32x128xbf16>
    tpu.vector_store %arg15[%c0_16, %c0_17], %29 {strides = array<i32>} : memref<32x384xbf16, #tpu.memory_space<vmem>>, vector<32x128xbf16>,
    %c0_18 = arith.constant 0 : index
    %c128 = arith.constant 128 : index
    %31 = vector.load %arg5[%c0_18, %c128] : memref<128x384xbf16, #tpu.memory_space<vmem>>, vector<128x128xbf16>
    %cst_19 = arith.constant dense<0.000000e+00> : vector<32x128xf32>
    %32 = tpu.matmul %26, %31, %cst_19 {dimension_numbers = #tpu.dot_dimension_numbers<[1], [0], [0], [1], [0, 0, 1, 1], [], []>} : vector<32x128xbf16>, vector<128x128xbf16>, vector<32x128xf32> -> vector<32x128xf32>
    %33 = arith.truncf %32 : vector<32x128xf32> to vector<32x128xbf16>
    %c0_20 = arith.constant 0 : index
    %c128_21 = arith.constant 128 : index
    %34 = vector.load %arg15[%c0_20, %c128_21] : memref<32x384xbf16, #tpu.memory_space<vmem>>, vector<32x128xbf16>
    tpu.vector_store %arg15[%c0_20, %c128_21], %33 {strides = array<i32>} : memref<32x384xbf16, #tpu.memory_space<vmem>>, vector<32x128xbf16>,
    %c0_22 = arith.constant 0 : index
    %c256 = arith.constant 256 : index
    %35 = vector.load %arg5[%c0_22, %c256] : memref<128x384xbf16, #tpu.memory_space<vmem>>, vector<128x128xbf16>
    %cst_23 = arith.constant dense<0.000000e+00> : vector<32x128xf32>
    %36 = tpu.matmul %26, %35, %cst_23 {dimension_numbers = #tpu.dot_dimension_numbers<[1], [0], [0], [1], [0, 0, 1, 1], [], []>} : vector<32x128xbf16>, vector<128x128xbf16>, vector<32x128xf32> -> vector<32x128xf32>
    %37 = arith.truncf %36 : vector<32x128xf32> to vector<32x128xbf16>
    %c0_24 = arith.constant 0 : index
    %c256_25 = arith.constant 256 : index
    %38 = vector.load %arg15[%c0_24, %c256_25] : memref<32x384xbf16, #tpu.memory_space<vmem>>, vector<32x128xbf16>
    tpu.vector_store %arg15[%c0_24, %c256_25], %37 {strides = array<i32>} : memref<32x384xbf16, #tpu.memory_space<vmem>>, vector<32x128xbf16>,
    %c0_26 = arith.constant 0 : index
    %c0_27 = arith.constant 0 : index
    %39 = vector.load %arg15[%c0_26, %c0_27] : memref<32x384xbf16, #tpu.memory_space<vmem>>, vector<32x128xbf16>
    %40 = vector.shape_cast %39 : vector<32x128xbf16> to vector<2x16x128xbf16>
    %c0_28 = arith.constant 0 : index
    %c128_29 = arith.constant 128 : index
    %41 = vector.load %arg15[%c0_28, %c128_29] : memref<32x384xbf16, #tpu.memory_space<vmem>>, vector<32x128xbf16>
    %42 = vector.shape_cast %41 : vector<32x128xbf16> to vector<2x16x128xbf16>
    %c0_30 = arith.constant 0 : index
    %c256_31 = arith.constant 256 : index
    %43 = vector.load %arg15[%c0_30, %c256_31] : memref<32x384xbf16, #tpu.memory_space<vmem>>, vector<32x128xbf16>
    %44 = vector.shape_cast %43 : vector<32x128xbf16> to vector<2x16x128xbf16>
    %45 = vector.extract_strided_slice %40 {offsets = [0, 0, 0], sizes = [2, 16, 32], strides = [1, 1, 1]} : vector<2x16x128xbf16> to vector<2x16x32xbf16>
    %46 = vector.extract_strided_slice %42 {offsets = [0, 0, 0], sizes = [2, 16, 32], strides = [1, 1, 1]} : vector<2x16x128xbf16> to vector<2x16x32xbf16>
    %47 = vector.extract_strided_slice %44 {offsets = [0, 0, 0], sizes = [2, 16, 32], strides = [1, 1, 1]} : vector<2x16x128xbf16> to vector<2x16x32xbf16>
    "tpu.trace_start"() <{level = 10 : i32, message = "bqd,bkd->bqk"}> : () -> ()
    %cst_32 = arith.constant dense<0.000000e+00> : vector<2x16x16xf32>
    %48 = tpu.matmul %45, %46, %cst_32 {dimension_numbers = #tpu.dot_dimension_numbers<[2], [2], [1], [1], [0, 0, 0, 1, 1, 1], [0], [0]>} : vector<2x16x32xbf16>, vector<2x16x32xbf16>, vector<2x16x16xf32> -> vector<2x16x16xf32>
    "tpu.trace_stop"() : () -> ()
    %cst_33 = arith.constant dense<0xFF800000> : vector<2x16xf32>
    %49 = vector.multi_reduction <maximumf>, %48, %cst_33 [2] : vector<2x16x16xf32> to vector<2x16xf32>
    %50 = vector.shape_cast %49 : vector<2x16xf32> to vector<2x16x1xf32>
    %51 = vector.broadcast %50 : vector<2x16x1xf32> to vector<2x16x16xf32>
    %52 = arith.subf %48, %51 : vector<2x16x16xf32>
    %53 = math.exp %52 : vector<2x16x16xf32>
    %cst_34 = arith.constant dense<0.000000e+00> : vector<2x16xf32>
    %54 = vector.multi_reduction <add>, %53, %cst_34 [2] : vector<2x16x16xf32> to vector<2x16xf32>
    %55 = vector.shape_cast %54 : vector<2x16xf32> to vector<2x16x1xf32>
    %56 = tpu.reciprocal %55 {approx = true} : vector<2x16x1xf32> -> vector<2x16x1xf32>
    %57 = vector.broadcast %56 : vector<2x16x1xf32> to vector<2x16x16xf32>
    %58 = arith.mulf %53, %57 : vector<2x16x16xf32>
    %59 = arith.truncf %58 : vector<2x16x16xf32> to vector<2x16x16xbf16>
    "tpu.trace_start"() <{level = 10 : i32, message = "bqk,bkd->bqd"}> : () -> ()
    %cst_35 = arith.constant dense<0.000000e+00> : vector<2x16x32xf32>
    %60 = tpu.matmul %59, %47, %cst_35 {dimension_numbers = #tpu.dot_dimension_numbers<[2], [1], [1], [2], [0, 0, 0, 1, 1, 2], [0], [0]>} : vector<2x16x16xbf16>, vector<2x16x32xbf16>, vector<2x16x32xf32> -> vector<2x16x32xf32>
    "tpu.trace_stop"() : () -> ()
    %61 = vector.extract_strided_slice %40 {offsets = [0, 0, 32], sizes = [2, 16, 32], strides = [1, 1, 1]} : vector<2x16x128xbf16> to vector<2x16x32xbf16>
    %62 = vector.extract_strided_slice %42 {offsets = [0, 0, 32], sizes = [2, 16, 32], strides = [1, 1, 1]} : vector<2x16x128xbf16> to vector<2x16x32xbf16>
    %63 = vector.extract_strided_slice %44 {offsets = [0, 0, 32], sizes = [2, 16, 32], strides = [1, 1, 1]} : vector<2x16x128xbf16> to vector<2x16x32xbf16>
    "tpu.trace_start"() <{level = 10 : i32, message = "bqd,bkd->bqk"}> : () -> ()
    %cst_36 = arith.constant dense<0.000000e+00> : vector<2x16x16xf32>
    %64 = tpu.matmul %61, %62, %cst_36 {dimension_numbers = #tpu.dot_dimension_numbers<[2], [2], [1], [1], [0, 0, 0, 1, 1, 1], [0], [0]>} : vector<2x16x32xbf16>, vector<2x16x32xbf16>, vector<2x16x16xf32> -> vector<2x16x16xf32>
    "tpu.trace_stop"() : () -> ()
    %cst_37 = arith.constant dense<0xFF800000> : vector<2x16xf32>
    %65 = vector.multi_reduction <maximumf>, %64, %cst_37 [2] : vector<2x16x16xf32> to vector<2x16xf32>
    %66 = vector.shape_cast %65 : vector<2x16xf32> to vector<2x16x1xf32>
    %67 = vector.broadcast %66 : vector<2x16x1xf32> to vector<2x16x16xf32>
    %68 = arith.subf %64, %67 : vector<2x16x16xf32>
    %69 = math.exp %68 : vector<2x16x16xf32>
    %cst_38 = arith.constant dense<0.000000e+00> : vector<2x16xf32>
    %70 = vector.multi_reduction <add>, %69, %cst_38 [2] : vector<2x16x16xf32> to vector<2x16xf32>
    %71 = vector.shape_cast %70 : vector<2x16xf32> to vector<2x16x1xf32>
    %72 = tpu.reciprocal %71 {approx = true} : vector<2x16x1xf32> -> vector<2x16x1xf32>
    %73 = vector.broadcast %72 : vector<2x16x1xf32> to vector<2x16x16xf32>
    %74 = arith.mulf %69, %73 : vector<2x16x16xf32>
    %75 = arith.truncf %74 : vector<2x16x16xf32> to vector<2x16x16xbf16>
    "tpu.trace_start"() <{level = 10 : i32, message = "bqk,bkd->bqd"}> : () -> ()
    %cst_39 = arith.constant dense<0.000000e+00> : vector<2x16x32xf32>
    %76 = tpu.matmul %75, %63, %cst_39 {dimension_numbers = #tpu.dot_dimension_numbers<[2], [1], [1], [2], [0, 0, 0, 1, 1, 2], [0], [0]>} : vector<2x16x16xbf16>, vector<2x16x32xbf16>, vector<2x16x32xf32> -> vector<2x16x32xf32>
    "tpu.trace_stop"() : () -> ()
    %77 = vector.extract_strided_slice %40 {offsets = [0, 0, 64], sizes = [2, 16, 32], strides = [1, 1, 1]} : vector<2x16x128xbf16> to vector<2x16x32xbf16>
    %78 = vector.extract_strided_slice %42 {offsets = [0, 0, 64], sizes = [2, 16, 32], strides = [1, 1, 1]} : vector<2x16x128xbf16> to vector<2x16x32xbf16>
    %79 = vector.extract_strided_slice %44 {offsets = [0, 0, 64], sizes = [2, 16, 32], strides = [1, 1, 1]} : vector<2x16x128xbf16> to vector<2x16x32xbf16>
    "tpu.trace_start"() <{level = 10 : i32, message = "bqd,bkd->bqk"}> : () -> ()
    %cst_40 = arith.constant dense<0.000000e+00> : vector<2x16x16xf32>
    %80 = tpu.matmul %77, %78, %cst_40 {dimension_numbers = #tpu.dot_dimension_numbers<[2], [2], [1], [1], [0, 0, 0, 1, 1, 1], [0], [0]>} : vector<2x16x32xbf16>, vector<2x16x32xbf16>, vector<2x16x16xf32> -> vector<2x16x16xf32>
    "tpu.trace_stop"() : () -> ()
    %cst_41 = arith.constant dense<0xFF800000> : vector<2x16xf32>
    %81 = vector.multi_reduction <maximumf>, %80, %cst_41 [2] : vector<2x16x16xf32> to vector<2x16xf32>
    %82 = vector.shape_cast %81 : vector<2x16xf32> to vector<2x16x1xf32>
    %83 = vector.broadcast %82 : vector<2x16x1xf32> to vector<2x16x16xf32>
    %84 = arith.subf %80, %83 : vector<2x16x16xf32>
    %85 = math.exp %84 : vector<2x16x16xf32>
    %cst_42 = arith.constant dense<0.000000e+00> : vector<2x16xf32>
    %86 = vector.multi_reduction <add>, %85, %cst_42 [2] : vector<2x16x16xf32> to vector<2x16xf32>
    %87 = vector.shape_cast %86 : vector<2x16xf32> to vector<2x16x1xf32>
    %88 = tpu.reciprocal %87 {approx = true} : vector<2x16x1xf32> -> vector<2x16x1xf32>
    %89 = vector.broadcast %88 : vector<2x16x1xf32> to vector<2x16x16xf32>
    %90 = arith.mulf %85, %89 : vector<2x16x16xf32>
    %91 = arith.truncf %90 : vector<2x16x16xf32> to vector<2x16x16xbf16>
    "tpu.trace_start"() <{level = 10 : i32, message = "bqk,bkd->bqd"}> : () -> ()
    %cst_43 = arith.constant dense<0.000000e+00> : vector<2x16x32xf32>
    %92 = tpu.matmul %91, %79, %cst_43 {dimension_numbers = #tpu.dot_dimension_numbers<[2], [1], [1], [2], [0, 0, 0, 1, 1, 2], [0], [0]>} : vector<2x16x16xbf16>, vector<2x16x32xbf16>, vector<2x16x32xf32> -> vector<2x16x32xf32>
    "tpu.trace_stop"() : () -> ()
    %93 = vector.extract_strided_slice %40 {offsets = [0, 0, 96], sizes = [2, 16, 32], strides = [1, 1, 1]} : vector<2x16x128xbf16> to vector<2x16x32xbf16>
    %94 = vector.extract_strided_slice %42 {offsets = [0, 0, 96], sizes = [2, 16, 32], strides = [1, 1, 1]} : vector<2x16x128xbf16> to vector<2x16x32xbf16>
    %95 = vector.extract_strided_slice %44 {offsets = [0, 0, 96], sizes = [2, 16, 32], strides = [1, 1, 1]} : vector<2x16x128xbf16> to vector<2x16x32xbf16>
    "tpu.trace_start"() <{level = 10 : i32, message = "bqd,bkd->bqk"}> : () -> ()
    %cst_44 = arith.constant dense<0.000000e+00> : vector<2x16x16xf32>
    %96 = tpu.matmul %93, %94, %cst_44 {dimension_numbers = #tpu.dot_dimension_numbers<[2], [2], [1], [1], [0, 0, 0, 1, 1, 1], [0], [0]>} : vector<2x16x32xbf16>, vector<2x16x32xbf16>, vector<2x16x16xf32> -> vector<2x16x16xf32>
    "tpu.trace_stop"() : () -> ()
    %cst_45 = arith.constant dense<0xFF800000> : vector<2x16xf32>
    %97 = vector.multi_reduction <maximumf>, %96, %cst_45 [2] : vector<2x16x16xf32> to vector<2x16xf32>
    %98 = vector.shape_cast %97 : vector<2x16xf32> to vector<2x16x1xf32>
    %99 = vector.broadcast %98 : vector<2x16x1xf32> to vector<2x16x16xf32>
    %100 = arith.subf %96, %99 : vector<2x16x16xf32>
    %101 = math.exp %100 : vector<2x16x16xf32>
    %cst_46 = arith.constant dense<0.000000e+00> : vector<2x16xf32>
    %102 = vector.multi_reduction <add>, %101, %cst_46 [2] : vector<2x16x16xf32> to vector<2x16xf32>
    %103 = vector.shape_cast %102 : vector<2x16xf32> to vector<2x16x1xf32>
    %104 = tpu.reciprocal %103 {approx = true} : vector<2x16x1xf32> -> vector<2x16x1xf32>
    %105 = vector.broadcast %104 : vector<2x16x1xf32> to vector<2x16x16xf32>
    %106 = arith.mulf %101, %105 : vector<2x16x16xf32>
    %107 = arith.truncf %106 : vector<2x16x16xf32> to vector<2x16x16xbf16>
    "tpu.trace_start"() <{level = 10 : i32, message = "bqk,bkd->bqd"}> : () -> ()
    %cst_47 = arith.constant dense<0.000000e+00> : vector<2x16x32xf32>
    %108 = tpu.matmul %107, %95, %cst_47 {dimension_numbers = #tpu.dot_dimension_numbers<[2], [1], [1], [2], [0, 0, 0, 1, 1, 2], [0], [0]>} : vector<2x16x16xbf16>, vector<2x16x32xbf16>, vector<2x16x32xf32> -> vector<2x16x32xf32>
    "tpu.trace_stop"() : () -> ()
    %109 = tpu.concatenate %60, %76, %92, %108 in 2 : vector<2x16x32xf32>, vector<2x16x32xf32>, vector<2x16x32xf32>, vector<2x16x32xf32> -> vector<2x16x128xf32>
    %110 = vector.shape_cast %109 : vector<2x16x128xf32> to vector<32x128xf32>
    %111 = arith.truncf %110 : vector<32x128xf32> to vector<32x128xbf16>
    %c0_48 = arith.constant 0 : index
    %c0_49 = arith.constant 0 : index
    %112 = vector.load %arg16[%c0_48, %c0_49] : memref<32x128xbf16, #tpu.memory_space<vmem>>, vector<32x128xbf16>
    tpu.vector_store %arg16[%c0_48, %c0_49], %111 {strides = array<i32>} : memref<32x128xbf16, #tpu.memory_space<vmem>>, vector<32x128xbf16>,
    %c0_50 = arith.constant 0 : index
    %c0_51 = arith.constant 0 : index
    %113 = vector.load %arg16[%c0_50, %c0_51] : memref<32x128xbf16, #tpu.memory_space<vmem>>, vector<32x128xbf16>
    %c0_52 = arith.constant 0 : index
    %c0_53 = arith.constant 0 : index
    %114 = vector.load %arg6[%c0_52, %c0_53] : memref<128x128xbf16, #tpu.memory_space<vmem>>, vector<128x128xbf16>
    %cst_54 = arith.constant dense<0.000000e+00> : vector<32x128xf32>
    %115 = tpu.matmul %113, %114, %cst_54 {dimension_numbers = #tpu.dot_dimension_numbers<[1], [0], [0], [1], [0, 0, 1, 1], [], []>} : vector<32x128xbf16>, vector<128x128xbf16>, vector<32x128xf32> -> vector<32x128xf32>
    %c0_55 = arith.constant 0 : index
    %c0_56 = arith.constant 0 : index
    %116 = vector.load %arg7[%c0_55, %c0_56] : memref<1x128xf32, #tpu.memory_space<vmem>>, vector<1x128xf32>
    %117 = vector.broadcast %116 : vector<1x128xf32> to vector<32x128xf32>
    %118 = arith.addf %115, %117 : vector<32x128xf32>
    %119 = arith.addf %3, %118 : vector<32x128xf32>
    %c0_57 = arith.constant 0 : index
    %c0_58 = arith.constant 0 : index
    %120 = vector.load %arg8[%c0_57, %c0_58] : memref<1x128xf32, #tpu.memory_space<vmem>>, vector<1x128xf32>
    %c0_59 = arith.constant 0 : index
    %c0_60 = arith.constant 0 : index
    %121 = vector.load %arg9[%c0_59, %c0_60] : memref<1x128xf32, #tpu.memory_space<vmem>>, vector<1x128xf32>
    %cst_61 = arith.constant dense<0.000000e+00> : vector<32xf32>
    %122 = vector.multi_reduction <add>, %119, %cst_61 [1] : vector<32x128xf32> to vector<32xf32>
    %123 = vector.shape_cast %122 : vector<32xf32> to vector<32x1xf32>
    %cst_62 = arith.constant 1.280000e+02 : f32
    %124 = vector.broadcast %cst_62 : f32 to vector<32x1xf32>
    %125 = arith.divf %123, %124 : vector<32x1xf32>
    %126 = vector.broadcast %125 : vector<32x1xf32> to vector<32x128xf32>
    %127 = arith.subf %119, %126 : vector<32x128xf32>
    %128 = arith.mulf %127, %127 : vector<32x128xf32>
    %cst_63 = arith.constant dense<0.000000e+00> : vector<32xf32>
    %129 = vector.multi_reduction <add>, %128, %cst_63 [1] : vector<32x128xf32> to vector<32xf32>
    %130 = vector.shape_cast %129 : vector<32xf32> to vector<32x1xf32>
    %cst_64 = arith.constant 1.280000e+02 : f32
    %131 = vector.broadcast %cst_64 : f32 to vector<32x1xf32>
    %132 = arith.divf %130, %131 : vector<32x1xf32>
    %cst_65 = arith.constant 9.99999974E-6 : f32
    %133 = vector.broadcast %cst_65 : f32 to vector<32x1xf32>
    %134 = arith.addf %132, %133 : vector<32x1xf32>
    %135 = math.rsqrt %134 : vector<32x1xf32>
    %136 = vector.broadcast %135 : vector<32x1xf32> to vector<32x128xf32>
    %137 = arith.mulf %127, %136 : vector<32x128xf32>
    %138 = vector.broadcast %120 : vector<1x128xf32> to vector<32x128xf32>
    %139 = arith.mulf %137, %138 : vector<32x128xf32>
    %140 = vector.broadcast %121 : vector<1x128xf32> to vector<32x128xf32>
    %141 = arith.addf %139, %140 : vector<32x128xf32>
    %142 = arith.truncf %141 : vector<32x128xf32> to vector<32x128xbf16>
    %c0_66 = arith.constant 0 : index
    %c0_67 = arith.constant 0 : index
    %143 = vector.load %arg10[%c0_66, %c0_67] : memref<128x512xbf16, #tpu.memory_space<vmem>>, vector<128x512xbf16>
    %cst_68 = arith.constant dense<0.000000e+00> : vector<32x512xf32>
    %144 = tpu.matmul %142, %143, %cst_68 {dimension_numbers = #tpu.dot_dimension_numbers<[1], [0], [0], [1], [0, 0, 1, 1], [], []>} : vector<32x128xbf16>, vector<128x512xbf16>, vector<32x512xf32> -> vector<32x512xf32>
    %c0_69 = arith.constant 0 : index
    %c0_70 = arith.constant 0 : index
    %145 = vector.load %arg11[%c0_69, %c0_70] : memref<1x512xf32, #tpu.memory_space<vmem>>, vector<1x512xf32>
    %146 = vector.broadcast %145 : vector<1x512xf32> to vector<32x512xf32>
    %147 = arith.addf %144, %146 : vector<32x512xf32>
    %cst_71 = arith.constant 5.000000e-01 : f32
    %148 = vector.broadcast %cst_71 : f32 to vector<32x512xf32>
    %149 = arith.mulf %148, %147 : vector<32x512xf32>
    %cst_72 = arith.constant 0.707106769 : f32
    %150 = vector.broadcast %cst_72 : f32 to vector<32x512xf32>
    %151 = arith.mulf %147, %150 : vector<32x512xf32>
    %152 = math.erf %151 : vector<32x512xf32>
    %cst_73 = arith.constant 1.000000e+00 : f32
    %153 = vector.broadcast %cst_73 : f32 to vector<32x512xf32>
    %154 = arith.addf %153, %152 : vector<32x512xf32>
    %155 = arith.mulf %149, %154 : vector<32x512xf32>
    %156 = arith.truncf %155 : vector<32x512xf32> to vector<32x512xbf16>
    %c0_74 = arith.constant 0 : index
    %c0_75 = arith.constant 0 : index
    %157 = vector.load %arg12[%c0_74, %c0_75] : memref<512x128xbf16, #tpu.memory_space<vmem>>, vector<512x128xbf16>
    %cst_76 = arith.constant dense<0.000000e+00> : vector<32x128xf32>
    %158 = tpu.matmul %156, %157, %cst_76 {dimension_numbers = #tpu.dot_dimension_numbers<[1], [0], [0], [1], [0, 0, 1, 1], [], []>} : vector<32x512xbf16>, vector<512x128xbf16>, vector<32x128xf32> -> vector<32x128xf32>
    %159 = arith.addf %119, %158 : vector<32x128xf32>
    %c0_77 = arith.constant 0 : index
    %c0_78 = arith.constant 0 : index
    %160 = vector.load %arg13[%c0_77, %c0_78] : memref<1x128xf32, #tpu.memory_space<vmem>>, vector<1x128xf32>
    %161 = vector.broadcast %160 : vector<1x128xf32> to vector<32x128xf32>
    %162 = arith.addf %159, %161 : vector<32x128xf32>
    %163 = vector.shape_cast %162 : vector<32x128xf32> to vector<2x16x128xf32>
    %c0_79 = arith.constant 0 : index
    %c0_80 = arith.constant 0 : index
    %c0_81 = arith.constant 0 : index
    %164 = vector.load %arg14[%c0_79, %c0_80, %c0_81] : memref<2x16x128xf32, #tpu.memory_space<vmem>>, vector<2x16x128xf32>
    tpu.vector_store %arg14[%c0_79, %c0_80, %c0_81], %163 {strides = array<i32>} : memref<2x16x128xf32, #tpu.memory_space<vmem>>, vector<2x16x128xf32>,
    return
  }
  func.func @transform_0(%arg0: i32) -> (i32, i32, i32) {
    %c0_i32 = arith.constant 0 : i32
    %c0_i32_0 = arith.constant 0 : i32
    %c0_i32_1 = arith.constant 0 : i32
    return %arg0, %c0_i32, %c0_i32_0 : i32, i32, i32
  }
  func.func @transform_1(%arg0: i32) -> (i32, i32, i32) {
    %c0_i32 = arith.constant 0 : i32
    %c0_i32_0 = arith.constant 0 : i32
    %c0_i32_1 = arith.constant 0 : i32
    return %arg0, %c0_i32, %c0_i32_0 : i32, i32, i32
  }
  func.func @transform_2(%arg0: i32) -> (i32, i32) {
    %c0_i32 = arith.constant 0 : i32
    %c0_i32_0 = arith.constant 0 : i32
    %c0_i32_1 = arith.constant 0 : i32
    return %c0_i32, %c0_i32_0 : i32, i32
  }
  func.func @transform_3(%arg0: i32) -> (i32, i32) {
    %c0_i32 = arith.constant 0 : i32
    %c0_i32_0 = arith.constant 0 : i32
    %c0_i32_1 = arith.constant 0 : i32
    return %c0_i32, %c0_i32_0 : i32, i32
  }
  func.func @transform_4(%arg0: i32) -> (i32, i32) {
    %c0_i32 = arith.constant 0 : i32
    %c0_i32_0 = arith.constant 0 : i32
    %c0_i32_1 = arith.constant 0 : i32
    return %c0_i32, %c0_i32_0 : i32, i32
  }
  func.func @transform_5(%arg0: i32) -> (i32, i32) {
    %c0_i32 = arith.constant 0 : i32
    %c0_i32_0 = arith.constant 0 : i32
    %c0_i32_1 = arith.constant 0 : i32
    return %c0_i32, %c0_i32_0 : i32, i32
  }
  func.func @transform_6(%arg0: i32) -> (i32, i32) {
    %c0_i32 = arith.constant 0 : i32
    %c0_i32_0 = arith.constant 0 : i32
    %c0_i32_1 = arith.constant 0 : i32
    return %c0_i32, %c0_i32_0 : i32, i32
  }
  func.func @transform_7(%arg0: i32) -> (i32, i32) {
    %c0_i32 = arith.constant 0 : i32
    %c0_i32_0 = arith.constant 0 : i32
    %c0_i32_1 = arith.constant 0 : i32
    return %c0_i32, %c0_i32_0 : i32, i32
  }
  func.func @transform_8(%arg0: i32) -> (i32, i32) {
    %c0_i32 = arith.constant 0 : i32
    %c0_i32_0 = arith.constant 0 : i32
    %c0_i32_1 = arith.constant 0 : i32
    return %c0_i32, %c0_i32_0 : i32, i32
  }
  func.func @transform_9(%arg0: i32) -> (i32, i32) {
    %c0_i32 = arith.constant 0 : i32
    %c0_i32_0 = arith.constant 0 : i32
    %c0_i32_1 = arith.constant 0 : i32
    return %c0_i32, %c0_i32_0 : i32, i32
  }
  func.func @transform_10(%arg0: i32) -> (i32, i32) {
    %c0_i32 = arith.constant 0 : i32
    %c0_i32_0 = arith.constant 0 : i32
    %c0_i32_1 = arith.constant 0 : i32
    return %c0_i32, %c0_i32_0 : i32, i32
  }
  func.func @transform_11(%arg0: i32) -> (i32, i32) {
    %c0_i32 = arith.constant 0 : i32
    %c0_i32_0 = arith.constant 0 : i32
    %c0_i32_1 = arith.constant 0 : i32
    return %c0_i32, %c0_i32_0 : i32, i32
  }
  func.func @transform_12(%arg0: i32) -> (i32, i32) {
    %c0_i32 = arith.constant 0 : i32
    %c0_i32_0 = arith.constant 0 : i32
    %c0_i32_1 = arith.constant 0 : i32
    return %c0_i32, %c0_i32_0 : i32, i32
  }
  func.func @transform_13(%arg0: i32) -> (i32, i32, i32) {
    %c0_i32 = arith.constant 0 : i32
    %c0_i32_0 = arith.constant 0 : i32
    %c0_i32_1 = arith.constant 0 : i32
    return %arg0, %c0_i32, %c0_i32_0 : i32, i32, i32
  }
}

module attributes {stable_mosaic.version = 11 : i64} {
  func.func @_block_kernel(%arg0: i32, %arg1: memref<2x16x128xf32, #tpu.memory_space<vmem>>, %arg2: memref<2x16x128xf32, #tpu.memory_space<vmem>>, %arg3: memref<1x128xf32, #tpu.memory_space<vmem>>, %arg4: memref<1x128xf32, #tpu.memory_space<vmem>>, %arg5: memref<128x384xbf16, #tpu.memory_space<vmem>>, %arg6: memref<128x128xbf16, #tpu.memory_space<vmem>>, %arg7: memref<1x128xf32, #tpu.memory_space<vmem>>, %arg8: memref<1x128xf32, #tpu.memory_space<vmem>>, %arg9: memref<1x128xf32, #tpu.memory_space<vmem>>, %arg10: memref<128x512xbf16, #tpu.memory_space<vmem>>, %arg11: memref<1x512xf32, #tpu.memory_space<vmem>>, %arg12: memref<512x128xbf16, #tpu.memory_space<vmem>>, %arg13: memref<1x128xf32, #tpu.memory_space<vmem>>, %arg14: memref<2x16x128xf32, #tpu.memory_space<vmem>>, %arg15: memref<32x384xbf16, #tpu.memory_space<vmem>>, %arg16: memref<32x128xbf16, #tpu.memory_space<vmem>>) attributes {dimension_semantics = [#tpu.dimension_semantics<parallel>], iteration_bounds = array<i64: 2>, scalar_prefetch = 0 : i64, scratch_operands = 2 : i64, tpu.core_type = #tpu.core_type<tc>, window_params = [{transform_indices = @transform_0, window_bounds = array<i64: 2, 16, 128>}, {transform_indices = @transform_1, window_bounds = array<i64: 2, 16, 128>}, {pipeline_mode = #tpu.pipeline_mode<synchronous>, transform_indices = @transform_2, window_bounds = array<i64: 1, 128>}, {pipeline_mode = #tpu.pipeline_mode<synchronous>, transform_indices = @transform_3, window_bounds = array<i64: 1, 128>}, {pipeline_mode = #tpu.pipeline_mode<synchronous>, transform_indices = @transform_4, window_bounds = array<i64: 128, 384>}, {pipeline_mode = #tpu.pipeline_mode<synchronous>, transform_indices = @transform_5, window_bounds = array<i64: 128, 128>}, {pipeline_mode = #tpu.pipeline_mode<synchronous>, transform_indices = @transform_6, window_bounds = array<i64: 1, 128>}, {pipeline_mode = #tpu.pipeline_mode<synchronous>, transform_indices = @transform_7, window_bounds = array<i64: 1, 128>}, {pipeline_mode = #tpu.pipeline_mode<synchronous>, transform_indices = @transform_8, window_bounds = array<i64: 1, 128>}, {pipeline_mode = #tpu.pipeline_mode<synchronous>, transform_indices = @transform_9, window_bounds = array<i64: 128, 512>}, {pipeline_mode = #tpu.pipeline_mode<synchronous>, transform_indices = @transform_10, window_bounds = array<i64: 1, 512>}, {pipeline_mode = #tpu.pipeline_mode<synchronous>, transform_indices = @transform_11, window_bounds = array<i64: 512, 128>}, {pipeline_mode = #tpu.pipeline_mode<synchronous>, transform_indices = @transform_12, window_bounds = array<i64: 1, 128>}, {transform_indices = @transform_13, window_bounds = array<i64: 2, 16, 128>}]} {
    %c0 = arith.constant 0 : index
    %c0_0 = arith.constant 0 : index
    %c0_1 = arith.constant 0 : index
    %0 = vector.load %arg1[%c0, %c0_0, %c0_1] : memref<2x16x128xf32, #tpu.memory_space<vmem>>, vector<2x16x128xf32>
    %c0_2 = arith.constant 0 : index
    %c0_3 = arith.constant 0 : index
    %c0_4 = arith.constant 0 : index
    %1 = vector.load %arg2[%c0_2, %c0_3, %c0_4] : memref<2x16x128xf32, #tpu.memory_space<vmem>>, vector<2x16x128xf32>
    %2 = arith.addf %0, %1 : vector<2x16x128xf32>
    %3 = vector.shape_cast %2 : vector<2x16x128xf32> to vector<32x128xf32>
    %c0_5 = arith.constant 0 : index
    %c0_6 = arith.constant 0 : index
    %4 = vector.load %arg3[%c0_5, %c0_6] : memref<1x128xf32, #tpu.memory_space<vmem>>, vector<1x128xf32>
    %c0_7 = arith.constant 0 : index
    %c0_8 = arith.constant 0 : index
    %5 = vector.load %arg4[%c0_7, %c0_8] : memref<1x128xf32, #tpu.memory_space<vmem>>, vector<1x128xf32>
    %cst = arith.constant dense<0.000000e+00> : vector<32xf32>
    %6 = vector.multi_reduction <add>, %3, %cst [1] : vector<32x128xf32> to vector<32xf32>
    %7 = vector.shape_cast %6 : vector<32xf32> to vector<32x1xf32>
    %cst_9 = arith.constant 1.280000e+02 : f32
    %8 = vector.broadcast %cst_9 : f32 to vector<32x1xf32>
    %9 = arith.divf %7, %8 : vector<32x1xf32>
    %10 = vector.broadcast %9 : vector<32x1xf32> to vector<32x128xf32>
    %11 = arith.subf %3, %10 : vector<32x128xf32>
    %12 = arith.mulf %11, %11 : vector<32x128xf32>
    %cst_10 = arith.constant dense<0.000000e+00> : vector<32xf32>
    %13 = vector.multi_reduction <add>, %12, %cst_10 [1] : vector<32x128xf32> to vector<32xf32>
    %14 = vector.shape_cast %13 : vector<32xf32> to vector<32x1xf32>
    %cst_11 = arith.constant 1.280000e+02 : f32
    %15 = vector.broadcast %cst_11 : f32 to vector<32x1xf32>
    %16 = arith.divf %14, %15 : vector<32x1xf32>
    %cst_12 = arith.constant 9.99999974E-6 : f32
    %17 = vector.broadcast %cst_12 : f32 to vector<32x1xf32>
    %18 = arith.addf %16, %17 : vector<32x1xf32>
    %19 = math.rsqrt %18 : vector<32x1xf32>
    %20 = vector.broadcast %19 : vector<32x1xf32> to vector<32x128xf32>
    %21 = arith.mulf %11, %20 : vector<32x128xf32>
    %22 = vector.broadcast %4 : vector<1x128xf32> to vector<32x128xf32>
    %23 = arith.mulf %21, %22 : vector<32x128xf32>
    %24 = vector.broadcast %5 : vector<1x128xf32> to vector<32x128xf32>
    %25 = arith.addf %23, %24 : vector<32x128xf32>
    %26 = arith.truncf %25 : vector<32x128xf32> to vector<32x128xbf16>
    %c0_13 = arith.constant 0 : index
    %c0_14 = arith.constant 0 : index
    %27 = vector.load %arg5[%c0_13, %c0_14] : memref<128x384xbf16, #tpu.memory_space<vmem>>, vector<128x128xbf16>
    %cst_15 = arith.constant dense<0.000000e+00> : vector<32x128xf32>
    %28 = tpu.matmul %26, %27, %cst_15 {dimension_numbers = #tpu.dot_dimension_numbers<[1], [0], [0], [1], [0, 0, 1, 1], [], []>} : vector<32x128xbf16>, vector<128x128xbf16>, vector<32x128xf32> -> vector<32x128xf32>
    %29 = arith.truncf %28 : vector<32x128xf32> to vector<32x128xbf16>
    %c0_16 = arith.constant 0 : index
    %c0_17 = arith.constant 0 : index
    %30 = vector.load %arg15[%c0_16, %c0_17] : memref<32x384xbf16, #tpu.memory_space<vmem>>, vector<32x128xbf16>
    tpu.vector_store %arg15[%c0_16, %c0_17], %29 {strides = array<i32>} : memref<32x384xbf16, #tpu.memory_space<vmem>>, vector<32x128xbf16>,
    %c0_18 = arith.constant 0 : index
    %c128 = arith.constant 128 : index
    %31 = vector.load %arg5[%c0_18, %c128] : memref<128x384xbf16, #tpu.memory_space<vmem>>, vector<128x128xbf16>
    %cst_19 = arith.constant dense<0.000000e+00> : vector<32x128xf32>
    %32 = tpu.matmul %26, %31, %cst_19 {dimension_numbers = #tpu.dot_dimension_numbers<[1], [0], [0], [1], [0, 0, 1, 1], [], []>} : vector<32x128xbf16>, vector<128x128xbf16>, vector<32x128xf32> -> vector<32x128xf32>
    %33 = arith.truncf %32 : vector<32x128xf32> to vector<32x128xbf16>
    %c0_20 = arith.constant 0 : index
    %c128_21 = arith.constant 128 : index
    %34 = vector.load %arg15[%c0_20, %c128_21] : memref<32x384xbf16, #tpu.memory_space<vmem>>, vector<32x128xbf16>
    tpu.vector_store %arg15[%c0_20, %c128_21], %33 {strides = array<i32>} : memref<32x384xbf16, #tpu.memory_space<vmem>>, vector<32x128xbf16>,
    %c0_22 = arith.constant 0 : index
    %c256 = arith.constant 256 : index
    %35 = vector.load %arg5[%c0_22, %c256] : memref<128x384xbf16, #tpu.memory_space<vmem>>, vector<128x128xbf16>
    %cst_23 = arith.constant dense<0.000000e+00> : vector<32x128xf32>
    %36 = tpu.matmul %26, %35, %cst_23 {dimension_numbers = #tpu.dot_dimension_numbers<[1], [0], [0], [1], [0, 0, 1, 1], [], []>} : vector<32x128xbf16>, vector<128x128xbf16>, vector<32x128xf32> -> vector<32x128xf32>
    %37 = arith.truncf %36 : vector<32x128xf32> to vector<32x128xbf16>
    %c0_24 = arith.constant 0 : index
    %c256_25 = arith.constant 256 : index
    %38 = vector.load %arg15[%c0_24, %c256_25] : memref<32x384xbf16, #tpu.memory_space<vmem>>, vector<32x128xbf16>
    tpu.vector_store %arg15[%c0_24, %c256_25], %37 {strides = array<i32>} : memref<32x384xbf16, #tpu.memory_space<vmem>>, vector<32x128xbf16>,
    %c0_26 = arith.constant 0 : index
    %c0_27 = arith.constant 0 : index
    %39 = vector.load %arg15[%c0_26, %c0_27] : memref<32x384xbf16, #tpu.memory_space<vmem>>, vector<32x128xbf16>
    %40 = vector.shape_cast %39 : vector<32x128xbf16> to vector<2x16x128xbf16>
    %c0_28 = arith.constant 0 : index
    %c128_29 = arith.constant 128 : index
    %41 = vector.load %arg15[%c0_28, %c128_29] : memref<32x384xbf16, #tpu.memory_space<vmem>>, vector<32x128xbf16>
    %42 = vector.shape_cast %41 : vector<32x128xbf16> to vector<2x16x128xbf16>
    %c0_30 = arith.constant 0 : index
    %c256_31 = arith.constant 256 : index
    %43 = vector.load %arg15[%c0_30, %c256_31] : memref<32x384xbf16, #tpu.memory_space<vmem>>, vector<32x128xbf16>
    %44 = vector.shape_cast %43 : vector<32x128xbf16> to vector<2x16x128xbf16>
    %45 = vector.extract_strided_slice %40 {offsets = [0, 0, 0], sizes = [2, 16, 32], strides = [1, 1, 1]} : vector<2x16x128xbf16> to vector<2x16x32xbf16>
    %46 = vector.extract_strided_slice %42 {offsets = [0, 0, 0], sizes = [2, 16, 32], strides = [1, 1, 1]} : vector<2x16x128xbf16> to vector<2x16x32xbf16>
    %47 = vector.extract_strided_slice %44 {offsets = [0, 0, 0], sizes = [2, 16, 32], strides = [1, 1, 1]} : vector<2x16x128xbf16> to vector<2x16x32xbf16>
    "tpu.trace_start"() <{level = 10 : i32, message = "bqd,bkd->bqk"}> : () -> ()
    %cst_32 = arith.constant dense<0.000000e+00> : vector<2x16x16xf32>
    %48 = tpu.matmul %45, %46, %cst_32 {dimension_numbers = #tpu.dot_dimension_numbers<[2], [2], [1], [1], [0, 0, 0, 1, 1, 1], [0], [0]>} : vector<2x16x32xbf16>, vector<2x16x32xbf16>, vector<2x16x16xf32> -> vector<2x16x16xf32>
    "tpu.trace_stop"() : () -> ()
    %cst_33 = arith.constant dense<0xFF800000> : vector<2x16xf32>
    %49 = vector.multi_reduction <maximumf>, %48, %cst_33 [2] : vector<2x16x16xf32> to vector<2x16xf32>
    %50 = vector.shape_cast %49 : vector<2x16xf32> to vector<2x16x1xf32>
    %51 = vector.broadcast %50 : vector<2x16x1xf32> to vector<2x16x16xf32>
    %52 = arith.subf %48, %51 : vector<2x16x16xf32>
    %53 = math.exp %52 : vector<2x16x16xf32>
    %cst_34 = arith.constant dense<0.000000e+00> : vector<2x16xf32>
    %54 = vector.multi_reduction <add>, %53, %cst_34 [2] : vector<2x16x16xf32> to vector<2x16xf32>
    %55 = vector.shape_cast %54 : vector<2x16xf32> to vector<2x16x1xf32>
    %56 = tpu.reciprocal %55 {approx = true} : vector<2x16x1xf32> -> vector<2x16x1xf32>
    %57 = vector.broadcast %56 : vector<2x16x1xf32> to vector<2x16x16xf32>
    %58 = arith.mulf %53, %57 : vector<2x16x16xf32>
    %59 = arith.truncf %58 : vector<2x16x16xf32> to vector<2x16x16xbf16>
    "tpu.trace_start"() <{level = 10 : i32, message = "bqk,bkd->bqd"}> : () -> ()
    %cst_35 = arith.constant dense<0.000000e+00> : vector<2x16x32xf32>
    %60 = tpu.matmul %59, %47, %cst_35 {dimension_numbers = #tpu.dot_dimension_numbers<[2], [1], [1], [2], [0, 0, 0, 1, 1, 2], [0], [0]>} : vector<2x16x16xbf16>, vector<2x16x32xbf16>, vector<2x16x32xf32> -> vector<2x16x32xf32>
    "tpu.trace_stop"() : () -> ()
    %61 = vector.extract_strided_slice %40 {offsets = [0, 0, 32], sizes = [2, 16, 32], strides = [1, 1, 1]} : vector<2x16x128xbf16> to vector<2x16x32xbf16>
    %62 = vector.extract_strided_slice %42 {offsets = [0, 0, 32], sizes = [2, 16, 32], strides = [1, 1, 1]} : vector<2x16x128xbf16> to vector<2x16x32xbf16>
    %63 = vector.extract_strided_slice %44 {offsets = [0, 0, 32], sizes = [2, 16, 32], strides = [1, 1, 1]} : vector<2x16x128xbf16> to vector<2x16x32xbf16>
    "tpu.trace_start"() <{level = 10 : i32, message = "bqd,bkd->bqk"}> : () -> ()
    %cst_36 = arith.constant dense<0.000000e+00> : vector<2x16x16xf32>
    %64 = tpu.matmul %61, %62, %cst_36 {dimension_numbers = #tpu.dot_dimension_numbers<[2], [2], [1], [1], [0, 0, 0, 1, 1, 1], [0], [0]>} : vector<2x16x32xbf16>, vector<2x16x32xbf16>, vector<2x16x16xf32> -> vector<2x16x16xf32>
    "tpu.trace_stop"() : () -> ()
    %cst_37 = arith.constant dense<0xFF800000> : vector<2x16xf32>
    %65 = vector.multi_reduction <maximumf>, %64, %cst_37 [2] : vector<2x16x16xf32> to vector<2x16xf32>
    %66 = vector.shape_cast %65 : vector<2x16xf32> to vector<2x16x1xf32>
    %67 = vector.broadcast %66 : vector<2x16x1xf32> to vector<2x16x16xf32>
    %68 = arith.subf %64, %67 : vector<2x16x16xf32>
    %69 = math.exp %68 : vector<2x16x16xf32>
    %cst_38 = arith.constant dense<0.000000e+00> : vector<2x16xf32>
    %70 = vector.multi_reduction <add>, %69, %cst_38 [2] : vector<2x16x16xf32> to vector<2x16xf32>
    %71 = vector.shape_cast %70 : vector<2x16xf32> to vector<2x16x1xf32>
    %72 = tpu.reciprocal %71 {approx = true} : vector<2x16x1xf32> -> vector<2x16x1xf32>
    %73 = vector.broadcast %72 : vector<2x16x1xf32> to vector<2x16x16xf32>
    %74 = arith.mulf %69, %73 : vector<2x16x16xf32>
    %75 = arith.truncf %74 : vector<2x16x16xf32> to vector<2x16x16xbf16>
    "tpu.trace_start"() <{level = 10 : i32, message = "bqk,bkd->bqd"}> : () -> ()
    %cst_39 = arith.constant dense<0.000000e+00> : vector<2x16x32xf32>
    %76 = tpu.matmul %75, %63, %cst_39 {dimension_numbers = #tpu.dot_dimension_numbers<[2], [1], [1], [2], [0, 0, 0, 1, 1, 2], [0], [0]>} : vector<2x16x16xbf16>, vector<2x16x32xbf16>, vector<2x16x32xf32> -> vector<2x16x32xf32>
    "tpu.trace_stop"() : () -> ()
    %77 = vector.extract_strided_slice %40 {offsets = [0, 0, 64], sizes = [2, 16, 32], strides = [1, 1, 1]} : vector<2x16x128xbf16> to vector<2x16x32xbf16>
    %78 = vector.extract_strided_slice %42 {offsets = [0, 0, 64], sizes = [2, 16, 32], strides = [1, 1, 1]} : vector<2x16x128xbf16> to vector<2x16x32xbf16>
    %79 = vector.extract_strided_slice %44 {offsets = [0, 0, 64], sizes = [2, 16, 32], strides = [1, 1, 1]} : vector<2x16x128xbf16> to vector<2x16x32xbf16>
    "tpu.trace_start"() <{level = 10 : i32, message = "bqd,bkd->bqk"}> : () -> ()
    %cst_40 = arith.constant dense<0.000000e+00> : vector<2x16x16xf32>
    %80 = tpu.matmul %77, %78, %cst_40 {dimension_numbers = #tpu.dot_dimension_numbers<[2], [2], [1], [1], [0, 0, 0, 1, 1, 1], [0], [0]>} : vector<2x16x32xbf16>, vector<2x16x32xbf16>, vector<2x16x16xf32> -> vector<2x16x16xf32>
    "tpu.trace_stop"() : () -> ()
    %cst_41 = arith.constant dense<0xFF800000> : vector<2x16xf32>
    %81 = vector.multi_reduction <maximumf>, %80, %cst_41 [2] : vector<2x16x16xf32> to vector<2x16xf32>
    %82 = vector.shape_cast %81 : vector<2x16xf32> to vector<2x16x1xf32>
    %83 = vector.broadcast %82 : vector<2x16x1xf32> to vector<2x16x16xf32>
    %84 = arith.subf %80, %83 : vector<2x16x16xf32>
    %85 = math.exp %84 : vector<2x16x16xf32>
    %cst_42 = arith.constant dense<0.000000e+00> : vector<2x16xf32>
    %86 = vector.multi_reduction <add>, %85, %cst_42 [2] : vector<2x16x16xf32> to vector<2x16xf32>
    %87 = vector.shape_cast %86 : vector<2x16xf32> to vector<2x16x1xf32>
    %88 = tpu.reciprocal %87 {approx = true} : vector<2x16x1xf32> -> vector<2x16x1xf32>
    %89 = vector.broadcast %88 : vector<2x16x1xf32> to vector<2x16x16xf32>
    %90 = arith.mulf %85, %89 : vector<2x16x16xf32>
    %91 = arith.truncf %90 : vector<2x16x16xf32> to vector<2x16x16xbf16>
    "tpu.trace_start"() <{level = 10 : i32, message = "bqk,bkd->bqd"}> : () -> ()
    %cst_43 = arith.constant dense<0.000000e+00> : vector<2x16x32xf32>
    %92 = tpu.matmul %91, %79, %cst_43 {dimension_numbers = #tpu.dot_dimension_numbers<[2], [1], [1], [2], [0, 0, 0, 1, 1, 2], [0], [0]>} : vector<2x16x16xbf16>, vector<2x16x32xbf16>, vector<2x16x32xf32> -> vector<2x16x32xf32>
    "tpu.trace_stop"() : () -> ()
    %93 = vector.extract_strided_slice %40 {offsets = [0, 0, 96], sizes = [2, 16, 32], strides = [1, 1, 1]} : vector<2x16x128xbf16> to vector<2x16x32xbf16>
    %94 = vector.extract_strided_slice %42 {offsets = [0, 0, 96], sizes = [2, 16, 32], strides = [1, 1, 1]} : vector<2x16x128xbf16> to vector<2x16x32xbf16>
    %95 = vector.extract_strided_slice %44 {offsets = [0, 0, 96], sizes = [2, 16, 32], strides = [1, 1, 1]} : vector<2x16x128xbf16> to vector<2x16x32xbf16>
    "tpu.trace_start"() <{level = 10 : i32, message = "bqd,bkd->bqk"}> : () -> ()
    %cst_44 = arith.constant dense<0.000000e+00> : vector<2x16x16xf32>
    %96 = tpu.matmul %93, %94, %cst_44 {dimension_numbers = #tpu.dot_dimension_numbers<[2], [2], [1], [1], [0, 0, 0, 1, 1, 1], [0], [0]>} : vector<2x16x32xbf16>, vector<2x16x32xbf16>, vector<2x16x16xf32> -> vector<2x16x16xf32>
    "tpu.trace_stop"() : () -> ()
    %cst_45 = arith.constant dense<0xFF800000> : vector<2x16xf32>
    %97 = vector.multi_reduction <maximumf>, %96, %cst_45 [2] : vector<2x16x16xf32> to vector<2x16xf32>
    %98 = vector.shape_cast %97 : vector<2x16xf32> to vector<2x16x1xf32>
    %99 = vector.broadcast %98 : vector<2x16x1xf32> to vector<2x16x16xf32>
    %100 = arith.subf %96, %99 : vector<2x16x16xf32>
    %101 = math.exp %100 : vector<2x16x16xf32>
    %cst_46 = arith.constant dense<0.000000e+00> : vector<2x16xf32>
    %102 = vector.multi_reduction <add>, %101, %cst_46 [2] : vector<2x16x16xf32> to vector<2x16xf32>
    %103 = vector.shape_cast %102 : vector<2x16xf32> to vector<2x16x1xf32>
    %104 = tpu.reciprocal %103 {approx = true} : vector<2x16x1xf32> -> vector<2x16x1xf32>
    %105 = vector.broadcast %104 : vector<2x16x1xf32> to vector<2x16x16xf32>
    %106 = arith.mulf %101, %105 : vector<2x16x16xf32>
    %107 = arith.truncf %106 : vector<2x16x16xf32> to vector<2x16x16xbf16>
    "tpu.trace_start"() <{level = 10 : i32, message = "bqk,bkd->bqd"}> : () -> ()
    %cst_47 = arith.constant dense<0.000000e+00> : vector<2x16x32xf32>
    %108 = tpu.matmul %107, %95, %cst_47 {dimension_numbers = #tpu.dot_dimension_numbers<[2], [1], [1], [2], [0, 0, 0, 1, 1, 2], [0], [0]>} : vector<2x16x16xbf16>, vector<2x16x32xbf16>, vector<2x16x32xf32> -> vector<2x16x32xf32>
    "tpu.trace_stop"() : () -> ()
    %109 = tpu.concatenate %60, %76, %92, %108 in 2 : vector<2x16x32xf32>, vector<2x16x32xf32>, vector<2x16x32xf32>, vector<2x16x32xf32> -> vector<2x16x128xf32>
    %110 = vector.shape_cast %109 : vector<2x16x128xf32> to vector<32x128xf32>
    %111 = arith.truncf %110 : vector<32x128xf32> to vector<32x128xbf16>
    %c0_48 = arith.constant 0 : index
    %c0_49 = arith.constant 0 : index
    %112 = vector.load %arg16[%c0_48, %c0_49] : memref<32x128xbf16, #tpu.memory_space<vmem>>, vector<32x128xbf16>
    tpu.vector_store %arg16[%c0_48, %c0_49], %111 {strides = array<i32>} : memref<32x128xbf16, #tpu.memory_space<vmem>>, vector<32x128xbf16>,
    %c0_50 = arith.constant 0 : index
    %c0_51 = arith.constant 0 : index
    %113 = vector.load %arg16[%c0_50, %c0_51] : memref<32x128xbf16, #tpu.memory_space<vmem>>, vector<32x128xbf16>
    %c0_52 = arith.constant 0 : index
    %c0_53 = arith.constant 0 : index
    %114 = vector.load %arg6[%c0_52, %c0_53] : memref<128x128xbf16, #tpu.memory_space<vmem>>, vector<128x128xbf16>
    %cst_54 = arith.constant dense<0.000000e+00> : vector<32x128xf32>
    %115 = tpu.matmul %113, %114, %cst_54 {dimension_numbers = #tpu.dot_dimension_numbers<[1], [0], [0], [1], [0, 0, 1, 1], [], []>} : vector<32x128xbf16>, vector<128x128xbf16>, vector<32x128xf32> -> vector<32x128xf32>
    %c0_55 = arith.constant 0 : index
    %c0_56 = arith.constant 0 : index
    %116 = vector.load %arg7[%c0_55, %c0_56] : memref<1x128xf32, #tpu.memory_space<vmem>>, vector<1x128xf32>
    %117 = vector.broadcast %116 : vector<1x128xf32> to vector<32x128xf32>
    %118 = arith.addf %115, %117 : vector<32x128xf32>
    %119 = arith.addf %3, %118 : vector<32x128xf32>
    %c0_57 = arith.constant 0 : index
    %c0_58 = arith.constant 0 : index
    %120 = vector.load %arg8[%c0_57, %c0_58] : memref<1x128xf32, #tpu.memory_space<vmem>>, vector<1x128xf32>
    %c0_59 = arith.constant 0 : index
    %c0_60 = arith.constant 0 : index
    %121 = vector.load %arg9[%c0_59, %c0_60] : memref<1x128xf32, #tpu.memory_space<vmem>>, vector<1x128xf32>
    %cst_61 = arith.constant dense<0.000000e+00> : vector<32xf32>
    %122 = vector.multi_reduction <add>, %119, %cst_61 [1] : vector<32x128xf32> to vector<32xf32>
    %123 = vector.shape_cast %122 : vector<32xf32> to vector<32x1xf32>
    %cst_62 = arith.constant 1.280000e+02 : f32
    %124 = vector.broadcast %cst_62 : f32 to vector<32x1xf32>
    %125 = arith.divf %123, %124 : vector<32x1xf32>
    %126 = vector.broadcast %125 : vector<32x1xf32> to vector<32x128xf32>
    %127 = arith.subf %119, %126 : vector<32x128xf32>
    %128 = arith.mulf %127, %127 : vector<32x128xf32>
    %cst_63 = arith.constant dense<0.000000e+00> : vector<32xf32>
    %129 = vector.multi_reduction <add>, %128, %cst_63 [1] : vector<32x128xf32> to vector<32xf32>
    %130 = vector.shape_cast %129 : vector<32xf32> to vector<32x1xf32>
    %cst_64 = arith.constant 1.280000e+02 : f32
    %131 = vector.broadcast %cst_64 : f32 to vector<32x1xf32>
    %132 = arith.divf %130, %131 : vector<32x1xf32>
    %cst_65 = arith.constant 9.99999974E-6 : f32
    %133 = vector.broadcast %cst_65 : f32 to vector<32x1xf32>
    %134 = arith.addf %132, %133 : vector<32x1xf32>
    %135 = math.rsqrt %134 : vector<32x1xf32>
    %136 = vector.broadcast %135 : vector<32x1xf32> to vector<32x128xf32>
    %137 = arith.mulf %127, %136 : vector<32x128xf32>
    %138 = vector.broadcast %120 : vector<1x128xf32> to vector<32x128xf32>
    %139 = arith.mulf %137, %138 : vector<32x128xf32>
    %140 = vector.broadcast %121 : vector<1x128xf32> to vector<32x128xf32>
    %141 = arith.addf %139, %140 : vector<32x128xf32>
    %142 = arith.truncf %141 : vector<32x128xf32> to vector<32x128xbf16>
    %c0_66 = arith.constant 0 : index
    %c0_67 = arith.constant 0 : index
    %143 = vector.load %arg10[%c0_66, %c0_67] : memref<128x512xbf16, #tpu.memory_space<vmem>>, vector<128x512xbf16>
    %cst_68 = arith.constant dense<0.000000e+00> : vector<32x512xf32>
    %144 = tpu.matmul %142, %143, %cst_68 {dimension_numbers = #tpu.dot_dimension_numbers<[1], [0], [0], [1], [0, 0, 1, 1], [], []>} : vector<32x128xbf16>, vector<128x512xbf16>, vector<32x512xf32> -> vector<32x512xf32>
    %c0_69 = arith.constant 0 : index
    %c0_70 = arith.constant 0 : index
    %145 = vector.load %arg11[%c0_69, %c0_70] : memref<1x512xf32, #tpu.memory_space<vmem>>, vector<1x512xf32>
    %146 = vector.broadcast %145 : vector<1x512xf32> to vector<32x512xf32>
    %147 = arith.addf %144, %146 : vector<32x512xf32>
    %cst_71 = arith.constant 5.000000e-01 : f32
    %148 = vector.broadcast %cst_71 : f32 to vector<32x512xf32>
    %149 = arith.mulf %148, %147 : vector<32x512xf32>
    %cst_72 = arith.constant 0.707106769 : f32
    %150 = vector.broadcast %cst_72 : f32 to vector<32x512xf32>
    %151 = arith.mulf %147, %150 : vector<32x512xf32>
    %152 = math.erf %151 : vector<32x512xf32>
    %cst_73 = arith.constant 1.000000e+00 : f32
    %153 = vector.broadcast %cst_73 : f32 to vector<32x512xf32>
    %154 = arith.addf %153, %152 : vector<32x512xf32>
    %155 = arith.mulf %149, %154 : vector<32x512xf32>
    %156 = arith.truncf %155 : vector<32x512xf32> to vector<32x512xbf16>
    %c0_74 = arith.constant 0 : index
    %c0_75 = arith.constant 0 : index
    %157 = vector.load %arg12[%c0_74, %c0_75] : memref<512x128xbf16, #tpu.memory_space<vmem>>, vector<512x128xbf16>
    %cst_76 = arith.constant dense<0.000000e+00> : vector<32x128xf32>
    %158 = tpu.matmul %156, %157, %cst_76 {dimension_numbers = #tpu.dot_dimension_numbers<[1], [0], [0], [1], [0, 0, 1, 1], [], []>} : vector<32x512xbf16>, vector<512x128xbf16>, vector<32x128xf32> -> vector<32x128xf32>
    %159 = arith.addf %119, %158 : vector<32x128xf32>
    %c0_77 = arith.constant 0 : index
    %c0_78 = arith.constant 0 : index
    %160 = vector.load %arg13[%c0_77, %c0_78] : memref<1x128xf32, #tpu.memory_space<vmem>>, vector<1x128xf32>
    %161 = vector.broadcast %160 : vector<1x128xf32> to vector<32x128xf32>
    %162 = arith.addf %159, %161 : vector<32x128xf32>
    %163 = vector.shape_cast %162 : vector<32x128xf32> to vector<2x16x128xf32>
    %c0_79 = arith.constant 0 : index
    %c0_80 = arith.constant 0 : index
    %c0_81 = arith.constant 0 : index
    %164 = vector.load %arg14[%c0_79, %c0_80, %c0_81] : memref<2x16x128xf32, #tpu.memory_space<vmem>>, vector<2x16x128xf32>
    tpu.vector_store %arg14[%c0_79, %c0_80, %c0_81], %163 {strides = array<i32>} : memref<2x16x128xf32, #tpu.memory_space<vmem>>, vector<2x16x128xf32>,
    return
  }
  func.func @transform_0(%arg0: i32) -> (i32, i32, i32) {
    %c0_i32 = arith.constant 0 : i32
    %c0_i32_0 = arith.constant 0 : i32
    %c0_i32_1 = arith.constant 0 : i32
    return %arg0, %c0_i32, %c0_i32_0 : i32, i32, i32
  }
  func.func @transform_1(%arg0: i32) -> (i32, i32, i32) {
    %c0_i32 = arith.constant 0 : i32
    %c0_i32_0 = arith.constant 0 : i32
    %c0_i32_1 = arith.constant 0 : i32
    return %arg0, %c0_i32, %c0_i32_0 : i32, i32, i32
  }
  func.func @transform_2(%arg0: i32) -> (i32, i32) {
    %c0_i32 = arith.constant 0 : i32
    %c0_i32_0 = arith.constant 0 : i32
    %c0_i32_1 = arith.constant 0 : i32
    return %c0_i32, %c0_i32_0 : i32, i32
  }
  func.func @transform_3(%arg0: i32) -> (i32, i32) {
    %c0_i32 = arith.constant 0 : i32
    %c0_i32_0 = arith.constant 0 : i32
    %c0_i32_1 = arith.constant 0 : i32
    return %c0_i32, %c0_i32_0 : i32, i32
  }
  func.func @transform_4(%arg0: i32) -> (i32, i32) {
    %c0_i32 = arith.constant 0 : i32
    %c0_i32_0 = arith.constant 0 : i32
    %c0_i32_1 = arith.constant 0 : i32
    return %c0_i32, %c0_i32_0 : i32, i32
  }
  func.func @transform_5(%arg0: i32) -> (i32, i32) {
    %c0_i32 = arith.constant 0 : i32
    %c0_i32_0 = arith.constant 0 : i32
    %c0_i32_1 = arith.constant 0 : i32
    return %c0_i32, %c0_i32_0 : i32, i32
  }
  func.func @transform_6(%arg0: i32) -> (i32, i32) {
    %c0_i32 = arith.constant 0 : i32
    %c0_i32_0 = arith.constant 0 : i32
    %c0_i32_1 = arith.constant 0 : i32
    return %c0_i32, %c0_i32_0 : i32, i32
  }
  func.func @transform_7(%arg0: i32) -> (i32, i32) {
    %c0_i32 = arith.constant 0 : i32
    %c0_i32_0 = arith.constant 0 : i32
    %c0_i32_1 = arith.constant 0 : i32
    return %c0_i32, %c0_i32_0 : i32, i32
  }
  func.func @transform_8(%arg0: i32) -> (i32, i32) {
    %c0_i32 = arith.constant 0 : i32
    %c0_i32_0 = arith.constant 0 : i32
    %c0_i32_1 = arith.constant 0 : i32
    return %c0_i32, %c0_i32_0 : i32, i32
  }
  func.func @transform_9(%arg0: i32) -> (i32, i32) {
    %c0_i32 = arith.constant 0 : i32
    %c0_i32_0 = arith.constant 0 : i32
    %c0_i32_1 = arith.constant 0 : i32
    return %c0_i32, %c0_i32_0 : i32, i32
  }
  func.func @transform_10(%arg0: i32) -> (i32, i32) {
    %c0_i32 = arith.constant 0 : i32
    %c0_i32_0 = arith.constant 0 : i32
    %c0_i32_1 = arith.constant 0 : i32
    return %c0_i32, %c0_i32_0 : i32, i32
  }
  func.func @transform_11(%arg0: i32) -> (i32, i32) {
    %c0_i32 = arith.constant 0 : i32
    %c0_i32_0 = arith.constant 0 : i32
    %c0_i32_1 = arith.constant 0 : i32
    return %c0_i32, %c0_i32_0 : i32, i32
  }
  func.func @transform_12(%arg0: i32) -> (i32, i32) {
    %c0_i32 = arith.constant 0 : i32
    %c0_i32_0 = arith.constant 0 : i32
    %c0_i32_1 = arith.constant 0 : i32
    return %c0_i32, %c0_i32_0 : i32, i32
  }
  func.func @transform_13(%arg0: i32) -> (i32, i32, i32) {
    %c0_i32 = arith.constant 0 : i32
    %c0_i32_0 = arith.constant 0 : i32
    %c0_i32_1 = arith.constant 0 : i32
    return %arg0, %c0_i32, %c0_i32_0 : i32, i32, i32
  }
}

</mosaic_0001>

<llo_original>
// kernel: tpu_custom_call.1
$region0: #{tpu_custom_call.1}
  #allocation0 [shape = 'u32[]', space=smem, size = 0x4, offset = 0x4, fixed_abs, tag = 'smem constant byte address 0x4 - core index']
  #allocation1 [shape = 'u32[144,128]{1,0:T(1,128)}', space=vmem, size = 0x12000, scoped, tag = 'internal scratch']
  #allocation2 [shape = 'bf16[32,384]{1,0:T(16,128)(2,1)}', space=vmem, size = 0x6000, scoped, tag = 'scratch operand']
  #allocation3 [shape = 'bf16[32,128]{1,0:T(16,128)(2,1)}', space=vmem, size = 0x2000, scoped, tag = 'scratch operand']
  %s0 = inlined_call_operand.hbm [shape: f32[4,16,128], index: 0, kind: input, shape index: {}]
  %s1 = inlined_call_operand.hbm [shape: f32[4,16,128], index: 1, kind: input, shape index: {}]
  %s2 = inlined_call_operand.vmem [shape: f32[1,128], index: 2, kind: input, shape index: {}]
  %s3 = inlined_call_operand.vmem [shape: f32[1,128], index: 3, kind: input, shape index: {}]
  %s4 = inlined_call_operand.hbm [shape: bf16[128,384], index: 4, kind: input, shape index: {}]
  %s5 = inlined_call_operand.hbm [shape: bf16[128,128], index: 5, kind: input, shape index: {}]
  %s6 = inlined_call_operand.vmem [shape: f32[1,128], index: 6, kind: input, shape index: {}]
  %s7 = inlined_call_operand.vmem [shape: f32[1,128], index: 7, kind: input, shape index: {}]
  %s8 = inlined_call_operand.vmem [shape: f32[1,128], index: 8, kind: input, shape index: {}]
  %s9 = inlined_call_operand.hbm [shape: bf16[128,512], index: 9, kind: input, shape index: {}]
  %s10 = inlined_call_operand.vmem [shape: f32[1,512], index: 10, kind: input, shape index: {}]
  %s11 = inlined_call_operand.hbm [shape: bf16[512,128], index: 11, kind: input, shape index: {}]
  %s12 = inlined_call_operand.vmem [shape: f32[1,128], index: 12, kind: input, shape index: {}]
  %s13 = inlined_call_operand.hbm [shape: f32[4,16,128], index: 13, kind: output, shape index: {}]
  %s14 = sld [smem:[#allocation0]]
  $region109: #{tpu_custom_call.1} parent=0
    _
  %s16 = ssub.s32 1, %s14
  %s17 = scalar_select 0, %s16, %s14
  $region1: #{tpu_custom_call.1} parent=0
    #allocation4 [shape = 'u8[32768]{0}', space=vmem, size = 0x8000, scoped, tag = 'input window, operand 0']
    #allocation5 [shape = 's32[2]{0}', space=sflag, size = 0x8, scoped, tag = 'scoped memory for tpu_custom_call.1']
    #allocation6 [shape = 's32[2]{0}', space=sflag, size = 0x8, scoped, tag = 'scoped memory for tpu_custom_call.1']
    #allocation7 [shape = 'u8[32768]{0}', space=vmem, size = 0x8000, scoped, tag = 'input window, operand 1']
    #allocation8 [shape = 's32[2]{0}', space=sflag, size = 0x8, scoped, tag = 'scoped memory for tpu_custom_call.1']
    #allocation9 [shape = 'u8[98304]{0}', space=vmem, size = 0x18000, scoped, tag = 'input window, operand 4, single buffered']
    #allocation10 [shape = 'u8[32768]{0}', space=vmem, size = 0x8000, scoped, tag = 'input window, operand 5, single buffered']
    #allocation11 [shape = 's32[1]{0}', space=sflag, size = 0x4, scoped, tag = 'scoped memory for tpu_custom_call.1']
    #allocation12 [shape = 'u8[131072]{0}', space=vmem, size = 0x20000, scoped, tag = 'input window, operand 9, single buffered']
    #allocation13 [shape = 'u8[131072]{0}', space=vmem, size = 0x20000, scoped, tag = 'input window, operand 11, single buffered']
    #allocation14 [shape = 's32[1]{0}', space=sflag, size = 0x4, scoped, tag = 'scoped memory for tpu_custom_call.1']
    #allocation15 [shape = 'u8[32768]{0}', space=vmem, size = 0x8000, scoped, tag = 'output window, operand 0']
    %18 = vsyncpa [#allocation5], 0
    %s19 = scalar_lea.sflag [#allocation5], 1
    %20 = vsyncpa %s19, 0
    %21 = vsyncpa [#allocation8], 0
    %s22 = scalar_lea.sflag [#allocation8], 1
    %23 = vsyncpa %s22, 0
    %24 = vsyncpa [#allocation11], 0
    %25 = vsyncpa [#allocation14], 0
    %26 = vsyncpa [#allocation6], 0
    %s27 = scalar_lea.sflag [#allocation6], 1
    %28 = vsyncpa %s27, 0
    loop: start=0, step=1, limit=4
    $region2: #{tpu_custom_call.1} parent=1 // loop_pre_header
      _
    $region3: #{tpu_custom_call.1} parent=1 // loop_header
      %s30 = sphi 0, %s34
      %p31 = scmp.ge.s32.totalorder %s30, 4
      %s40 = sphi 0, %s42
      %s43 = sphi 0, %s40
      %s44 = sphi 0, %s43
      %s60 = sphi 0, %s44
      %s66 = sphi 0, %s68
      %s69 = sphi 0, %s66
      %s70 = sphi 0, %s69
      %s86 = sphi 0, %s70
      %s90 = sphi 0, %s90
      %s92 = sphi 0, %s90
      %s93 = sphi 0, %s92
      %s107 = sphi 0, %s93
      %s111 = sphi 0, %s111
      %s113 = sphi 0, %s111
      %s114 = sphi 0, %s113
      %s128 = sphi 0, %s114
      %s132 = sphi 0, %s132
      %s134 = sphi 0, %s132
      %s135 = sphi 0, %s134
      %s149 = sphi 0, %s135
      %s153 = sphi 0, %s153
      %s155 = sphi 0, %s153
      %s156 = sphi 0, %s155
      %s170 = sphi 0, %s156
      %s174 = sphi 0, %s174
      %s176 = sphi 0, %s174
      %s177 = sphi 0, %s176
      %s191 = sphi 0, %s177
      %s195 = sphi 0, %s195
      %s197 = sphi 0, %s195
      %s198 = sphi 0, %s197
      %s212 = sphi 0, %s198
      %s216 = sphi 0, %s216
      %s218 = sphi 0, %s216
      %s219 = sphi 0, %s218
      %s233 = sphi 0, %s219
      %s237 = sphi 0, %s237
      %s239 = sphi 0, %s237
      %s240 = sphi 0, %s239
      %s254 = sphi 0, %s240
      %s258 = sphi 0, %s258
      %s260 = sphi 0, %s258
      %s261 = sphi 0, %s260
      %s275 = sphi 0, %s261
      %s279 = sphi 0, %s279
      %s281 = sphi 0, %s279
      %s282 = sphi 0, %s281
      %s296 = sphi 0, %s282
      %s300 = sphi 0, %s300
      %s302 = sphi 0, %s300
      %s303 = sphi 0, %s302
      %s317 = sphi 0, %s303
      %s323 = sphi 0, %s325
      %s326 = sphi 0, %s323
      %s327 = sphi 0, %s326
      %s343 = sphi 0, %s327
    $region4: #{tpu_custom_call.1} parent=1 // loop_header_branch
      %33 = sbr.rel (%p31) target = $region8
    $region5: #{tpu_custom_call.1} parent=1 // loop_body
      %s35 = ssub.s32 %s30, 1
      %s36 = ssub.s32 %s30, 2
      %s37 = sadd.s32 %s30, 1
      %s38 = ssub.s32 %s30, %s37
      %p39 = scmp.eq.s32.totalorder %s38, 0
      %s41 = sadd.s32 %s40, 1
      %s42 = scalar_select %p39, %s40, %s41
      %p45 = pneg %p39
      %p46 = scmp.eq.s32.totalorder %s30, 1
      %p47 = por %p45, %p46
      %p48 = scmp.ne.s32.totalorder %s40, %s43
      %p49 = scmp.eq.s32.totalorder %s30, 0
      %p50 = por %p48, %p49
      %p51 = scmp.ne.s32.totalorder %s40, %s43
      %p52 = scmp.eq.s32.totalorder %s35, 1
      %p53 = por %p51, %p52
      %p54 = scmp.ne.s32.totalorder %s43, %s44
      %p55 = scmp.eq.s32.totalorder %s35, 0
      %p56 = por %p54, %p55
      %p57 = scmp.ne.s32.totalorder %s43, %s44
      %p58 = scmp.eq.s32.totalorder %s36, 1
      %p59 = por %p57, %p58
      %p61 = scmp.ne.s32.totalorder %s44, %s60
      %p62 = scmp.eq.s32.totalorder %s36, 0
      %p63 = por %p61, %p62
      %s64 = ssub.s32 %s30, %s37
      %p65 = scmp.eq.s32.totalorder %s64, 0
      %s67 = sadd.s32 %s66, 1
      %s68 = scalar_select %p65, %s66, %s67
      %p71 = pneg %p65
      %p72 = scmp.eq.s32.totalorder %s30, 1
      %p73 = por %p71, %p72
      %p74 = scmp.ne.s32.totalorder %s66, %s69
      %p75 = scmp.eq.s32.totalorder %s30, 0
      %p76 = por %p74, %p75
      %p77 = scmp.ne.s32.totalorder %s66, %s69
      %p78 = scmp.eq.s32.totalorder %s35, 1
      %p79 = por %p77, %p78
      %p80 = scmp.ne.s32.totalorder %s69, %s70
      %p81 = scmp.eq.s32.totalorder %s35, 0
      %p82 = por %p80, %p81
      %p83 = scmp.ne.s32.totalorder %s69, %s70
      %p84 = scmp.eq.s32.totalorder %s36, 1
      %p85 = por %p83, %p84
      %p87 = scmp.ne.s32.totalorder %s70, %s86
      %p88 = scmp.eq.s32.totalorder %s36, 0
      %p89 = por %p87, %p88
      %s91 = sadd.s32 %s90, 1
      %p94 = scmp.eq.s32.totalorder %s30, 1
      %p95 = scmp.ne.s32.totalorder %s90, %s92
      %p96 = scmp.eq.s32.totalorder %s30, 0
      %p97 = por %p95, %p96
      %p98 = scmp.ne.s32.totalorder %s90, %s92
      %p99 = scmp.eq.s32.totalorder %s35, 1
      %p100 = por %p98, %p99
      %p101 = scmp.ne.s32.totalorder %s92, %s93
      %p102 = scmp.eq.s32.totalorder %s35, 0
      %p103 = por %p101, %p102
      %p104 = scmp.ne.s32.totalorder %s92, %s93
      %p105 = scmp.eq.s32.totalorder %s36, 1
      %p106 = por %p104, %p105
      %p108 = scmp.ne.s32.totalorder %s93, %s107
      %p109 = scmp.eq.s32.totalorder %s36, 0
      %p110 = por %p108, %p109
      %s112 = sadd.s32 %s111, 1
      %p115 = scmp.eq.s32.totalorder %s30, 1
      %p116 = scmp.ne.s32.totalorder %s111, %s113
      %p117 = scmp.eq.s32.totalorder %s30, 0
      %p118 = por %p116, %p117
      %p119 = scmp.ne.s32.totalorder %s111, %s113
      %p120 = scmp.eq.s32.totalorder %s35, 1
      %p121 = por %p119, %p120
      %p122 = scmp.ne.s32.totalorder %s113, %s114
      %p123 = scmp.eq.s32.totalorder %s35, 0
      %p124 = por %p122, %p123
      %p125 = scmp.ne.s32.totalorder %s113, %s114
      %p126 = scmp.eq.s32.totalorder %s36, 1
      %p127 = por %p125, %p126
      %p129 = scmp.ne.s32.totalorder %s114, %s128
      %p130 = scmp.eq.s32.totalorder %s36, 0
      %p131 = por %p129, %p130
      %s133 = sadd.s32 %s132, 1
      %p136 = scmp.eq.s32.totalorder %s30, 1
      %p137 = scmp.ne.s32.totalorder %s132, %s134
      %p138 = scmp.eq.s32.totalorder %s30, 0
      %p139 = por %p137, %p138
      %p140 = scmp.ne.s32.totalorder %s132, %s134
      %p141 = scmp.eq.s32.totalorder %s35, 1
      %p142 = por %p140, %p141
      %p143 = scmp.ne.s32.totalorder %s134, %s135
      %p144 = scmp.eq.s32.totalorder %s35, 0
      %p145 = por %p143, %p144
      %p146 = scmp.ne.s32.totalorder %s134, %s135
      %p147 = scmp.eq.s32.totalorder %s36, 1
      %p148 = por %p146, %p147
      %p150 = scmp.ne.s32.totalorder %s135, %s149
      %p151 = scmp.eq.s32.totalorder %s36, 0
      %p152 = por %p150, %p151
      %s154 = sadd.s32 %s153, 1
      %p157 = scmp.eq.s32.totalorder %s30, 1
      %p158 = scmp.ne.s32.totalorder %s153, %s155
      %p159 = scmp.eq.s32.totalorder %s30, 0
      %p160 = por %p158, %p159
      %p161 = scmp.ne.s32.totalorder %s153, %s155
      %p162 = scmp.eq.s32.totalorder %s35, 1
      %p163 = por %p161, %p162
      %p164 = scmp.ne.s32.totalorder %s155, %s156
      %p165 = scmp.eq.s32.totalorder %s35, 0
      %p166 = por %p164, %p165
      %p167 = scmp.ne.s32.totalorder %s155, %s156
      %p168 = scmp.eq.s32.totalorder %s36, 1
      %p169 = por %p167, %p168
      %p171 = scmp.ne.s32.totalorder %s156, %s170
      %p172 = scmp.eq.s32.totalorder %s36, 0
      %p173 = por %p171, %p172
      %s175 = sadd.s32 %s174, 1
      %p178 = scmp.eq.s32.totalorder %s30, 1
      %p179 = scmp.ne.s32.totalorder %s174, %s176
      %p180 = scmp.eq.s32.totalorder %s30, 0
      %p181 = por %p179, %p180
      %p182 = scmp.ne.s32.totalorder %s174, %s176
      %p183 = scmp.eq.s32.totalorder %s35, 1
      %p184 = por %p182, %p183
      %p185 = scmp.ne.s32.totalorder %s176, %s177
      %p186 = scmp.eq.s32.totalorder %s35, 0
      %p187 = por %p185, %p186
      %p188 = scmp.ne.s32.totalorder %s176, %s177
      %p189 = scmp.eq.s32.totalorder %s36, 1
      %p190 = por %p188, %p189
      %p192 = scmp.ne.s32.totalorder %s177, %s191
      %p193 = scmp.eq.s32.totalorder %s36, 0
      %p194 = por %p192, %p193
      %s196 = sadd.s32 %s195, 1
      %p199 = scmp.eq.s32.totalorder %s30, 1
      %p200 = scmp.ne.s32.totalorder %s195, %s197
      %p201 = scmp.eq.s32.totalorder %s30, 0
      %p202 = por %p200, %p201
      %p203 = scmp.ne.s32.totalorder %s195, %s197
      %p204 = scmp.eq.s32.totalorder %s35, 1
      %p205 = por %p203, %p204
      %p206 = scmp.ne.s32.totalorder %s197, %s198
      %p207 = scmp.eq.s32.totalorder %s35, 0
      %p208 = por %p206, %p207
      %p209 = scmp.ne.s32.totalorder %s197, %s198
      %p210 = scmp.eq.s32.totalorder %s36, 1
      %p211 = por %p209, %p210
      %p213 = scmp.ne.s32.totalorder %s198, %s212
      %p214 = scmp.eq.s32.totalorder %s36, 0
      %p215 = por %p213, %p214
      %s217 = sadd.s32 %s216, 1
      %p220 = scmp.eq.s32.totalorder %s30, 1
      %p221 = scmp.ne.s32.totalorder %s216, %s218
      %p222 = scmp.eq.s32.totalorder %s30, 0
      %p223 = por %p221, %p222
      %p224 = scmp.ne.s32.totalorder %s216, %s218
      %p225 = scmp.eq.s32.totalorder %s35, 1
      %p226 = por %p224, %p225
      %p227 = scmp.ne.s32.totalorder %s218, %s219
      %p228 = scmp.eq.s32.totalorder %s35, 0
      %p229 = por %p227, %p228
      %p230 = scmp.ne.s32.totalorder %s218, %s219
      %p231 = scmp.eq.s32.totalorder %s36, 1
      %p232 = por %p230, %p231
      %p234 = scmp.ne.s32.totalorder %s219, %s233
      %p235 = scmp.eq.s32.totalorder %s36, 0
      %p236 = por %p234, %p235
      %s238 = sadd.s32 %s237, 1
      %p241 = scmp.eq.s32.totalorder %s30, 1
      %p242 = scmp.ne.s32.totalorder %s237, %s239
      %p243 = scmp.eq.s32.totalorder %s30, 0
      %p244 = por %p242, %p243
      %p245 = scmp.ne.s32.totalorder %s237, %s239
      %p246 = scmp.eq.s32.totalorder %s35, 1
      %p247 = por %p245, %p246
      %p248 = scmp.ne.s32.totalorder %s239, %s240
      %p249 = scmp.eq.s32.totalorder %s35, 0
      %p250 = por %p248, %p249
      %p251 = scmp.ne.s32.totalorder %s239, %s240
      %p252 = scmp.eq.s32.totalorder %s36, 1
      %p253 = por %p251, %p252
      %p255 = scmp.ne.s32.totalorder %s240, %s254
      %p256 = scmp.eq.s32.totalorder %s36, 0
      %p257 = por %p255, %p256
      %s259 = sadd.s32 %s258, 1
      %p262 = scmp.eq.s32.totalorder %s30, 1
      %p263 = scmp.ne.s32.totalorder %s258, %s260
      %p264 = scmp.eq.s32.totalorder %s30, 0
      %p265 = por %p263, %p264
      %p266 = scmp.ne.s32.totalorder %s258, %s260
      %p267 = scmp.eq.s32.totalorder %s35, 1
      %p268 = por %p266, %p267
      %p269 = scmp.ne.s32.totalorder %s260, %s261
      %p270 = scmp.eq.s32.totalorder %s35, 0
      %p271 = por %p269, %p270
      %p272 = scmp.ne.s32.totalorder %s260, %s261
      %p273 = scmp.eq.s32.totalorder %s36, 1
      %p274 = por %p272, %p273
      %p276 = scmp.ne.s32.totalorder %s261, %s275
      %p277 = scmp.eq.s32.totalorder %s36, 0
      %p278 = por %p276, %p277
      %s280 = sadd.s32 %s279, 1
      %p283 = scmp.eq.s32.totalorder %s30, 1
      %p284 = scmp.ne.s32.totalorder %s279, %s281
      %p285 = scmp.eq.s32.totalorder %s30, 0
      %p286 = por %p284, %p285
      %p287 = scmp.ne.s32.totalorder %s279, %s281
      %p288 = scmp.eq.s32.totalorder %s35, 1
      %p289 = por %p287, %p288
      %p290 = scmp.ne.s32.totalorder %s281, %s282
      %p291 = scmp.eq.s32.totalorder %s35, 0
      %p292 = por %p290, %p291
      %p293 = scmp.ne.s32.totalorder %s281, %s282
      %p294 = scmp.eq.s32.totalorder %s36, 1
      %p295 = por %p293, %p294
      %p297 = scmp.ne.s32.totalorder %s282, %s296
      %p298 = scmp.eq.s32.totalorder %s36, 0
      %p299 = por %p297, %p298
      %s301 = sadd.s32 %s300, 1
      %p304 = scmp.eq.s32.totalorder %s30, 1
      %p305 = scmp.ne.s32.totalorder %s300, %s302
      %p306 = scmp.eq.s32.totalorder %s30, 0
      %p307 = por %p305, %p306
      %p308 = scmp.ne.s32.totalorder %s300, %s302
      %p309 = scmp.eq.s32.totalorder %s35, 1
      %p310 = por %p308, %p309
      %p311 = scmp.ne.s32.totalorder %s302, %s303
      %p312 = scmp.eq.s32.totalorder %s35, 0
      %p313 = por %p311, %p312
      %p314 = scmp.ne.s32.totalorder %s302, %s303
      %p315 = scmp.eq.s32.totalorder %s36, 1
      %p316 = por %p314, %p315
      %p318 = scmp.ne.s32.totalorder %s303, %s317
      %p319 = scmp.eq.s32.totalorder %s36, 0
      %p320 = por %p318, %p319
      %s321 = ssub.s32 %s30, %s37
      %p322 = scmp.eq.s32.totalorder %s321, 0
      %s324 = sadd.s32 %s323, 1
      %s325 = scalar_select %p322, %s323, %s324
      %p328 = pneg %p322
      %p329 = scmp.eq.s32.totalorder %s30, 1
      %p330 = por %p328, %p329
      %p331 = scmp.ne.s32.totalorder %s323, %s326
      %p332 = scmp.eq.s32.totalorder %s30, 0
      %p333 = por %p331, %p332
      %p334 = scmp.ne.s32.totalorder %s323, %s326
      %p335 = scmp.eq.s32.totalorder %s35, 1
      %p336 = por %p334, %p335
      %p337 = scmp.ne.s32.totalorder %s326, %s327
      %p338 = scmp.eq.s32.totalorder %s35, 0
      %p339 = por %p337, %p338
      %p340 = scmp.ne.s32.totalorder %s326, %s327
      %p341 = scmp.eq.s32.totalorder %s36, 1
      %p342 = por %p340, %p341
      %p344 = scmp.ne.s32.totalorder %s327, %s343
      %p345 = scmp.eq.s32.totalorder %s36, 0
      %p346 = por %p344, %p345
      %p347 = scmp.le.s32.totalorder 1, %s30
      %p348 = scmp.lt.s32.totalorder %s30, 3
      %p349 = pnand %p347, %p348
      %p350 = pneg %p349
      // Predicated region
      $region9: #{tpu_custom_call.1} parent=5 // pred_check
        _
      $region10: #{tpu_custom_call.1} parent=5 // pred_check_branch
        %352 = sbr.rel (%p349) target = $region12
      $region11: #{tpu_custom_call.1} parent=5 // pred_region
        %s353 = ssub.s32 %s30, 1
        // Predicated region
        $region13: #{tpu_custom_call.1} parent=11 // pred_check
          %p354 = pneg %p103
        $region14: #{tpu_custom_call.1} parent=11 // pred_check_branch
          %356 = sbr.rel (%p354) target = $region16
        $region15: #{tpu_custom_call.1} parent=11 // pred_region
          _
        $region16: #{tpu_custom_call.1} parent=11 // pred_fallthru
          _
        // Predicated region
        $region17: #{tpu_custom_call.1} parent=11 // pred_check
          %p357 = pneg %p124
        $region18: #{tpu_custom_call.1} parent=11 // pred_check_branch
          %359 = sbr.rel (%p357) target = $region20
        $region19: #{tpu_custom_call.1} parent=11 // pred_region
          _
        $region20: #{tpu_custom_call.1} parent=11 // pred_fallthru
          _
        // Predicated region
        $region21: #{tpu_custom_call.1} parent=11 // pred_check
          %p360 = pneg %p145
        $region22: #{tpu_custom_call.1} parent=11 // pred_check_branch
          %362 = sbr.rel (%p360) target = $region24
        $region23: #{tpu_custom_call.1} parent=11 // pred_region
          %s364 = ssub.s32 3072, 3072
          %365 = vsyncadd [#allocation8], %s364
          %s366 = sshll.u32 [#allocation9], 4
          %s367 = int_to_ptr.vmem [resolvable:$true] %s366
          %372 = dma.hbm_to_vmem [thread:$0]  %s4, 3072, %s367, [#allocation8], 192, 192, 12
        $region24: #{tpu_custom_call.1} parent=11 // pred_fallthru
          _
        // Predicated region
        $region25: #{tpu_custom_call.1} parent=11 // pred_check
          %p373 = pneg %p166
        $region26: #{tpu_custom_call.1} parent=11 // pred_check_branch
          %375 = sbr.rel (%p373) target = $region28
        $region27: #{tpu_custom_call.1} parent=11 // pred_region
          %s377 = ssub.s32 1024, 1024
          %378 = vsyncadd [#allocation11], %s377
          %s379 = sshll.u32 [#allocation10], 4
          %s380 = int_to_ptr.vmem [resolvable:$true] %s379
          %385 = dma.hbm_to_vmem [thread:$0]  %s5, 1024, %s380, [#allocation11], 64, 64, 4
        $region28: #{tpu_custom_call.1} parent=11 // pred_fallthru
          _
        // Predicated region
        $region29: #{tpu_custom_call.1} parent=11 // pred_check
          %p386 = pneg %p187
        $region30: #{tpu_custom_call.1} parent=11 // pred_check_branch
          %388 = sbr.rel (%p386) target = $region32
        $region31: #{tpu_custom_call.1} parent=11 // pred_region
          _
        $region32: #{tpu_custom_call.1} parent=11 // pred_fallthru
          _
        // Predicated region
        $region33: #{tpu_custom_call.1} parent=11 // pred_check
          %p389 = pneg %p208
        $region34: #{tpu_custom_call.1} parent=11 // pred_check_branch
          %391 = sbr.rel (%p389) target = $region36
        $region35: #{tpu_custom_call.1} parent=11 // pred_region
          _
        $region36: #{tpu_custom_call.1} parent=11 // pred_fallthru
          _
        // Predicated region
        $region37: #{tpu_custom_call.1} parent=11 // pred_check
          %p392 = pneg %p229
        $region38: #{tpu_custom_call.1} parent=11 // pred_check_branch
          %394 = sbr.rel (%p392) target = $region40
        $region39: #{tpu_custom_call.1} parent=11 // pred_region
          _
        $region40: #{tpu_custom_call.1} parent=11 // pred_fallthru
          _
        // Predicated region
        $region41: #{tpu_custom_call.1} parent=11 // pred_check
          %p395 = pneg %p250
        $region42: #{tpu_custom_call.1} parent=11 // pred_check_branch
          %397 = sbr.rel (%p395) target = $region44
        $region43: #{tpu_custom_call.1} parent=11 // pred_region
          %s399 = ssub.s32 4096, 4096
          %400 = vsyncadd [#allocation11], %s399
          %s401 = sshll.u32 [#allocation12], 4
          %s402 = int_to_ptr.vmem [resolvable:$true] %s401
          %407 = dma.hbm_to_vmem [thread:$0]  %s9, 4096, %s402, [#allocation11], 256, 256, 16
        $region44: #{tpu_custom_call.1} parent=11 // pred_fallthru
          _
        // Predicated region
        $region45: #{tpu_custom_call.1} parent=11 // pred_check
          %p408 = pneg %p271
        $region46: #{tpu_custom_call.1} parent=11 // pred_check_branch
          %410 = sbr.rel (%p408) target = $region48
        $region47: #{tpu_custom_call.1} parent=11 // pred_region
          _
        $region48: #{tpu_custom_call.1} parent=11 // pred_fallthru
          _
        // Predicated region
        $region49: #{tpu_custom_call.1} parent=11 // pred_check
          %p411 = pneg %p292
        $region50: #{tpu_custom_call.1} parent=11 // pred_check_branch
          %413 = sbr.rel (%p411) target = $region52
        $region51: #{tpu_custom_call.1} parent=11 // pred_region
          %s415 = ssub.s32 4096, 4096
          %416 = vsyncadd [#allocation14], %s415
          %s417 = sshll.u32 [#allocation13], 4
          %s418 = int_to_ptr.vmem [resolvable:$true] %s417
          %423 = dma.hbm_to_vmem [thread:$0]  %s11, 4096, %s418, [#allocation14], 64, 64, 4
        $region52: #{tpu_custom_call.1} parent=11 // pred_fallthru
          _
        // Predicated region
        $region53: #{tpu_custom_call.1} parent=11 // pred_check
          %p424 = pneg %p313
        $region54: #{tpu_custom_call.1} parent=11 // pred_check_branch
          %426 = sbr.rel (%p424) target = $region56
        $region55: #{tpu_custom_call.1} parent=11 // pred_region
          _
        $region56: #{tpu_custom_call.1} parent=11 // pred_fallthru
          _
      $region12: #{tpu_custom_call.1} parent=5 // pred_fallthru
        _
      %p427 = scmp.lt.s32.totalorder %s30, 2
      // Predicated region
      $region57: #{tpu_custom_call.1} parent=5 // pred_check
        %p428 = pneg %p427
      $region58: #{tpu_custom_call.1} parent=5 // pred_check_branch
        %430 = sbr.rel (%p428) target = $region60
      $region59: #{tpu_custom_call.1} parent=5 // pred_region
        // Predicated region
        $region61: #{tpu_custom_call.1} parent=59 // pred_check
          %p431 = pneg %p50
        $region62: #{tpu_custom_call.1} parent=59 // pred_check_branch
          %433 = sbr.rel (%p431) target = $region64
        $region63: #{tpu_custom_call.1} parent=59 // pred_region
          %s434 = sand.u32 %s40, 1
          %s435 = scalar_lea.sflag [#allocation5], %s434
          %s436 = sand.u32 %s40, 1
          %s437 = smul.addr %s436, 32
          %s438 = scalar_lea.vmem [#allocation4], %s437
          %s439 = smul.u32 2, %s30
          %s441 = ssub.s32 512, 512
          %442 = vsyncadd %s435, %s441
          %s443 = smul.addr %s439, 2
          %s444 = smul.addr %s443, 128
          %s445 = scalar_lea.hbm %s0, %s444
          %s446 = sshll.u32 %s438, 4
          %s447 = int_to_ptr.vmem [resolvable:$true] %s446
          %452 = dma.hbm_to_vmem [thread:$0]  %s445, 512, %s447, %s435, 128, 128, 8
        $region64: #{tpu_custom_call.1} parent=59 // pred_fallthru
          _
        // Predicated region
        $region65: #{tpu_custom_call.1} parent=59 // pred_check
          %p453 = pneg %p76
        $region66: #{tpu_custom_call.1} parent=59 // pred_check_branch
          %455 = sbr.rel (%p453) target = $region68
        $region67: #{tpu_custom_call.1} parent=59 // pred_region
          %s456 = sand.u32 %s30, 1
          %s457 = scalar_lea.sflag [#allocation8], %s456
          %s458 = sand.u32 %s66, 1
          %s459 = smul.addr %s458, 32
          %s460 = scalar_lea.vmem [#allocation7], %s459
          %s461 = smul.u32 2, %s30
          %s463 = ssub.s32 512, 512
          %464 = vsyncadd %s457, %s463
          %s465 = smul.addr %s461, 2
          %s466 = smul.addr %s465, 128
          %s467 = scalar_lea.hbm %s1, %s466
          %s468 = sshll.u32 %s460, 4
          %s469 = int_to_ptr.vmem [resolvable:$true] %s468
          %474 = dma.hbm_to_vmem [thread:$0]  %s467, 512, %s469, %s457, 128, 128, 8
        $region68: #{tpu_custom_call.1} parent=59 // pred_fallthru
          _
      $region60: #{tpu_custom_call.1} parent=5 // pred_fallthru
        _
      %p475 = scmp.le.s32.totalorder 1, %s30
      %p476 = scmp.lt.s32.totalorder %s30, 3
      %p477 = pnand %p475, %p476
      %p478 = pneg %p477
      // Predicated region
      $region69: #{tpu_custom_call.1} parent=5 // pred_check
        _
      $region70: #{tpu_custom_call.1} parent=5 // pred_check_branch
        %480 = sbr.rel (%p477) target = $region72
      $region71: #{tpu_custom_call.1} parent=5 // pred_region
        %s481 = ssub.s32 %s30, 1
        %s482 = sand.u32 %s43, 1
        %s483 = scalar_lea.sflag [#allocation5], %s482
        %s484 = sand.u32 %s43, 1
        %s485 = smul.addr %s484, 32
        %s486 = scalar_lea.vmem [#allocation4], %s485
        // Predicated region
        $region73: #{tpu_custom_call.1} parent=71 // pred_check
          %p487 = pneg %p56
        $region74: #{tpu_custom_call.1} parent=71 // pred_check_branch
          %489 = sbr.rel (%p487) target = $region76
        $region75: #{tpu_custom_call.1} parent=71 // pred_region
          %490 = dma.done %s483, 512
        $region76: #{tpu_custom_call.1} parent=71 // pred_fallthru
          _
        %s491 = sand.u32 %s35, 1
        %s492 = scalar_lea.sflag [#allocation8], %s491
        %s493 = sand.u32 %s69, 1
        %s494 = smul.addr %s493, 32
        %s495 = scalar_lea.vmem [#allocation7], %s494
        // Predicated region
        $region77: #{tpu_custom_call.1} parent=71 // pred_check
          %p496 = pneg %p82
        $region78: #{tpu_custom_call.1} parent=71 // pred_check_branch
          %498 = sbr.rel (%p496) target = $region80
        $region79: #{tpu_custom_call.1} parent=71 // pred_region
          %499 = dma.done %s492, 512
        $region80: #{tpu_custom_call.1} parent=71 // pred_fallthru
          _
        // Predicated region
        $region81: #{tpu_custom_call.1} parent=71 // pred_check
          %p500 = pneg %p145
        $region82: #{tpu_custom_call.1} parent=71 // pred_check_branch
          %502 = sbr.rel (%p500) target = $region84
        $region83: #{tpu_custom_call.1} parent=71 // pred_region
          %503 = dma.done [#allocation8], 3072
        $region84: #{tpu_custom_call.1} parent=71 // pred_fallthru
          _
        // Predicated region
        $region85: #{tpu_custom_call.1} parent=71 // pred_check
          %p504 = pneg %p166
        $region86: #{tpu_custom_call.1} parent=71 // pred_check_branch
          %506 = sbr.rel (%p504) target = $region88
        $region87: #{tpu_custom_call.1} parent=71 // pred_region
          %507 = dma.done [#allocation11], 1024
        $region88: #{tpu_custom_call.1} parent=71 // pred_fallthru
          _
        // Predicated region
        $region89: #{tpu_custom_call.1} parent=71 // pred_check
          %p508 = pneg %p250
        $region90: #{tpu_custom_call.1} parent=71 // pred_check_branch
          %510 = sbr.rel (%p508) target = $region92
        $region91: #{tpu_custom_call.1} parent=71 // pred_region
          %511 = dma.done [#allocation11], 4096
        $region92: #{tpu_custom_call.1} parent=71 // pred_fallthru
          _
        // Predicated region
        $region93: #{tpu_custom_call.1} parent=71 // pred_check
          %p512 = pneg %p292
        $region94: #{tpu_custom_call.1} parent=71 // pred_check_branch
          %514 = sbr.rel (%p512) target = $region96
        $region95: #{tpu_custom_call.1} parent=71 // pred_region
          %515 = dma.done [#allocation14], 4096
        $region96: #{tpu_custom_call.1} parent=71 // pred_fallthru
          _
        %s516 = sand.u32 %s43, 1
        %s517 = scalar_lea.sflag [#allocation5], %s516
        %s518 = sand.u32 %s43, 1
        %s519 = smul.addr %s518, 32
        %s520 = scalar_lea.vmem [#allocation4], %s519
        %p521 = pneg %p56
        %p522 = pneg %p53
        %s523 = sand.u32 %s35, 1
        %s524 = scalar_lea.sflag [#allocation8], %s523
        %s525 = sand.u32 %s69, 1
        %s526 = smul.addr %s525, 32
        %s527 = scalar_lea.vmem [#allocation7], %s526
        %p528 = pneg %p82
        %p529 = pneg %p79
        %p530 = pneg %p103
        %p531 = pneg %p100
        %p532 = pneg %p124
        %p533 = pneg %p121
        %p534 = pneg %p145
        %p535 = pneg %p142
        %p536 = pneg %p166
        %p537 = pneg %p163
        %p538 = pneg %p187
        %p539 = pneg %p184
        %p540 = pneg %p208
        %p541 = pneg %p205
        %p542 = pneg %p229
        %p543 = pneg %p226
        %p544 = pneg %p250
        %p545 = pneg %p247
        %p546 = pneg %p271
        %p547 = pneg %p268
        %p548 = pneg %p292
        %p549 = pneg %p289
        %p550 = pneg %p313
        %p551 = pneg %p310
        %p552 = pneg %p339
        %p553 = pneg %p336
        %s554 = sand.u32 %s326, 1
        %s555 = scalar_lea.sflag [#allocation6], %s554
        %s556 = sand.u32 %s326, 1
        %s557 = smul.addr %s556, 32
        %s558 = scalar_lea.vmem [#allocation15], %s557
        %s559 = smul.u32 2, %s35
        %s560 = smul.u32 2, %s35
        %s561 = smul.u32 2, %s35
        %v563 = vld [vmem:[%s486] sm:$0xff]
        %v564 = vld [vmem:[%s486 + $0x8] sm:$0xff]
        %v565 = vld [vmem:[%s486 + $0x10] sm:$0xff]
        %v566 = vld [vmem:[%s486 + $0x18] sm:$0xff]
        %v567 = vld [vmem:[%s495] sm:$0xff]
        %v568 = vld [vmem:[%s495 + $0x8] sm:$0xff]
        %v569 = vld [vmem:[%s495 + $0x10] sm:$0xff]
        %v570 = vld [vmem:[%s495 + $0x18] sm:$0xff]
        %v571 = vadd.f32 %v563, %v567
        %v572 = vadd.f32 %v564, %v568
        %v573 = vadd.f32 %v565, %v569
        %v574 = vadd.f32 %v566, %v570
        %v575 = vld [vmem:[%s2] sm:$0x1]
        %v576 = vld [vmem:[%s3] sm:$0x1]
        %577 = vadd.xlane.f32.xlu0 %v571
        %v578 = vpop.xlane.xlu0 %577
        %579 = vadd.xlane.f32.xlu0 %v572
        %v580 = vpop.xlane.xlu0 %579
        %581 = vadd.xlane.f32.xlu0 %v573
        %v582 = vpop.xlane.xlu0 %581
        %583 = vadd.xlane.f32.xlu0 %v574
        %v584 = vpop.xlane.xlu0 %583
        %v585 = vrcp.pop 128.0
        %v586 = vmul.f32 %v578, %v585
        %v587 = vmul.f32 %v580, %v585
        %v588 = vmul.f32 %v582, %v585
        %v589 = vmul.f32 %v584, %v585
        %v590 = vsub.f32 %v571, %v586
        %v591 = vsub.f32 %v572, %v587
        %v592 = vsub.f32 %v573, %v588
        %v593 = vsub.f32 %v574, %v589
        %v594 = vmul.f32 %v590, %v590
        %v595 = vmul.f32 %v591, %v591
        %v596 = vmul.f32 %v592, %v592
        %v597 = vmul.f32 %v593, %v593
        %598 = vadd.xlane.f32.xlu0 %v594
        %v599 = vpop.xlane.xlu0 %598
        %600 = vadd.xlane.f32.xlu0 %v595
        %v601 = vpop.xlane.xlu0 %600
        %602 = vadd.xlane.f32.xlu0 %v596
        %v603 = vpop.xlane.xlu0 %602
        %604 = vadd.xlane.f32.xlu0 %v597
        %v605 = vpop.xlane.xlu0 %604
        %v606 = vmul.f32 %v599, %v585
        %v607 = vmul.f32 %v601, %v585
        %v608 = vmul.f32 %v603, %v585
        %v609 = vmul.f32 %v605, %v585
        %v610 = vadd.f32 %v606, 1e-05
        %v611 = vadd.f32 %v607, 1e-05
        %v612 = vadd.f32 %v608, 1e-05
        %v613 = vadd.f32 %v609, 1e-05
        %v614 = vrsqrt.pop %v610
        %v615 = vrsqrt.pop %v611
        %v616 = vrsqrt.pop %v612
        %v617 = vrsqrt.pop %v613
        %v618 = vmul.f32 %v590, %v614
        %v619 = vmul.f32 %v591, %v615
        %v620 = vmul.f32 %v592, %v616
        %v621 = vmul.f32 %v593, %v617
        %v623 = vlaneseq
        %v624 = vshrl.u32 %v623, 7
        %v625 = vsub.s32 0, %v624
        %v626 = vrot.slane %v575, %v625
        %v628 = vmul.f32 %v618, %v626
        %v629 = vmul.f32 %v619, %v626
        %v630 = vmul.f32 %v620, %v626
        %v631 = vmul.f32 %v621, %v626
        %v633 = vlaneseq
        %v634 = vshrl.u32 %v633, 7
        %v635 = vsub.s32 0, %v634
        %v636 = vrot.slane %v576, %v635
        %v638 = vadd.f32 %v628, %v636
        %v639 = vadd.f32 %v629, %v636
        %v640 = vadd.f32 %v630, %v636
        %v641 = vadd.f32 %v631, %v636
        %v642 = vpack.c.bf16 %v639, %v638
        %v643 = vpack.c.bf16 %v641, %v640
        %v644 = vld [vmem:[#allocation9] sm:$0xf]
        %v645 = vld [vmem:[#allocation9 + $0xc] sm:$0xf]
        %v646 = vld [vmem:[#allocation9 + $0x18] sm:$0xf]
        %v647 = vld [vmem:[#allocation9 + $0x24] sm:$0xf]
        %v648 = vld [vmem:[#allocation9 + $0x30] sm:$0xf]
        %v649 = vld [vmem:[#allocation9 + $0x3c] sm:$0xf]
        %v650 = vld [vmem:[#allocation9 + $0x48] sm:$0xf]
        %v651 = vld [vmem:[#allocation9 + $0x54] sm:$0xf]
        %v652 = vld [vmem:[#allocation9 + $0x60] sm:$0xf]
        %v653 = vld [vmem:[#allocation9 + $0x6c] sm:$0xf]
        %v654 = vld [vmem:[#allocation9 + $0x78] sm:$0xf]
        %v655 = vld [vmem:[#allocation9 + $0x84] sm:$0xf]
        %v656 = vld [vmem:[#allocation9 + $0x90] sm:$0xf]
        %v657 = vld [vmem:[#allocation9 + $0x9c] sm:$0xf]
        %v658 = vld [vmem:[#allocation9 + $0xa8] sm:$0xf]
        %v659 = vld [vmem:[#allocation9 + $0xb4] sm:$0xf]
        %v676 = vunpack.c.l.b16 %v644
        %v677 = vunpack.c.l.b16 %v645
        %v678 = vunpack.c.l.b16 %v646
        %v679 = vunpack.c.l.b16 %v647
        %v680 = vunpack.c.l.b16 %v648
        %v681 = vunpack.c.l.b16 %v649
        %v682 = vunpack.c.l.b16 %v650
        %v683 = vunpack.c.l.b16 %v651
        %v684 = vunpack.c.l.b16 %v652
        %v685 = vunpack.c.l.b16 %v653
        %v686 = vunpack.c.l.b16 %v654
        %v687 = vunpack.c.l.b16 %v655
        %v688 = vunpack.c.l.b16 %v656
        %v689 = vunpack.c.l.b16 %v657
        %v690 = vunpack.c.l.b16 %v658
        %v691 = vunpack.c.l.b16 %v659
        %v692 = vpack.c.b16 %v677, %v676
        %v693 = vpack.c.b16 %v679, %v678
        %v694 = vpack.c.b16 %v681, %v680
        %v695 = vpack.c.b16 %v683, %v682
        %v696 = vpack.c.b16 %v685, %v684
        %v697 = vpack.c.b16 %v687, %v686
        %v698 = vpack.c.b16 %v689, %v688
        %v699 = vpack.c.b16 %v691, %v690
        %708 = vmatprep.subr.bf16.mxu0 0
        %709 = vmatpush1.bf16.msra.mxu0 %v692
        %710 = vmatprep.subr.bf16.mxu0 0
        %711 = vmatpush1.bf16.msra.mxu0 %v693
        %712 = vmatprep.subr.bf16.mxu0 0
        %713 = vmatpush1.bf16.msra.mxu0 %v694
        %714 = vmatprep.subr.bf16.mxu0 0
        %715 = vmatpush1.bf16.msra.mxu0 %v695
        %716 = vmatprep.subr.bf16.mxu0 0
        %717 = vmatpush1.bf16.msra.mxu0 %v696
        %718 = vmatprep.subr.bf16.mxu0 0
        %719 = vmatpush1.bf16.msra.mxu0 %v697
        %720 = vmatprep.subr.bf16.mxu0 0
        %721 = vmatpush1.bf16.msra.mxu0 %v698
        %722 = vmatprep.subr.bf16.mxu0 0
        %723 = vmatpush1.bf16.msra.mxu0 %v699
        %724 = vmatprep.subr.bf16.mxu0 0
        %725 = vmatpush1.bf16.msra.mxu0 0
        %726 = vmatprep.subr.bf16.mxu0 0
        %727 = vmatpush1.bf16.msra.mxu0 0
        %728 = vmatprep.subr.bf16.mxu0 0
        %729 = vmatpush1.bf16.msra.mxu0 0
        %730 = vmatprep.subr.bf16.mxu0 0
        %731 = vmatpush1.bf16.msra.mxu0 0
        %732 = vmatprep.subr.bf16.mxu0 0
        %733 = vmatpush1.bf16.msra.mxu0 0
        %734 = vmatprep.subr.bf16.mxu0 0
        %735 = vmatpush1.bf16.msra.mxu0 0
        %736 = vmatprep.subr.bf16.mxu0 0
        %737 = vmatpush1.bf16.msra.mxu0 0
        %738 = vmatprep.subr.bf16.mxu0 0
        %739 = vmatpush1.bf16.msra.mxu0 0
        %740 = vmatprep.mubr.bf16.mxu0 0
        %741 = vmatmul.mubr.bf16.gmra.mrb[0].mxu0 %v642
        %v742 = vpop.f32.mrb[0].mxu0
        %v743 = vadd.f32 0.0, %v742
        %v744 = vpop.f32.mrb[0].mxu0
        %v745 = vpop.f32.mrb[0].mxu0
        %v746 = vadd.f32 0.0, %v745
        %v747 = vpop.f32.mrb[0].mxu0
        %748 = vmatprep.mubr.bf16.mxu0 0
        %749 = vmatmul.mubr.bf16.gmra.mrb[0].mxu0 %v643
        %v750 = vpop.f32.mrb[0].mxu0
        %v751 = vadd.f32 0.0, %v750
        %v752 = vpop.f32.mrb[0].mxu0
        %v753 = vpop.f32.mrb[0].mxu0
        %v754 = vadd.f32 0.0, %v753
        %v755 = vpop.f32.mrb[0].mxu0
        %756 = vdwg.mxu0
        %v757 = vpack.c.bf16 %v746, %v743
        %v758 = vpack.c.bf16 %v754, %v751
        %759 = vst [vmem:[#allocation2] sm:$0xff] %v757
        %760 = vst [vmem:[#allocation2 + $0x18] sm:$0xff] %v758
        %v761 = vld [vmem:[#allocation9 + $0x4] sm:$0xf]
        %v762 = vld [vmem:[#allocation9 + $0x10] sm:$0xf]
        %v763 = vld [vmem:[#allocation9 + $0x1c] sm:$0xf]
        %v764 = vld [vmem:[#allocation9 + $0x28] sm:$0xf]
        %v765 = vld [vmem:[#allocation9 + $0x34] sm:$0xf]
        %v766 = vld [vmem:[#allocation9 + $0x40] sm:$0xf]
        %v767 = vld [vmem:[#allocation9 + $0x4c] sm:$0xf]
        %v768 = vld [vmem:[#allocation9 + $0x58] sm:$0xf]
        %v769 = vld [vmem:[#allocation9 + $0x64] sm:$0xf]
        %v770 = vld [vmem:[#allocation9 + $0x70] sm:$0xf]
        %v771 = vld [vmem:[#allocation9 + $0x7c] sm:$0xf]
        %v772 = vld [vmem:[#allocation9 + $0x88] sm:$0xf]
        %v773 = vld [vmem:[#allocation9 + $0x94] sm:$0xf]
        %v774 = vld [vmem:[#allocation9 + $0xa0] sm:$0xf]
        %v775 = vld [vmem:[#allocation9 + $0xac] sm:$0xf]
        %v776 = vld [vmem:[#allocation9 + $0xb8] sm:$0xf]
        %v793 = vunpack.c.l.b16 %v761
        %v794 = vunpack.c.l.b16 %v762
        %v795 = vunpack.c.l.b16 %v763
        %v796 = vunpack.c.l.b16 %v764
        %v797 = vunpack.c.l.b16 %v765
        %v798 = vunpack.c.l.b16 %v766
        %v799 = vunpack.c.l.b16 %v767
        %v800 = vunpack.c.l.b16 %v768
        %v801 = vunpack.c.l.b16 %v769
        %v802 = vunpack.c.l.b16 %v770
        %v803 = vunpack.c.l.b16 %v771
        %v804 = vunpack.c.l.b16 %v772
        %v805 = vunpack.c.l.b16 %v773
        %v806 = vunpack.c.l.b16 %v774
        %v807 = vunpack.c.l.b16 %v775
        %v808 = vunpack.c.l.b16 %v776
        %v809 = vpack.c.b16 %v794, %v793
        %v810 = vpack.c.b16 %v796, %v795
        %v811 = vpack.c.b16 %v798, %v797
        %v812 = vpack.c.b16 %v800, %v799
        %v813 = vpack.c.b16 %v802, %v801
        %v814 = vpack.c.b16 %v804, %v803
        %v815 = vpack.c.b16 %v806, %v805
        %v816 = vpack.c.b16 %v808, %v807
        %825 = vmatprep.subr.bf16.mxu0 0
        %826 = vmatpush1.bf16.msra.mxu0 %v809
        %827 = vmatprep.subr.bf16.mxu0 0
        %828 = vmatpush1.bf16.msra.mxu0 %v810
        %829 = vmatprep.subr.bf16.mxu0 0
        %830 = vmatpush1.bf16.msra.mxu0 %v811
        %831 = vmatprep.subr.bf16.mxu0 0
        %832 = vmatpush1.bf16.msra.mxu0 %v812
        %833 = vmatprep.subr.bf16.mxu0 0
        %834 = vmatpush1.bf16.msra.mxu0 %v813
        %835 = vmatprep.subr.bf16.mxu0 0
        %836 = vmatpush1.bf16.msra.mxu0 %v814
        %837 = vmatprep.subr.bf16.mxu0 0
        %838 = vmatpush1.bf16.msra.mxu0 %v815
        %839 = vmatprep.subr.bf16.mxu0 0
        %840 = vmatpush1.bf16.msra.mxu0 %v816
        %841 = vmatprep.subr.bf16.mxu0 0
        %842 = vmatpush1.bf16.msra.mxu0 0
        %843 = vmatprep.subr.bf16.mxu0 0
        %844 = vmatpush1.bf16.msra.mxu0 0
        %845 = vmatprep.subr.bf16.mxu0 0
        %846 = vmatpush1.bf16.msra.mxu0 0
        %847 = vmatprep.subr.bf16.mxu0 0
        %848 = vmatpush1.bf16.msra.mxu0 0
        %849 = vmatprep.subr.bf16.mxu0 0
        %850 = vmatpush1.bf16.msra.mxu0 0
        %851 = vmatprep.subr.bf16.mxu0 0
        %852 = vmatpush1.bf16.msra.mxu0 0
        %853 = vmatprep.subr.bf16.mxu0 0
        %854 = vmatpush1.bf16.msra.mxu0 0
        %855 = vmatprep.subr.bf16.mxu0 0
        %856 = vmatpush1.bf16.msra.mxu0 0
        %857 = vmatprep.mubr.bf16.mxu0 0
        %858 = vmatmul.mubr.bf16.gmra.mrb[0].mxu0 %v642
        %v859 = vpop.f32.mrb[0].mxu0
        %v860 = vadd.f32 0.0, %v859
        %v861 = vpop.f32.mrb[0].mxu0
        %v862 = vpop.f32.mrb[0].mxu0
        %v863 = vadd.f32 0.0, %v862
        %v864 = vpop.f32.mrb[0].mxu0
        %865 = vmatprep.mubr.bf16.mxu0 0
        %866 = vmatmul.mubr.bf16.gmra.mrb[0].mxu0 %v643
        %v867 = vpop.f32.mrb[0].mxu0
        %v868 = vadd.f32 0.0, %v867
        %v869 = vpop.f32.mrb[0].mxu0
        %v870 = vpop.f32.mrb[0].mxu0
        %v871 = vadd.f32 0.0, %v870
        %v872 = vpop.f32.mrb[0].mxu0
        %873 = vdwg.mxu0
        %v874 = vpack.c.bf16 %v863, %v860
        %v875 = vpack.c.bf16 %v871, %v868
        %876 = vst [vmem:[#allocation2 + $0x8] sm:$0xff] %v874
        %877 = vst [vmem:[#allocation2 + $0x20] sm:$0xff] %v875
        %v878 = vld [vmem:[#allocation9 + $0x8] sm:$0xf]
        %v879 = vld [vmem:[#allocation9 + $0x14] sm:$0xf]
        %v880 = vld [vmem:[#allocation9 + $0x20] sm:$0xf]
        %v881 = vld [vmem:[#allocation9 + $0x2c] sm:$0xf]
        %v882 = vld [vmem:[#allocation9 + $0x38] sm:$0xf]
        %v883 = vld [vmem:[#allocation9 + $0x44] sm:$0xf]
        %v884 = vld [vmem:[#allocation9 + $0x50] sm:$0xf]
        %v885 = vld [vmem:[#allocation9 + $0x5c] sm:$0xf]
        %v886 = vld [vmem:[#allocation9 + $0x68] sm:$0xf]
        %v887 = vld [vmem:[#allocation9 + $0x74] sm:$0xf]
        %v888 = vld [vmem:[#allocation9 + $0x80] sm:$0xf]
        %v889 = vld [vmem:[#allocation9 + $0x8c] sm:$0xf]
        %v890 = vld [vmem:[#allocation9 + $0x98] sm:$0xf]
        %v891 = vld [vmem:[#allocation9 + $0xa4] sm:$0xf]
        %v892 = vld [vmem:[#allocation9 + $0xb0] sm:$0xf]
        %v893 = vld [vmem:[#allocation9 + $0xbc] sm:$0xf]
        %v910 = vunpack.c.l.b16 %v878
        %v911 = vunpack.c.l.b16 %v879
        %v912 = vunpack.c.l.b16 %v880
        %v913 = vunpack.c.l.b16 %v881
        %v914 = vunpack.c.l.b16 %v882
        %v915 = vunpack.c.l.b16 %v883
        %v916 = vunpack.c.l.b16 %v884
        %v917 = vunpack.c.l.b16 %v885
        %v918 = vunpack.c.l.b16 %v886
        %v919 = vunpack.c.l.b16 %v887
        %v920 = vunpack.c.l.b16 %v888
        %v921 = vunpack.c.l.b16 %v889
        %v922 = vunpack.c.l.b16 %v890
        %v923 = vunpack.c.l.b16 %v891
        %v924 = vunpack.c.l.b16 %v892
        %v925 = vunpack.c.l.b16 %v893
        %v926 = vpack.c.b16 %v911, %v910
        %v927 = vpack.c.b16 %v913, %v912
        %v928 = vpack.c.b16 %v915, %v914
        %v929 = vpack.c.b16 %v917, %v916
        %v930 = vpack.c.b16 %v919, %v918
        %v931 = vpack.c.b16 %v921, %v920
        %v932 = vpack.c.b16 %v923, %v922
        %v933 = vpack.c.b16 %v925, %v924
        %942 = vmatprep.subr.bf16.mxu0 0
        %943 = vmatpush1.bf16.msra.mxu0 %v926
        %944 = vmatprep.subr.bf16.mxu0 0
        %945 = vmatpush1.bf16.msra.mxu0 %v927
        %946 = vmatprep.subr.bf16.mxu0 0
        %947 = vmatpush1.bf16.msra.mxu0 %v928
        %948 = vmatprep.subr.bf16.mxu0 0
        %949 = vmatpush1.bf16.msra.mxu0 %v929
        %950 = vmatprep.subr.bf16.mxu0 0
        %951 = vmatpush1.bf16.msra.mxu0 %v930
        %952 = vmatprep.subr.bf16.mxu0 0
        %953 = vmatpush1.bf16.msra.mxu0 %v931
        %954 = vmatprep.subr.bf16.mxu0 0
        %955 = vmatpush1.bf16.msra.mxu0 %v932
        %956 = vmatprep.subr.bf16.mxu0 0
        %957 = vmatpush1.bf16.msra.mxu0 %v933
        %958 = vmatprep.subr.bf16.mxu0 0
        %959 = vmatpush1.bf16.msra.mxu0 0
        %960 = vmatprep.subr.bf16.mxu0 0
        %961 = vmatpush1.bf16.msra.mxu0 0
        %962 = vmatprep.subr.bf16.mxu0 0
        %963 = vmatpush1.bf16.msra.mxu0 0
        %964 = vmatprep.subr.bf16.mxu0 0
        %965 = vmatpush1.bf16.msra.mxu0 0
        %966 = vmatprep.subr.bf16.mxu0 0
        %967 = vmatpush1.bf16.msra.mxu0 0
        %968 = vmatprep.subr.bf16.mxu0 0
        %969 = vmatpush1.bf16.msra.mxu0 0
        %970 = vmatprep.subr.bf16.mxu0 0
        %971 = vmatpush1.bf16.msra.mxu0 0
        %972 = vmatprep.subr.bf16.mxu0 0
        %973 = vmatpush1.bf16.msra.mxu0 0
        %974 = vmatprep.mubr.bf16.mxu0 0
        %975 = vmatmul.mubr.bf16.gmra.mrb[0].mxu0 %v642
        %v976 = vpop.f32.mrb[0].mxu0
        %v977 = vadd.f32 0.0, %v976
        %v978 = vpop.f32.mrb[0].mxu0
        %v979 = vpop.f32.mrb[0].mxu0
        %v980 = vadd.f32 0.0, %v979
        %v981 = vpop.f32.mrb[0].mxu0
        %982 = vmatprep.mubr.bf16.mxu0 0
        %983 = vmatmul.mubr.bf16.gmra.mrb[0].mxu0 %v643
        %v984 = vpop.f32.mrb[0].mxu0
        %v985 = vadd.f32 0.0, %v984
        %v986 = vpop.f32.mrb[0].mxu0
        %v987 = vpop.f32.mrb[0].mxu0
        %v988 = vadd.f32 0.0, %v987
        %v989 = vpop.f32.mrb[0].mxu0
        %990 = vdwg.mxu0
        %v991 = vpack.c.bf16 %v980, %v977
        %v992 = vpack.c.bf16 %v988, %v985
        %993 = vst [vmem:[#allocation2 + $0x10] sm:$0xff] %v991
        %994 = vst [vmem:[#allocation2 + $0x28] sm:$0xff] %v992
        %v995 = vld [vmem:[#allocation2] sm:$0xff]
        %v996 = vld [vmem:[#allocation2 + $0x18] sm:$0xff]
        %v997 = vld [vmem:[#allocation2 + $0x8] sm:$0xff]
        %v998 = vld [vmem:[#allocation2 + $0x20] sm:$0xff]
        %v999 = vld [vmem:[#allocation2 + $0x10] sm:$0xff]
        %v1000 = vld [vmem:[#allocation2 + $0x28] sm:$0xff]
        %vm1001 = vcmask 261120
        %v1003 = vsel %vm1001, %v995, 0
        %v1006 = vsel %vm1001, %v997, 0
        %1008 = vmatprep.subr.bf16.mxu0 0
        %1009 = vmatpush1.bf16.xpose.msra.mxu0 %v1006
        %1010 = vmatprep.subr.bf16.mxu0 0
        %1011 = vmatpush1.bf16.xpose.msra.mxu0 0
        %1012 = vmatprep.subr.bf16.mxu0 0
        %1013 = vmatpush1.bf16.xpose.msra.mxu0 0
        %1014 = vmatprep.subr.bf16.mxu0 0
        %1015 = vmatpush1.bf16.xpose.msra.mxu0 0
        %1016 = vmatprep.subr.bf16.mxu0 0
        %1017 = vmatpush1.bf16.xpose.msra.mxu0 0
        %1018 = vmatprep.subr.bf16.mxu0 0
        %1019 = vmatpush1.bf16.xpose.msra.mxu0 0
        %1020 = vmatprep.subr.bf16.mxu0 0
        %1021 = vmatpush1.bf16.xpose.msra.mxu0 0
        %1022 = vmatprep.subr.bf16.mxu0 0
        %1023 = vmatpush1.bf16.xpose.msra.mxu0 0
        %1024 = vmatprep.subr.bf16.mxu0 0
        %1025 = vmatpush1.bf16.xpose.msra.mxu0 0
        %1026 = vmatprep.subr.bf16.mxu0 0
        %1027 = vmatpush1.bf16.xpose.msra.mxu0 0
        %1028 = vmatprep.subr.bf16.mxu0 0
        %1029 = vmatpush1.bf16.xpose.msra.mxu0 0
        %1030 = vmatprep.subr.bf16.mxu0 0
        %1031 = vmatpush1.bf16.xpose.msra.mxu0 0
        %1032 = vmatprep.subr.bf16.mxu0 0
        %1033 = vmatpush1.bf16.xpose.msra.mxu0 0
        %1034 = vmatprep.subr.bf16.mxu0 0
        %1035 = vmatpush1.bf16.xpose.msra.mxu0 0
        %1036 = vmatprep.subr.bf16.mxu0 0
        %1037 = vmatpush1.bf16.xpose.msra.mxu0 0
        %1038 = vmatprep.subr.bf16.mxu0 0
        %1039 = vmatpush1.bf16.xpose.msra.mxu0 0
        %1040 = vmatprep.mubr.bf16.mxu0 0
        %1041 = vmatmul.mubr.bf16.gmra.mrb[0].mxu0 %v1003
        %v1042 = vpop.f32.mrb[0].mxu0
        %v1043 = vadd.f32 0.0, %v1042
        %v1044 = vpop.f32.mrb[0].mxu0
        %v1045 = vpop.f32.mrb[0].mxu0
        %v1046 = vadd.f32 0.0, %v1045
        %v1047 = vpop.f32.mrb[0].mxu0
        %1048 = vdwg.mxu0
        %v1050 = vsel %vm1001, %v996, 0
        %v1053 = vsel %vm1001, %v998, 0
        %1055 = vmatprep.subr.bf16.mxu0 0
        %1056 = vmatpush1.bf16.xpose.msra.mxu0 %v1053
        %1057 = vmatprep.subr.bf16.mxu0 0
        %1058 = vmatpush1.bf16.xpose.msra.mxu0 0
        %1059 = vmatprep.subr.bf16.mxu0 0
        %1060 = vmatpush1.bf16.xpose.msra.mxu0 0
        %1061 = vmatprep.subr.bf16.mxu0 0
        %1062 = vmatpush1.bf16.xpose.msra.mxu0 0
        %1063 = vmatprep.subr.bf16.mxu0 0
        %1064 = vmatpush1.bf16.xpose.msra.mxu0 0
        %1065 = vmatprep.subr.bf16.mxu0 0
        %1066 = vmatpush1.bf16.xpose.msra.mxu0 0
        %1067 = vmatprep.subr.bf16.mxu0 0
        %1068 = vmatpush1.bf16.xpose.msra.mxu0 0
        %1069 = vmatprep.subr.bf16.mxu0 0
        %1070 = vmatpush1.bf16.xpose.msra.mxu0 0
        %1071 = vmatprep.subr.bf16.mxu0 0
        %1072 = vmatpush1.bf16.xpose.msra.mxu0 0
        %1073 = vmatprep.subr.bf16.mxu0 0
        %1074 = vmatpush1.bf16.xpose.msra.mxu0 0
        %1075 = vmatprep.subr.bf16.mxu0 0
        %1076 = vmatpush1.bf16.xpose.msra.mxu0 0
        %1077 = vmatprep.subr.bf16.mxu0 0
        %1078 = vmatpush1.bf16.xpose.msra.mxu0 0
        %1079 = vmatprep.subr.bf16.mxu0 0
        %1080 = vmatpush1.bf16.xpose.msra.mxu0 0
        %1081 = vmatprep.subr.bf16.mxu0 0
        %1082 = vmatpush1.bf16.xpose.msra.mxu0 0
        %1083 = vmatprep.subr.bf16.mxu0 0
        %1084 = vmatpush1.bf16.xpose.msra.mxu0 0
        %1085 = vmatprep.subr.bf16.mxu0 0
        %1086 = vmatpush1.bf16.xpose.msra.mxu0 0
        %1087 = vmatprep.mubr.bf16.mxu0 0
        %1088 = vmatmul.mubr.bf16.gmra.mrb[0].mxu0 %v1050
        %v1089 = vpop.f32.mrb[0].mxu0
        %v1090 = vadd.f32 0.0, %v1089
        %v1091 = vpop.f32.mrb[0].mxu0
        %v1092 = vpop.f32.mrb[0].mxu0
        %v1093 = vadd.f32 0.0, %v1092
        %v1094 = vpop.f32.mrb[0].mxu0
        %1095 = vdwg.mxu0
        %vm1096 = vcmask 130048
        %v1097 = vsel %vm1096, %v1043, -inf
        %1098 = vmax.xlane.f32.xlu0 %v1097
        %v1099 = vpop.xlane.xlu0 %1098
        %v1100 = vsel %vm1096, %v1046, -inf
        %1101 = vmax.xlane.f32.xlu0 %v1100
        %v1102 = vpop.xlane.xlu0 %1101
        %v1103 = vsel %vm1096, %v1090, -inf
        %1104 = vmax.xlane.f32.xlu0 %v1103
        %v1105 = vpop.xlane.xlu0 %1104
        %v1106 = vsel %vm1096, %v1093, -inf
        %1107 = vmax.xlane.f32.xlu0 %v1106
        %v1108 = vpop.xlane.xlu0 %1107
        %v1109 = vsub.f32 %v1043, %v1099
        %v1110 = vsub.f32 %v1046, %v1102
        %v1111 = vsub.f32 %v1090, %v1105
        %v1112 = vsub.f32 %v1093, %v1108
        %v1113 = vmul.f32 %v1109, 1.442695
        %v1114 = vpow.pop %v1113
        %v1115 = vmul.f32 %v1110, 1.442695
        %v1116 = vpow.pop %v1115
        %v1117 = vmul.f32 %v1111, 1.442695
        %v1118 = vpow.pop %v1117
        %v1119 = vmul.f32 %v1112, 1.442695
        %v1120 = vpow.pop %v1119
        %v1121 = vsel %vm1096, %v1114, 0.0
        %1122 = vadd.xlane.f32.xlu0 %v1121
        %v1123 = vpop.xlane.xlu0 %1122
        %v1124 = vsel %vm1096, %v1116, 0.0
        %1125 = vadd.xlane.f32.xlu0 %v1124
        %v1126 = vpop.xlane.xlu0 %1125
        %v1127 = vsel %vm1096, %v1118, 0.0
        %1128 = vadd.xlane.f32.xlu0 %v1127
        %v1129 = vpop.xlane.xlu0 %1128
        %v1130 = vsel %vm1096, %v1120, 0.0
        %1131 = vadd.xlane.f32.xlu0 %v1130
        %v1132 = vpop.xlane.xlu0 %1131
        %v1133 = vrcp.pop %v1123
        %v1134 = vrcp.pop %v1126
        %v1135 = vrcp.pop %v1129
        %v1136 = vrcp.pop %v1132
        %v1137 = vmul.f32 %v1114, %v1133
        %v1138 = vmul.f32 %v1116, %v1134
        %v1139 = vmul.f32 %v1118, %v1135
        %v1140 = vmul.f32 %v1120, %v1136
        %v1141 = vpack.c.bf16 %v1138, %v1137
        %v1142 = vpack.c.bf16 %v1140, %v1139
        %v1144 = vsel %vm1096, %v1141, 0
        %1146 = vmatprep.subr.bf16.mxu0 0
        %1147 = vmatpush1.bf16.msra.mxu0 %v999
        %1148 = vmatprep.subr.bf16.mxu0 0
        %1149 = vmatpush1.bf16.msra.mxu0 0
        %1150 = vmatprep.subr.bf16.mxu0 0
        %1151 = vmatpush1.bf16.msra.mxu0 0
        %1152 = vmatprep.subr.bf16.mxu0 0
        %1153 = vmatpush1.bf16.msra.mxu0 0
        %1154 = vmatprep.subr.bf16.mxu0 0
        %1155 = vmatpush1.bf16.msra.mxu0 0
        %1156 = vmatprep.subr.bf16.mxu0 0
        %1157 = vmatpush1.bf16.msra.mxu0 0
        %1158 = vmatprep.subr.bf16.mxu0 0
        %1159 = vmatpush1.bf16.msra.mxu0 0
        %1160 = vmatprep.subr.bf16.mxu0 0
        %1161 = vmatpush1.bf16.msra.mxu0 0
        %1162 = vmatprep.subr.bf16.mxu0 0
        %1163 = vmatpush1.bf16.msra.mxu0 0
        %1164 = vmatprep.subr.bf16.mxu0 0
        %1165 = vmatpush1.bf16.msra.mxu0 0
        %1166 = vmatprep.subr.bf16.mxu0 0
        %1167 = vmatpush1.bf16.msra.mxu0 0
        %1168 = vmatprep.subr.bf16.mxu0 0
        %1169 = vmatpush1.bf16.msra.mxu0 0
        %1170 = vmatprep.subr.bf16.mxu0 0
        %1171 = vmatpush1.bf16.msra.mxu0 0
        %1172 = vmatprep.subr.bf16.mxu0 0
        %1173 = vmatpush1.bf16.msra.mxu0 0
        %1174 = vmatprep.subr.bf16.mxu0 0
        %1175 = vmatpush1.bf16.msra.mxu0 0
        %1176 = vmatprep.subr.bf16.mxu0 0
        %1177 = vmatpush1.bf16.msra.mxu0 0
        %1178 = vmatprep.mubr.bf16.mxu0 0
        %1179 = vmatmul.mubr.bf16.gmra.mrb[0].mxu0 %v1144
        %v1180 = vpop.f32.mrb[0].mxu0
        %v1181 = vadd.f32 0.0, %v1180
        %v1182 = vpop.f32.mrb[0].mxu0
        %v1183 = vpop.f32.mrb[0].mxu0
        %v1184 = vadd.f32 0.0, %v1183
        %v1185 = vpop.f32.mrb[0].mxu0
        %1186 = vdwg.mxu0
        %v1188 = vsel %vm1096, %v1142, 0
        %1190 = vmatprep.subr.bf16.mxu0 0
        %1191 = vmatpush1.bf16.msra.mxu0 %v1000
        %1192 = vmatprep.subr.bf16.mxu0 0
        %1193 = vmatpush1.bf16.msra.mxu0 0
        %1194 = vmatprep.subr.bf16.mxu0 0
        %1195 = vmatpush1.bf16.msra.mxu0 0
        %1196 = vmatprep.subr.bf16.mxu0 0
        %1197 = vmatpush1.bf16.msra.mxu0 0
        %1198 = vmatprep.subr.bf16.mxu0 0
        %1199 = vmatpush1.bf16.msra.mxu0 0
        %1200 = vmatprep.subr.bf16.mxu0 0
        %1201 = vmatpush1.bf16.msra.mxu0 0
        %1202 = vmatprep.subr.bf16.mxu0 0
        %1203 = vmatpush1.bf16.msra.mxu0 0
        %1204 = vmatprep.subr.bf16.mxu0 0
        %1205 = vmatpush1.bf16.msra.mxu0 0
        %1206 = vmatprep.subr.bf16.mxu0 0
        %1207 = vmatpush1.bf16.msra.mxu0 0
        %1208 = vmatprep.subr.bf16.mxu0 0
        %1209 = vmatpush1.bf16.msra.mxu0 0
        %1210 = vmatprep.subr.bf16.mxu0 0
        %1211 = vmatpush1.bf16.msra.mxu0 0
        %1212 = vmatprep.subr.bf16.mxu0 0
        %1213 = vmatpush1.bf16.msra.mxu0 0
        %1214 = vmatprep.subr.bf16.mxu0 0
        %1215 = vmatpush1.bf16.msra.mxu0 0
        %1216 = vmatprep.subr.bf16.mxu0 0
        %1217 = vmatpush1.bf16.msra.mxu0 0
        %1218 = vmatprep.subr.bf16.mxu0 0
        %1219 = vmatpush1.bf16.msra.mxu0 0
        %1220 = vmatprep.subr.bf16.mxu0 0
        %1221 = vmatpush1.bf16.msra.mxu0 0
        %1222 = vmatprep.mubr.bf16.mxu0 0
        %1223 = vmatmul.mubr.bf16.gmra.mrb[0].mxu0 %v1188
        %v1224 = vpop.f32.mrb[0].mxu0
        %v1225 = vadd.f32 0.0, %v1224
        %v1226 = vpop.f32.mrb[0].mxu0
        %v1227 = vpop.f32.mrb[0].mxu0
        %v1228 = vadd.f32 0.0, %v1227
        %v1229 = vpop.f32.mrb[0].mxu0
        %1230 = vdwg.mxu0
        %1232 = vrot.lane.b32.xlu0 %v995, 96
        %v1233 = vpop.permute.xlu0 %1232
        %1235 = vrot.lane.b32.xlu0 %v997, 96
        %v1236 = vpop.permute.xlu0 %1235
        %v1238 = vsel %vm1001, %v1233, 0
        %v1241 = vsel %vm1001, %v1236, 0
        %1243 = vmatprep.subr.bf16.mxu0 0
        %1244 = vmatpush1.bf16.xpose.msra.mxu0 %v1241
        %1245 = vmatprep.subr.bf16.mxu0 0
        %1246 = vmatpush1.bf16.xpose.msra.mxu0 0
        %1247 = vmatprep.subr.bf16.mxu0 0
        %1248 = vmatpush1.bf16.xpose.msra.mxu0 0
        %1249 = vmatprep.subr.bf16.mxu0 0
        %1250 = vmatpush1.bf16.xpose.msra.mxu0 0
        %1251 = vmatprep.subr.bf16.mxu0 0
        %1252 = vmatpush1.bf16.xpose.msra.mxu0 0
        %1253 = vmatprep.subr.bf16.mxu0 0
        %1254 = vmatpush1.bf16.xpose.msra.mxu0 0
        %1255 = vmatprep.subr.bf16.mxu0 0
        %1256 = vmatpush1.bf16.xpose.msra.mxu0 0
        %1257 = vmatprep.subr.bf16.mxu0 0
        %1258 = vmatpush1.bf16.xpose.msra.mxu0 0
        %1259 = vmatprep.subr.bf16.mxu0 0
        %1260 = vmatpush1.bf16.xpose.msra.mxu0 0
        %1261 = vmatprep.subr.bf16.mxu0 0
        %1262 = vmatpush1.bf16.xpose.msra.mxu0 0
        %1263 = vmatprep.subr.bf16.mxu0 0
        %1264 = vmatpush1.bf16.xpose.msra.mxu0 0
        %1265 = vmatprep.subr.bf16.mxu0 0
        %1266 = vmatpush1.bf16.xpose.msra.mxu0 0
        %1267 = vmatprep.subr.bf16.mxu0 0
        %1268 = vmatpush1.bf16.xpose.msra.mxu0 0
        %1269 = vmatprep.subr.bf16.mxu0 0
        %1270 = vmatpush1.bf16.xpose.msra.mxu0 0
        %1271 = vmatprep.subr.bf16.mxu0 0
        %1272 = vmatpush1.bf16.xpose.msra.mxu0 0
        %1273 = vmatprep.subr.bf16.mxu0 0
        %1274 = vmatpush1.bf16.xpose.msra.mxu0 0
        %1275 = vmatprep.mubr.bf16.mxu0 0
        %1276 = vmatmul.mubr.bf16.gmra.mrb[0].mxu0 %v1238
        %v1277 = vpop.f32.mrb[0].mxu0
        %v1278 = vadd.f32 0.0, %v1277
        %v1279 = vpop.f32.mrb[0].mxu0
        %v1280 = vpop.f32.mrb[0].mxu0
        %v1281 = vadd.f32 0.0, %v1280
        %v1282 = vpop.f32.mrb[0].mxu0
        %1283 = vdwg.mxu0
        %1285 = vrot.lane.b32.xlu0 %v996, 96
        %v1286 = vpop.permute.xlu0 %1285
        %1288 = vrot.lane.b32.xlu0 %v998, 96
        %v1289 = vpop.permute.xlu0 %1288
        %v1291 = vsel %vm1001, %v1286, 0
        %v1294 = vsel %vm1001, %v1289, 0
        %1296 = vmatprep.subr.bf16.mxu0 0
        %1297 = vmatpush1.bf16.xpose.msra.mxu0 %v1294
        %1298 = vmatprep.subr.bf16.mxu0 0
        %1299 = vmatpush1.bf16.xpose.msra.mxu0 0
        %1300 = vmatprep.subr.bf16.mxu0 0
        %1301 = vmatpush1.bf16.xpose.msra.mxu0 0
        %1302 = vmatprep.subr.bf16.mxu0 0
        %1303 = vmatpush1.bf16.xpose.msra.mxu0 0
        %1304 = vmatprep.subr.bf16.mxu0 0
        %1305 = vmatpush1.bf16.xpose.msra.mxu0 0
        %1306 = vmatprep.subr.bf16.mxu0 0
        %1307 = vmatpush1.bf16.xpose.msra.mxu0 0
        %1308 = vmatprep.subr.bf16.mxu0 0
        %1309 = vmatpush1.bf16.xpose.msra.mxu0 0
        %1310 = vmatprep.subr.bf16.mxu0 0
        %1311 = vmatpush1.bf16.xpose.msra.mxu0 0
        %1312 = vmatprep.subr.bf16.mxu0 0
        %1313 = vmatpush1.bf16.xpose.msra.mxu0 0
        %1314 = vmatprep.subr.bf16.mxu0 0
        %1315 = vmatpush1.bf16.xpose.msra.mxu0 0
        %1316 = vmatprep.subr.bf16.mxu0 0
        %1317 = vmatpush1.bf16.xpose.msra.mxu0 0
        %1318 = vmatprep.subr.bf16.mxu0 0
        %1319 = vmatpush1.bf16.xpose.msra.mxu0 0
        %1320 = vmatprep.subr.bf16.mxu0 0
        %1321 = vmatpush1.bf16.xpose.msra.mxu0 0
        %1322 = vmatprep.subr.bf16.mxu0 0
        %1323 = vmatpush1.bf16.xpose.msra.mxu0 0
        %1324 = vmatprep.subr.bf16.mxu0 0
        %1325 = vmatpush1.bf16.xpose.msra.mxu0 0
        %1326 = vmatprep.subr.bf16.mxu0 0
        %1327 = vmatpush1.bf16.xpose.msra.mxu0 0
        %1328 = vmatprep.mubr.bf16.mxu0 0
        %1329 = vmatmul.mubr.bf16.gmra.mrb[0].mxu0 %v1291
        %v1330 = vpop.f32.mrb[0].mxu0
        %v1331 = vadd.f32 0.0, %v1330
        %v1332 = vpop.f32.mrb[0].mxu0
        %v1333 = vpop.f32.mrb[0].mxu0
        %v1334 = vadd.f32 0.0, %v1333
        %v1335 = vpop.f32.mrb[0].mxu0
        %1336 = vdwg.mxu0
        %v1337 = vsel %vm1096, %v1278, -inf
        %1338 = vmax.xlane.f32.xlu0 %v1337
        %v1339 = vpop.xlane.xlu0 %1338
        %v1340 = vsel %vm1096, %v1281, -inf
        %1341 = vmax.xlane.f32.xlu0 %v1340
        %v1342 = vpop.xlane.xlu0 %1341
        %v1343 = vsel %vm1096, %v1331, -inf
        %1344 = vmax.xlane.f32.xlu0 %v1343
        %v1345 = vpop.xlane.xlu0 %1344
        %v1346 = vsel %vm1096, %v1334, -inf
        %1347 = vmax.xlane.f32.xlu0 %v1346
        %v1348 = vpop.xlane.xlu0 %1347
        %v1349 = vsub.f32 %v1278, %v1339
        %v1350 = vsub.f32 %v1281, %v1342
        %v1351 = vsub.f32 %v1331, %v1345
        %v1352 = vsub.f32 %v1334, %v1348
        %v1353 = vmul.f32 %v1349, 1.442695
        %v1354 = vpow.pop %v1353
        %v1355 = vmul.f32 %v1350, 1.442695
        %v1356 = vpow.pop %v1355
        %v1357 = vmul.f32 %v1351, 1.442695
        %v1358 = vpow.pop %v1357
        %v1359 = vmul.f32 %v1352, 1.442695
        %v1360 = vpow.pop %v1359
        %v1361 = vsel %vm1096, %v1354, 0.0
        %1362 = vadd.xlane.f32.xlu0 %v1361
        %v1363 = vpop.xlane.xlu0 %1362
        %v1364 = vsel %vm1096, %v1356, 0.0
        %1365 = vadd.xlane.f32.xlu0 %v1364
        %v1366 = vpop.xlane.xlu0 %1365
        %v1367 = vsel %vm1096, %v1358, 0.0
        %1368 = vadd.xlane.f32.xlu0 %v1367
        %v1369 = vpop.xlane.xlu0 %1368
        %v1370 = vsel %vm1096, %v1360, 0.0
        %1371 = vadd.xlane.f32.xlu0 %v1370
        %v1372 = vpop.xlane.xlu0 %1371
        %v1373 = vrcp.pop %v1363
        %v1374 = vrcp.pop %v1366
        %v1375 = vrcp.pop %v1369
        %v1376 = vrcp.pop %v1372
        %v1377 = vmul.f32 %v1354, %v1373
        %v1378 = vmul.f32 %v1356, %v1374
        %v1379 = vmul.f32 %v1358, %v1375
        %v1380 = vmul.f32 %v1360, %v1376
        %v1381 = vpack.c.bf16 %v1378, %v1377
        %v1382 = vpack.c.bf16 %v1380, %v1379
        %1384 = vrot.lane.b32.xlu0 %v999, 96
        %v1385 = vpop.permute.xlu0 %1384
        %v1388 = vsel %vm1096, %v1381, 0
        %1390 = vmatprep.subr.bf16.mxu0 0
        %1391 = vmatpush1.bf16.msra.mxu0 %v1385
        %1392 = vmatprep.subr.bf16.mxu0 0
        %1393 = vmatpush1.bf16.msra.mxu0 0
        %1394 = vmatprep.subr.bf16.mxu0 0
        %1395 = vmatpush1.bf16.msra.mxu0 0
        %1396 = vmatprep.subr.bf16.mxu0 0
        %1397 = vmatpush1.bf16.msra.mxu0 0
        %1398 = vmatprep.subr.bf16.mxu0 0
        %1399 = vmatpush1.bf16.msra.mxu0 0
        %1400 = vmatprep.subr.bf16.mxu0 0
        %1401 = vmatpush1.bf16.msra.mxu0 0
        %1402 = vmatprep.subr.bf16.mxu0 0
        %1403 = vmatpush1.bf16.msra.mxu0 0
        %1404 = vmatprep.subr.bf16.mxu0 0
        %1405 = vmatpush1.bf16.msra.mxu0 0
        %1406 = vmatprep.subr.bf16.mxu0 0
        %1407 = vmatpush1.bf16.msra.mxu0 0
        %1408 = vmatprep.subr.bf16.mxu0 0
        %1409 = vmatpush1.bf16.msra.mxu0 0
        %1410 = vmatprep.subr.bf16.mxu0 0
        %1411 = vmatpush1.bf16.msra.mxu0 0
        %1412 = vmatprep.subr.bf16.mxu0 0
        %1413 = vmatpush1.bf16.msra.mxu0 0
        %1414 = vmatprep.subr.bf16.mxu0 0
        %1415 = vmatpush1.bf16.msra.mxu0 0
        %1416 = vmatprep.subr.bf16.mxu0 0
        %1417 = vmatpush1.bf16.msra.mxu0 0
        %1418 = vmatprep.subr.bf16.mxu0 0
        %1419 = vmatpush1.bf16.msra.mxu0 0
        %1420 = vmatprep.subr.bf16.mxu0 0
        %1421 = vmatpush1.bf16.msra.mxu0 0
        %1422 = vmatprep.mubr.bf16.mxu0 0
        %1423 = vmatmul.mubr.bf16.gmra.mrb[0].mxu0 %v1388
        %v1424 = vpop.f32.mrb[0].mxu0
        %v1425 = vadd.f32 0.0, %v1424
        %v1426 = vpop.f32.mrb[0].mxu0
        %v1427 = vpop.f32.mrb[0].mxu0
        %v1428 = vadd.f32 0.0, %v1427
        %v1429 = vpop.f32.mrb[0].mxu0
        %1430 = vdwg.mxu0
        %1432 = vrot.lane.b32.xlu0 %v1000, 96
        %v1433 = vpop.permute.xlu0 %1432
        %v1436 = vsel %vm1096, %v1382, 0
        %1438 = vmatprep.subr.bf16.mxu0 0
        %1439 = vmatpush1.bf16.msra.mxu0 %v1433
        %1440 = vmatprep.subr.bf16.mxu0 0
        %1441 = vmatpush1.bf16.msra.mxu0 0
        %1442 = vmatprep.subr.bf16.mxu0 0
        %1443 = vmatpush1.bf16.msra.mxu0 0
        %1444 = vmatprep.subr.bf16.mxu0 0
        %1445 = vmatpush1.bf16.msra.mxu0 0
        %1446 = vmatprep.subr.bf16.mxu0 0
        %1447 = vmatpush1.bf16.msra.mxu0 0
        %1448 = vmatprep.subr.bf16.mxu0 0
        %1449 = vmatpush1.bf16.msra.mxu0 0
        %1450 = vmatprep.subr.bf16.mxu0 0
        %1451 = vmatpush1.bf16.msra.mxu0 0
        %1452 = vmatprep.subr.bf16.mxu0 0
        %1453 = vmatpush1.bf16.msra.mxu0 0
        %1454 = vmatprep.subr.bf16.mxu0 0
        %1455 = vmatpush1.bf16.msra.mxu0 0
        %1456 = vmatprep.subr.bf16.mxu0 0
        %1457 = vmatpush1.bf16.msra.mxu0 0
        %1458 = vmatprep.subr.bf16.mxu0 0
        %1459 = vmatpush1.bf16.msra.mxu0 0
        %1460 = vmatprep.subr.bf16.mxu0 0
        %1461 = vmatpush1.bf16.msra.mxu0 0
        %1462 = vmatprep.subr.bf16.mxu0 0
        %1463 = vmatpush1.bf16.msra.mxu0 0
        %1464 = vmatprep.subr.bf16.mxu0 0
        %1465 = vmatpush1.bf16.msra.mxu0 0
        %1466 = vmatprep.subr.bf16.mxu0 0
        %1467 = vmatpush1.bf16.msra.mxu0 0
        %1468 = vmatprep.subr.bf16.mxu0 0
        %1469 = vmatpush1.bf16.msra.mxu0 0
        %1470 = vmatprep.mubr.bf16.mxu0 0
        %1471 = vmatmul.mubr.bf16.gmra.mrb[0].mxu0 %v1436
        %v1472 = vpop.f32.mrb[0].mxu0
        %v1473 = vadd.f32 0.0, %v1472
        %v1474 = vpop.f32.mrb[0].mxu0
        %v1475 = vpop.f32.mrb[0].mxu0
        %v1476 = vadd.f32 0.0, %v1475
        %v1477 = vpop.f32.mrb[0].mxu0
        %1478 = vdwg.mxu0
        %1479 = vrot.lane.b32.xlu0 %v995, 64
        %v1480 = vpop.permute.xlu0 %1479
        %1481 = vrot.lane.b32.xlu0 %v997, 64
        %v1482 = vpop.permute.xlu0 %1481
        %v1484 = vsel %vm1001, %v1480, 0
        %v1487 = vsel %vm1001, %v1482, 0
        %1489 = vmatprep.subr.bf16.mxu0 0
        %1490 = vmatpush1.bf16.xpose.msra.mxu0 %v1487
        %1491 = vmatprep.subr.bf16.mxu0 0
        %1492 = vmatpush1.bf16.xpose.msra.mxu0 0
        %1493 = vmatprep.subr.bf16.mxu0 0
        %1494 = vmatpush1.bf16.xpose.msra.mxu0 0
        %1495 = vmatprep.subr.bf16.mxu0 0
        %1496 = vmatpush1.bf16.xpose.msra.mxu0 0
        %1497 = vmatprep.subr.bf16.mxu0 0
        %1498 = vmatpush1.bf16.xpose.msra.mxu0 0
        %1499 = vmatprep.subr.bf16.mxu0 0
        %1500 = vmatpush1.bf16.xpose.msra.mxu0 0
        %1501 = vmatprep.subr.bf16.mxu0 0
        %1502 = vmatpush1.bf16.xpose.msra.mxu0 0
        %1503 = vmatprep.subr.bf16.mxu0 0
        %1504 = vmatpush1.bf16.xpose.msra.mxu0 0
        %1505 = vmatprep.subr.bf16.mxu0 0
        %1506 = vmatpush1.bf16.xpose.msra.mxu0 0
        %1507 = vmatprep.subr.bf16.mxu0 0
        %1508 = vmatpush1.bf16.xpose.msra.mxu0 0
        %1509 = vmatprep.subr.bf16.mxu0 0
        %1510 = vmatpush1.bf16.xpose.msra.mxu0 0
        %1511 = vmatprep.subr.bf16.mxu0 0
        %1512 = vmatpush1.bf16.xpose.msra.mxu0 0
        %1513 = vmatprep.subr.bf16.mxu0 0
        %1514 = vmatpush1.bf16.xpose.msra.mxu0 0
        %1515 = vmatprep.subr.bf16.mxu0 0
        %1516 = vmatpush1.bf16.xpose.msra.mxu0 0
        %1517 = vmatprep.subr.bf16.mxu0 0
        %1518 = vmatpush1.bf16.xpose.msra.mxu0 0
        %1519 = vmatprep.subr.bf16.mxu0 0
        %1520 = vmatpush1.bf16.xpose.msra.mxu0 0
        %1521 = vmatprep.mubr.bf16.mxu0 0
        %1522 = vmatmul.mubr.bf16.gmra.mrb[0].mxu0 %v1484
        %v1523 = vpop.f32.mrb[0].mxu0
        %v1524 = vadd.f32 0.0, %v1523
        %v1525 = vpop.f32.mrb[0].mxu0
        %v1526 = vpop.f32.mrb[0].mxu0
        %v1527 = vadd.f32 0.0, %v1526
        %v1528 = vpop.f32.mrb[0].mxu0
        %1529 = vdwg.mxu0
        %1530 = vrot.lane.b32.xlu0 %v996, 64
        %v1531 = vpop.permute.xlu0 %1530
        %1532 = vrot.lane.b32.xlu0 %v998, 64
        %v1533 = vpop.permute.xlu0 %1532
        %v1535 = vsel %vm1001, %v1531, 0
        %v1538 = vsel %vm1001, %v1533, 0
        %1540 = vmatprep.subr.bf16.mxu0 0
        %1541 = vmatpush1.bf16.xpose.msra.mxu0 %v1538
        %1542 = vmatprep.subr.bf16.mxu0 0
        %1543 = vmatpush1.bf16.xpose.msra.mxu0 0
        %1544 = vmatprep.subr.bf16.mxu0 0
        %1545 = vmatpush1.bf16.xpose.msra.mxu0 0
        %1546 = vmatprep.subr.bf16.mxu0 0
        %1547 = vmatpush1.bf16.xpose.msra.mxu0 0
        %1548 = vmatprep.subr.bf16.mxu0 0
        %1549 = vmatpush1.bf16.xpose.msra.mxu0 0
        %1550 = vmatprep.subr.bf16.mxu0 0
        %1551 = vmatpush1.bf16.xpose.msra.mxu0 0
        %1552 = vmatprep.subr.bf16.mxu0 0
        %1553 = vmatpush1.bf16.xpose.msra.mxu0 0
        %1554 = vmatprep.subr.bf16.mxu0 0
        %1555 = vmatpush1.bf16.xpose.msra.mxu0 0
        %1556 = vmatprep.subr.bf16.mxu0 0
        %1557 = vmatpush1.bf16.xpose.msra.mxu0 0
        %1558 = vmatprep.subr.bf16.mxu0 0
        %1559 = vmatpush1.bf16.xpose.msra.mxu0 0
        %1560 = vmatprep.subr.bf16.mxu0 0
        %1561 = vmatpush1.bf16.xpose.msra.mxu0 0
        %1562 = vmatprep.subr.bf16.mxu0 0
        %1563 = vmatpush1.bf16.xpose.msra.mxu0 0
        %1564 = vmatprep.subr.bf16.mxu0 0
        %1565 = vmatpush1.bf16.xpose.msra.mxu0 0
        %1566 = vmatprep.subr.bf16.mxu0 0
        %1567 = vmatpush1.bf16.xpose.msra.mxu0 0
        %1568 = vmatprep.subr.bf16.mxu0 0
        %1569 = vmatpush1.bf16.xpose.msra.mxu0 0
        %1570 = vmatprep.subr.bf16.mxu0 0
        %1571 = vmatpush1.bf16.xpose.msra.mxu0 0
        %1572 = vmatprep.mubr.bf16.mxu0 0
        %1573 = vmatmul.mubr.bf16.gmra.mrb[0].mxu0 %v1535
        %v1574 = vpop.f32.mrb[0].mxu0
        %v1575 = vadd.f32 0.0, %v1574
        %v1576 = vpop.f32.mrb[0].mxu0
        %v1577 = vpop.f32.mrb[0].mxu0
        %v1578 = vadd.f32 0.0, %v1577
        %v1579 = vpop.f32.mrb[0].mxu0
        %1580 = vdwg.mxu0
        %v1581 = vsel %vm1096, %v1524, -inf
        %1582 = vmax.xlane.f32.xlu0 %v1581
        %v1583 = vpop.xlane.xlu0 %1582
        %v1584 = vsel %vm1096, %v1527, -inf
        %1585 = vmax.xlane.f32.xlu0 %v1584
        %v1586 = vpop.xlane.xlu0 %1585
        %v1587 = vsel %vm1096, %v1575, -inf
        %1588 = vmax.xlane.f32.xlu0 %v1587
        %v1589 = vpop.xlane.xlu0 %1588
        %v1590 = vsel %vm1096, %v1578, -inf
        %1591 = vmax.xlane.f32.xlu0 %v1590
        %v1592 = vpop.xlane.xlu0 %1591
        %v1593 = vsub.f32 %v1524, %v1583
        %v1594 = vsub.f32 %v1527, %v1586
        %v1595 = vsub.f32 %v1575, %v1589
        %v1596 = vsub.f32 %v1578, %v1592
        %v1597 = vmul.f32 %v1593, 1.442695
        %v1598 = vpow.pop %v1597
        %v1599 = vmul.f32 %v1594, 1.442695
        %v1600 = vpow.pop %v1599
        %v1601 = vmul.f32 %v1595, 1.442695
        %v1602 = vpow.pop %v1601
        %v1603 = vmul.f32 %v1596, 1.442695
        %v1604 = vpow.pop %v1603
        %v1605 = vsel %vm1096, %v1598, 0.0
        %1606 = vadd.xlane.f32.xlu0 %v1605
        %v1607 = vpop.xlane.xlu0 %1606
        %v1608 = vsel %vm1096, %v1600, 0.0
        %1609 = vadd.xlane.f32.xlu0 %v1608
        %v1610 = vpop.xlane.xlu0 %1609
        %v1611 = vsel %vm1096, %v1602, 0.0
        %1612 = vadd.xlane.f32.xlu0 %v1611
        %v1613 = vpop.xlane.xlu0 %1612
        %v1614 = vsel %vm1096, %v1604, 0.0
        %1615 = vadd.xlane.f32.xlu0 %v1614
        %v1616 = vpop.xlane.xlu0 %1615
        %v1617 = vrcp.pop %v1607
        %v1618 = vrcp.pop %v1610
        %v1619 = vrcp.pop %v1613
        %v1620 = vrcp.pop %v1616
        %v1621 = vmul.f32 %v1598, %v1617
        %v1622 = vmul.f32 %v1600, %v1618
        %v1623 = vmul.f32 %v1602, %v1619
        %v1624 = vmul.f32 %v1604, %v1620
        %v1625 = vpack.c.bf16 %v1622, %v1621
        %v1626 = vpack.c.bf16 %v1624, %v1623
        %1627 = vrot.lane.b32.xlu0 %v999, 64
        %v1628 = vpop.permute.xlu0 %1627
        %v1631 = vsel %vm1096, %v1625, 0
        %1633 = vmatprep.subr.bf16.mxu0 0
        %1634 = vmatpush1.bf16.msra.mxu0 %v1628
        %1635 = vmatprep.subr.bf16.mxu0 0
        %1636 = vmatpush1.bf16.msra.mxu0 0
        %1637 = vmatprep.subr.bf16.mxu0 0
        %1638 = vmatpush1.bf16.msra.mxu0 0
        %1639 = vmatprep.subr.bf16.mxu0 0
        %1640 = vmatpush1.bf16.msra.mxu0 0
        %1641 = vmatprep.subr.bf16.mxu0 0
        %1642 = vmatpush1.bf16.msra.mxu0 0
        %1643 = vmatprep.subr.bf16.mxu0 0
        %1644 = vmatpush1.bf16.msra.mxu0 0
        %1645 = vmatprep.subr.bf16.mxu0 0
        %1646 = vmatpush1.bf16.msra.mxu0 0
        %1647 = vmatprep.subr.bf16.mxu0 0
        %1648 = vmatpush1.bf16.msra.mxu0 0
        %1649 = vmatprep.subr.bf16.mxu0 0
        %1650 = vmatpush1.bf16.msra.mxu0 0
        %1651 = vmatprep.subr.bf16.mxu0 0
        %1652 = vmatpush1.bf16.msra.mxu0 0
        %1653 = vmatprep.subr.bf16.mxu0 0
        %1654 = vmatpush1.bf16.msra.mxu0 0
        %1655 = vmatprep.subr.bf16.mxu0 0
        %1656 = vmatpush1.bf16.msra.mxu0 0
        %1657 = vmatprep.subr.bf16.mxu0 0
        %1658 = vmatpush1.bf16.msra.mxu0 0
        %1659 = vmatprep.subr.bf16.mxu0 0
        %1660 = vmatpush1.bf16.msra.mxu0 0
        %1661 = vmatprep.subr.bf16.mxu0 0
        %1662 = vmatpush1.bf16.msra.mxu0 0
        %1663 = vmatprep.subr.bf16.mxu0 0
        %1664 = vmatpush1.bf16.msra.mxu0 0
        %1665 = vmatprep.mubr.bf16.mxu0 0
        %1666 = vmatmul.mubr.bf16.gmra.mrb[0].mxu0 %v1631
        %v1667 = vpop.f32.mrb[0].mxu0
        %v1668 = vadd.f32 0.0, %v1667
        %v1669 = vpop.f32.mrb[0].mxu0
        %v1670 = vpop.f32.mrb[0].mxu0
        %v1671 = vadd.f32 0.0, %v1670
        %v1672 = vpop.f32.mrb[0].mxu0
        %1673 = vdwg.mxu0
        %1674 = vrot.lane.b32.xlu0 %v1000, 64
        %v1675 = vpop.permute.xlu0 %1674
        %v1678 = vsel %vm1096, %v1626, 0
        %1680 = vmatprep.subr.bf16.mxu0 0
        %1681 = vmatpush1.bf16.msra.mxu0 %v1675
        %1682 = vmatprep.subr.bf16.mxu0 0
        %1683 = vmatpush1.bf16.msra.mxu0 0
        %1684 = vmatprep.subr.bf16.mxu0 0
        %1685 = vmatpush1.bf16.msra.mxu0 0
        %1686 = vmatprep.subr.bf16.mxu0 0
        %1687 = vmatpush1.bf16.msra.mxu0 0
        %1688 = vmatprep.subr.bf16.mxu0 0
        %1689 = vmatpush1.bf16.msra.mxu0 0
        %1690 = vmatprep.subr.bf16.mxu0 0
        %1691 = vmatpush1.bf16.msra.mxu0 0
        %1692 = vmatprep.subr.bf16.mxu0 0
        %1693 = vmatpush1.bf16.msra.mxu0 0
        %1694 = vmatprep.subr.bf16.mxu0 0
        %1695 = vmatpush1.bf16.msra.mxu0 0
        %1696 = vmatprep.subr.bf16.mxu0 0
        %1697 = vmatpush1.bf16.msra.mxu0 0
        %1698 = vmatprep.subr.bf16.mxu0 0
        %1699 = vmatpush1.bf16.msra.mxu0 0
        %1700 = vmatprep.subr.bf16.mxu0 0
        %1701 = vmatpush1.bf16.msra.mxu0 0
        %1702 = vmatprep.subr.bf16.mxu0 0
        %1703 = vmatpush1.bf16.msra.mxu0 0
        %1704 = vmatprep.subr.bf16.mxu0 0
        %1705 = vmatpush1.bf16.msra.mxu0 0
        %1706 = vmatprep.subr.bf16.mxu0 0
        %1707 = vmatpush1.bf16.msra.mxu0 0
        %1708 = vmatprep.subr.bf16.mxu0 0
        %1709 = vmatpush1.bf16.msra.mxu0 0
        %1710 = vmatprep.subr.bf16.mxu0 0
        %1711 = vmatpush1.bf16.msra.mxu0 0
        %1712 = vmatprep.mubr.bf16.mxu0 0
        %1713 = vmatmul.mubr.bf16.gmra.mrb[0].mxu0 %v1678
        %v1714 = vpop.f32.mrb[0].mxu0
        %v1715 = vadd.f32 0.0, %v1714
        %v1716 = vpop.f32.mrb[0].mxu0
        %v1717 = vpop.f32.mrb[0].mxu0
        %v1718 = vadd.f32 0.0, %v1717
        %v1719 = vpop.f32.mrb[0].mxu0
        %1720 = vdwg.mxu0
        %1721 = vrot.lane.b32.xlu0 %v995, 32
        %v1722 = vpop.permute.xlu0 %1721
        %1723 = vrot.lane.b32.xlu0 %v997, 32
        %v1724 = vpop.permute.xlu0 %1723
        %v1726 = vsel %vm1001, %v1722, 0
        %v1729 = vsel %vm1001, %v1724, 0
        %1731 = vmatprep.subr.bf16.mxu0 0
        %1732 = vmatpush1.bf16.xpose.msra.mxu0 %v1729
        %1733 = vmatprep.subr.bf16.mxu0 0
        %1734 = vmatpush1.bf16.xpose.msra.mxu0 0
        %1735 = vmatprep.subr.bf16.mxu0 0
        %1736 = vmatpush1.bf16.xpose.msra.mxu0 0
        %1737 = vmatprep.subr.bf16.mxu0 0
        %1738 = vmatpush1.bf16.xpose.msra.mxu0 0
        %1739 = vmatprep.subr.bf16.mxu0 0
        %1740 = vmatpush1.bf16.xpose.msra.mxu0 0
        %1741 = vmatprep.subr.bf16.mxu0 0
        %1742 = vmatpush1.bf16.xpose.msra.mxu0 0
        %1743 = vmatprep.subr.bf16.mxu0 0
        %1744 = vmatpush1.bf16.xpose.msra.mxu0 0
        %1745 = vmatprep.subr.bf16.mxu0 0
        %1746 = vmatpush1.bf16.xpose.msra.mxu0 0
        %1747 = vmatprep.subr.bf16.mxu0 0
        %1748 = vmatpush1.bf16.xpose.msra.mxu0 0
        %1749 = vmatprep.subr.bf16.mxu0 0
        %1750 = vmatpush1.bf16.xpose.msra.mxu0 0
        %1751 = vmatprep.subr.bf16.mxu0 0
        %1752 = vmatpush1.bf16.xpose.msra.mxu0 0
        %1753 = vmatprep.subr.bf16.mxu0 0
        %1754 = vmatpush1.bf16.xpose.msra.mxu0 0
        %1755 = vmatprep.subr.bf16.mxu0 0
        %1756 = vmatpush1.bf16.xpose.msra.mxu0 0
        %1757 = vmatprep.subr.bf16.mxu0 0
        %1758 = vmatpush1.bf16.xpose.msra.mxu0 0
        %1759 = vmatprep.subr.bf16.mxu0 0
        %1760 = vmatpush1.bf16.xpose.msra.mxu0 0
        %1761 = vmatprep.subr.bf16.mxu0 0
        %1762 = vmatpush1.bf16.xpose.msra.mxu0 0
        %1763 = vmatprep.mubr.bf16.mxu0 0
        %1764 = vmatmul.mubr.bf16.gmra.mrb[0].mxu0 %v1726
        %v1765 = vpop.f32.mrb[0].mxu0
        %v1766 = vadd.f32 0.0, %v1765
        %v1767 = vpop.f32.mrb[0].mxu0
        %v1768 = vpop.f32.mrb[0].mxu0
        %v1769 = vadd.f32 0.0, %v1768
        %v1770 = vpop.f32.mrb[0].mxu0
        %1771 = vdwg.mxu0
        %1772 = vrot.lane.b32.xlu0 %v996, 32
        %v1773 = vpop.permute.xlu0 %1772
        %1774 = vrot.lane.b32.xlu0 %v998, 32
        %v1775 = vpop.permute.xlu0 %1774
        %v1777 = vsel %vm1001, %v1773, 0
        %v1780 = vsel %vm1001, %v1775, 0
        %1782 = vmatprep.subr.bf16.mxu0 0
        %1783 = vmatpush1.bf16.xpose.msra.mxu0 %v1780
        %1784 = vmatprep.subr.bf16.mxu0 0
        %1785 = vmatpush1.bf16.xpose.msra.mxu0 0
        %1786 = vmatprep.subr.bf16.mxu0 0
        %1787 = vmatpush1.bf16.xpose.msra.mxu0 0
        %1788 = vmatprep.subr.bf16.mxu0 0
        %1789 = vmatpush1.bf16.xpose.msra.mxu0 0
        %1790 = vmatprep.subr.bf16.mxu0 0
        %1791 = vmatpush1.bf16.xpose.msra.mxu0 0
        %1792 = vmatprep.subr.bf16.mxu0 0
        %1793 = vmatpush1.bf16.xpose.msra.mxu0 0
        %1794 = vmatprep.subr.bf16.mxu0 0
        %1795 = vmatpush1.bf16.xpose.msra.mxu0 0
        %1796 = vmatprep.subr.bf16.mxu0 0
        %1797 = vmatpush1.bf16.xpose.msra.mxu0 0
        %1798 = vmatprep.subr.bf16.mxu0 0
        %1799 = vmatpush1.bf16.xpose.msra.mxu0 0
        %1800 = vmatprep.subr.bf16.mxu0 0
        %1801 = vmatpush1.bf16.xpose.msra.mxu0 0
        %1802 = vmatprep.subr.bf16.mxu0 0
        %1803 = vmatpush1.bf16.xpose.msra.mxu0 0
        %1804 = vmatprep.subr.bf16.mxu0 0
        %1805 = vmatpush1.bf16.xpose.msra.mxu0 0
        %1806 = vmatprep.subr.bf16.mxu0 0
        %1807 = vmatpush1.bf16.xpose.msra.mxu0 0
        %1808 = vmatprep.subr.bf16.mxu0 0
        %1809 = vmatpush1.bf16.xpose.msra.mxu0 0
        %1810 = vmatprep.subr.bf16.mxu0 0
        %1811 = vmatpush1.bf16.xpose.msra.mxu0 0
        %1812 = vmatprep.subr.bf16.mxu0 0
        %1813 = vmatpush1.bf16.xpose.msra.mxu0 0
        %1814 = vmatprep.mubr.bf16.mxu0 0
        %1815 = vmatmul.mubr.bf16.gmra.mrb[0].mxu0 %v1777
        %v1816 = vpop.f32.mrb[0].mxu0
        %v1817 = vadd.f32 0.0, %v1816
        %v1818 = vpop.f32.mrb[0].mxu0
        %v1819 = vpop.f32.mrb[0].mxu0
        %v1820 = vadd.f32 0.0, %v1819
        %v1821 = vpop.f32.mrb[0].mxu0
        %1822 = vdwg.mxu0
        %v1823 = vsel %vm1096, %v1766, -inf
        %1824 = vmax.xlane.f32.xlu0 %v1823
        %v1825 = vpop.xlane.xlu0 %1824
        %v1826 = vsel %vm1096, %v1769, -inf
        %1827 = vmax.xlane.f32.xlu0 %v1826
        %v1828 = vpop.xlane.xlu0 %1827
        %v1829 = vsel %vm1096, %v1817, -inf
        %1830 = vmax.xlane.f32.xlu0 %v1829
        %v1831 = vpop.xlane.xlu0 %1830
        %v1832 = vsel %vm1096, %v1820, -inf
        %1833 = vmax.xlane.f32.xlu0 %v1832
        %v1834 = vpop.xlane.xlu0 %1833
        %v1835 = vsub.f32 %v1766, %v1825
        %v1836 = vsub.f32 %v1769, %v1828
        %v1837 = vsub.f32 %v1817, %v1831
        %v1838 = vsub.f32 %v1820, %v1834
        %v1839 = vmul.f32 %v1835, 1.442695
        %v1840 = vpow.pop %v1839
        %v1841 = vmul.f32 %v1836, 1.442695
        %v1842 = vpow.pop %v1841
        %v1843 = vmul.f32 %v1837, 1.442695
        %v1844 = vpow.pop %v1843
        %v1845 = vmul.f32 %v1838, 1.442695
        %v1846 = vpow.pop %v1845
        %v1847 = vsel %vm1096, %v1840, 0.0
        %1848 = vadd.xlane.f32.xlu0 %v1847
        %v1849 = vpop.xlane.xlu0 %1848
        %v1850 = vsel %vm1096, %v1842, 0.0
        %1851 = vadd.xlane.f32.xlu0 %v1850
        %v1852 = vpop.xlane.xlu0 %1851
        %v1853 = vsel %vm1096, %v1844, 0.0
        %1854 = vadd.xlane.f32.xlu0 %v1853
        %v1855 = vpop.xlane.xlu0 %1854
        %v1856 = vsel %vm1096, %v1846, 0.0
        %1857 = vadd.xlane.f32.xlu0 %v1856
        %v1858 = vpop.xlane.xlu0 %1857
        %v1859 = vrcp.pop %v1849
        %v1860 = vrcp.pop %v1852
        %v1861 = vrcp.pop %v1855
        %v1862 = vrcp.pop %v1858
        %v1863 = vmul.f32 %v1840, %v1859
        %v1864 = vmul.f32 %v1842, %v1860
        %v1865 = vmul.f32 %v1844, %v1861
        %v1866 = vmul.f32 %v1846, %v1862
        %v1867 = vpack.c.bf16 %v1864, %v1863
        %v1868 = vpack.c.bf16 %v1866, %v1865
        %1869 = vrot.lane.b32.xlu0 %v999, 32
        %v1870 = vpop.permute.xlu0 %1869
        %v1873 = vsel %vm1096, %v1867, 0
        %1875 = vmatprep.subr.bf16.mxu0 0
        %1876 = vmatpush1.bf16.msra.mxu0 %v1870
        %1877 = vmatprep.subr.bf16.mxu0 0
        %1878 = vmatpush1.bf16.msra.mxu0 0
        %1879 = vmatprep.subr.bf16.mxu0 0
        %1880 = vmatpush1.bf16.msra.mxu0 0
        %1881 = vmatprep.subr.bf16.mxu0 0
        %1882 = vmatpush1.bf16.msra.mxu0 0
        %1883 = vmatprep.subr.bf16.mxu0 0
        %1884 = vmatpush1.bf16.msra.mxu0 0
        %1885 = vmatprep.subr.bf16.mxu0 0
        %1886 = vmatpush1.bf16.msra.mxu0 0
        %1887 = vmatprep.subr.bf16.mxu0 0
        %1888 = vmatpush1.bf16.msra.mxu0 0
        %1889 = vmatprep.subr.bf16.mxu0 0
        %1890 = vmatpush1.bf16.msra.mxu0 0
        %1891 = vmatprep.subr.bf16.mxu0 0
        %1892 = vmatpush1.bf16.msra.mxu0 0
        %1893 = vmatprep.subr.bf16.mxu0 0
        %1894 = vmatpush1.bf16.msra.mxu0 0
        %1895 = vmatprep.subr.bf16.mxu0 0
        %1896 = vmatpush1.bf16.msra.mxu0 0
        %1897 = vmatprep.subr.bf16.mxu0 0
        %1898 = vmatpush1.bf16.msra.mxu0 0
        %1899 = vmatprep.subr.bf16.mxu0 0
        %1900 = vmatpush1.bf16.msra.mxu0 0
        %1901 = vmatprep.subr.bf16.mxu0 0
        %1902 = vmatpush1.bf16.msra.mxu0 0
        %1903 = vmatprep.subr.bf16.mxu0 0
        %1904 = vmatpush1.bf16.msra.mxu0 0
        %1905 = vmatprep.subr.bf16.mxu0 0
        %1906 = vmatpush1.bf16.msra.mxu0 0
        %1907 = vmatprep.mubr.bf16.mxu0 0
        %1908 = vmatmul.mubr.bf16.gmra.mrb[0].mxu0 %v1873
        %v1909 = vpop.f32.mrb[0].mxu0
        %v1910 = vadd.f32 0.0, %v1909
        %v1911 = vpop.f32.mrb[0].mxu0
        %v1912 = vpop.f32.mrb[0].mxu0
        %v1913 = vadd.f32 0.0, %v1912
        %v1914 = vpop.f32.mrb[0].mxu0
        %1915 = vdwg.mxu0
        %1916 = vrot.lane.b32.xlu0 %v1000, 32
        %v1917 = vpop.permute.xlu0 %1916
        %v1920 = vsel %vm1096, %v1868, 0
        %1922 = vmatprep.subr.bf16.mxu0 0
        %1923 = vmatpush1.bf16.msra.mxu0 %v1917
        %1924 = vmatprep.subr.bf16.mxu0 0
        %1925 = vmatpush1.bf16.msra.mxu0 0
        %1926 = vmatprep.subr.bf16.mxu0 0
        %1927 = vmatpush1.bf16.msra.mxu0 0
        %1928 = vmatprep.subr.bf16.mxu0 0
        %1929 = vmatpush1.bf16.msra.mxu0 0
        %1930 = vmatprep.subr.bf16.mxu0 0
        %1931 = vmatpush1.bf16.msra.mxu0 0
        %1932 = vmatprep.subr.bf16.mxu0 0
        %1933 = vmatpush1.bf16.msra.mxu0 0
        %1934 = vmatprep.subr.bf16.mxu0 0
        %1935 = vmatpush1.bf16.msra.mxu0 0
        %1936 = vmatprep.subr.bf16.mxu0 0
        %1937 = vmatpush1.bf16.msra.mxu0 0
        %1938 = vmatprep.subr.bf16.mxu0 0
        %1939 = vmatpush1.bf16.msra.mxu0 0
        %1940 = vmatprep.subr.bf16.mxu0 0
        %1941 = vmatpush1.bf16.msra.mxu0 0
        %1942 = vmatprep.subr.bf16.mxu0 0
        %1943 = vmatpush1.bf16.msra.mxu0 0
        %1944 = vmatprep.subr.bf16.mxu0 0
        %1945 = vmatpush1.bf16.msra.mxu0 0
        %1946 = vmatprep.subr.bf16.mxu0 0
        %1947 = vmatpush1.bf16.msra.mxu0 0
        %1948 = vmatprep.subr.bf16.mxu0 0
        %1949 = vmatpush1.bf16.msra.mxu0 0
        %1950 = vmatprep.subr.bf16.mxu0 0
        %1951 = vmatpush1.bf16.msra.mxu0 0
        %1952 = vmatprep.subr.bf16.mxu0 0
        %1953 = vmatpush1.bf16.msra.mxu0 0
        %1954 = vmatprep.mubr.bf16.mxu0 0
        %1955 = vmatmul.mubr.bf16.gmra.mrb[0].mxu0 %v1920
        %v1956 = vpop.f32.mrb[0].mxu0
        %v1957 = vadd.f32 0.0, %v1956
        %v1958 = vpop.f32.mrb[0].mxu0
        %v1959 = vpop.f32.mrb[0].mxu0
        %v1960 = vadd.f32 0.0, %v1959
        %v1961 = vpop.f32.mrb[0].mxu0
        %1962 = vdwg.mxu0
        %1967 = vrot.lane.b32.xlu0 %v1425, 32
        %v1968 = vpop.permute.xlu0 %1967
        %1969 = vrot.lane.b32.xlu0 %v1428, 32
        %v1970 = vpop.permute.xlu0 %1969
        %1971 = vrot.lane.b32.xlu0 %v1473, 32
        %v1972 = vpop.permute.xlu0 %1971
        %1973 = vrot.lane.b32.xlu0 %v1476, 32
        %v1974 = vpop.permute.xlu0 %1973
        %1983 = vrot.lane.b32.xlu0 %v1668, 64
        %v1984 = vpop.permute.xlu0 %1983
        %1985 = vrot.lane.b32.xlu0 %v1671, 64
        %v1986 = vpop.permute.xlu0 %1985
        %1987 = vrot.lane.b32.xlu0 %v1715, 64
        %v1988 = vpop.permute.xlu0 %1987
        %1989 = vrot.lane.b32.xlu0 %v1718, 64
        %v1990 = vpop.permute.xlu0 %1989
        %1999 = vrot.lane.b32.xlu0 %v1910, 96
        %v2000 = vpop.permute.xlu0 %1999
        %2001 = vrot.lane.b32.xlu0 %v1913, 96
        %v2002 = vpop.permute.xlu0 %2001
        %2003 = vrot.lane.b32.xlu0 %v1957, 96
        %v2004 = vpop.permute.xlu0 %2003
        %2005 = vrot.lane.b32.xlu0 %v1960, 96
        %v2006 = vpop.permute.xlu0 %2005
        %v2011 = vsel %vm1001, %v1181, %v1968
        %v2012 = vsel %vm1001, %v1184, %v1970
        %v2013 = vsel %vm1001, %v1225, %v1972
        %v2014 = vsel %vm1001, %v1228, %v1974
        %vm2015 = vcmask 523264
        %v2016 = vsel %vm2015, %v2011, %v1984
        %v2017 = vsel %vm2015, %v2012, %v1986
        %v2018 = vsel %vm2015, %v2013, %v1988
        %v2019 = vsel %vm2015, %v2014, %v1990
        %vm2020 = vcmask 785408
        %v2021 = vsel %vm2020, %v2016, %v2000
        %v2022 = vsel %vm2020, %v2017, %v2002
        %v2023 = vsel %vm2020, %v2018, %v2004
        %v2024 = vsel %vm2020, %v2019, %v2006
        %v2025 = vpack.c.bf16 %v2022, %v2021
        %v2026 = vpack.c.bf16 %v2024, %v2023
        %2027 = vst [vmem:[#allocation3] sm:$0xff] %v2025
        %2028 = vst [vmem:[#allocation3 + $0x8] sm:$0xff] %v2026
        %v2029 = vld [vmem:[#allocation3] sm:$0xff]
        %v2030 = vld [vmem:[#allocation3 + $0x8] sm:$0xff]
        %v2031 = vld [vmem:[#allocation10] sm:$0xf]
        %v2032 = vld [vmem:[#allocation10 + $0x4] sm:$0xf]
        %v2033 = vld [vmem:[#allocation10 + $0x8] sm:$0xf]
        %v2034 = vld [vmem:[#allocation10 + $0xc] sm:$0xf]
        %v2035 = vld [vmem:[#allocation10 + $0x10] sm:$0xf]
        %v2036 = vld [vmem:[#allocation10 + $0x14] sm:$0xf]
        %v2037 = vld [vmem:[#allocation10 + $0x18] sm:$0xf]
        %v2038 = vld [vmem:[#allocation10 + $0x1c] sm:$0xf]
        %v2039 = vld [vmem:[#allocation10 + $0x20] sm:$0xf]
        %v2040 = vld [vmem:[#allocation10 + $0x24] sm:$0xf]
        %v2041 = vld [vmem:[#allocation10 + $0x28] sm:$0xf]
        %v2042 = vld [vmem:[#allocation10 + $0x2c] sm:$0xf]
        %v2043 = vld [vmem:[#allocation10 + $0x30] sm:$0xf]
        %v2044 = vld [vmem:[#allocation10 + $0x34] sm:$0xf]
        %v2045 = vld [vmem:[#allocation10 + $0x38] sm:$0xf]
        %v2046 = vld [vmem:[#allocation10 + $0x3c] sm:$0xf]
        %v2047 = vld [vmem:[%s6] sm:$0x1]
        %v2049 = vlaneseq
        %v2050 = vshrl.u32 %v2049, 7
        %v2051 = vsub.s32 0, %v2050
        %v2052 = vrot.slane %v2047, %v2051
        %v2070 = vunpack.c.l.b16 %v2031
        %v2071 = vunpack.c.l.b16 %v2032
        %v2072 = vunpack.c.l.b16 %v2033
        %v2073 = vunpack.c.l.b16 %v2034
        %v2074 = vunpack.c.l.b16 %v2035
        %v2075 = vunpack.c.l.b16 %v2036
        %v2076 = vunpack.c.l.b16 %v2037
        %v2077 = vunpack.c.l.b16 %v2038
        %v2078 = vunpack.c.l.b16 %v2039
        %v2079 = vunpack.c.l.b16 %v2040
        %v2080 = vunpack.c.l.b16 %v2041
        %v2081 = vunpack.c.l.b16 %v2042
        %v2082 = vunpack.c.l.b16 %v2043
        %v2083 = vunpack.c.l.b16 %v2044
        %v2084 = vunpack.c.l.b16 %v2045
        %v2085 = vunpack.c.l.b16 %v2046
        %v2086 = vpack.c.b16 %v2071, %v2070
        %v2087 = vpack.c.b16 %v2073, %v2072
        %v2088 = vpack.c.b16 %v2075, %v2074
        %v2089 = vpack.c.b16 %v2077, %v2076
        %v2090 = vpack.c.b16 %v2079, %v2078
        %v2091 = vpack.c.b16 %v2081, %v2080
        %v2092 = vpack.c.b16 %v2083, %v2082
        %v2093 = vpack.c.b16 %v2085, %v2084
        %2102 = vmatprep.subr.bf16.mxu0 0
        %2103 = vmatpush1.bf16.msra.mxu0 %v2086
        %2104 = vmatprep.subr.bf16.mxu0 0
        %2105 = vmatpush1.bf16.msra.mxu0 %v2087
        %2106 = vmatprep.subr.bf16.mxu0 0
        %2107 = vmatpush1.bf16.msra.mxu0 %v2088
        %2108 = vmatprep.subr.bf16.mxu0 0
        %2109 = vmatpush1.bf16.msra.mxu0 %v2089
        %2110 = vmatprep.subr.bf16.mxu0 0
        %2111 = vmatpush1.bf16.msra.mxu0 %v2090
        %2112 = vmatprep.subr.bf16.mxu0 0
        %2113 = vmatpush1.bf16.msra.mxu0 %v2091
        %2114 = vmatprep.subr.bf16.mxu0 0
        %2115 = vmatpush1.bf16.msra.mxu0 %v2092
        %2116 = vmatprep.subr.bf16.mxu0 0
        %2117 = vmatpush1.bf16.msra.mxu0 %v2093
        %2118 = vmatprep.subr.bf16.mxu0 0
        %2119 = vmatpush1.bf16.msra.mxu0 0
        %2120 = vmatprep.subr.bf16.mxu0 0
        %2121 = vmatpush1.bf16.msra.mxu0 0
        %2122 = vmatprep.subr.bf16.mxu0 0
        %2123 = vmatpush1.bf16.msra.mxu0 0
        %2124 = vmatprep.subr.bf16.mxu0 0
        %2125 = vmatpush1.bf16.msra.mxu0 0
        %2126 = vmatprep.subr.bf16.mxu0 0
        %2127 = vmatpush1.bf16.msra.mxu0 0
        %2128 = vmatprep.subr.bf16.mxu0 0
        %2129 = vmatpush1.bf16.msra.mxu0 0
        %2130 = vmatprep.subr.bf16.mxu0 0
        %2131 = vmatpush1.bf16.msra.mxu0 0
        %2132 = vmatprep.subr.bf16.mxu0 0
        %2133 = vmatpush1.bf16.msra.mxu0 0
        %2134 = vmatprep.mubr.bf16.mxu0 0
        %2135 = vmatmul.mubr.bf16.gmra.mrb[0].mxu0 %v2029
        %v2136 = vpop.f32.mrb[0].mxu0
        %v2137 = vadd.f32 %v2052, %v2136
        %v2138 = vpop.f32.mrb[0].mxu0
        %v2139 = vpop.f32.mrb[0].mxu0
        %v2140 = vadd.f32 %v2052, %v2139
        %v2141 = vpop.f32.mrb[0].mxu0
        %2142 = vmatprep.mubr.bf16.mxu0 0
        %2143 = vmatmul.mubr.bf16.gmra.mrb[0].mxu0 %v2030
        %v2144 = vpop.f32.mrb[0].mxu0
        %v2145 = vadd.f32 %v2052, %v2144
        %v2146 = vpop.f32.mrb[0].mxu0
        %v2147 = vpop.f32.mrb[0].mxu0
        %v2148 = vadd.f32 %v2052, %v2147
        %v2149 = vpop.f32.mrb[0].mxu0
        %2150 = vdwg.mxu0
        %v2151 = vadd.f32 %v571, %v2137
        %v2152 = vadd.f32 %v572, %v2140
        %v2153 = vadd.f32 %v573, %v2145
        %v2154 = vadd.f32 %v574, %v2148
        %v2155 = vld [vmem:[%s7] sm:$0x1]
        %v2156 = vld [vmem:[%s8] sm:$0x1]
        %2157 = vadd.xlane.f32.xlu0 %v2151
        %v2158 = vpop.xlane.xlu0 %2157
        %2159 = vadd.xlane.f32.xlu0 %v2152
        %v2160 = vpop.xlane.xlu0 %2159
        %2161 = vadd.xlane.f32.xlu0 %v2153
        %v2162 = vpop.xlane.xlu0 %2161
        %2163 = vadd.xlane.f32.xlu0 %v2154
        %v2164 = vpop.xlane.xlu0 %2163
        %v2165 = vmul.f32 %v2158, %v585
        %v2166 = vmul.f32 %v2160, %v585
        %v2167 = vmul.f32 %v2162, %v585
        %v2168 = vmul.f32 %v2164, %v585
        %v2169 = vsub.f32 %v2151, %v2165
        %v2170 = vsub.f32 %v2152, %v2166
        %v2171 = vsub.f32 %v2153, %v2167
        %v2172 = vsub.f32 %v2154, %v2168
        %v2173 = vmul.f32 %v2169, %v2169
        %v2174 = vmul.f32 %v2170, %v2170
        %v2175 = vmul.f32 %v2171, %v2171
        %v2176 = vmul.f32 %v2172, %v2172
        %2177 = vadd.xlane.f32.xlu0 %v2173
        %v2178 = vpop.xlane.xlu0 %2177
        %2179 = vadd.xlane.f32.xlu0 %v2174
        %v2180 = vpop.xlane.xlu0 %2179
        %2181 = vadd.xlane.f32.xlu0 %v2175
        %v2182 = vpop.xlane.xlu0 %2181
        %2183 = vadd.xlane.f32.xlu0 %v2176
        %v2184 = vpop.xlane.xlu0 %2183
        %v2185 = vmul.f32 %v2178, %v585
        %v2186 = vmul.f32 %v2180, %v585
        %v2187 = vmul.f32 %v2182, %v585
        %v2188 = vmul.f32 %v2184, %v585
        %v2189 = vadd.f32 %v2185, 1e-05
        %v2190 = vadd.f32 %v2186, 1e-05
        %v2191 = vadd.f32 %v2187, 1e-05
        %v2192 = vadd.f32 %v2188, 1e-05
        %v2193 = vrsqrt.pop %v2189
        %v2194 = vrsqrt.pop %v2190
        %v2195 = vrsqrt.pop %v2191
        %v2196 = vrsqrt.pop %v2192
        %v2197 = vmul.f32 %v2169, %v2193
        %v2198 = vmul.f32 %v2170, %v2194
        %v2199 = vmul.f32 %v2171, %v2195
        %v2200 = vmul.f32 %v2172, %v2196
        %v2202 = vlaneseq
        %v2203 = vshrl.u32 %v2202, 7
        %v2204 = vsub.s32 0, %v2203
        %v2205 = vrot.slane %v2155, %v2204
        %v2207 = vmul.f32 %v2197, %v2205
        %v2208 = vmul.f32 %v2198, %v2205
        %v2209 = vmul.f32 %v2199, %v2205
        %v2210 = vmul.f32 %v2200, %v2205
        %v2212 = vlaneseq
        %v2213 = vshrl.u32 %v2212, 7
        %v2214 = vsub.s32 0, %v2213
        %v2215 = vrot.slane %v2156, %v2214
        %v2217 = vadd.f32 %v2207, %v2215
        %v2218 = vadd.f32 %v2208, %v2215
        %v2219 = vadd.f32 %v2209, %v2215
        %v2220 = vadd.f32 %v2210, %v2215
        %v2221 = vpack.c.bf16 %v2218, %v2217
        %v2222 = vpack.c.bf16 %v2220, %v2219
        %v2223 = vld [vmem:[#allocation12] sm:$0xff]
        %v2224 = vld [vmem:[#allocation12 + $0x8] sm:$0xff]
        %v2225 = vld [vmem:[#allocation12 + $0x10] sm:$0xff]
        %v2226 = vld [vmem:[#allocation12 + $0x18] sm:$0xff]
        %v2227 = vld [vmem:[#allocation12 + $0x20] sm:$0xff]
        %v2228 = vld [vmem:[#allocation12 + $0x28] sm:$0xff]
        %v2229 = vld [vmem:[#allocation12 + $0x30] sm:$0xff]
        %v2230 = vld [vmem:[#allocation12 + $0x38] sm:$0xff]
        %v2231 = vld [vmem:[#allocation12 + $0x40] sm:$0xff]
        %v2232 = vld [vmem:[#allocation12 + $0x48] sm:$0xff]
        %v2233 = vld [vmem:[#allocation12 + $0x50] sm:$0xff]
        %v2234 = vld [vmem:[#allocation12 + $0x58] sm:$0xff]
        %v2235 = vld [vmem:[#allocation12 + $0x60] sm:$0xff]
        %v2236 = vld [vmem:[#allocation12 + $0x68] sm:$0xff]
        %v2237 = vld [vmem:[#allocation12 + $0x70] sm:$0xff]
        %v2238 = vld [vmem:[#allocation12 + $0x78] sm:$0xff]
        %v2239 = vld [vmem:[#allocation12 + $0x80] sm:$0xff]
        %v2240 = vld [vmem:[#allocation12 + $0x88] sm:$0xff]
        %v2241 = vld [vmem:[#allocation12 + $0x90] sm:$0xff]
        %v2242 = vld [vmem:[#allocation12 + $0x98] sm:$0xff]
        %v2243 = vld [vmem:[#allocation12 + $0xa0] sm:$0xff]
        %v2244 = vld [vmem:[#allocation12 + $0xa8] sm:$0xff]
        %v2245 = vld [vmem:[#allocation12 + $0xb0] sm:$0xff]
        %v2246 = vld [vmem:[#allocation12 + $0xb8] sm:$0xff]
        %v2247 = vld [vmem:[#allocation12 + $0xc0] sm:$0xff]
        %v2248 = vld [vmem:[#allocation12 + $0xc8] sm:$0xff]
        %v2249 = vld [vmem:[#allocation12 + $0xd0] sm:$0xff]
        %v2250 = vld [vmem:[#allocation12 + $0xd8] sm:$0xff]
        %v2251 = vld [vmem:[#allocation12 + $0xe0] sm:$0xff]
        %v2252 = vld [vmem:[#allocation12 + $0xe8] sm:$0xff]
        %v2253 = vld [vmem:[#allocation12 + $0xf0] sm:$0xff]
        %v2254 = vld [vmem:[#allocation12 + $0xf8] sm:$0xff]
        %v2255 = vld [vmem:[%s10] sm:$0xf]
        %v2257 = vlaneseq
        %v2258 = vshrl.u32 %v2257, 7
        %v2259 = vsub.s32 0, %v2258
        %v2260 = vrot.slane %v2255, %v2259
        %v2261 = vlaneseq
        %v2262 = vshrl.u32 %v2261, 7
        %v2263 = vsub.s32 1, %v2262
        %v2264 = vrot.slane %v2255, %v2263
        %v2265 = vlaneseq
        %v2266 = vshrl.u32 %v2265, 7
        %v2267 = vsub.s32 2, %v2266
        %v2268 = vrot.slane %v2255, %v2267
        %v2269 = vlaneseq
        %v2270 = vshrl.u32 %v2269, 7
        %v2271 = vsub.s32 3, %v2270
        %v2272 = vrot.slane %v2255, %v2271
        %v2309 = vunpack.c.l.b16 %v2223
        %v2310 = vunpack.c.h.b16 %v2223
        %v2311 = vunpack.c.l.b16 %v2224
        %v2312 = vunpack.c.h.b16 %v2224
        %v2313 = vunpack.c.l.b16 %v2225
        %v2314 = vunpack.c.h.b16 %v2225
        %v2315 = vunpack.c.l.b16 %v2226
        %v2316 = vunpack.c.h.b16 %v2226
        %v2317 = vunpack.c.l.b16 %v2227
        %v2318 = vunpack.c.h.b16 %v2227
        %v2319 = vunpack.c.l.b16 %v2228
        %v2320 = vunpack.c.h.b16 %v2228
        %v2321 = vunpack.c.l.b16 %v2229
        %v2322 = vunpack.c.h.b16 %v2229
        %v2323 = vunpack.c.l.b16 %v2230
        %v2324 = vunpack.c.h.b16 %v2230
        %v2325 = vunpack.c.l.b16 %v2231
        %v2326 = vunpack.c.h.b16 %v2231
        %v2327 = vunpack.c.l.b16 %v2232
        %v2328 = vunpack.c.h.b16 %v2232
        %v2329 = vunpack.c.l.b16 %v2233
        %v2330 = vunpack.c.h.b16 %v2233
        %v2331 = vunpack.c.l.b16 %v2234
        %v2332 = vunpack.c.h.b16 %v2234
        %v2333 = vunpack.c.l.b16 %v2235
        %v2334 = vunpack.c.h.b16 %v2235
        %v2335 = vunpack.c.l.b16 %v2236
        %v2336 = vunpack.c.h.b16 %v2236
        %v2337 = vunpack.c.l.b16 %v2237
        %v2338 = vunpack.c.h.b16 %v2237
        %v2339 = vunpack.c.l.b16 %v2238
        %v2340 = vunpack.c.h.b16 %v2238
        %v2341 = vunpack.c.l.b16 %v2239
        %v2342 = vunpack.c.h.b16 %v2239
        %v2343 = vunpack.c.l.b16 %v2240
        %v2344 = vunpack.c.h.b16 %v2240
        %v2345 = vunpack.c.l.b16 %v2241
        %v2346 = vunpack.c.h.b16 %v2241
        %v2347 = vunpack.c.l.b16 %v2242
        %v2348 = vunpack.c.h.b16 %v2242
        %v2349 = vunpack.c.l.b16 %v2243
        %v2350 = vunpack.c.h.b16 %v2243
        %v2351 = vunpack.c.l.b16 %v2244
        %v2352 = vunpack.c.h.b16 %v2244
        %v2353 = vunpack.c.l.b16 %v2245
        %v2354 = vunpack.c.h.b16 %v2245
        %v2355 = vunpack.c.l.b16 %v2246
        %v2356 = vunpack.c.h.b16 %v2246
        %v2357 = vunpack.c.l.b16 %v2247
        %v2358 = vunpack.c.h.b16 %v2247
        %v2359 = vunpack.c.l.b16 %v2248
        %v2360 = vunpack.c.h.b16 %v2248
        %v2361 = vunpack.c.l.b16 %v2249
        %v2362 = vunpack.c.h.b16 %v2249
        %v2363 = vunpack.c.l.b16 %v2250
        %v2364 = vunpack.c.h.b16 %v2250
        %v2365 = vunpack.c.l.b16 %v2251
        %v2366 = vunpack.c.h.b16 %v2251
        %v2367 = vunpack.c.l.b16 %v2252
        %v2368 = vunpack.c.h.b16 %v2252
        %v2369 = vunpack.c.l.b16 %v2253
        %v2370 = vunpack.c.h.b16 %v2253
        %v2371 = vunpack.c.l.b16 %v2254
        %v2372 = vunpack.c.h.b16 %v2254
        %v2373 = vpack.c.b16 %v2313, %v2309
        %v2374 = vpack.c.b16 %v2314, %v2310
        %v2375 = vpack.c.b16 %v2315, %v2311
        %v2376 = vpack.c.b16 %v2316, %v2312
        %v2377 = vpack.c.b16 %v2321, %v2317
        %v2378 = vpack.c.b16 %v2322, %v2318
        %v2379 = vpack.c.b16 %v2323, %v2319
        %v2380 = vpack.c.b16 %v2324, %v2320
        %v2381 = vpack.c.b16 %v2329, %v2325
        %v2382 = vpack.c.b16 %v2330, %v2326
        %v2383 = vpack.c.b16 %v2331, %v2327
        %v2384 = vpack.c.b16 %v2332, %v2328
        %v2385 = vpack.c.b16 %v2337, %v2333
        %v2386 = vpack.c.b16 %v2338, %v2334
        %v2387 = vpack.c.b16 %v2339, %v2335
        %v2388 = vpack.c.b16 %v2340, %v2336
        %v2389 = vpack.c.b16 %v2345, %v2341
        %v2390 = vpack.c.b16 %v2346, %v2342
        %v2391 = vpack.c.b16 %v2347, %v2343
        %v2392 = vpack.c.b16 %v2348, %v2344
        %v2393 = vpack.c.b16 %v2353, %v2349
        %v2394 = vpack.c.b16 %v2354, %v2350
        %v2395 = vpack.c.b16 %v2355, %v2351
        %v2396 = vpack.c.b16 %v2356, %v2352
        %v2397 = vpack.c.b16 %v2361, %v2357
        %v2398 = vpack.c.b16 %v2362, %v2358
        %v2399 = vpack.c.b16 %v2363, %v2359
        %v2400 = vpack.c.b16 %v2364, %v2360
        %v2401 = vpack.c.b16 %v2369, %v2365
        %v2402 = vpack.c.b16 %v2370, %v2366
        %v2403 = vpack.c.b16 %v2371, %v2367
        %v2404 = vpack.c.b16 %v2372, %v2368
        %2437 = vmatprep.subr.bf16.mxu0 %v2374
        %2438 = vmatpush1.bf16.msra.mxu0 %v2373
        %2439 = vmatprep.subr.bf16.mxu0 %v2378
        %2440 = vmatpush1.bf16.msra.mxu0 %v2377
        %2441 = vmatprep.subr.bf16.mxu0 %v2382
        %2442 = vmatpush1.bf16.msra.mxu0 %v2381
        %2443 = vmatprep.subr.bf16.mxu0 %v2386
        %2444 = vmatpush1.bf16.msra.mxu0 %v2385
        %2445 = vmatprep.subr.bf16.mxu0 %v2390
        %2446 = vmatpush1.bf16.msra.mxu0 %v2389
        %2447 = vmatprep.subr.bf16.mxu0 %v2394
        %2448 = vmatpush1.bf16.msra.mxu0 %v2393
        %2449 = vmatprep.subr.bf16.mxu0 %v2398
        %2450 = vmatpush1.bf16.msra.mxu0 %v2397
        %2451 = vmatprep.subr.bf16.mxu0 %v2402
        %2452 = vmatpush1.bf16.msra.mxu0 %v2401
        %2453 = vmatprep.subr.bf16.mxu0 0
        %2454 = vmatpush1.bf16.msra.mxu0 0
        %2455 = vmatprep.subr.bf16.mxu0 0
        %2456 = vmatpush1.bf16.msra.mxu0 0
        %2457 = vmatprep.subr.bf16.mxu0 0
        %2458 = vmatpush1.bf16.msra.mxu0 0
        %2459 = vmatprep.subr.bf16.mxu0 0
        %2460 = vmatpush1.bf16.msra.mxu0 0
        %2461 = vmatprep.subr.bf16.mxu0 0
        %2462 = vmatpush1.bf16.msra.mxu0 0
        %2463 = vmatprep.subr.bf16.mxu0 0
        %2464 = vmatpush1.bf16.msra.mxu0 0
        %2465 = vmatprep.subr.bf16.mxu0 0
        %2466 = vmatpush1.bf16.msra.mxu0 0
        %2467 = vmatprep.subr.bf16.mxu0 0
        %2468 = vmatpush1.bf16.msra.mxu0 0
        %2469 = vmatprep.mubr.bf16.mxu0 0
        %2470 = vmatmul.mubr.bf16.gmra.mrb[0].mxu0 %v2221
        %v2471 = vpop.f32.mrb[0].mxu0
        %v2472 = vadd.f32 %v2260, %v2471
        %v2473 = vpop.f32.mrb[0].mxu0
        %v2474 = vadd.f32 %v2264, %v2473
        %v2475 = vpop.f32.mrb[0].mxu0
        %v2476 = vadd.f32 %v2260, %v2475
        %v2477 = vpop.f32.mrb[0].mxu0
        %v2478 = vadd.f32 %v2264, %v2477
        %2479 = vmatprep.mubr.bf16.mxu0 0
        %2480 = vmatmul.mubr.bf16.gmra.mrb[0].mxu0 %v2222
        %v2481 = vpop.f32.mrb[0].mxu0
        %v2482 = vadd.f32 %v2260, %v2481
        %v2483 = vpop.f32.mrb[0].mxu0
        %v2484 = vadd.f32 %v2264, %v2483
        %v2485 = vpop.f32.mrb[0].mxu0
        %v2486 = vadd.f32 %v2260, %v2485
        %v2487 = vpop.f32.mrb[0].mxu0
        %v2488 = vadd.f32 %v2264, %v2487
        %2489 = vdwg.mxu0
        %2490 = vmatprep.subr.bf16.mxu0 %v2376
        %2491 = vmatpush1.bf16.msra.mxu0 %v2375
        %2492 = vmatprep.subr.bf16.mxu0 %v2380
        %2493 = vmatpush1.bf16.msra.mxu0 %v2379
        %2494 = vmatprep.subr.bf16.mxu0 %v2384
        %2495 = vmatpush1.bf16.msra.mxu0 %v2383
        %2496 = vmatprep.subr.bf16.mxu0 %v2388
        %2497 = vmatpush1.bf16.msra.mxu0 %v2387
        %2498 = vmatprep.subr.bf16.mxu0 %v2392
        %2499 = vmatpush1.bf16.msra.mxu0 %v2391
        %2500 = vmatprep.subr.bf16.mxu0 %v2396
        %2501 = vmatpush1.bf16.msra.mxu0 %v2395
        %2502 = vmatprep.subr.bf16.mxu0 %v2400
        %2503 = vmatpush1.bf16.msra.mxu0 %v2399
        %2504 = vmatprep.subr.bf16.mxu0 %v2404
        %2505 = vmatpush1.bf16.msra.mxu0 %v2403
        %2506 = vmatprep.subr.bf16.mxu0 0
        %2507 = vmatpush1.bf16.msra.mxu0 0
        %2508 = vmatprep.subr.bf16.mxu0 0
        %2509 = vmatpush1.bf16.msra.mxu0 0
        %2510 = vmatprep.subr.bf16.mxu0 0
        %2511 = vmatpush1.bf16.msra.mxu0 0
        %2512 = vmatprep.subr.bf16.mxu0 0
        %2513 = vmatpush1.bf16.msra.mxu0 0
        %2514 = vmatprep.subr.bf16.mxu0 0
        %2515 = vmatpush1.bf16.msra.mxu0 0
        %2516 = vmatprep.subr.bf16.mxu0 0
        %2517 = vmatpush1.bf16.msra.mxu0 0
        %2518 = vmatprep.subr.bf16.mxu0 0
        %2519 = vmatpush1.bf16.msra.mxu0 0
        %2520 = vmatprep.subr.bf16.mxu0 0
        %2521 = vmatpush1.bf16.msra.mxu0 0
        %2522 = vmatprep.mubr.bf16.mxu0 0
        %2523 = vmatmul.mubr.bf16.gmra.mrb[0].mxu0 %v2221
        %v2524 = vpop.f32.mrb[0].mxu0
        %v2525 = vadd.f32 %v2268, %v2524
        %v2526 = vpop.f32.mrb[0].mxu0
        %v2527 = vadd.f32 %v2272, %v2526
        %v2528 = vpop.f32.mrb[0].mxu0
        %v2529 = vadd.f32 %v2268, %v2528
        %v2530 = vpop.f32.mrb[0].mxu0
        %v2531 = vadd.f32 %v2272, %v2530
        %2532 = vmatprep.mubr.bf16.mxu0 0
        %2533 = vmatmul.mubr.bf16.gmra.mrb[0].mxu0 %v2222
        %v2534 = vpop.f32.mrb[0].mxu0
        %v2535 = vadd.f32 %v2268, %v2534
        %v2536 = vpop.f32.mrb[0].mxu0
        %v2537 = vadd.f32 %v2272, %v2536
        %v2538 = vpop.f32.mrb[0].mxu0
        %v2539 = vadd.f32 %v2268, %v2538
        %v2540 = vpop.f32.mrb[0].mxu0
        %v2541 = vadd.f32 %v2272, %v2540
        %2542 = vdwg.mxu0
        %v2543 = vmul.f32 %v2472, 0.5
        %v2544 = vmul.f32 %v2474, 0.5
        %v2545 = vmul.f32 %v2525, 0.5
        %v2546 = vmul.f32 %v2527, 0.5
        %v2547 = vmul.f32 %v2476, 0.5
        %v2548 = vmul.f32 %v2478, 0.5
        %v2549 = vmul.f32 %v2529, 0.5
        %v2550 = vmul.f32 %v2531, 0.5
        %v2551 = vmul.f32 %v2482, 0.5
        %v2552 = vmul.f32 %v2484, 0.5
        %v2553 = vmul.f32 %v2535, 0.5
        %v2554 = vmul.f32 %v2537, 0.5
        %v2555 = vmul.f32 %v2486, 0.5
        %v2556 = vmul.f32 %v2488, 0.5
        %v2557 = vmul.f32 %v2539, 0.5
        %v2558 = vmul.f32 %v2541, 0.5
        %v2559 = vmul.f32 %v2472, 0.70710677
        %v2560 = vmul.f32 %v2474, 0.70710677
        %v2561 = vmul.f32 %v2525, 0.70710677
        %v2562 = vmul.f32 %v2527, 0.70710677
        %v2563 = vmul.f32 %v2476, 0.70710677
        %v2564 = vmul.f32 %v2478, 0.70710677
        %v2565 = vmul.f32 %v2529, 0.70710677
        %v2566 = vmul.f32 %v2531, 0.70710677
        %v2567 = vmul.f32 %v2482, 0.70710677
        %v2568 = vmul.f32 %v2484, 0.70710677
        %v2569 = vmul.f32 %v2535, 0.70710677
        %v2570 = vmul.f32 %v2537, 0.70710677
        %v2571 = vmul.f32 %v2486, 0.70710677
        %v2572 = vmul.f32 %v2488, 0.70710677
        %v2573 = vmul.f32 %v2539, 0.70710677
        %v2574 = vmul.f32 %v2541, 0.70710677
        %v2575 = verf.f32.pop %v2559
        %v2576 = verf.f32.pop %v2560
        %v2577 = verf.f32.pop %v2561
        %v2578 = verf.f32.pop %v2562
        %v2579 = verf.f32.pop %v2563
        %v2580 = verf.f32.pop %v2564
        %v2581 = verf.f32.pop %v2565
        %v2582 = verf.f32.pop %v2566
        %v2583 = verf.f32.pop %v2567
        %v2584 = verf.f32.pop %v2568
        %v2585 = verf.f32.pop %v2569
        %v2586 = verf.f32.pop %v2570
        %v2587 = verf.f32.pop %v2571
        %v2588 = verf.f32.pop %v2572
        %v2589 = verf.f32.pop %v2573
        %v2590 = verf.f32.pop %v2574
        %v2591 = vadd.f32 %v2575, 1.0
        %v2592 = vadd.f32 %v2576, 1.0
        %v2593 = vadd.f32 %v2577, 1.0
        %v2594 = vadd.f32 %v2578, 1.0
        %v2595 = vadd.f32 %v2579, 1.0
        %v2596 = vadd.f32 %v2580, 1.0
        %v2597 = vadd.f32 %v2581, 1.0
        %v2598 = vadd.f32 %v2582, 1.0
        %v2599 = vadd.f32 %v2583, 1.0
        %v2600 = vadd.f32 %v2584, 1.0
        %v2601 = vadd.f32 %v2585, 1.0
        %v2602 = vadd.f32 %v2586, 1.0
        %v2603 = vadd.f32 %v2587, 1.0
        %v2604 = vadd.f32 %v2588, 1.0
        %v2605 = vadd.f32 %v2589, 1.0
        %v2606 = vadd.f32 %v2590, 1.0
        %v2607 = vmul.f32 %v2543, %v2591
        %v2608 = vmul.f32 %v2544, %v2592
        %v2609 = vmul.f32 %v2545, %v2593
        %v2610 = vmul.f32 %v2546, %v2594
        %v2611 = vmul.f32 %v2547, %v2595
        %v2612 = vmul.f32 %v2548, %v2596
        %v2613 = vmul.f32 %v2549, %v2597
        %v2614 = vmul.f32 %v2550, %v2598
        %v2615 = vmul.f32 %v2551, %v2599
        %v2616 = vmul.f32 %v2552, %v2600
        %v2617 = vmul.f32 %v2553, %v2601
        %v2618 = vmul.f32 %v2554, %v2602
        %v2619 = vmul.f32 %v2555, %v2603
        %v2620 = vmul.f32 %v2556, %v2604
        %v2621 = vmul.f32 %v2557, %v2605
        %v2622 = vmul.f32 %v2558, %v2606
        %v2623 = vpack.c.bf16 %v2611, %v2607
        %v2624 = vpack.c.bf16 %v2612, %v2608
        %v2625 = vpack.c.bf16 %v2613, %v2609
        %v2626 = vpack.c.bf16 %v2614, %v2610
        %v2627 = vpack.c.bf16 %v2619, %v2615
        %v2628 = vpack.c.bf16 %v2620, %v2616
        %v2629 = vpack.c.bf16 %v2621, %v2617
        %v2630 = vpack.c.bf16 %v2622, %v2618
        %v2631 = vld [vmem:[#allocation13] sm:$0xf]
        %v2632 = vld [vmem:[#allocation13 + $0x4] sm:$0xf]
        %v2633 = vld [vmem:[#allocation13 + $0x8] sm:$0xf]
        %v2634 = vld [vmem:[#allocation13 + $0xc] sm:$0xf]
        %v2635 = vld [vmem:[#allocation13 + $0x10] sm:$0xf]
        %v2636 = vld [vmem:[#allocation13 + $0x14] sm:$0xf]
        %v2637 = vld [vmem:[#allocation13 + $0x18] sm:$0xf]
        %v2638 = vld [vmem:[#allocation13 + $0x1c] sm:$0xf]
        %v2639 = vld [vmem:[#allocation13 + $0x20] sm:$0xf]
        %v2640 = vld [vmem:[#allocation13 + $0x24] sm:$0xf]
        %v2641 = vld [vmem:[#allocation13 + $0x28] sm:$0xf]
        %v2642 = vld [vmem:[#allocation13 + $0x2c] sm:$0xf]
        %v2643 = vld [vmem:[#allocation13 + $0x30] sm:$0xf]
        %v2644 = vld [vmem:[#allocation13 + $0x34] sm:$0xf]
        %v2645 = vld [vmem:[#allocation13 + $0x38] sm:$0xf]
        %v2646 = vld [vmem:[#allocation13 + $0x3c] sm:$0xf]
        %v2647 = vld [vmem:[#allocation13 + $0x40] sm:$0xf]
        %v2648 = vld [vmem:[#allocation13 + $0x44] sm:$0xf]
        %v2649 = vld [vmem:[#allocation13 + $0x48] sm:$0xf]
        %v2650 = vld [vmem:[#allocation13 + $0x4c] sm:$0xf]
        %v2651 = vld [vmem:[#allocation13 + $0x50] sm:$0xf]
        %v2652 = vld [vmem:[#allocation13 + $0x54] sm:$0xf]
        %v2653 = vld [vmem:[#allocation13 + $0x58] sm:$0xf]
        %v2654 = vld [vmem:[#allocation13 + $0x5c] sm:$0xf]
        %v2655 = vld [vmem:[#allocation13 + $0x60] sm:$0xf]
        %v2656 = vld [vmem:[#allocation13 + $0x64] sm:$0xf]
        %v2657 = vld [vmem:[#allocation13 + $0x68] sm:$0xf]
        %v2658 = vld [vmem:[#allocation13 + $0x6c] sm:$0xf]
        %v2659 = vld [vmem:[#allocation13 + $0x70] sm:$0xf]
        %v2660 = vld [vmem:[#allocation13 + $0x74] sm:$0xf]
        %v2661 = vld [vmem:[#allocation13 + $0x78] sm:$0xf]
        %v2662 = vld [vmem:[#allocation13 + $0x7c] sm:$0xf]
        %v2663 = vld [vmem:[#allocation13 + $0x80] sm:$0xf]
        %v2664 = vld [vmem:[#allocation13 + $0x84] sm:$0xf]
        %v2665 = vld [vmem:[#allocation13 + $0x88] sm:$0xf]
        %v2666 = vld [vmem:[#allocation13 + $0x8c] sm:$0xf]
        %v2667 = vld [vmem:[#allocation13 + $0x90] sm:$0xf]
        %v2668 = vld [vmem:[#allocation13 + $0x94] sm:$0xf]
        %v2669 = vld [vmem:[#allocation13 + $0x98] sm:$0xf]
        %v2670 = vld [vmem:[#allocation13 + $0x9c] sm:$0xf]
        %v2671 = vld [vmem:[#allocation13 + $0xa0] sm:$0xf]
        %v2672 = vld [vmem:[#allocation13 + $0xa4] sm:$0xf]
        %v2673 = vld [vmem:[#allocation13 + $0xa8] sm:$0xf]
        %v2674 = vld [vmem:[#allocation13 + $0xac] sm:$0xf]
        %v2675 = vld [vmem:[#allocation13 + $0xb0] sm:$0xf]
        %v2676 = vld [vmem:[#allocation13 + $0xb4] sm:$0xf]
        %v2677 = vld [vmem:[#allocation13 + $0xb8] sm:$0xf]
        %v2678 = vld [vmem:[#allocation13 + $0xbc] sm:$0xf]
        %v2679 = vld [vmem:[#allocation13 + $0xc0] sm:$0xf]
        %v2680 = vld [vmem:[#allocation13 + $0xc4] sm:$0xf]
        %v2681 = vld [vmem:[#allocation13 + $0xc8] sm:$0xf]
        %v2682 = vld [vmem:[#allocation13 + $0xcc] sm:$0xf]
        %v2683 = vld [vmem:[#allocation13 + $0xd0] sm:$0xf]
        %v2684 = vld [vmem:[#allocation13 + $0xd4] sm:$0xf]
        %v2685 = vld [vmem:[#allocation13 + $0xd8] sm:$0xf]
        %v2686 = vld [vmem:[#allocation13 + $0xdc] sm:$0xf]
        %v2687 = vld [vmem:[#allocation13 + $0xe0] sm:$0xf]
        %v2688 = vld [vmem:[#allocation13 + $0xe4] sm:$0xf]
        %v2689 = vld [vmem:[#allocation13 + $0xe8] sm:$0xf]
        %v2690 = vld [vmem:[#allocation13 + $0xec] sm:$0xf]
        %v2691 = vld [vmem:[#allocation13 + $0xf0] sm:$0xf]
        %v2692 = vld [vmem:[#allocation13 + $0xf4] sm:$0xf]
        %v2693 = vld [vmem:[#allocation13 + $0xf8] sm:$0xf]
        %v2694 = vld [vmem:[#allocation13 + $0xfc] sm:$0xf]
        %v2759 = vunpack.c.l.b16 %v2631
        %v2760 = vunpack.c.l.b16 %v2632
        %v2761 = vunpack.c.l.b16 %v2633
        %v2762 = vunpack.c.l.b16 %v2634
        %v2763 = vunpack.c.l.b16 %v2635
        %v2764 = vunpack.c.l.b16 %v2636
        %v2765 = vunpack.c.l.b16 %v2637
        %v2766 = vunpack.c.l.b16 %v2638
        %v2767 = vunpack.c.l.b16 %v2639
        %v2768 = vunpack.c.l.b16 %v2640
        %v2769 = vunpack.c.l.b16 %v2641
        %v2770 = vunpack.c.l.b16 %v2642
        %v2771 = vunpack.c.l.b16 %v2643
        %v2772 = vunpack.c.l.b16 %v2644
        %v2773 = vunpack.c.l.b16 %v2645
        %v2774 = vunpack.c.l.b16 %v2646
        %v2775 = vunpack.c.l.b16 %v2647
        %v2776 = vunpack.c.l.b16 %v2648
        %v2777 = vunpack.c.l.b16 %v2649
        %v2778 = vunpack.c.l.b16 %v2650
        %v2779 = vunpack.c.l.b16 %v2651
        %v2780 = vunpack.c.l.b16 %v2652
        %v2781 = vunpack.c.l.b16 %v2653
        %v2782 = vunpack.c.l.b16 %v2654
        %v2783 = vunpack.c.l.b16 %v2655
        %v2784 = vunpack.c.l.b16 %v2656
        %v2785 = vunpack.c.l.b16 %v2657
        %v2786 = vunpack.c.l.b16 %v2658
        %v2787 = vunpack.c.l.b16 %v2659
        %v2788 = vunpack.c.l.b16 %v2660
        %v2789 = vunpack.c.l.b16 %v2661
        %v2790 = vunpack.c.l.b16 %v2662
        %v2791 = vunpack.c.l.b16 %v2663
        %v2792 = vunpack.c.l.b16 %v2664
        %v2793 = vunpack.c.l.b16 %v2665
        %v2794 = vunpack.c.l.b16 %v2666
        %v2795 = vunpack.c.l.b16 %v2667
        %v2796 = vunpack.c.l.b16 %v2668
        %v2797 = vunpack.c.l.b16 %v2669
        %v2798 = vunpack.c.l.b16 %v2670
        %v2799 = vunpack.c.l.b16 %v2671
        %v2800 = vunpack.c.l.b16 %v2672
        %v2801 = vunpack.c.l.b16 %v2673
        %v2802 = vunpack.c.l.b16 %v2674
        %v2803 = vunpack.c.l.b16 %v2675
        %v2804 = vunpack.c.l.b16 %v2676
        %v2805 = vunpack.c.l.b16 %v2677
        %v2806 = vunpack.c.l.b16 %v2678
        %v2807 = vunpack.c.l.b16 %v2679
        %v2808 = vunpack.c.l.b16 %v2680
        %v2809 = vunpack.c.l.b16 %v2681
        %v2810 = vunpack.c.l.b16 %v2682
        %v2811 = vunpack.c.l.b16 %v2683
        %v2812 = vunpack.c.l.b16 %v2684
        %v2813 = vunpack.c.l.b16 %v2685
        %v2814 = vunpack.c.l.b16 %v2686
        %v2815 = vunpack.c.l.b16 %v2687
        %v2816 = vunpack.c.l.b16 %v2688
        %v2817 = vunpack.c.l.b16 %v2689
        %v2818 = vunpack.c.l.b16 %v2690
        %v2819 = vunpack.c.l.b16 %v2691
        %v2820 = vunpack.c.l.b16 %v2692
        %v2821 = vunpack.c.l.b16 %v2693
        %v2822 = vunpack.c.l.b16 %v2694
        %v2823 = vpack.c.b16 %v2760, %v2759
        %v2824 = vpack.c.b16 %v2762, %v2761
        %v2825 = vpack.c.b16 %v2764, %v2763
        %v2826 = vpack.c.b16 %v2766, %v2765
        %v2827 = vpack.c.b16 %v2768, %v2767
        %v2828 = vpack.c.b16 %v2770, %v2769
        %v2829 = vpack.c.b16 %v2772, %v2771
        %v2830 = vpack.c.b16 %v2774, %v2773
        %v2831 = vpack.c.b16 %v2776, %v2775
        %v2832 = vpack.c.b16 %v2778, %v2777
        %v2833 = vpack.c.b16 %v2780, %v2779
        %v2834 = vpack.c.b16 %v2782, %v2781
        %v2835 = vpack.c.b16 %v2784, %v2783
        %v2836 = vpack.c.b16 %v2786, %v2785
        %v2837 = vpack.c.b16 %v2788, %v2787
        %v2838 = vpack.c.b16 %v2790, %v2789
        %v2839 = vpack.c.b16 %v2792, %v2791
        %v2840 = vpack.c.b16 %v2794, %v2793
        %v2841 = vpack.c.b16 %v2796, %v2795
        %v2842 = vpack.c.b16 %v2798, %v2797
        %v2843 = vpack.c.b16 %v2800, %v2799
        %v2844 = vpack.c.b16 %v2802, %v2801
        %v2845 = vpack.c.b16 %v2804, %v2803
        %v2846 = vpack.c.b16 %v2806, %v2805
        %v2847 = vpack.c.b16 %v2808, %v2807
        %v2848 = vpack.c.b16 %v2810, %v2809
        %v2849 = vpack.c.b16 %v2812, %v2811
        %v2850 = vpack.c.b16 %v2814, %v2813
        %v2851 = vpack.c.b16 %v2816, %v2815
        %v2852 = vpack.c.b16 %v2818, %v2817
        %v2853 = vpack.c.b16 %v2820, %v2819
        %v2854 = vpack.c.b16 %v2822, %v2821
        %2887 = vmatprep.subr.bf16.mxu0 0
        %2888 = vmatpush1.bf16.msra.mxu0 %v2823
        %2889 = vmatprep.subr.bf16.mxu0 0
        %2890 = vmatpush1.bf16.msra.mxu0 %v2824
        %2891 = vmatprep.subr.bf16.mxu0 0
        %2892 = vmatpush1.bf16.msra.mxu0 %v2825
        %2893 = vmatprep.subr.bf16.mxu0 0
        %2894 = vmatpush1.bf16.msra.mxu0 %v2826
        %2895 = vmatprep.subr.bf16.mxu0 0
        %2896 = vmatpush1.bf16.msra.mxu0 %v2827
        %2897 = vmatprep.subr.bf16.mxu0 0
        %2898 = vmatpush1.bf16.msra.mxu0 %v2828
        %2899 = vmatprep.subr.bf16.mxu0 0
        %2900 = vmatpush1.bf16.msra.mxu0 %v2829
        %2901 = vmatprep.subr.bf16.mxu0 0
        %2902 = vmatpush1.bf16.msra.mxu0 %v2830
        %2903 = vmatprep.subr.bf16.mxu0 0
        %2904 = vmatpush1.bf16.msra.mxu0 %v2831
        %2905 = vmatprep.subr.bf16.mxu0 0
        %2906 = vmatpush1.bf16.msra.mxu0 %v2832
        %2907 = vmatprep.subr.bf16.mxu0 0
        %2908 = vmatpush1.bf16.msra.mxu0 %v2833
        %2909 = vmatprep.subr.bf16.mxu0 0
        %2910 = vmatpush1.bf16.msra.mxu0 %v2834
        %2911 = vmatprep.subr.bf16.mxu0 0
        %2912 = vmatpush1.bf16.msra.mxu0 %v2835
        %2913 = vmatprep.subr.bf16.mxu0 0
        %2914 = vmatpush1.bf16.msra.mxu0 %v2836
        %2915 = vmatprep.subr.bf16.mxu0 0
        %2916 = vmatpush1.bf16.msra.mxu0 %v2837
        %2917 = vmatprep.subr.bf16.mxu0 0
        %2918 = vmatpush1.bf16.msra.mxu0 %v2838
        %2919 = vmatprep.mubr.bf16.mxu0 %v2624
        %2920 = vmatmul.mubr.bf16.gmra.mrb[0].mxu0 %v2623
        %v2921 = vpop.f32.mrb[0].mxu0
        %v2922 = vadd.f32 0.0, %v2921
        %v2923 = vpop.f32.mrb[0].mxu0
        %v2924 = vpop.f32.mrb[0].mxu0
        %v2925 = vadd.f32 0.0, %v2924
        %v2926 = vpop.f32.mrb[0].mxu0
        %2927 = vmatprep.mubr.bf16.mxu0 %v2628
        %2928 = vmatmul.mubr.bf16.gmra.mrb[0].mxu0 %v2627
        %v2929 = vpop.f32.mrb[0].mxu0
        %v2930 = vadd.f32 0.0, %v2929
        %v2931 = vpop.f32.mrb[0].mxu0
        %v2932 = vpop.f32.mrb[0].mxu0
        %v2933 = vadd.f32 0.0, %v2932
        %v2934 = vpop.f32.mrb[0].mxu0
        %2935 = vdwg.mxu0
        %2936 = vmatprep.subr.bf16.mxu0 0
        %2937 = vmatpush1.bf16.msra.mxu0 %v2839
        %2938 = vmatprep.subr.bf16.mxu0 0
        %2939 = vmatpush1.bf16.msra.mxu0 %v2840
        %2940 = vmatprep.subr.bf16.mxu0 0
        %2941 = vmatpush1.bf16.msra.mxu0 %v2841
        %2942 = vmatprep.subr.bf16.mxu0 0
        %2943 = vmatpush1.bf16.msra.mxu0 %v2842
        %2944 = vmatprep.subr.bf16.mxu0 0
        %2945 = vmatpush1.bf16.msra.mxu0 %v2843
        %2946 = vmatprep.subr.bf16.mxu0 0
        %2947 = vmatpush1.bf16.msra.mxu0 %v2844
        %2948 = vmatprep.subr.bf16.mxu0 0
        %2949 = vmatpush1.bf16.msra.mxu0 %v2845
        %2950 = vmatprep.subr.bf16.mxu0 0
        %2951 = vmatpush1.bf16.msra.mxu0 %v2846
        %2952 = vmatprep.subr.bf16.mxu0 0
        %2953 = vmatpush1.bf16.msra.mxu0 %v2847
        %2954 = vmatprep.subr.bf16.mxu0 0
        %2955 = vmatpush1.bf16.msra.mxu0 %v2848
        %2956 = vmatprep.subr.bf16.mxu0 0
        %2957 = vmatpush1.bf16.msra.mxu0 %v2849
        %2958 = vmatprep.subr.bf16.mxu0 0
        %2959 = vmatpush1.bf16.msra.mxu0 %v2850
        %2960 = vmatprep.subr.bf16.mxu0 0
        %2961 = vmatpush1.bf16.msra.mxu0 %v2851
        %2962 = vmatprep.subr.bf16.mxu0 0
        %2963 = vmatpush1.bf16.msra.mxu0 %v2852
        %2964 = vmatprep.subr.bf16.mxu0 0
        %2965 = vmatpush1.bf16.msra.mxu0 %v2853
        %2966 = vmatprep.subr.bf16.mxu0 0
        %2967 = vmatpush1.bf16.msra.mxu0 %v2854
        %2968 = vmatprep.mubr.bf16.mxu0 %v2626
        %2969 = vmatmul.mubr.bf16.gmra.mrb[0].mxu0 %v2625
        %v2970 = vpop.f32.mrb[0].mxu0
        %v2971 = vadd.f32 %v2922, %v2970
        %v2972 = vpop.f32.mrb[0].mxu0
        %v2973 = vpop.f32.mrb[0].mxu0
        %v2974 = vadd.f32 %v2925, %v2973
        %v2975 = vpop.f32.mrb[0].mxu0
        %2976 = vmatprep.mubr.bf16.mxu0 %v2630
        %2977 = vmatmul.mubr.bf16.gmra.mrb[0].mxu0 %v2629
        %v2978 = vpop.f32.mrb[0].mxu0
        %v2979 = vadd.f32 %v2930, %v2978
        %v2980 = vpop.f32.mrb[0].mxu0
        %v2981 = vpop.f32.mrb[0].mxu0
        %v2982 = vadd.f32 %v2933, %v2981
        %v2983 = vpop.f32.mrb[0].mxu0
        %2984 = vdwg.mxu0
        %v2985 = vadd.f32 %v2151, %v2971
        %v2986 = vadd.f32 %v2152, %v2974
        %v2987 = vadd.f32 %v2153, %v2979
        %v2988 = vadd.f32 %v2154, %v2982
        %v2989 = vld [vmem:[%s12] sm:$0x1]
        %v2991 = vlaneseq
        %v2992 = vshrl.u32 %v2991, 7
        %v2993 = vsub.s32 0, %v2992
        %v2994 = vrot.slane %v2989, %v2993
        %v2996 = vadd.f32 %v2985, %v2994
        %v2997 = vadd.f32 %v2986, %v2994
        %v2998 = vadd.f32 %v2987, %v2994
        %v2999 = vadd.f32 %v2988, %v2994
        %3000 = vst [vmem:[%s558] sm:$0xff] %v2996
        %3001 = vst [vmem:[%s558 + $0x8] sm:$0xff] %v2997
        %3002 = vst [vmem:[%s558 + $0x10] sm:$0xff] %v2998
        %3003 = vst [vmem:[%s558 + $0x18] sm:$0xff] %v2999
        %s3004 = sand.u32 %s326, 1
        %s3005 = scalar_lea.sflag [#allocation6], %s3004
        %s3006 = sand.u32 %s326, 1
        %s3007 = smul.addr %s3006, 32
        %s3008 = scalar_lea.vmem [#allocation15], %s3007
        // Predicated region
        $region97: #{tpu_custom_call.1} parent=71 // pred_check
          %p3009 = pneg %p336
        $region98: #{tpu_custom_call.1} parent=71 // pred_check_branch
          %3011 = sbr.rel (%p3009) target = $region100
        $region99: #{tpu_custom_call.1} parent=71 // pred_region
          %s3012 = smul.u32 2, %s35
          %s3014 = ssub.s32 512, 512
          %3015 = vsyncadd %s3005, %s3014
          %s3016 = smul.addr %s3012, 2
          %s3017 = smul.addr %s3016, 128
          %s3018 = scalar_lea.hbm %s13, %s3017
          %s3019 = sshll.u32 %s3008, 4
          %s3020 = int_to_ptr.vmem [resolvable:$true] %s3019
          %3025 = dma.vmem_to_hbm [thread:$0]  %s3020, 512, %s3018, %s3005, 128, 128, 8
        $region100: #{tpu_custom_call.1} parent=71 // pred_fallthru
          _
      $region72: #{tpu_custom_call.1} parent=5 // pred_fallthru
        _
      %p3026 = scmp.le.s32.totalorder 2, %s30
      // Predicated region
      $region101: #{tpu_custom_call.1} parent=5 // pred_check
        %p3027 = pneg %p3026
      $region102: #{tpu_custom_call.1} parent=5 // pred_check_branch
        %3029 = sbr.rel (%p3027) target = $region104
      $region103: #{tpu_custom_call.1} parent=5 // pred_region
        %s3030 = ssub.s32 %s30, 2
        // Predicated region
        $region105: #{tpu_custom_call.1} parent=103 // pred_check
          %p3031 = pneg %p342
        $region106: #{tpu_custom_call.1} parent=103 // pred_check_branch
          %3033 = sbr.rel (%p3031) target = $region108
        $region107: #{tpu_custom_call.1} parent=103 // pred_region
          %s3034 = sand.u32 %s327, 1
          %s3035 = scalar_lea.sflag [#allocation6], %s3034
          %s3036 = sand.u32 %s327, 1
          %s3037 = smul.addr %s3036, 32
          %s3038 = scalar_lea.vmem [#allocation15], %s3037
          %3039 = dma.done %s3035, 512
        $region108: #{tpu_custom_call.1} parent=103 // pred_fallthru
          _
      $region104: #{tpu_custom_call.1} parent=5 // pred_fallthru
        _
    $region6: #{tpu_custom_call.1} parent=1 // loop_footer
      %s34 = sadd.s32 1, %s30
    $region7: #{tpu_custom_call.1} parent=1 // loop_footer_branch
      %29 = sbr.rel target = $region3
    $region8: #{tpu_custom_call.1} parent=1 // loop_exit
      _
    %3040 = vsyncpa [#allocation5], 1
    %s3041 = scalar_lea.sflag [#allocation5], 1
    %3042 = vsyncpa %s3041, 1
    %3043 = vsyncpa [#allocation8], 1
    %s3044 = scalar_lea.sflag [#allocation8], 1
    %3045 = vsyncpa %s3044, 1
    %3046 = vsyncpa [#allocation11], 1
    %3047 = vsyncpa [#allocation14], 1
    %3048 = vsyncpa [#allocation6], 1
    %s3049 = scalar_lea.sflag [#allocation6], 1
    %3050 = vsyncpa %s3049, 1

// kernel: tpu_custom_call.1
$region0: #{tpu_custom_call.1}
  #allocation0 [shape = 'u32[]', space=smem, size = 0x4, offset = 0x4, fixed_abs, tag = 'smem constant byte address 0x4 - core index']
  #allocation1 [shape = 'u32[144,128]{1,0:T(1,128)}', space=vmem, size = 0x12000, scoped, tag = 'internal scratch']
  #allocation2 [shape = 'bf16[32,384]{1,0:T(16,128)(2,1)}', space=vmem, size = 0x6000, scoped, tag = 'scratch operand']
  #allocation3 [shape = 'bf16[32,128]{1,0:T(16,128)(2,1)}', space=vmem, size = 0x2000, scoped, tag = 'scratch operand']
  %s0 = inlined_call_operand.hbm [shape: f32[4,16,128], index: 0, kind: input, shape index: {}]
  %s1 = inlined_call_operand.hbm [shape: f32[4,16,128], index: 1, kind: input, shape index: {}]
  %s2 = inlined_call_operand.vmem [shape: f32[1,128], index: 2, kind: input, shape index: {}]
  %s3 = inlined_call_operand.vmem [shape: f32[1,128], index: 3, kind: input, shape index: {}]
  %s4 = inlined_call_operand.hbm [shape: bf16[128,384], index: 4, kind: input, shape index: {}]
  %s5 = inlined_call_operand.hbm [shape: bf16[128,128], index: 5, kind: input, shape index: {}]
  %s6 = inlined_call_operand.vmem [shape: f32[1,128], index: 6, kind: input, shape index: {}]
  %s7 = inlined_call_operand.vmem [shape: f32[1,128], index: 7, kind: input, shape index: {}]
  %s8 = inlined_call_operand.vmem [shape: f32[1,128], index: 8, kind: input, shape index: {}]
  %s9 = inlined_call_operand.hbm [shape: bf16[128,512], index: 9, kind: input, shape index: {}]
  %s10 = inlined_call_operand.vmem [shape: f32[1,512], index: 10, kind: input, shape index: {}]
  %s11 = inlined_call_operand.hbm [shape: bf16[512,128], index: 11, kind: input, shape index: {}]
  %s12 = inlined_call_operand.vmem [shape: f32[1,128], index: 12, kind: input, shape index: {}]
  %s13 = inlined_call_operand.hbm [shape: f32[4,16,128], index: 13, kind: output, shape index: {}]
  %s14 = sld [smem:[#allocation0]]
  $region109: #{tpu_custom_call.1} parent=0
    _
  %s16 = ssub.s32 1, %s14
  %s17 = scalar_select 0, %s16, %s14
  $region1: #{tpu_custom_call.1} parent=0
    #allocation4 [shape = 'u8[32768]{0}', space=vmem, size = 0x8000, scoped, tag = 'input window, operand 0']
    #allocation5 [shape = 's32[2]{0}', space=sflag, size = 0x8, scoped, tag = 'scoped memory for tpu_custom_call.1']
    #allocation6 [shape = 's32[2]{0}', space=sflag, size = 0x8, scoped, tag = 'scoped memory for tpu_custom_call.1']
    #allocation7 [shape = 'u8[32768]{0}', space=vmem, size = 0x8000, scoped, tag = 'input window, operand 1']
    #allocation8 [shape = 's32[2]{0}', space=sflag, size = 0x8, scoped, tag = 'scoped memory for tpu_custom_call.1']
    #allocation9 [shape = 'u8[98304]{0}', space=vmem, size = 0x18000, scoped, tag = 'input window, operand 4, single buffered']
    #allocation10 [shape = 'u8[32768]{0}', space=vmem, size = 0x8000, scoped, tag = 'input window, operand 5, single buffered']
    #allocation11 [shape = 's32[1]{0}', space=sflag, size = 0x4, scoped, tag = 'scoped memory for tpu_custom_call.1']
    #allocation12 [shape = 'u8[131072]{0}', space=vmem, size = 0x20000, scoped, tag = 'input window, operand 9, single buffered']
    #allocation13 [shape = 'u8[131072]{0}', space=vmem, size = 0x20000, scoped, tag = 'input window, operand 11, single buffered']
    #allocation14 [shape = 's32[1]{0}', space=sflag, size = 0x4, scoped, tag = 'scoped memory for tpu_custom_call.1']
    #allocation15 [shape = 'u8[32768]{0}', space=vmem, size = 0x8000, scoped, tag = 'output window, operand 0']
    %18 = vsyncpa [#allocation5], 0
    %s19 = scalar_lea.sflag [#allocation5], 1
    %20 = vsyncpa %s19, 0
    %21 = vsyncpa [#allocation8], 0
    %s22 = scalar_lea.sflag [#allocation8], 1
    %23 = vsyncpa %s22, 0
    %24 = vsyncpa [#allocation11], 0
    %25 = vsyncpa [#allocation14], 0
    %26 = vsyncpa [#allocation6], 0
    %s27 = scalar_lea.sflag [#allocation6], 1
    %28 = vsyncpa %s27, 0
    loop: start=0, step=1, limit=4
    $region2: #{tpu_custom_call.1} parent=1 // loop_pre_header
      _
    $region3: #{tpu_custom_call.1} parent=1 // loop_header
      %s30 = sphi 0, %s34
      %p31 = scmp.ge.s32.totalorder %s30, 4
      %s40 = sphi 0, %s42
      %s43 = sphi 0, %s40
      %s44 = sphi 0, %s43
      %s60 = sphi 0, %s44
      %s66 = sphi 0, %s68
      %s69 = sphi 0, %s66
      %s70 = sphi 0, %s69
      %s86 = sphi 0, %s70
      %s90 = sphi 0, %s90
      %s92 = sphi 0, %s90
      %s93 = sphi 0, %s92
      %s107 = sphi 0, %s93
      %s111 = sphi 0, %s111
      %s113 = sphi 0, %s111
      %s114 = sphi 0, %s113
      %s128 = sphi 0, %s114
      %s132 = sphi 0, %s132
      %s134 = sphi 0, %s132
      %s135 = sphi 0, %s134
      %s149 = sphi 0, %s135
      %s153 = sphi 0, %s153
      %s155 = sphi 0, %s153
      %s156 = sphi 0, %s155
      %s170 = sphi 0, %s156
      %s174 = sphi 0, %s174
      %s176 = sphi 0, %s174
      %s177 = sphi 0, %s176
      %s191 = sphi 0, %s177
      %s195 = sphi 0, %s195
      %s197 = sphi 0, %s195
      %s198 = sphi 0, %s197
      %s212 = sphi 0, %s198
      %s216 = sphi 0, %s216
      %s218 = sphi 0, %s216
      %s219 = sphi 0, %s218
      %s233 = sphi 0, %s219
      %s237 = sphi 0, %s237
      %s239 = sphi 0, %s237
      %s240 = sphi 0, %s239
      %s254 = sphi 0, %s240
      %s258 = sphi 0, %s258
      %s260 = sphi 0, %s258
      %s261 = sphi 0, %s260
      %s275 = sphi 0, %s261
      %s279 = sphi 0, %s279
      %s281 = sphi 0, %s279
      %s282 = sphi 0, %s281
      %s296 = sphi 0, %s282
      %s300 = sphi 0, %s300
      %s302 = sphi 0, %s300
      %s303 = sphi 0, %s302
      %s317 = sphi 0, %s303
      %s323 = sphi 0, %s325
      %s326 = sphi 0, %s323
      %s327 = sphi 0, %s326
      %s343 = sphi 0, %s327
    $region4: #{tpu_custom_call.1} parent=1 // loop_header_branch
      %33 = sbr.rel (%p31) target = $region8
    $region5: #{tpu_custom_call.1} parent=1 // loop_body
      %s35 = ssub.s32 %s30, 1
      %s36 = ssub.s32 %s30, 2
      %s37 = sadd.s32 %s30, 1
      %s38 = ssub.s32 %s30, %s37
      %p39 = scmp.eq.s32.totalorder %s38, 0
      %s41 = sadd.s32 %s40, 1
      %s42 = scalar_select %p39, %s40, %s41
      %p45 = pneg %p39
      %p46 = scmp.eq.s32.totalorder %s30, 1
      %p47 = por %p45, %p46
      %p48 = scmp.ne.s32.totalorder %s40, %s43
      %p49 = scmp.eq.s32.totalorder %s30, 0
      %p50 = por %p48, %p49
      %p51 = scmp.ne.s32.totalorder %s40, %s43
      %p52 = scmp.eq.s32.totalorder %s35, 1
      %p53 = por %p51, %p52
      %p54 = scmp.ne.s32.totalorder %s43, %s44
      %p55 = scmp.eq.s32.totalorder %s35, 0
      %p56 = por %p54, %p55
      %p57 = scmp.ne.s32.totalorder %s43, %s44
      %p58 = scmp.eq.s32.totalorder %s36, 1
      %p59 = por %p57, %p58
      %p61 = scmp.ne.s32.totalorder %s44, %s60
      %p62 = scmp.eq.s32.totalorder %s36, 0
      %p63 = por %p61, %p62
      %s64 = ssub.s32 %s30, %s37
      %p65 = scmp.eq.s32.totalorder %s64, 0
      %s67 = sadd.s32 %s66, 1
      %s68 = scalar_select %p65, %s66, %s67
      %p71 = pneg %p65
      %p72 = scmp.eq.s32.totalorder %s30, 1
      %p73 = por %p71, %p72
      %p74 = scmp.ne.s32.totalorder %s66, %s69
      %p75 = scmp.eq.s32.totalorder %s30, 0
      %p76 = por %p74, %p75
      %p77 = scmp.ne.s32.totalorder %s66, %s69
      %p78 = scmp.eq.s32.totalorder %s35, 1
      %p79 = por %p77, %p78
      %p80 = scmp.ne.s32.totalorder %s69, %s70
      %p81 = scmp.eq.s32.totalorder %s35, 0
      %p82 = por %p80, %p81
      %p83 = scmp.ne.s32.totalorder %s69, %s70
      %p84 = scmp.eq.s32.totalorder %s36, 1
      %p85 = por %p83, %p84
      %p87 = scmp.ne.s32.totalorder %s70, %s86
      %p88 = scmp.eq.s32.totalorder %s36, 0
      %p89 = por %p87, %p88
      %s91 = sadd.s32 %s90, 1
      %p94 = scmp.eq.s32.totalorder %s30, 1
      %p95 = scmp.ne.s32.totalorder %s90, %s92
      %p96 = scmp.eq.s32.totalorder %s30, 0
      %p97 = por %p95, %p96
      %p98 = scmp.ne.s32.totalorder %s90, %s92
      %p99 = scmp.eq.s32.totalorder %s35, 1
      %p100 = por %p98, %p99
      %p101 = scmp.ne.s32.totalorder %s92, %s93
      %p102 = scmp.eq.s32.totalorder %s35, 0
      %p103 = por %p101, %p102
      %p104 = scmp.ne.s32.totalorder %s92, %s93
      %p105 = scmp.eq.s32.totalorder %s36, 1
      %p106 = por %p104, %p105
      %p108 = scmp.ne.s32.totalorder %s93, %s107
      %p109 = scmp.eq.s32.totalorder %s36, 0
      %p110 = por %p108, %p109
      %s112 = sadd.s32 %s111, 1
      %p115 = scmp.eq.s32.totalorder %s30, 1
      %p116 = scmp.ne.s32.totalorder %s111, %s113
      %p117 = scmp.eq.s32.totalorder %s30, 0
      %p118 = por %p116, %p117
      %p119 = scmp.ne.s32.totalorder %s111, %s113
      %p120 = scmp.eq.s32.totalorder %s35, 1
      %p121 = por %p119, %p120
      %p122 = scmp.ne.s32.totalorder %s113, %s114
      %p123 = scmp.eq.s32.totalorder %s35, 0
      %p124 = por %p122, %p123
      %p125 = scmp.ne.s32.totalorder %s113, %s114
      %p126 = scmp.eq.s32.totalorder %s36, 1
      %p127 = por %p125, %p126
      %p129 = scmp.ne.s32.totalorder %s114, %s128
      %p130 = scmp.eq.s32.totalorder %s36, 0
      %p131 = por %p129, %p130
      %s133 = sadd.s32 %s132, 1
      %p136 = scmp.eq.s32.totalorder %s30, 1
      %p137 = scmp.ne.s32.totalorder %s132, %s134
      %p138 = scmp.eq.s32.totalorder %s30, 0
      %p139 = por %p137, %p138
      %p140 = scmp.ne.s32.totalorder %s132, %s134
      %p141 = scmp.eq.s32.totalorder %s35, 1
      %p142 = por %p140, %p141
      %p143 = scmp.ne.s32.totalorder %s134, %s135
      %p144 = scmp.eq.s32.totalorder %s35, 0
      %p145 = por %p143, %p144
      %p146 = scmp.ne.s32.totalorder %s134, %s135
      %p147 = scmp.eq.s32.totalorder %s36, 1
      %p148 = por %p146, %p147
      %p150 = scmp.ne.s32.totalorder %s135, %s149
      %p151 = scmp.eq.s32.totalorder %s36, 0
      %p152 = por %p150, %p151
      %s154 = sadd.s32 %s153, 1
      %p157 = scmp.eq.s32.totalorder %s30, 1
      %p158 = scmp.ne.s32.totalorder %s153, %s155
      %p159 = scmp.eq.s32.totalorder %s30, 0
      %p160 = por %p158, %p159
      %p161 = scmp.ne.s32.totalorder %s153, %s155
      %p162 = scmp.eq.s32.totalorder %s35, 1
      %p163 = por %p161, %p162
      %p164 = scmp.ne.s32.totalorder %s155, %s156
      %p165 = scmp.eq.s32.totalorder %s35, 0
      %p166 = por %p164, %p165
      %p167 = scmp.ne.s32.totalorder %s155, %s156
      %p168 = scmp.eq.s32.totalorder %s36, 1
      %p169 = por %p167, %p168
      %p171 = scmp.ne.s32.totalorder %s156, %s170
      %p172 = scmp.eq.s32.totalorder %s36, 0
      %p173 = por %p171, %p172
      %s175 = sadd.s32 %s174, 1
      %p178 = scmp.eq.s32.totalorder %s30, 1
      %p179 = scmp.ne.s32.totalorder %s174, %s176
      %p180 = scmp.eq.s32.totalorder %s30, 0
      %p181 = por %p179, %p180
      %p182 = scmp.ne.s32.totalorder %s174, %s176
      %p183 = scmp.eq.s32.totalorder %s35, 1
      %p184 = por %p182, %p183
      %p185 = scmp.ne.s32.totalorder %s176, %s177
      %p186 = scmp.eq.s32.totalorder %s35, 0
      %p187 = por %p185, %p186
      %p188 = scmp.ne.s32.totalorder %s176, %s177
      %p189 = scmp.eq.s32.totalorder %s36, 1
      %p190 = por %p188, %p189
      %p192 = scmp.ne.s32.totalorder %s177, %s191
      %p193 = scmp.eq.s32.totalorder %s36, 0
      %p194 = por %p192, %p193
      %s196 = sadd.s32 %s195, 1
      %p199 = scmp.eq.s32.totalorder %s30, 1
      %p200 = scmp.ne.s32.totalorder %s195, %s197
      %p201 = scmp.eq.s32.totalorder %s30, 0
      %p202 = por %p200, %p201
      %p203 = scmp.ne.s32.totalorder %s195, %s197
      %p204 = scmp.eq.s32.totalorder %s35, 1
      %p205 = por %p203, %p204
      %p206 = scmp.ne.s32.totalorder %s197, %s198
      %p207 = scmp.eq.s32.totalorder %s35, 0
      %p208 = por %p206, %p207
      %p209 = scmp.ne.s32.totalorder %s197, %s198
      %p210 = scmp.eq.s32.totalorder %s36, 1
      %p211 = por %p209, %p210
      %p213 = scmp.ne.s32.totalorder %s198, %s212
      %p214 = scmp.eq.s32.totalorder %s36, 0
      %p215 = por %p213, %p214
      %s217 = sadd.s32 %s216, 1
      %p220 = scmp.eq.s32.totalorder %s30, 1
      %p221 = scmp.ne.s32.totalorder %s216, %s218
      %p222 = scmp.eq.s32.totalorder %s30, 0
      %p223 = por %p221, %p222
      %p224 = scmp.ne.s32.totalorder %s216, %s218
      %p225 = scmp.eq.s32.totalorder %s35, 1
      %p226 = por %p224, %p225
      %p227 = scmp.ne.s32.totalorder %s218, %s219
      %p228 = scmp.eq.s32.totalorder %s35, 0
      %p229 = por %p227, %p228
      %p230 = scmp.ne.s32.totalorder %s218, %s219
      %p231 = scmp.eq.s32.totalorder %s36, 1
      %p232 = por %p230, %p231
      %p234 = scmp.ne.s32.totalorder %s219, %s233
      %p235 = scmp.eq.s32.totalorder %s36, 0
      %p236 = por %p234, %p235
      %s238 = sadd.s32 %s237, 1
      %p241 = scmp.eq.s32.totalorder %s30, 1
      %p242 = scmp.ne.s32.totalorder %s237, %s239
      %p243 = scmp.eq.s32.totalorder %s30, 0
      %p244 = por %p242, %p243
      %p245 = scmp.ne.s32.totalorder %s237, %s239
      %p246 = scmp.eq.s32.totalorder %s35, 1
      %p247 = por %p245, %p246
      %p248 = scmp.ne.s32.totalorder %s239, %s240
      %p249 = scmp.eq.s32.totalorder %s35, 0
      %p250 = por %p248, %p249
      %p251 = scmp.ne.s32.totalorder %s239, %s240
      %p252 = scmp.eq.s32.totalorder %s36, 1
      %p253 = por %p251, %p252
      %p255 = scmp.ne.s32.totalorder %s240, %s254
      %p256 = scmp.eq.s32.totalorder %s36, 0
      %p257 = por %p255, %p256
      %s259 = sadd.s32 %s258, 1
      %p262 = scmp.eq.s32.totalorder %s30, 1
      %p263 = scmp.ne.s32.totalorder %s258, %s260
      %p264 = scmp.eq.s32.totalorder %s30, 0
      %p265 = por %p263, %p264
      %p266 = scmp.ne.s32.totalorder %s258, %s260
      %p267 = scmp.eq.s32.totalorder %s35, 1
      %p268 = por %p266, %p267
      %p269 = scmp.ne.s32.totalorder %s260, %s261
      %p270 = scmp.eq.s32.totalorder %s35, 0
      %p271 = por %p269, %p270
      %p272 = scmp.ne.s32.totalorder %s260, %s261
      %p273 = scmp.eq.s32.totalorder %s36, 1
      %p274 = por %p272, %p273
      %p276 = scmp.ne.s32.totalorder %s261, %s275
      %p277 = scmp.eq.s32.totalorder %s36, 0
      %p278 = por %p276, %p277
      %s280 = sadd.s32 %s279, 1
      %p283 = scmp.eq.s32.totalorder %s30, 1
      %p284 = scmp.ne.s32.totalorder %s279, %s281
      %p285 = scmp.eq.s32.totalorder %s30, 0
      %p286 = por %p284, %p285
      %p287 = scmp.ne.s32.totalorder %s279, %s281
      %p288 = scmp.eq.s32.totalorder %s35, 1
      %p289 = por %p287, %p288
      %p290 = scmp.ne.s32.totalorder %s281, %s282
      %p291 = scmp.eq.s32.totalorder %s35, 0
      %p292 = por %p290, %p291
      %p293 = scmp.ne.s32.totalorder %s281, %s282
      %p294 = scmp.eq.s32.totalorder %s36, 1
      %p295 = por %p293, %p294
      %p297 = scmp.ne.s32.totalorder %s282, %s296
      %p298 = scmp.eq.s32.totalorder %s36, 0
      %p299 = por %p297, %p298
      %s301 = sadd.s32 %s300, 1
      %p304 = scmp.eq.s32.totalorder %s30, 1
      %p305 = scmp.ne.s32.totalorder %s300, %s302
      %p306 = scmp.eq.s32.totalorder %s30, 0
      %p307 = por %p305, %p306
      %p308 = scmp.ne.s32.totalorder %s300, %s302
      %p309 = scmp.eq.s32.totalorder %s35, 1
      %p310 = por %p308, %p309
      %p311 = scmp.ne.s32.totalorder %s302, %s303
      %p312 = scmp.eq.s32.totalorder %s35, 0
      %p313 = por %p311, %p312
      %p314 = scmp.ne.s32.totalorder %s302, %s303
      %p315 = scmp.eq.s32.totalorder %s36, 1
      %p316 = por %p314, %p315
      %p318 = scmp.ne.s32.totalorder %s303, %s317
      %p319 = scmp.eq.s32.totalorder %s36, 0
      %p320 = por %p318, %p319
      %s321 = ssub.s32 %s30, %s37
      %p322 = scmp.eq.s32.totalorder %s321, 0
      %s324 = sadd.s32 %s323, 1
      %s325 = scalar_select %p322, %s323, %s324
      %p328 = pneg %p322
      %p329 = scmp.eq.s32.totalorder %s30, 1
      %p330 = por %p328, %p329
      %p331 = scmp.ne.s32.totalorder %s323, %s326
      %p332 = scmp.eq.s32.totalorder %s30, 0
      %p333 = por %p331, %p332
      %p334 = scmp.ne.s32.totalorder %s323, %s326
      %p335 = scmp.eq.s32.totalorder %s35, 1
      %p336 = por %p334, %p335
      %p337 = scmp.ne.s32.totalorder %s326, %s327
      %p338 = scmp.eq.s32.totalorder %s35, 0
      %p339 = por %p337, %p338
      %p340 = scmp.ne.s32.totalorder %s326, %s327
      %p341 = scmp.eq.s32.totalorder %s36, 1
      %p342 = por %p340, %p341
      %p344 = scmp.ne.s32.totalorder %s327, %s343
      %p345 = scmp.eq.s32.totalorder %s36, 0
      %p346 = por %p344, %p345
      %p347 = scmp.le.s32.totalorder 1, %s30
      %p348 = scmp.lt.s32.totalorder %s30, 3
      %p349 = pnand %p347, %p348
      %p350 = pneg %p349
      // Predicated region
      $region9: #{tpu_custom_call.1} parent=5 // pred_check
        _
      $region10: #{tpu_custom_call.1} parent=5 // pred_check_branch
        %352 = sbr.rel (%p349) target = $region12
      $region11: #{tpu_custom_call.1} parent=5 // pred_region
        %s353 = ssub.s32 %s30, 1
        // Predicated region
        $region13: #{tpu_custom_call.1} parent=11 // pred_check
          %p354 = pneg %p103
        $region14: #{tpu_custom_call.1} parent=11 // pred_check_branch
          %356 = sbr.rel (%p354) target = $region16
        $region15: #{tpu_custom_call.1} parent=11 // pred_region
          _
        $region16: #{tpu_custom_call.1} parent=11 // pred_fallthru
          _
        // Predicated region
        $region17: #{tpu_custom_call.1} parent=11 // pred_check
          %p357 = pneg %p124
        $region18: #{tpu_custom_call.1} parent=11 // pred_check_branch
          %359 = sbr.rel (%p357) target = $region20
        $region19: #{tpu_custom_call.1} parent=11 // pred_region
          _
        $region20: #{tpu_custom_call.1} parent=11 // pred_fallthru
          _
        // Predicated region
        $region21: #{tpu_custom_call.1} parent=11 // pred_check
          %p360 = pneg %p145
        $region22: #{tpu_custom_call.1} parent=11 // pred_check_branch
          %362 = sbr.rel (%p360) target = $region24
        $region23: #{tpu_custom_call.1} parent=11 // pred_region
          %s364 = ssub.s32 3072, 3072
          %365 = vsyncadd [#allocation8], %s364
          %s366 = sshll.u32 [#allocation9], 4
          %s367 = int_to_ptr.vmem [resolvable:$true] %s366
          %372 = dma.hbm_to_vmem [thread:$0]  %s4, 3072, %s367, [#allocation8], 192, 192, 12
        $region24: #{tpu_custom_call.1} parent=11 // pred_fallthru
          _
        // Predicated region
        $region25: #{tpu_custom_call.1} parent=11 // pred_check
          %p373 = pneg %p166
        $region26: #{tpu_custom_call.1} parent=11 // pred_check_branch
          %375 = sbr.rel (%p373) target = $region28
        $region27: #{tpu_custom_call.1} parent=11 // pred_region
          %s377 = ssub.s32 1024, 1024
          %378 = vsyncadd [#allocation11], %s377
          %s379 = sshll.u32 [#allocation10], 4
          %s380 = int_to_ptr.vmem [resolvable:$true] %s379
          %385 = dma.hbm_to_vmem [thread:$0]  %s5, 1024, %s380, [#allocation11], 64, 64, 4
        $region28: #{tpu_custom_call.1} parent=11 // pred_fallthru
          _
        // Predicated region
        $region29: #{tpu_custom_call.1} parent=11 // pred_check
          %p386 = pneg %p187
        $region30: #{tpu_custom_call.1} parent=11 // pred_check_branch
          %388 = sbr.rel (%p386) target = $region32
        $region31: #{tpu_custom_call.1} parent=11 // pred_region
          _
        $region32: #{tpu_custom_call.1} parent=11 // pred_fallthru
          _
        // Predicated region
        $region33: #{tpu_custom_call.1} parent=11 // pred_check
          %p389 = pneg %p208
        $region34: #{tpu_custom_call.1} parent=11 // pred_check_branch
          %391 = sbr.rel (%p389) target = $region36
        $region35: #{tpu_custom_call.1} parent=11 // pred_region
          _
        $region36: #{tpu_custom_call.1} parent=11 // pred_fallthru
          _
        // Predicated region
        $region37: #{tpu_custom_call.1} parent=11 // pred_check
          %p392 = pneg %p229
        $region38: #{tpu_custom_call.1} parent=11 // pred_check_branch
          %394 = sbr.rel (%p392) target = $region40
        $region39: #{tpu_custom_call.1} parent=11 // pred_region
          _
        $region40: #{tpu_custom_call.1} parent=11 // pred_fallthru
          _
        // Predicated region
        $region41: #{tpu_custom_call.1} parent=11 // pred_check
          %p395 = pneg %p250
        $region42: #{tpu_custom_call.1} parent=11 // pred_check_branch
          %397 = sbr.rel (%p395) target = $region44
        $region43: #{tpu_custom_call.1} parent=11 // pred_region
          %s399 = ssub.s32 4096, 4096
          %400 = vsyncadd [#allocation11], %s399
          %s401 = sshll.u32 [#allocation12], 4
          %s402 = int_to_ptr.vmem [resolvable:$true] %s401
          %407 = dma.hbm_to_vmem [thread:$0]  %s9, 4096, %s402, [#allocation11], 256, 256, 16
        $region44: #{tpu_custom_call.1} parent=11 // pred_fallthru
          _
        // Predicated region
        $region45: #{tpu_custom_call.1} parent=11 // pred_check
          %p408 = pneg %p271
        $region46: #{tpu_custom_call.1} parent=11 // pred_check_branch
          %410 = sbr.rel (%p408) target = $region48
        $region47: #{tpu_custom_call.1} parent=11 // pred_region
          _
        $region48: #{tpu_custom_call.1} parent=11 // pred_fallthru
          _
        // Predicated region
        $region49: #{tpu_custom_call.1} parent=11 // pred_check
          %p411 = pneg %p292
        $region50: #{tpu_custom_call.1} parent=11 // pred_check_branch
          %413 = sbr.rel (%p411) target = $region52
        $region51: #{tpu_custom_call.1} parent=11 // pred_region
          %s415 = ssub.s32 4096, 4096
          %416 = vsyncadd [#allocation14], %s415
          %s417 = sshll.u32 [#allocation13], 4
          %s418 = int_to_ptr.vmem [resolvable:$true] %s417
          %423 = dma.hbm_to_vmem [thread:$0]  %s11, 4096, %s418, [#allocation14], 64, 64, 4
        $region52: #{tpu_custom_call.1} parent=11 // pred_fallthru
          _
        // Predicated region
        $region53: #{tpu_custom_call.1} parent=11 // pred_check
          %p424 = pneg %p313
        $region54: #{tpu_custom_call.1} parent=11 // pred_check_branch
          %426 = sbr.rel (%p424) target = $region56
        $region55: #{tpu_custom_call.1} parent=11 // pred_region
          _
        $region56: #{tpu_custom_call.1} parent=11 // pred_fallthru
          _
      $region12: #{tpu_custom_call.1} parent=5 // pred_fallthru
        _
      %p427 = scmp.lt.s32.totalorder %s30, 2
      // Predicated region
      $region57: #{tpu_custom_call.1} parent=5 // pred_check
        %p428 = pneg %p427
      $region58: #{tpu_custom_call.1} parent=5 // pred_check_branch
        %430 = sbr.rel (%p428) target = $region60
      $region59: #{tpu_custom_call.1} parent=5 // pred_region
        // Predicated region
        $region61: #{tpu_custom_call.1} parent=59 // pred_check
          %p431 = pneg %p50
        $region62: #{tpu_custom_call.1} parent=59 // pred_check_branch
          %433 = sbr.rel (%p431) target = $region64
        $region63: #{tpu_custom_call.1} parent=59 // pred_region
          %s434 = sand.u32 %s40, 1
          %s435 = scalar_lea.sflag [#allocation5], %s434
          %s436 = sand.u32 %s40, 1
          %s437 = smul.addr %s436, 32
          %s438 = scalar_lea.vmem [#allocation4], %s437
          %s439 = smul.u32 2, %s30
          %s441 = ssub.s32 512, 512
          %442 = vsyncadd %s435, %s441
          %s443 = smul.addr %s439, 2
          %s444 = smul.addr %s443, 128
          %s445 = scalar_lea.hbm %s0, %s444
          %s446 = sshll.u32 %s438, 4
          %s447 = int_to_ptr.vmem [resolvable:$true] %s446
          %452 = dma.hbm_to_vmem [thread:$0]  %s445, 512, %s447, %s435, 128, 128, 8
        $region64: #{tpu_custom_call.1} parent=59 // pred_fallthru
          _
        // Predicated region
        $region65: #{tpu_custom_call.1} parent=59 // pred_check
          %p453 = pneg %p76
        $region66: #{tpu_custom_call.1} parent=59 // pred_check_branch
          %455 = sbr.rel (%p453) target = $region68
        $region67: #{tpu_custom_call.1} parent=59 // pred_region
          %s456 = sand.u32 %s30, 1
          %s457 = scalar_lea.sflag [#allocation8], %s456
          %s458 = sand.u32 %s66, 1
          %s459 = smul.addr %s458, 32
          %s460 = scalar_lea.vmem [#allocation7], %s459
          %s461 = smul.u32 2, %s30
          %s463 = ssub.s32 512, 512
          %464 = vsyncadd %s457, %s463
          %s465 = smul.addr %s461, 2
          %s466 = smul.addr %s465, 128
          %s467 = scalar_lea.hbm %s1, %s466
          %s468 = sshll.u32 %s460, 4
          %s469 = int_to_ptr.vmem [resolvable:$true] %s468
          %474 = dma.hbm_to_vmem [thread:$0]  %s467, 512, %s469, %s457, 128, 128, 8
        $region68: #{tpu_custom_call.1} parent=59 // pred_fallthru
          _
      $region60: #{tpu_custom_call.1} parent=5 // pred_fallthru
        _
      %p475 = scmp.le.s32.totalorder 1, %s30
      %p476 = scmp.lt.s32.totalorder %s30, 3
      %p477 = pnand %p475, %p476
      %p478 = pneg %p477
      // Predicated region
      $region69: #{tpu_custom_call.1} parent=5 // pred_check
        _
      $region70: #{tpu_custom_call.1} parent=5 // pred_check_branch
        %480 = sbr.rel (%p477) target = $region72
      $region71: #{tpu_custom_call.1} parent=5 // pred_region
        %s481 = ssub.s32 %s30, 1
        %s482 = sand.u32 %s43, 1
        %s483 = scalar_lea.sflag [#allocation5], %s482
        %s484 = sand.u32 %s43, 1
        %s485 = smul.addr %s484, 32
        %s486 = scalar_lea.vmem [#allocation4], %s485
        // Predicated region
        $region73: #{tpu_custom_call.1} parent=71 // pred_check
          %p487 = pneg %p56
        $region74: #{tpu_custom_call.1} parent=71 // pred_check_branch
          %489 = sbr.rel (%p487) target = $region76
        $region75: #{tpu_custom_call.1} parent=71 // pred_region
          %490 = dma.done %s483, 512
        $region76: #{tpu_custom_call.1} parent=71 // pred_fallthru
          _
        %s491 = sand.u32 %s35, 1
        %s492 = scalar_lea.sflag [#allocation8], %s491
        %s493 = sand.u32 %s69, 1
        %s494 = smul.addr %s493, 32
        %s495 = scalar_lea.vmem [#allocation7], %s494
        // Predicated region
        $region77: #{tpu_custom_call.1} parent=71 // pred_check
          %p496 = pneg %p82
        $region78: #{tpu_custom_call.1} parent=71 // pred_check_branch
          %498 = sbr.rel (%p496) target = $region80
        $region79: #{tpu_custom_call.1} parent=71 // pred_region
          %499 = dma.done %s492, 512
        $region80: #{tpu_custom_call.1} parent=71 // pred_fallthru
          _
        // Predicated region
        $region81: #{tpu_custom_call.1} parent=71 // pred_check
          %p500 = pneg %p145
        $region82: #{tpu_custom_call.1} parent=71 // pred_check_branch
          %502 = sbr.rel (%p500) target = $region84
        $region83: #{tpu_custom_call.1} parent=71 // pred_region
          %503 = dma.done [#allocation8], 3072
        $region84: #{tpu_custom_call.1} parent=71 // pred_fallthru
          _
        // Predicated region
        $region85: #{tpu_custom_call.1} parent=71 // pred_check
          %p504 = pneg %p166
        $region86: #{tpu_custom_call.1} parent=71 // pred_check_branch
          %506 = sbr.rel (%p504) target = $region88
        $region87: #{tpu_custom_call.1} parent=71 // pred_region
          %507 = dma.done [#allocation11], 1024
        $region88: #{tpu_custom_call.1} parent=71 // pred_fallthru
          _
        // Predicated region
        $region89: #{tpu_custom_call.1} parent=71 // pred_check
          %p508 = pneg %p250
        $region90: #{tpu_custom_call.1} parent=71 // pred_check_branch
          %510 = sbr.rel (%p508) target = $region92
        $region91: #{tpu_custom_call.1} parent=71 // pred_region
          %511 = dma.done [#allocation11], 4096
        $region92: #{tpu_custom_call.1} parent=71 // pred_fallthru
          _
        // Predicated region
        $region93: #{tpu_custom_call.1} parent=71 // pred_check
          %p512 = pneg %p292
        $region94: #{tpu_custom_call.1} parent=71 // pred_check_branch
          %514 = sbr.rel (%p512) target = $region96
        $region95: #{tpu_custom_call.1} parent=71 // pred_region
          %515 = dma.done [#allocation14], 4096
        $region96: #{tpu_custom_call.1} parent=71 // pred_fallthru
          _
        %s516 = sand.u32 %s43, 1
        %s517 = scalar_lea.sflag [#allocation5], %s516
        %s518 = sand.u32 %s43, 1
        %s519 = smul.addr %s518, 32
        %s520 = scalar_lea.vmem [#allocation4], %s519
        %p521 = pneg %p56
        %p522 = pneg %p53
        %s523 = sand.u32 %s35, 1
        %s524 = scalar_lea.sflag [#allocation8], %s523
        %s525 = sand.u32 %s69, 1
        %s526 = smul.addr %s525, 32
        %s527 = scalar_lea.vmem [#allocation7], %s526
        %p528 = pneg %p82
        %p529 = pneg %p79
        %p530 = pneg %p103
        %p531 = pneg %p100
        %p532 = pneg %p124
        %p533 = pneg %p121
        %p534 = pneg %p145
        %p535 = pneg %p142
        %p536 = pneg %p166
        %p537 = pneg %p163
        %p538 = pneg %p187
        %p539 = pneg %p184
        %p540 = pneg %p208
        %p541 = pneg %p205
        %p542 = pneg %p229
        %p543 = pneg %p226
        %p544 = pneg %p250
        %p545 = pneg %p247
        %p546 = pneg %p271
        %p547 = pneg %p268
        %p548 = pneg %p292
        %p549 = pneg %p289
        %p550 = pneg %p313
        %p551 = pneg %p310
        %p552 = pneg %p339
        %p553 = pneg %p336
        %s554 = sand.u32 %s326, 1
        %s555 = scalar_lea.sflag [#allocation6], %s554
        %s556 = sand.u32 %s326, 1
        %s557 = smul.addr %s556, 32
        %s558 = scalar_lea.vmem [#allocation15], %s557
        %s559 = smul.u32 2, %s35
        %s560 = smul.u32 2, %s35
        %s561 = smul.u32 2, %s35
        %v563 = vld [vmem:[%s486] sm:$0xff]
        %v564 = vld [vmem:[%s486 + $0x8] sm:$0xff]
        %v565 = vld [vmem:[%s486 + $0x10] sm:$0xff]
        %v566 = vld [vmem:[%s486 + $0x18] sm:$0xff]
        %v567 = vld [vmem:[%s495] sm:$0xff]
        %v568 = vld [vmem:[%s495 + $0x8] sm:$0xff]
        %v569 = vld [vmem:[%s495 + $0x10] sm:$0xff]
        %v570 = vld [vmem:[%s495 + $0x18] sm:$0xff]
        %v571 = vadd.f32 %v563, %v567
        %v572 = vadd.f32 %v564, %v568
        %v573 = vadd.f32 %v565, %v569
        %v574 = vadd.f32 %v566, %v570
        %v575 = vld [vmem:[%s2] sm:$0x1]
        %v576 = vld [vmem:[%s3] sm:$0x1]
        %577 = vadd.xlane.f32.xlu0 %v571
        %v578 = vpop.xlane.xlu0 %577
        %579 = vadd.xlane.f32.xlu0 %v572
        %v580 = vpop.xlane.xlu0 %579
        %581 = vadd.xlane.f32.xlu0 %v573
        %v582 = vpop.xlane.xlu0 %581
        %583 = vadd.xlane.f32.xlu0 %v574
        %v584 = vpop.xlane.xlu0 %583
        %v585 = vrcp.pop 128.0
        %v586 = vmul.f32 %v578, %v585
        %v587 = vmul.f32 %v580, %v585
        %v588 = vmul.f32 %v582, %v585
        %v589 = vmul.f32 %v584, %v585
        %v590 = vsub.f32 %v571, %v586
        %v591 = vsub.f32 %v572, %v587
        %v592 = vsub.f32 %v573, %v588
        %v593 = vsub.f32 %v574, %v589
        %v594 = vmul.f32 %v590, %v590
        %v595 = vmul.f32 %v591, %v591
        %v596 = vmul.f32 %v592, %v592
        %v597 = vmul.f32 %v593, %v593
        %598 = vadd.xlane.f32.xlu0 %v594
        %v599 = vpop.xlane.xlu0 %598
        %600 = vadd.xlane.f32.xlu0 %v595
        %v601 = vpop.xlane.xlu0 %600
        %602 = vadd.xlane.f32.xlu0 %v596
        %v603 = vpop.xlane.xlu0 %602
        %604 = vadd.xlane.f32.xlu0 %v597
        %v605 = vpop.xlane.xlu0 %604
        %v606 = vmul.f32 %v599, %v585
        %v607 = vmul.f32 %v601, %v585
        %v608 = vmul.f32 %v603, %v585
        %v609 = vmul.f32 %v605, %v585
        %v610 = vadd.f32 %v606, 1e-05
        %v611 = vadd.f32 %v607, 1e-05
        %v612 = vadd.f32 %v608, 1e-05
        %v613 = vadd.f32 %v609, 1e-05
        %v614 = vrsqrt.pop %v610
        %v615 = vrsqrt.pop %v611
        %v616 = vrsqrt.pop %v612
        %v617 = vrsqrt.pop %v613
        %v618 = vmul.f32 %v590, %v614
        %v619 = vmul.f32 %v591, %v615
        %v620 = vmul.f32 %v592, %v616
        %v621 = vmul.f32 %v593, %v617
        %v623 = vlaneseq
        %v624 = vshrl.u32 %v623, 7
        %v625 = vsub.s32 0, %v624
        %v626 = vrot.slane %v575, %v625
        %v628 = vmul.f32 %v618, %v626
        %v629 = vmul.f32 %v619, %v626
        %v630 = vmul.f32 %v620, %v626
        %v631 = vmul.f32 %v621, %v626
        %v633 = vlaneseq
        %v634 = vshrl.u32 %v633, 7
        %v635 = vsub.s32 0, %v634
        %v636 = vrot.slane %v576, %v635
        %v638 = vadd.f32 %v628, %v636
        %v639 = vadd.f32 %v629, %v636
        %v640 = vadd.f32 %v630, %v636
        %v641 = vadd.f32 %v631, %v636
        %v642 = vpack.c.bf16 %v639, %v638
        %v643 = vpack.c.bf16 %v641, %v640
        %v644 = vld [vmem:[#allocation9] sm:$0xf]
        %v645 = vld [vmem:[#allocation9 + $0xc] sm:$0xf]
        %v646 = vld [vmem:[#allocation9 + $0x18] sm:$0xf]
        %v647 = vld [vmem:[#allocation9 + $0x24] sm:$0xf]
        %v648 = vld [vmem:[#allocation9 + $0x30] sm:$0xf]
        %v649 = vld [vmem:[#allocation9 + $0x3c] sm:$0xf]
        %v650 = vld [vmem:[#allocation9 + $0x48] sm:$0xf]
        %v651 = vld [vmem:[#allocation9 + $0x54] sm:$0xf]
        %v652 = vld [vmem:[#allocation9 + $0x60] sm:$0xf]
        %v653 = vld [vmem:[#allocation9 + $0x6c] sm:$0xf]
        %v654 = vld [vmem:[#allocation9 + $0x78] sm:$0xf]
        %v655 = vld [vmem:[#allocation9 + $0x84] sm:$0xf]
        %v656 = vld [vmem:[#allocation9 + $0x90] sm:$0xf]
        %v657 = vld [vmem:[#allocation9 + $0x9c] sm:$0xf]
        %v658 = vld [vmem:[#allocation9 + $0xa8] sm:$0xf]
        %v659 = vld [vmem:[#allocation9 + $0xb4] sm:$0xf]
        %v676 = vunpack.c.l.b16 %v644
        %v677 = vunpack.c.l.b16 %v645
        %v678 = vunpack.c.l.b16 %v646
        %v679 = vunpack.c.l.b16 %v647
        %v680 = vunpack.c.l.b16 %v648
        %v681 = vunpack.c.l.b16 %v649
        %v682 = vunpack.c.l.b16 %v650
        %v683 = vunpack.c.l.b16 %v651
        %v684 = vunpack.c.l.b16 %v652
        %v685 = vunpack.c.l.b16 %v653
        %v686 = vunpack.c.l.b16 %v654
        %v687 = vunpack.c.l.b16 %v655
        %v688 = vunpack.c.l.b16 %v656
        %v689 = vunpack.c.l.b16 %v657
        %v690 = vunpack.c.l.b16 %v658
        %v691 = vunpack.c.l.b16 %v659
        %v692 = vpack.c.b16 %v677, %v676
        %v693 = vpack.c.b16 %v679, %v678
        %v694 = vpack.c.b16 %v681, %v680
        %v695 = vpack.c.b16 %v683, %v682
        %v696 = vpack.c.b16 %v685, %v684
        %v697 = vpack.c.b16 %v687, %v686
        %v698 = vpack.c.b16 %v689, %v688
        %v699 = vpack.c.b16 %v691, %v690
        %708 = vmatprep.subr.bf16.mxu0 0
        %709 = vmatpush1.bf16.msra.mxu0 %v692
        %710 = vmatprep.subr.bf16.mxu0 0
        %711 = vmatpush1.bf16.msra.mxu0 %v693
        %712 = vmatprep.subr.bf16.mxu0 0
        %713 = vmatpush1.bf16.msra.mxu0 %v694
        %714 = vmatprep.subr.bf16.mxu0 0
        %715 = vmatpush1.bf16.msra.mxu0 %v695
        %716 = vmatprep.subr.bf16.mxu0 0
        %717 = vmatpush1.bf16.msra.mxu0 %v696
        %718 = vmatprep.subr.bf16.mxu0 0
        %719 = vmatpush1.bf16.msra.mxu0 %v697
        %720 = vmatprep.subr.bf16.mxu0 0
        %721 = vmatpush1.bf16.msra.mxu0 %v698
        %722 = vmatprep.subr.bf16.mxu0 0
        %723 = vmatpush1.bf16.msra.mxu0 %v699
        %724 = vmatprep.subr.bf16.mxu0 0
        %725 = vmatpush1.bf16.msra.mxu0 0
        %726 = vmatprep.subr.bf16.mxu0 0
        %727 = vmatpush1.bf16.msra.mxu0 0
        %728 = vmatprep.subr.bf16.mxu0 0
        %729 = vmatpush1.bf16.msra.mxu0 0
        %730 = vmatprep.subr.bf16.mxu0 0
        %731 = vmatpush1.bf16.msra.mxu0 0
        %732 = vmatprep.subr.bf16.mxu0 0
        %733 = vmatpush1.bf16.msra.mxu0 0
        %734 = vmatprep.subr.bf16.mxu0 0
        %735 = vmatpush1.bf16.msra.mxu0 0
        %736 = vmatprep.subr.bf16.mxu0 0
        %737 = vmatpush1.bf16.msra.mxu0 0
        %738 = vmatprep.subr.bf16.mxu0 0
        %739 = vmatpush1.bf16.msra.mxu0 0
        %740 = vmatprep.mubr.bf16.mxu0 0
        %741 = vmatmul.mubr.bf16.gmra.mrb[0].mxu0 %v642
        %v742 = vpop.f32.mrb[0].mxu0
        %v743 = vadd.f32 0.0, %v742
        %v744 = vpop.f32.mrb[0].mxu0
        %v745 = vpop.f32.mrb[0].mxu0
        %v746 = vadd.f32 0.0, %v745
        %v747 = vpop.f32.mrb[0].mxu0
        %748 = vmatprep.mubr.bf16.mxu0 0
        %749 = vmatmul.mubr.bf16.gmra.mrb[0].mxu0 %v643
        %v750 = vpop.f32.mrb[0].mxu0
        %v751 = vadd.f32 0.0, %v750
        %v752 = vpop.f32.mrb[0].mxu0
        %v753 = vpop.f32.mrb[0].mxu0
        %v754 = vadd.f32 0.0, %v753
        %v755 = vpop.f32.mrb[0].mxu0
        %756 = vdwg.mxu0
        %v757 = vpack.c.bf16 %v746, %v743
        %v758 = vpack.c.bf16 %v754, %v751
        %759 = vst [vmem:[#allocation2] sm:$0xff] %v757
        %760 = vst [vmem:[#allocation2 + $0x18] sm:$0xff] %v758
        %v761 = vld [vmem:[#allocation9 + $0x4] sm:$0xf]
        %v762 = vld [vmem:[#allocation9 + $0x10] sm:$0xf]
        %v763 = vld [vmem:[#allocation9 + $0x1c] sm:$0xf]
        %v764 = vld [vmem:[#allocation9 + $0x28] sm:$0xf]
        %v765 = vld [vmem:[#allocation9 + $0x34] sm:$0xf]
        %v766 = vld [vmem:[#allocation9 + $0x40] sm:$0xf]
        %v767 = vld [vmem:[#allocation9 + $0x4c] sm:$0xf]
        %v768 = vld [vmem:[#allocation9 + $0x58] sm:$0xf]
        %v769 = vld [vmem:[#allocation9 + $0x64] sm:$0xf]
        %v770 = vld [vmem:[#allocation9 + $0x70] sm:$0xf]
        %v771 = vld [vmem:[#allocation9 + $0x7c] sm:$0xf]
        %v772 = vld [vmem:[#allocation9 + $0x88] sm:$0xf]
        %v773 = vld [vmem:[#allocation9 + $0x94] sm:$0xf]
        %v774 = vld [vmem:[#allocation9 + $0xa0] sm:$0xf]
        %v775 = vld [vmem:[#allocation9 + $0xac] sm:$0xf]
        %v776 = vld [vmem:[#allocation9 + $0xb8] sm:$0xf]
        %v793 = vunpack.c.l.b16 %v761
        %v794 = vunpack.c.l.b16 %v762
        %v795 = vunpack.c.l.b16 %v763
        %v796 = vunpack.c.l.b16 %v764
        %v797 = vunpack.c.l.b16 %v765
        %v798 = vunpack.c.l.b16 %v766
        %v799 = vunpack.c.l.b16 %v767
        %v800 = vunpack.c.l.b16 %v768
        %v801 = vunpack.c.l.b16 %v769
        %v802 = vunpack.c.l.b16 %v770
        %v803 = vunpack.c.l.b16 %v771
        %v804 = vunpack.c.l.b16 %v772
        %v805 = vunpack.c.l.b16 %v773
        %v806 = vunpack.c.l.b16 %v774
        %v807 = vunpack.c.l.b16 %v775
        %v808 = vunpack.c.l.b16 %v776
        %v809 = vpack.c.b16 %v794, %v793
        %v810 = vpack.c.b16 %v796, %v795
        %v811 = vpack.c.b16 %v798, %v797
        %v812 = vpack.c.b16 %v800, %v799
        %v813 = vpack.c.b16 %v802, %v801
        %v814 = vpack.c.b16 %v804, %v803
        %v815 = vpack.c.b16 %v806, %v805
        %v816 = vpack.c.b16 %v808, %v807
        %825 = vmatprep.subr.bf16.mxu0 0
        %826 = vmatpush1.bf16.msra.mxu0 %v809
        %827 = vmatprep.subr.bf16.mxu0 0
        %828 = vmatpush1.bf16.msra.mxu0 %v810
        %829 = vmatprep.subr.bf16.mxu0 0
        %830 = vmatpush1.bf16.msra.mxu0 %v811
        %831 = vmatprep.subr.bf16.mxu0 0
        %832 = vmatpush1.bf16.msra.mxu0 %v812
        %833 = vmatprep.subr.bf16.mxu0 0
        %834 = vmatpush1.bf16.msra.mxu0 %v813
        %835 = vmatprep.subr.bf16.mxu0 0
        %836 = vmatpush1.bf16.msra.mxu0 %v814
        %837 = vmatprep.subr.bf16.mxu0 0
        %838 = vmatpush1.bf16.msra.mxu0 %v815
        %839 = vmatprep.subr.bf16.mxu0 0
        %840 = vmatpush1.bf16.msra.mxu0 %v816
        %841 = vmatprep.subr.bf16.mxu0 0
        %842 = vmatpush1.bf16.msra.mxu0 0
        %843 = vmatprep.subr.bf16.mxu0 0
        %844 = vmatpush1.bf16.msra.mxu0 0
        %845 = vmatprep.subr.bf16.mxu0 0
        %846 = vmatpush1.bf16.msra.mxu0 0
        %847 = vmatprep.subr.bf16.mxu0 0
        %848 = vmatpush1.bf16.msra.mxu0 0
        %849 = vmatprep.subr.bf16.mxu0 0
        %850 = vmatpush1.bf16.msra.mxu0 0
        %851 = vmatprep.subr.bf16.mxu0 0
        %852 = vmatpush1.bf16.msra.mxu0 0
        %853 = vmatprep.subr.bf16.mxu0 0
        %854 = vmatpush1.bf16.msra.mxu0 0
        %855 = vmatprep.subr.bf16.mxu0 0
        %856 = vmatpush1.bf16.msra.mxu0 0
        %857 = vmatprep.mubr.bf16.mxu0 0
        %858 = vmatmul.mubr.bf16.gmra.mrb[0].mxu0 %v642
        %v859 = vpop.f32.mrb[0].mxu0
        %v860 = vadd.f32 0.0, %v859
        %v861 = vpop.f32.mrb[0].mxu0
        %v862 = vpop.f32.mrb[0].mxu0
        %v863 = vadd.f32 0.0, %v862
        %v864 = vpop.f32.mrb[0].mxu0
        %865 = vmatprep.mubr.bf16.mxu0 0
        %866 = vmatmul.mubr.bf16.gmra.mrb[0].mxu0 %v643
        %v867 = vpop.f32.mrb[0].mxu0
        %v868 = vadd.f32 0.0, %v867
        %v869 = vpop.f32.mrb[0].mxu0
        %v870 = vpop.f32.mrb[0].mxu0
        %v871 = vadd.f32 0.0, %v870
        %v872 = vpop.f32.mrb[0].mxu0
        %873 = vdwg.mxu0
        %v874 = vpack.c.bf16 %v863, %v860
        %v875 = vpack.c.bf16 %v871, %v868
        %876 = vst [vmem:[#allocation2 + $0x8] sm:$0xff] %v874
        %877 = vst [vmem:[#allocation2 + $0x20] sm:$0xff] %v875
        %v878 = vld [vmem:[#allocation9 + $0x8] sm:$0xf]
        %v879 = vld [vmem:[#allocation9 + $0x14] sm:$0xf]
        %v880 = vld [vmem:[#allocation9 + $0x20] sm:$0xf]
        %v881 = vld [vmem:[#allocation9 + $0x2c] sm:$0xf]
        %v882 = vld [vmem:[#allocation9 + $0x38] sm:$0xf]
        %v883 = vld [vmem:[#allocation9 + $0x44] sm:$0xf]
        %v884 = vld [vmem:[#allocation9 + $0x50] sm:$0xf]
        %v885 = vld [vmem:[#allocation9 + $0x5c] sm:$0xf]
        %v886 = vld [vmem:[#allocation9 + $0x68] sm:$0xf]
        %v887 = vld [vmem:[#allocation9 + $0x74] sm:$0xf]
        %v888 = vld [vmem:[#allocation9 + $0x80] sm:$0xf]
        %v889 = vld [vmem:[#allocation9 + $0x8c] sm:$0xf]
        %v890 = vld [vmem:[#allocation9 + $0x98] sm:$0xf]
        %v891 = vld [vmem:[#allocation9 + $0xa4] sm:$0xf]
        %v892 = vld [vmem:[#allocation9 + $0xb0] sm:$0xf]
        %v893 = vld [vmem:[#allocation9 + $0xbc] sm:$0xf]
        %v910 = vunpack.c.l.b16 %v878
        %v911 = vunpack.c.l.b16 %v879
        %v912 = vunpack.c.l.b16 %v880
        %v913 = vunpack.c.l.b16 %v881
        %v914 = vunpack.c.l.b16 %v882
        %v915 = vunpack.c.l.b16 %v883
        %v916 = vunpack.c.l.b16 %v884
        %v917 = vunpack.c.l.b16 %v885
        %v918 = vunpack.c.l.b16 %v886
        %v919 = vunpack.c.l.b16 %v887
        %v920 = vunpack.c.l.b16 %v888
        %v921 = vunpack.c.l.b16 %v889
        %v922 = vunpack.c.l.b16 %v890
        %v923 = vunpack.c.l.b16 %v891
        %v924 = vunpack.c.l.b16 %v892
        %v925 = vunpack.c.l.b16 %v893
        %v926 = vpack.c.b16 %v911, %v910
        %v927 = vpack.c.b16 %v913, %v912
        %v928 = vpack.c.b16 %v915, %v914
        %v929 = vpack.c.b16 %v917, %v916
        %v930 = vpack.c.b16 %v919, %v918
        %v931 = vpack.c.b16 %v921, %v920
        %v932 = vpack.c.b16 %v923, %v922
        %v933 = vpack.c.b16 %v925, %v924
        %942 = vmatprep.subr.bf16.mxu0 0
        %943 = vmatpush1.bf16.msra.mxu0 %v926
        %944 = vmatprep.subr.bf16.mxu0 0
        %945 = vmatpush1.bf16.msra.mxu0 %v927
        %946 = vmatprep.subr.bf16.mxu0 0
        %947 = vmatpush1.bf16.msra.mxu0 %v928
        %948 = vmatprep.subr.bf16.mxu0 0
        %949 = vmatpush1.bf16.msra.mxu0 %v929
        %950 = vmatprep.subr.bf16.mxu0 0
        %951 = vmatpush1.bf16.msra.mxu0 %v930
        %952 = vmatprep.subr.bf16.mxu0 0
        %953 = vmatpush1.bf16.msra.mxu0 %v931
        %954 = vmatprep.subr.bf16.mxu0 0
        %955 = vmatpush1.bf16.msra.mxu0 %v932
        %956 = vmatprep.subr.bf16.mxu0 0
        %957 = vmatpush1.bf16.msra.mxu0 %v933
        %958 = vmatprep.subr.bf16.mxu0 0
        %959 = vmatpush1.bf16.msra.mxu0 0
        %960 = vmatprep.subr.bf16.mxu0 0
        %961 = vmatpush1.bf16.msra.mxu0 0
        %962 = vmatprep.subr.bf16.mxu0 0
        %963 = vmatpush1.bf16.msra.mxu0 0
        %964 = vmatprep.subr.bf16.mxu0 0
        %965 = vmatpush1.bf16.msra.mxu0 0
        %966 = vmatprep.subr.bf16.mxu0 0
        %967 = vmatpush1.bf16.msra.mxu0 0
        %968 = vmatprep.subr.bf16.mxu0 0
        %969 = vmatpush1.bf16.msra.mxu0 0
        %970 = vmatprep.subr.bf16.mxu0 0
        %971 = vmatpush1.bf16.msra.mxu0 0
        %972 = vmatprep.subr.bf16.mxu0 0
        %973 = vmatpush1.bf16.msra.mxu0 0
        %974 = vmatprep.mubr.bf16.mxu0 0
        %975 = vmatmul.mubr.bf16.gmra.mrb[0].mxu0 %v642
        %v976 = vpop.f32.mrb[0].mxu0
        %v977 = vadd.f32 0.0, %v976
        %v978 = vpop.f32.mrb[0].mxu0
        %v979 = vpop.f32.mrb[0].mxu0
        %v980 = vadd.f32 0.0, %v979
        %v981 = vpop.f32.mrb[0].mxu0
        %982 = vmatprep.mubr.bf16.mxu0 0
        %983 = vmatmul.mubr.bf16.gmra.mrb[0].mxu0 %v643
        %v984 = vpop.f32.mrb[0].mxu0
        %v985 = vadd.f32 0.0, %v984
        %v986 = vpop.f32.mrb[0].mxu0
        %v987 = vpop.f32.mrb[0].mxu0
        %v988 = vadd.f32 0.0, %v987
        %v989 = vpop.f32.mrb[0].mxu0
        %990 = vdwg.mxu0
        %v991 = vpack.c.bf16 %v980, %v977
        %v992 = vpack.c.bf16 %v988, %v985
        %993 = vst [vmem:[#allocation2 + $0x10] sm:$0xff] %v991
        %994 = vst [vmem:[#allocation2 + $0x28] sm:$0xff] %v992
        %v995 = vld [vmem:[#allocation2] sm:$0xff]
        %v996 = vld [vmem:[#allocation2 + $0x18] sm:$0xff]
        %v997 = vld [vmem:[#allocation2 + $0x8] sm:$0xff]
        %v998 = vld [vmem:[#allocation2 + $0x20] sm:$0xff]
        %v999 = vld [vmem:[#allocation2 + $0x10] sm:$0xff]
        %v1000 = vld [vmem:[#allocation2 + $0x28] sm:$0xff]
        %vm1001 = vcmask 261120
        %v1003 = vsel %vm1001, %v995, 0
        %v1006 = vsel %vm1001, %v997, 0
        %1008 = vmatprep.subr.bf16.mxu0 0
        %1009 = vmatpush1.bf16.xpose.msra.mxu0 %v1006
        %1010 = vmatprep.subr.bf16.mxu0 0
        %1011 = vmatpush1.bf16.xpose.msra.mxu0 0
        %1012 = vmatprep.subr.bf16.mxu0 0
        %1013 = vmatpush1.bf16.xpose.msra.mxu0 0
        %1014 = vmatprep.subr.bf16.mxu0 0
        %1015 = vmatpush1.bf16.xpose.msra.mxu0 0
        %1016 = vmatprep.subr.bf16.mxu0 0
        %1017 = vmatpush1.bf16.xpose.msra.mxu0 0
        %1018 = vmatprep.subr.bf16.mxu0 0
        %1019 = vmatpush1.bf16.xpose.msra.mxu0 0
        %1020 = vmatprep.subr.bf16.mxu0 0
        %1021 = vmatpush1.bf16.xpose.msra.mxu0 0
        %1022 = vmatprep.subr.bf16.mxu0 0
        %1023 = vmatpush1.bf16.xpose.msra.mxu0 0
        %1024 = vmatprep.subr.bf16.mxu0 0
        %1025 = vmatpush1.bf16.xpose.msra.mxu0 0
        %1026 = vmatprep.subr.bf16.mxu0 0
        %1027 = vmatpush1.bf16.xpose.msra.mxu0 0
        %1028 = vmatprep.subr.bf16.mxu0 0
        %1029 = vmatpush1.bf16.xpose.msra.mxu0 0
        %1030 = vmatprep.subr.bf16.mxu0 0
        %1031 = vmatpush1.bf16.xpose.msra.mxu0 0
        %1032 = vmatprep.subr.bf16.mxu0 0
        %1033 = vmatpush1.bf16.xpose.msra.mxu0 0
        %1034 = vmatprep.subr.bf16.mxu0 0
        %1035 = vmatpush1.bf16.xpose.msra.mxu0 0
        %1036 = vmatprep.subr.bf16.mxu0 0
        %1037 = vmatpush1.bf16.xpose.msra.mxu0 0
        %1038 = vmatprep.subr.bf16.mxu0 0
        %1039 = vmatpush1.bf16.xpose.msra.mxu0 0
        %1040 = vmatprep.mubr.bf16.mxu0 0
        %1041 = vmatmul.mubr.bf16.gmra.mrb[0].mxu0 %v1003
        %v1042 = vpop.f32.mrb[0].mxu0
        %v1043 = vadd.f32 0.0, %v1042
        %v1044 = vpop.f32.mrb[0].mxu0
        %v1045 = vpop.f32.mrb[0].mxu0
        %v1046 = vadd.f32 0.0, %v1045
        %v1047 = vpop.f32.mrb[0].mxu0
        %1048 = vdwg.mxu0
        %v1050 = vsel %vm1001, %v996, 0
        %v1053 = vsel %vm1001, %v998, 0
        %1055 = vmatprep.subr.bf16.mxu0 0
        %1056 = vmatpush1.bf16.xpose.msra.mxu0 %v1053
        %1057 = vmatprep.subr.bf16.mxu0 0
        %1058 = vmatpush1.bf16.xpose.msra.mxu0 0
        %1059 = vmatprep.subr.bf16.mxu0 0
        %1060 = vmatpush1.bf16.xpose.msra.mxu0 0
        %1061 = vmatprep.subr.bf16.mxu0 0
        %1062 = vmatpush1.bf16.xpose.msra.mxu0 0
        %1063 = vmatprep.subr.bf16.mxu0 0
        %1064 = vmatpush1.bf16.xpose.msra.mxu0 0
        %1065 = vmatprep.subr.bf16.mxu0 0
        %1066 = vmatpush1.bf16.xpose.msra.mxu0 0
        %1067 = vmatprep.subr.bf16.mxu0 0
        %1068 = vmatpush1.bf16.xpose.msra.mxu0 0
        %1069 = vmatprep.subr.bf16.mxu0 0
        %1070 = vmatpush1.bf16.xpose.msra.mxu0 0
        %1071 = vmatprep.subr.bf16.mxu0 0
        %1072 = vmatpush1.bf16.xpose.msra.mxu0 0
        %1073 = vmatprep.subr.bf16.mxu0 0
        %1074 = vmatpush1.bf16.xpose.msra.mxu0 0
        %1075 = vmatprep.subr.bf16.mxu0 0
        %1076 = vmatpush1.bf16.xpose.msra.mxu0 0
        %1077 = vmatprep.subr.bf16.mxu0 0
        %1078 = vmatpush1.bf16.xpose.msra.mxu0 0
        %1079 = vmatprep.subr.bf16.mxu0 0
        %1080 = vmatpush1.bf16.xpose.msra.mxu0 0
        %1081 = vmatprep.subr.bf16.mxu0 0
        %1082 = vmatpush1.bf16.xpose.msra.mxu0 0
        %1083 = vmatprep.subr.bf16.mxu0 0
        %1084 = vmatpush1.bf16.xpose.msra.mxu0 0
        %1085 = vmatprep.subr.bf16.mxu0 0
        %1086 = vmatpush1.bf16.xpose.msra.mxu0 0
        %1087 = vmatprep.mubr.bf16.mxu0 0
        %1088 = vmatmul.mubr.bf16.gmra.mrb[0].mxu0 %v1050
        %v1089 = vpop.f32.mrb[0].mxu0
        %v1090 = vadd.f32 0.0, %v1089
        %v1091 = vpop.f32.mrb[0].mxu0
        %v1092 = vpop.f32.mrb[0].mxu0
        %v1093 = vadd.f32 0.0, %v1092
        %v1094 = vpop.f32.mrb[0].mxu0
        %1095 = vdwg.mxu0
        %vm1096 = vcmask 130048
        %v1097 = vsel %vm1096, %v1043, -inf
        %1098 = vmax.xlane.f32.xlu0 %v1097
        %v1099 = vpop.xlane.xlu0 %1098
        %v1100 = vsel %vm1096, %v1046, -inf
        %1101 = vmax.xlane.f32.xlu0 %v1100
        %v1102 = vpop.xlane.xlu0 %1101
        %v1103 = vsel %vm1096, %v1090, -inf
        %1104 = vmax.xlane.f32.xlu0 %v1103
        %v1105 = vpop.xlane.xlu0 %1104
        %v1106 = vsel %vm1096, %v1093, -inf
        %1107 = vmax.xlane.f32.xlu0 %v1106
        %v1108 = vpop.xlane.xlu0 %1107
        %v1109 = vsub.f32 %v1043, %v1099
        %v1110 = vsub.f32 %v1046, %v1102
        %v1111 = vsub.f32 %v1090, %v1105
        %v1112 = vsub.f32 %v1093, %v1108
        %v1113 = vmul.f32 %v1109, 1.442695
        %v1114 = vpow.pop %v1113
        %v1115 = vmul.f32 %v1110, 1.442695
        %v1116 = vpow.pop %v1115
        %v1117 = vmul.f32 %v1111, 1.442695
        %v1118 = vpow.pop %v1117
        %v1119 = vmul.f32 %v1112, 1.442695
        %v1120 = vpow.pop %v1119
        %v1121 = vsel %vm1096, %v1114, 0.0
        %1122 = vadd.xlane.f32.xlu0 %v1121
        %v1123 = vpop.xlane.xlu0 %1122
        %v1124 = vsel %vm1096, %v1116, 0.0
        %1125 = vadd.xlane.f32.xlu0 %v1124
        %v1126 = vpop.xlane.xlu0 %1125
        %v1127 = vsel %vm1096, %v1118, 0.0
        %1128 = vadd.xlane.f32.xlu0 %v1127
        %v1129 = vpop.xlane.xlu0 %1128
        %v1130 = vsel %vm1096, %v1120, 0.0
        %1131 = vadd.xlane.f32.xlu0 %v1130
        %v1132 = vpop.xlane.xlu0 %1131
        %v1133 = vrcp.pop %v1123
        %v1134 = vrcp.pop %v1126
        %v1135 = vrcp.pop %v1129
        %v1136 = vrcp.pop %v1132
        %v1137 = vmul.f32 %v1114, %v1133
        %v1138 = vmul.f32 %v1116, %v1134
        %v1139 = vmul.f32 %v1118, %v1135
        %v1140 = vmul.f32 %v1120, %v1136
        %v1141 = vpack.c.bf16 %v1138, %v1137
        %v1142 = vpack.c.bf16 %v1140, %v1139
        %v1144 = vsel %vm1096, %v1141, 0
        %1146 = vmatprep.subr.bf16.mxu0 0
        %1147 = vmatpush1.bf16.msra.mxu0 %v999
        %1148 = vmatprep.subr.bf16.mxu0 0
        %1149 = vmatpush1.bf16.msra.mxu0 0
        %1150 = vmatprep.subr.bf16.mxu0 0
        %1151 = vmatpush1.bf16.msra.mxu0 0
        %1152 = vmatprep.subr.bf16.mxu0 0
        %1153 = vmatpush1.bf16.msra.mxu0 0
        %1154 = vmatprep.subr.bf16.mxu0 0
        %1155 = vmatpush1.bf16.msra.mxu0 0
        %1156 = vmatprep.subr.bf16.mxu0 0
        %1157 = vmatpush1.bf16.msra.mxu0 0
        %1158 = vmatprep.subr.bf16.mxu0 0
        %1159 = vmatpush1.bf16.msra.mxu0 0
        %1160 = vmatprep.subr.bf16.mxu0 0
        %1161 = vmatpush1.bf16.msra.mxu0 0
        %1162 = vmatprep.subr.bf16.mxu0 0
        %1163 = vmatpush1.bf16.msra.mxu0 0
        %1164 = vmatprep.subr.bf16.mxu0 0
        %1165 = vmatpush1.bf16.msra.mxu0 0
        %1166 = vmatprep.subr.bf16.mxu0 0
        %1167 = vmatpush1.bf16.msra.mxu0 0
        %1168 = vmatprep.subr.bf16.mxu0 0
        %1169 = vmatpush1.bf16.msra.mxu0 0
        %1170 = vmatprep.subr.bf16.mxu0 0
        %1171 = vmatpush1.bf16.msra.mxu0 0
        %1172 = vmatprep.subr.bf16.mxu0 0
        %1173 = vmatpush1.bf16.msra.mxu0 0
        %1174 = vmatprep.subr.bf16.mxu0 0
        %1175 = vmatpush1.bf16.msra.mxu0 0
        %1176 = vmatprep.subr.bf16.mxu0 0
        %1177 = vmatpush1.bf16.msra.mxu0 0
        %1178 = vmatprep.mubr.bf16.mxu0 0
        %1179 = vmatmul.mubr.bf16.gmra.mrb[0].mxu0 %v1144
        %v1180 = vpop.f32.mrb[0].mxu0
        %v1181 = vadd.f32 0.0, %v1180
        %v1182 = vpop.f32.mrb[0].mxu0
        %v1183 = vpop.f32.mrb[0].mxu0
        %v1184 = vadd.f32 0.0, %v1183
        %v1185 = vpop.f32.mrb[0].mxu0
        %1186 = vdwg.mxu0
        %v1188 = vsel %vm1096, %v1142, 0
        %1190 = vmatprep.subr.bf16.mxu0 0
        %1191 = vmatpush1.bf16.msra.mxu0 %v1000
        %1192 = vmatprep.subr.bf16.mxu0 0
        %1193 = vmatpush1.bf16.msra.mxu0 0
        %1194 = vmatprep.subr.bf16.mxu0 0
        %1195 = vmatpush1.bf16.msra.mxu0 0
        %1196 = vmatprep.subr.bf16.mxu0 0
        %1197 = vmatpush1.bf16.msra.mxu0 0
        %1198 = vmatprep.subr.bf16.mxu0 0
        %1199 = vmatpush1.bf16.msra.mxu0 0
        %1200 = vmatprep.subr.bf16.mxu0 0
        %1201 = vmatpush1.bf16.msra.mxu0 0
        %1202 = vmatprep.subr.bf16.mxu0 0
        %1203 = vmatpush1.bf16.msra.mxu0 0
        %1204 = vmatprep.subr.bf16.mxu0 0
        %1205 = vmatpush1.bf16.msra.mxu0 0
        %1206 = vmatprep.subr.bf16.mxu0 0
        %1207 = vmatpush1.bf16.msra.mxu0 0
        %1208 = vmatprep.subr.bf16.mxu0 0
        %1209 = vmatpush1.bf16.msra.mxu0 0
        %1210 = vmatprep.subr.bf16.mxu0 0
        %1211 = vmatpush1.bf16.msra.mxu0 0
        %1212 = vmatprep.subr.bf16.mxu0 0
        %1213 = vmatpush1.bf16.msra.mxu0 0
        %1214 = vmatprep.subr.bf16.mxu0 0
        %1215 = vmatpush1.bf16.msra.mxu0 0
        %1216 = vmatprep.subr.bf16.mxu0 0
        %1217 = vmatpush1.bf16.msra.mxu0 0
        %1218 = vmatprep.subr.bf16.mxu0 0
        %1219 = vmatpush1.bf16.msra.mxu0 0
        %1220 = vmatprep.subr.bf16.mxu0 0
        %1221 = vmatpush1.bf16.msra.mxu0 0
        %1222 = vmatprep.mubr.bf16.mxu0 0
        %1223 = vmatmul.mubr.bf16.gmra.mrb[0].mxu0 %v1188
        %v1224 = vpop.f32.mrb[0].mxu0
        %v1225 = vadd.f32 0.0, %v1224
        %v1226 = vpop.f32.mrb[0].mxu0
        %v1227 = vpop.f32.mrb[0].mxu0
        %v1228 = vadd.f32 0.0, %v1227
        %v1229 = vpop.f32.mrb[0].mxu0
        %1230 = vdwg.mxu0
        %1232 = vrot.lane.b32.xlu0 %v995, 96
        %v1233 = vpop.permute.xlu0 %1232
        %1235 = vrot.lane.b32.xlu0 %v997, 96
        %v1236 = vpop.permute.xlu0 %1235
        %v1238 = vsel %vm1001, %v1233, 0
        %v1241 = vsel %vm1001, %v1236, 0
        %1243 = vmatprep.subr.bf16.mxu0 0
        %1244 = vmatpush1.bf16.xpose.msra.mxu0 %v1241
        %1245 = vmatprep.subr.bf16.mxu0 0
        %1246 = vmatpush1.bf16.xpose.msra.mxu0 0
        %1247 = vmatprep.subr.bf16.mxu0 0
        %1248 = vmatpush1.bf16.xpose.msra.mxu0 0
        %1249 = vmatprep.subr.bf16.mxu0 0
        %1250 = vmatpush1.bf16.xpose.msra.mxu0 0
        %1251 = vmatprep.subr.bf16.mxu0 0
        %1252 = vmatpush1.bf16.xpose.msra.mxu0 0
        %1253 = vmatprep.subr.bf16.mxu0 0
        %1254 = vmatpush1.bf16.xpose.msra.mxu0 0
        %1255 = vmatprep.subr.bf16.mxu0 0
        %1256 = vmatpush1.bf16.xpose.msra.mxu0 0
        %1257 = vmatprep.subr.bf16.mxu0 0
        %1258 = vmatpush1.bf16.xpose.msra.mxu0 0
        %1259 = vmatprep.subr.bf16.mxu0 0
        %1260 = vmatpush1.bf16.xpose.msra.mxu0 0
        %1261 = vmatprep.subr.bf16.mxu0 0
        %1262 = vmatpush1.bf16.xpose.msra.mxu0 0
        %1263 = vmatprep.subr.bf16.mxu0 0
        %1264 = vmatpush1.bf16.xpose.msra.mxu0 0
        %1265 = vmatprep.subr.bf16.mxu0 0
        %1266 = vmatpush1.bf16.xpose.msra.mxu0 0
        %1267 = vmatprep.subr.bf16.mxu0 0
        %1268 = vmatpush1.bf16.xpose.msra.mxu0 0
        %1269 = vmatprep.subr.bf16.mxu0 0
        %1270 = vmatpush1.bf16.xpose.msra.mxu0 0
        %1271 = vmatprep.subr.bf16.mxu0 0
        %1272 = vmatpush1.bf16.xpose.msra.mxu0 0
        %1273 = vmatprep.subr.bf16.mxu0 0
        %1274 = vmatpush1.bf16.xpose.msra.mxu0 0
        %1275 = vmatprep.mubr.bf16.mxu0 0
        %1276 = vmatmul.mubr.bf16.gmra.mrb[0].mxu0 %v1238
        %v1277 = vpop.f32.mrb[0].mxu0
        %v1278 = vadd.f32 0.0, %v1277
        %v1279 = vpop.f32.mrb[0].mxu0
        %v1280 = vpop.f32.mrb[0].mxu0
        %v1281 = vadd.f32 0.0, %v1280
        %v1282 = vpop.f32.mrb[0].mxu0
        %1283 = vdwg.mxu0
        %1285 = vrot.lane.b32.xlu0 %v996, 96
        %v1286 = vpop.permute.xlu0 %1285
        %1288 = vrot.lane.b32.xlu0 %v998, 96
        %v1289 = vpop.permute.xlu0 %1288
        %v1291 = vsel %vm1001, %v1286, 0
        %v1294 = vsel %vm1001, %v1289, 0
        %1296 = vmatprep.subr.bf16.mxu0 0
        %1297 = vmatpush1.bf16.xpose.msra.mxu0 %v1294
        %1298 = vmatprep.subr.bf16.mxu0 0
        %1299 = vmatpush1.bf16.xpose.msra.mxu0 0
        %1300 = vmatprep.subr.bf16.mxu0 0
        %1301 = vmatpush1.bf16.xpose.msra.mxu0 0
        %1302 = vmatprep.subr.bf16.mxu0 0
        %1303 = vmatpush1.bf16.xpose.msra.mxu0 0
        %1304 = vmatprep.subr.bf16.mxu0 0
        %1305 = vmatpush1.bf16.xpose.msra.mxu0 0
        %1306 = vmatprep.subr.bf16.mxu0 0
        %1307 = vmatpush1.bf16.xpose.msra.mxu0 0
        %1308 = vmatprep.subr.bf16.mxu0 0
        %1309 = vmatpush1.bf16.xpose.msra.mxu0 0
        %1310 = vmatprep.subr.bf16.mxu0 0
        %1311 = vmatpush1.bf16.xpose.msra.mxu0 0
        %1312 = vmatprep.subr.bf16.mxu0 0
        %1313 = vmatpush1.bf16.xpose.msra.mxu0 0
        %1314 = vmatprep.subr.bf16.mxu0 0
        %1315 = vmatpush1.bf16.xpose.msra.mxu0 0
        %1316 = vmatprep.subr.bf16.mxu0 0
        %1317 = vmatpush1.bf16.xpose.msra.mxu0 0
        %1318 = vmatprep.subr.bf16.mxu0 0
        %1319 = vmatpush1.bf16.xpose.msra.mxu0 0
        %1320 = vmatprep.subr.bf16.mxu0 0
        %1321 = vmatpush1.bf16.xpose.msra.mxu0 0
        %1322 = vmatprep.subr.bf16.mxu0 0
        %1323 = vmatpush1.bf16.xpose.msra.mxu0 0
        %1324 = vmatprep.subr.bf16.mxu0 0
        %1325 = vmatpush1.bf16.xpose.msra.mxu0 0
        %1326 = vmatprep.subr.bf16.mxu0 0
        %1327 = vmatpush1.bf16.xpose.msra.mxu0 0
        %1328 = vmatprep.mubr.bf16.mxu0 0
        %1329 = vmatmul.mubr.bf16.gmra.mrb[0].mxu0 %v1291
        %v1330 = vpop.f32.mrb[0].mxu0
        %v1331 = vadd.f32 0.0, %v1330
        %v1332 = vpop.f32.mrb[0].mxu0
        %v1333 = vpop.f32.mrb[0].mxu0
        %v1334 = vadd.f32 0.0, %v1333
        %v1335 = vpop.f32.mrb[0].mxu0
        %1336 = vdwg.mxu0
        %v1337 = vsel %vm1096, %v1278, -inf
        %1338 = vmax.xlane.f32.xlu0 %v1337
        %v1339 = vpop.xlane.xlu0 %1338
        %v1340 = vsel %vm1096, %v1281, -inf
        %1341 = vmax.xlane.f32.xlu0 %v1340
        %v1342 = vpop.xlane.xlu0 %1341
        %v1343 = vsel %vm1096, %v1331, -inf
        %1344 = vmax.xlane.f32.xlu0 %v1343
        %v1345 = vpop.xlane.xlu0 %1344
        %v1346 = vsel %vm1096, %v1334, -inf
        %1347 = vmax.xlane.f32.xlu0 %v1346
        %v1348 = vpop.xlane.xlu0 %1347
        %v1349 = vsub.f32 %v1278, %v1339
        %v1350 = vsub.f32 %v1281, %v1342
        %v1351 = vsub.f32 %v1331, %v1345
        %v1352 = vsub.f32 %v1334, %v1348
        %v1353 = vmul.f32 %v1349, 1.442695
        %v1354 = vpow.pop %v1353
        %v1355 = vmul.f32 %v1350, 1.442695
        %v1356 = vpow.pop %v1355
        %v1357 = vmul.f32 %v1351, 1.442695
        %v1358 = vpow.pop %v1357
        %v1359 = vmul.f32 %v1352, 1.442695
        %v1360 = vpow.pop %v1359
        %v1361 = vsel %vm1096, %v1354, 0.0
        %1362 = vadd.xlane.f32.xlu0 %v1361
        %v1363 = vpop.xlane.xlu0 %1362
        %v1364 = vsel %vm1096, %v1356, 0.0
        %1365 = vadd.xlane.f32.xlu0 %v1364
        %v1366 = vpop.xlane.xlu0 %1365
        %v1367 = vsel %vm1096, %v1358, 0.0
        %1368 = vadd.xlane.f32.xlu0 %v1367
        %v1369 = vpop.xlane.xlu0 %1368
        %v1370 = vsel %vm1096, %v1360, 0.0
        %1371 = vadd.xlane.f32.xlu0 %v1370
        %v1372 = vpop.xlane.xlu0 %1371
        %v1373 = vrcp.pop %v1363
        %v1374 = vrcp.pop %v1366
        %v1375 = vrcp.pop %v1369
        %v1376 = vrcp.pop %v1372
        %v1377 = vmul.f32 %v1354, %v1373
        %v1378 = vmul.f32 %v1356, %v1374
        %v1379 = vmul.f32 %v1358, %v1375
        %v1380 = vmul.f32 %v1360, %v1376
        %v1381 = vpack.c.bf16 %v1378, %v1377
        %v1382 = vpack.c.bf16 %v1380, %v1379
        %1384 = vrot.lane.b32.xlu0 %v999, 96
        %v1385 = vpop.permute.xlu0 %1384
        %v1388 = vsel %vm1096, %v1381, 0
        %1390 = vmatprep.subr.bf16.mxu0 0
        %1391 = vmatpush1.bf16.msra.mxu0 %v1385
        %1392 = vmatprep.subr.bf16.mxu0 0
        %1393 = vmatpush1.bf16.msra.mxu0 0
        %1394 = vmatprep.subr.bf16.mxu0 0
        %1395 = vmatpush1.bf16.msra.mxu0 0
        %1396 = vmatprep.subr.bf16.mxu0 0
        %1397 = vmatpush1.bf16.msra.mxu0 0
        %1398 = vmatprep.subr.bf16.mxu0 0
        %1399 = vmatpush1.bf16.msra.mxu0 0
        %1400 = vmatprep.subr.bf16.mxu0 0
        %1401 = vmatpush1.bf16.msra.mxu0 0
        %1402 = vmatprep.subr.bf16.mxu0 0
        %1403 = vmatpush1.bf16.msra.mxu0 0
        %1404 = vmatprep.subr.bf16.mxu0 0
        %1405 = vmatpush1.bf16.msra.mxu0 0
        %1406 = vmatprep.subr.bf16.mxu0 0
        %1407 = vmatpush1.bf16.msra.mxu0 0
        %1408 = vmatprep.subr.bf16.mxu0 0
        %1409 = vmatpush1.bf16.msra.mxu0 0
        %1410 = vmatprep.subr.bf16.mxu0 0
        %1411 = vmatpush1.bf16.msra.mxu0 0
        %1412 = vmatprep.subr.bf16.mxu0 0
        %1413 = vmatpush1.bf16.msra.mxu0 0
        %1414 = vmatprep.subr.bf16.mxu0 0
        %1415 = vmatpush1.bf16.msra.mxu0 0
        %1416 = vmatprep.subr.bf16.mxu0 0
        %1417 = vmatpush1.bf16.msra.mxu0 0
        %1418 = vmatprep.subr.bf16.mxu0 0
        %1419 = vmatpush1.bf16.msra.mxu0 0
        %1420 = vmatprep.subr.bf16.mxu0 0
        %1421 = vmatpush1.bf16.msra.mxu0 0
        %1422 = vmatprep.mubr.bf16.mxu0 0
        %1423 = vmatmul.mubr.bf16.gmra.mrb[0].mxu0 %v1388
        %v1424 = vpop.f32.mrb[0].mxu0
        %v1425 = vadd.f32 0.0, %v1424
        %v1426 = vpop.f32.mrb[0].mxu0
        %v1427 = vpop.f32.mrb[0].mxu0
        %v1428 = vadd.f32 0.0, %v1427
        %v1429 = vpop.f32.mrb[0].mxu0
        %1430 = vdwg.mxu0
        %1432 = vrot.lane.b32.xlu0 %v1000, 96
        %v1433 = vpop.permute.xlu0 %1432
        %v1436 = vsel %vm1096, %v1382, 0
        %1438 = vmatprep.subr.bf16.mxu0 0
        %1439 = vmatpush1.bf16.msra.mxu0 %v1433
        %1440 = vmatprep.subr.bf16.mxu0 0
        %1441 = vmatpush1.bf16.msra.mxu0 0
        %1442 = vmatprep.subr.bf16.mxu0 0
        %1443 = vmatpush1.bf16.msra.mxu0 0
        %1444 = vmatprep.subr.bf16.mxu0 0
        %1445 = vmatpush1.bf16.msra.mxu0 0
        %1446 = vmatprep.subr.bf16.mxu0 0
        %1447 = vmatpush1.bf16.msra.mxu0 0
        %1448 = vmatprep.subr.bf16.mxu0 0
        %1449 = vmatpush1.bf16.msra.mxu0 0
        %1450 = vmatprep.subr.bf16.mxu0 0
        %1451 = vmatpush1.bf16.msra.mxu0 0
        %1452 = vmatprep.subr.bf16.mxu0 0
        %1453 = vmatpush1.bf16.msra.mxu0 0
        %1454 = vmatprep.subr.bf16.mxu0 0
        %1455 = vmatpush1.bf16.msra.mxu0 0
        %1456 = vmatprep.subr.bf16.mxu0 0
        %1457 = vmatpush1.bf16.msra.mxu0 0
        %1458 = vmatprep.subr.bf16.mxu0 0
        %1459 = vmatpush1.bf16.msra.mxu0 0
        %1460 = vmatprep.subr.bf16.mxu0 0
        %1461 = vmatpush1.bf16.msra.mxu0 0
        %1462 = vmatprep.subr.bf16.mxu0 0
        %1463 = vmatpush1.bf16.msra.mxu0 0
        %1464 = vmatprep.subr.bf16.mxu0 0
        %1465 = vmatpush1.bf16.msra.mxu0 0
        %1466 = vmatprep.subr.bf16.mxu0 0
        %1467 = vmatpush1.bf16.msra.mxu0 0
        %1468 = vmatprep.subr.bf16.mxu0 0
        %1469 = vmatpush1.bf16.msra.mxu0 0
        %1470 = vmatprep.mubr.bf16.mxu0 0
        %1471 = vmatmul.mubr.bf16.gmra.mrb[0].mxu0 %v1436
        %v1472 = vpop.f32.mrb[0].mxu0
        %v1473 = vadd.f32 0.0, %v1472
        %v1474 = vpop.f32.mrb[0].mxu0
        %v1475 = vpop.f32.mrb[0].mxu0
        %v1476 = vadd.f32 0.0, %v1475
        %v1477 = vpop.f32.mrb[0].mxu0
        %1478 = vdwg.mxu0
        %1479 = vrot.lane.b32.xlu0 %v995, 64
        %v1480 = vpop.permute.xlu0 %1479
        %1481 = vrot.lane.b32.xlu0 %v997, 64
        %v1482 = vpop.permute.xlu0 %1481
        %v1484 = vsel %vm1001, %v1480, 0
        %v1487 = vsel %vm1001, %v1482, 0
        %1489 = vmatprep.subr.bf16.mxu0 0
        %1490 = vmatpush1.bf16.xpose.msra.mxu0 %v1487
        %1491 = vmatprep.subr.bf16.mxu0 0
        %1492 = vmatpush1.bf16.xpose.msra.mxu0 0
        %1493 = vmatprep.subr.bf16.mxu0 0
        %1494 = vmatpush1.bf16.xpose.msra.mxu0 0
        %1495 = vmatprep.subr.bf16.mxu0 0
        %1496 = vmatpush1.bf16.xpose.msra.mxu0 0
        %1497 = vmatprep.subr.bf16.mxu0 0
        %1498 = vmatpush1.bf16.xpose.msra.mxu0 0
        %1499 = vmatprep.subr.bf16.mxu0 0
        %1500 = vmatpush1.bf16.xpose.msra.mxu0 0
        %1501 = vmatprep.subr.bf16.mxu0 0
        %1502 = vmatpush1.bf16.xpose.msra.mxu0 0
        %1503 = vmatprep.subr.bf16.mxu0 0
        %1504 = vmatpush1.bf16.xpose.msra.mxu0 0
        %1505 = vmatprep.subr.bf16.mxu0 0
        %1506 = vmatpush1.bf16.xpose.msra.mxu0 0
        %1507 = vmatprep.subr.bf16.mxu0 0
        %1508 = vmatpush1.bf16.xpose.msra.mxu0 0
        %1509 = vmatprep.subr.bf16.mxu0 0
        %1510 = vmatpush1.bf16.xpose.msra.mxu0 0
        %1511 = vmatprep.subr.bf16.mxu0 0
        %1512 = vmatpush1.bf16.xpose.msra.mxu0 0
        %1513 = vmatprep.subr.bf16.mxu0 0
        %1514 = vmatpush1.bf16.xpose.msra.mxu0 0
        %1515 = vmatprep.subr.bf16.mxu0 0
        %1516 = vmatpush1.bf16.xpose.msra.mxu0 0
        %1517 = vmatprep.subr.bf16.mxu0 0
        %1518 = vmatpush1.bf16.xpose.msra.mxu0 0
        %1519 = vmatprep.subr.bf16.mxu0 0
        %1520 = vmatpush1.bf16.xpose.msra.mxu0 0
        %1521 = vmatprep.mubr.bf16.mxu0 0
        %1522 = vmatmul.mubr.bf16.gmra.mrb[0].mxu0 %v1484
        %v1523 = vpop.f32.mrb[0].mxu0
        %v1524 = vadd.f32 0.0, %v1523
        %v1525 = vpop.f32.mrb[0].mxu0
        %v1526 = vpop.f32.mrb[0].mxu0
        %v1527 = vadd.f32 0.0, %v1526
        %v1528 = vpop.f32.mrb[0].mxu0
        %1529 = vdwg.mxu0
        %1530 = vrot.lane.b32.xlu0 %v996, 64
        %v1531 = vpop.permute.xlu0 %1530
        %1532 = vrot.lane.b32.xlu0 %v998, 64
        %v1533 = vpop.permute.xlu0 %1532
        %v1535 = vsel %vm1001, %v1531, 0
        %v1538 = vsel %vm1001, %v1533, 0
        %1540 = vmatprep.subr.bf16.mxu0 0
        %1541 = vmatpush1.bf16.xpose.msra.mxu0 %v1538
        %1542 = vmatprep.subr.bf16.mxu0 0
        %1543 = vmatpush1.bf16.xpose.msra.mxu0 0
        %1544 = vmatprep.subr.bf16.mxu0 0
        %1545 = vmatpush1.bf16.xpose.msra.mxu0 0
        %1546 = vmatprep.subr.bf16.mxu0 0
        %1547 = vmatpush1.bf16.xpose.msra.mxu0 0
        %1548 = vmatprep.subr.bf16.mxu0 0
        %1549 = vmatpush1.bf16.xpose.msra.mxu0 0
        %1550 = vmatprep.subr.bf16.mxu0 0
        %1551 = vmatpush1.bf16.xpose.msra.mxu0 0
        %1552 = vmatprep.subr.bf16.mxu0 0
        %1553 = vmatpush1.bf16.xpose.msra.mxu0 0
        %1554 = vmatprep.subr.bf16.mxu0 0
        %1555 = vmatpush1.bf16.xpose.msra.mxu0 0
        %1556 = vmatprep.subr.bf16.mxu0 0
        %1557 = vmatpush1.bf16.xpose.msra.mxu0 0
        %1558 = vmatprep.subr.bf16.mxu0 0
        %1559 = vmatpush1.bf16.xpose.msra.mxu0 0
        %1560 = vmatprep.subr.bf16.mxu0 0
        %1561 = vmatpush1.bf16.xpose.msra.mxu0 0
        %1562 = vmatprep.subr.bf16.mxu0 0
        %1563 = vmatpush1.bf16.xpose.msra.mxu0 0
        %1564 = vmatprep.subr.bf16.mxu0 0
        %1565 = vmatpush1.bf16.xpose.msra.mxu0 0
        %1566 = vmatprep.subr.bf16.mxu0 0
        %1567 = vmatpush1.bf16.xpose.msra.mxu0 0
        %1568 = vmatprep.subr.bf16.mxu0 0
        %1569 = vmatpush1.bf16.xpose.msra.mxu0 0
        %1570 = vmatprep.subr.bf16.mxu0 0
        %1571 = vmatpush1.bf16.xpose.msra.mxu0 0
        %1572 = vmatprep.mubr.bf16.mxu0 0
        %1573 = vmatmul.mubr.bf16.gmra.mrb[0].mxu0 %v1535
        %v1574 = vpop.f32.mrb[0].mxu0
        %v1575 = vadd.f32 0.0, %v1574
        %v1576 = vpop.f32.mrb[0].mxu0
        %v1577 = vpop.f32.mrb[0].mxu0
        %v1578 = vadd.f32 0.0, %v1577
        %v1579 = vpop.f32.mrb[0].mxu0
        %1580 = vdwg.mxu0
        %v1581 = vsel %vm1096, %v1524, -inf
        %1582 = vmax.xlane.f32.xlu0 %v1581
        %v1583 = vpop.xlane.xlu0 %1582
        %v1584 = vsel %vm1096, %v1527, -inf
        %1585 = vmax.xlane.f32.xlu0 %v1584
        %v1586 = vpop.xlane.xlu0 %1585
        %v1587 = vsel %vm1096, %v1575, -inf
        %1588 = vmax.xlane.f32.xlu0 %v1587
        %v1589 = vpop.xlane.xlu0 %1588
        %v1590 = vsel %vm1096, %v1578, -inf
        %1591 = vmax.xlane.f32.xlu0 %v1590
        %v1592 = vpop.xlane.xlu0 %1591
        %v1593 = vsub.f32 %v1524, %v1583
        %v1594 = vsub.f32 %v1527, %v1586
        %v1595 = vsub.f32 %v1575, %v1589
        %v1596 = vsub.f32 %v1578, %v1592
        %v1597 = vmul.f32 %v1593, 1.442695
        %v1598 = vpow.pop %v1597
        %v1599 = vmul.f32 %v1594, 1.442695
        %v1600 = vpow.pop %v1599
        %v1601 = vmul.f32 %v1595, 1.442695
        %v1602 = vpow.pop %v1601
        %v1603 = vmul.f32 %v1596, 1.442695
        %v1604 = vpow.pop %v1603
        %v1605 = vsel %vm1096, %v1598, 0.0
        %1606 = vadd.xlane.f32.xlu0 %v1605
        %v1607 = vpop.xlane.xlu0 %1606
        %v1608 = vsel %vm1096, %v1600, 0.0
        %1609 = vadd.xlane.f32.xlu0 %v1608
        %v1610 = vpop.xlane.xlu0 %1609
        %v1611 = vsel %vm1096, %v1602, 0.0
        %1612 = vadd.xlane.f32.xlu0 %v1611
        %v1613 = vpop.xlane.xlu0 %1612
        %v1614 = vsel %vm1096, %v1604, 0.0
        %1615 = vadd.xlane.f32.xlu0 %v1614
        %v1616 = vpop.xlane.xlu0 %1615
        %v1617 = vrcp.pop %v1607
        %v1618 = vrcp.pop %v1610
        %v1619 = vrcp.pop %v1613
        %v1620 = vrcp.pop %v1616
        %v1621 = vmul.f32 %v1598, %v1617
        %v1622 = vmul.f32 %v1600, %v1618
        %v1623 = vmul.f32 %v1602, %v1619
        %v1624 = vmul.f32 %v1604, %v1620
        %v1625 = vpack.c.bf16 %v1622, %v1621
        %v1626 = vpack.c.bf16 %v1624, %v1623
        %1627 = vrot.lane.b32.xlu0 %v999, 64
        %v1628 = vpop.permute.xlu0 %1627
        %v1631 = vsel %vm1096, %v1625, 0
        %1633 = vmatprep.subr.bf16.mxu0 0
        %1634 = vmatpush1.bf16.msra.mxu0 %v1628
        %1635 = vmatprep.subr.bf16.mxu0 0
        %1636 = vmatpush1.bf16.msra.mxu0 0
        %1637 = vmatprep.subr.bf16.mxu0 0
        %1638 = vmatpush1.bf16.msra.mxu0 0
        %1639 = vmatprep.subr.bf16.mxu0 0
        %1640 = vmatpush1.bf16.msra.mxu0 0
        %1641 = vmatprep.subr.bf16.mxu0 0
        %1642 = vmatpush1.bf16.msra.mxu0 0
        %1643 = vmatprep.subr.bf16.mxu0 0
        %1644 = vmatpush1.bf16.msra.mxu0 0
        %1645 = vmatprep.subr.bf16.mxu0 0
        %1646 = vmatpush1.bf16.msra.mxu0 0
        %1647 = vmatprep.subr.bf16.mxu0 0
        %1648 = vmatpush1.bf16.msra.mxu0 0
        %1649 = vmatprep.subr.bf16.mxu0 0
        %1650 = vmatpush1.bf16.msra.mxu0 0
        %1651 = vmatprep.subr.bf16.mxu0 0
        %1652 = vmatpush1.bf16.msra.mxu0 0
        %1653 = vmatprep.subr.bf16.mxu0 0
        %1654 = vmatpush1.bf16.msra.mxu0 0
        %1655 = vmatprep.subr.bf16.mxu0 0
        %1656 = vmatpush1.bf16.msra.mxu0 0
        %1657 = vmatprep.subr.bf16.mxu0 0
        %1658 = vmatpush1.bf16.msra.mxu0 0
        %1659 = vmatprep.subr.bf16.mxu0 0
        %1660 = vmatpush1.bf16.msra.mxu0 0
        %1661 = vmatprep.subr.bf16.mxu0 0
        %1662 = vmatpush1.bf16.msra.mxu0 0
        %1663 = vmatprep.subr.bf16.mxu0 0
        %1664 = vmatpush1.bf16.msra.mxu0 0
        %1665 = vmatprep.mubr.bf16.mxu0 0
        %1666 = vmatmul.mubr.bf16.gmra.mrb[0].mxu0 %v1631
        %v1667 = vpop.f32.mrb[0].mxu0
        %v1668 = vadd.f32 0.0, %v1667
        %v1669 = vpop.f32.mrb[0].mxu0
        %v1670 = vpop.f32.mrb[0].mxu0
        %v1671 = vadd.f32 0.0, %v1670
        %v1672 = vpop.f32.mrb[0].mxu0
        %1673 = vdwg.mxu0
        %1674 = vrot.lane.b32.xlu0 %v1000, 64
        %v1675 = vpop.permute.xlu0 %1674
        %v1678 = vsel %vm1096, %v1626, 0
        %1680 = vmatprep.subr.bf16.mxu0 0
        %1681 = vmatpush1.bf16.msra.mxu0 %v1675
        %1682 = vmatprep.subr.bf16.mxu0 0
        %1683 = vmatpush1.bf16.msra.mxu0 0
        %1684 = vmatprep.subr.bf16.mxu0 0
        %1685 = vmatpush1.bf16.msra.mxu0 0
        %1686 = vmatprep.subr.bf16.mxu0 0
        %1687 = vmatpush1.bf16.msra.mxu0 0
        %1688 = vmatprep.subr.bf16.mxu0 0
        %1689 = vmatpush1.bf16.msra.mxu0 0
        %1690 = vmatprep.subr.bf16.mxu0 0
        %1691 = vmatpush1.bf16.msra.mxu0 0
        %1692 = vmatprep.subr.bf16.mxu0 0
        %1693 = vmatpush1.bf16.msra.mxu0 0
        %1694 = vmatprep.subr.bf16.mxu0 0
        %1695 = vmatpush1.bf16.msra.mxu0 0
        %1696 = vmatprep.subr.bf16.mxu0 0
        %1697 = vmatpush1.bf16.msra.mxu0 0
        %1698 = vmatprep.subr.bf16.mxu0 0
        %1699 = vmatpush1.bf16.msra.mxu0 0
        %1700 = vmatprep.subr.bf16.mxu0 0
        %1701 = vmatpush1.bf16.msra.mxu0 0
        %1702 = vmatprep.subr.bf16.mxu0 0
        %1703 = vmatpush1.bf16.msra.mxu0 0
        %1704 = vmatprep.subr.bf16.mxu0 0
        %1705 = vmatpush1.bf16.msra.mxu0 0
        %1706 = vmatprep.subr.bf16.mxu0 0
        %1707 = vmatpush1.bf16.msra.mxu0 0
        %1708 = vmatprep.subr.bf16.mxu0 0
        %1709 = vmatpush1.bf16.msra.mxu0 0
        %1710 = vmatprep.subr.bf16.mxu0 0
        %1711 = vmatpush1.bf16.msra.mxu0 0
        %1712 = vmatprep.mubr.bf16.mxu0 0
        %1713 = vmatmul.mubr.bf16.gmra.mrb[0].mxu0 %v1678
        %v1714 = vpop.f32.mrb[0].mxu0
        %v1715 = vadd.f32 0.0, %v1714
        %v1716 = vpop.f32.mrb[0].mxu0
        %v1717 = vpop.f32.mrb[0].mxu0
        %v1718 = vadd.f32 0.0, %v1717
        %v1719 = vpop.f32.mrb[0].mxu0
        %1720 = vdwg.mxu0
        %1721 = vrot.lane.b32.xlu0 %v995, 32
        %v1722 = vpop.permute.xlu0 %1721
        %1723 = vrot.lane.b32.xlu0 %v997, 32
        %v1724 = vpop.permute.xlu0 %1723
        %v1726 = vsel %vm1001, %v1722, 0
        %v1729 = vsel %vm1001, %v1724, 0
        %1731 = vmatprep.subr.bf16.mxu0 0
        %1732 = vmatpush1.bf16.xpose.msra.mxu0 %v1729
        %1733 = vmatprep.subr.bf16.mxu0 0
        %1734 = vmatpush1.bf16.xpose.msra.mxu0 0
        %1735 = vmatprep.subr.bf16.mxu0 0
        %1736 = vmatpush1.bf16.xpose.msra.mxu0 0
        %1737 = vmatprep.subr.bf16.mxu0 0
        %1738 = vmatpush1.bf16.xpose.msra.mxu0 0
        %1739 = vmatprep.subr.bf16.mxu0 0
        %1740 = vmatpush1.bf16.xpose.msra.mxu0 0
        %1741 = vmatprep.subr.bf16.mxu0 0
        %1742 = vmatpush1.bf16.xpose.msra.mxu0 0
        %1743 = vmatprep.subr.bf16.mxu0 0
        %1744 = vmatpush1.bf16.xpose.msra.mxu0 0
        %1745 = vmatprep.subr.bf16.mxu0 0
        %1746 = vmatpush1.bf16.xpose.msra.mxu0 0
        %1747 = vmatprep.subr.bf16.mxu0 0
        %1748 = vmatpush1.bf16.xpose.msra.mxu0 0
        %1749 = vmatprep.subr.bf16.mxu0 0
        %1750 = vmatpush1.bf16.xpose.msra.mxu0 0
        %1751 = vmatprep.subr.bf16.mxu0 0
        %1752 = vmatpush1.bf16.xpose.msra.mxu0 0
        %1753 = vmatprep.subr.bf16.mxu0 0
        %1754 = vmatpush1.bf16.xpose.msra.mxu0 0
        %1755 = vmatprep.subr.bf16.mxu0 0
        %1756 = vmatpush1.bf16.xpose.msra.mxu0 0
        %1757 = vmatprep.subr.bf16.mxu0 0
        %1758 = vmatpush1.bf16.xpose.msra.mxu0 0
        %1759 = vmatprep.subr.bf16.mxu0 0
        %1760 = vmatpush1.bf16.xpose.msra.mxu0 0
        %1761 = vmatprep.subr.bf16.mxu0 0
        %1762 = vmatpush1.bf16.xpose.msra.mxu0 0
        %1763 = vmatprep.mubr.bf16.mxu0 0
        %1764 = vmatmul.mubr.bf16.gmra.mrb[0].mxu0 %v1726
        %v1765 = vpop.f32.mrb[0].mxu0
        %v1766 = vadd.f32 0.0, %v1765
        %v1767 = vpop.f32.mrb[0].mxu0
        %v1768 = vpop.f32.mrb[0].mxu0
        %v1769 = vadd.f32 0.0, %v1768
        %v1770 = vpop.f32.mrb[0].mxu0
        %1771 = vdwg.mxu0
        %1772 = vrot.lane.b32.xlu0 %v996, 32
        %v1773 = vpop.permute.xlu0 %1772
        %1774 = vrot.lane.b32.xlu0 %v998, 32
        %v1775 = vpop.permute.xlu0 %1774
        %v1777 = vsel %vm1001, %v1773, 0
        %v1780 = vsel %vm1001, %v1775, 0
        %1782 = vmatprep.subr.bf16.mxu0 0
        %1783 = vmatpush1.bf16.xpose.msra.mxu0 %v1780
        %1784 = vmatprep.subr.bf16.mxu0 0
        %1785 = vmatpush1.bf16.xpose.msra.mxu0 0
        %1786 = vmatprep.subr.bf16.mxu0 0
        %1787 = vmatpush1.bf16.xpose.msra.mxu0 0
        %1788 = vmatprep.subr.bf16.mxu0 0
        %1789 = vmatpush1.bf16.xpose.msra.mxu0 0
        %1790 = vmatprep.subr.bf16.mxu0 0
        %1791 = vmatpush1.bf16.xpose.msra.mxu0 0
        %1792 = vmatprep.subr.bf16.mxu0 0
        %1793 = vmatpush1.bf16.xpose.msra.mxu0 0
        %1794 = vmatprep.subr.bf16.mxu0 0
        %1795 = vmatpush1.bf16.xpose.msra.mxu0 0
        %1796 = vmatprep.subr.bf16.mxu0 0
        %1797 = vmatpush1.bf16.xpose.msra.mxu0 0
        %1798 = vmatprep.subr.bf16.mxu0 0
        %1799 = vmatpush1.bf16.xpose.msra.mxu0 0
        %1800 = vmatprep.subr.bf16.mxu0 0
        %1801 = vmatpush1.bf16.xpose.msra.mxu0 0
        %1802 = vmatprep.subr.bf16.mxu0 0
        %1803 = vmatpush1.bf16.xpose.msra.mxu0 0
        %1804 = vmatprep.subr.bf16.mxu0 0
        %1805 = vmatpush1.bf16.xpose.msra.mxu0 0
        %1806 = vmatprep.subr.bf16.mxu0 0
        %1807 = vmatpush1.bf16.xpose.msra.mxu0 0
        %1808 = vmatprep.subr.bf16.mxu0 0
        %1809 = vmatpush1.bf16.xpose.msra.mxu0 0
        %1810 = vmatprep.subr.bf16.mxu0 0
        %1811 = vmatpush1.bf16.xpose.msra.mxu0 0
        %1812 = vmatprep.subr.bf16.mxu0 0
        %1813 = vmatpush1.bf16.xpose.msra.mxu0 0
        %1814 = vmatprep.mubr.bf16.mxu0 0
        %1815 = vmatmul.mubr.bf16.gmra.mrb[0].mxu0 %v1777
        %v1816 = vpop.f32.mrb[0].mxu0
        %v1817 = vadd.f32 0.0, %v1816
        %v1818 = vpop.f32.mrb[0].mxu0
        %v1819 = vpop.f32.mrb[0].mxu0
        %v1820 = vadd.f32 0.0, %v1819
        %v1821 = vpop.f32.mrb[0].mxu0
        %1822 = vdwg.mxu0
        %v1823 = vsel %vm1096, %v1766, -inf
        %1824 = vmax.xlane.f32.xlu0 %v1823
        %v1825 = vpop.xlane.xlu0 %1824
        %v1826 = vsel %vm1096, %v1769, -inf
        %1827 = vmax.xlane.f32.xlu0 %v1826
        %v1828 = vpop.xlane.xlu0 %1827
        %v1829 = vsel %vm1096, %v1817, -inf
        %1830 = vmax.xlane.f32.xlu0 %v1829
        %v1831 = vpop.xlane.xlu0 %1830
        %v1832 = vsel %vm1096, %v1820, -inf
        %1833 = vmax.xlane.f32.xlu0 %v1832
        %v1834 = vpop.xlane.xlu0 %1833
        %v1835 = vsub.f32 %v1766, %v1825
        %v1836 = vsub.f32 %v1769, %v1828
        %v1837 = vsub.f32 %v1817, %v1831
        %v1838 = vsub.f32 %v1820, %v1834
        %v1839 = vmul.f32 %v1835, 1.442695
        %v1840 = vpow.pop %v1839
        %v1841 = vmul.f32 %v1836, 1.442695
        %v1842 = vpow.pop %v1841
        %v1843 = vmul.f32 %v1837, 1.442695
        %v1844 = vpow.pop %v1843
        %v1845 = vmul.f32 %v1838, 1.442695
        %v1846 = vpow.pop %v1845
        %v1847 = vsel %vm1096, %v1840, 0.0
        %1848 = vadd.xlane.f32.xlu0 %v1847
        %v1849 = vpop.xlane.xlu0 %1848
        %v1850 = vsel %vm1096, %v1842, 0.0
        %1851 = vadd.xlane.f32.xlu0 %v1850
        %v1852 = vpop.xlane.xlu0 %1851
        %v1853 = vsel %vm1096, %v1844, 0.0
        %1854 = vadd.xlane.f32.xlu0 %v1853
        %v1855 = vpop.xlane.xlu0 %1854
        %v1856 = vsel %vm1096, %v1846, 0.0
        %1857 = vadd.xlane.f32.xlu0 %v1856
        %v1858 = vpop.xlane.xlu0 %1857
        %v1859 = vrcp.pop %v1849
        %v1860 = vrcp.pop %v1852
        %v1861 = vrcp.pop %v1855
        %v1862 = vrcp.pop %v1858
        %v1863 = vmul.f32 %v1840, %v1859
        %v1864 = vmul.f32 %v1842, %v1860
        %v1865 = vmul.f32 %v1844, %v1861
        %v1866 = vmul.f32 %v1846, %v1862
        %v1867 = vpack.c.bf16 %v1864, %v1863
        %v1868 = vpack.c.bf16 %v1866, %v1865
        %1869 = vrot.lane.b32.xlu0 %v999, 32
        %v1870 = vpop.permute.xlu0 %1869
        %v1873 = vsel %vm1096, %v1867, 0
        %1875 = vmatprep.subr.bf16.mxu0 0
        %1876 = vmatpush1.bf16.msra.mxu0 %v1870
        %1877 = vmatprep.subr.bf16.mxu0 0
        %1878 = vmatpush1.bf16.msra.mxu0 0
        %1879 = vmatprep.subr.bf16.mxu0 0
        %1880 = vmatpush1.bf16.msra.mxu0 0
        %1881 = vmatprep.subr.bf16.mxu0 0
        %1882 = vmatpush1.bf16.msra.mxu0 0
        %1883 = vmatprep.subr.bf16.mxu0 0
        %1884 = vmatpush1.bf16.msra.mxu0 0
        %1885 = vmatprep.subr.bf16.mxu0 0
        %1886 = vmatpush1.bf16.msra.mxu0 0
        %1887 = vmatprep.subr.bf16.mxu0 0
        %1888 = vmatpush1.bf16.msra.mxu0 0
        %1889 = vmatprep.subr.bf16.mxu0 0
        %1890 = vmatpush1.bf16.msra.mxu0 0
        %1891 = vmatprep.subr.bf16.mxu0 0
        %1892 = vmatpush1.bf16.msra.mxu0 0
        %1893 = vmatprep.subr.bf16.mxu0 0
        %1894 = vmatpush1.bf16.msra.mxu0 0
        %1895 = vmatprep.subr.bf16.mxu0 0
        %1896 = vmatpush1.bf16.msra.mxu0 0
        %1897 = vmatprep.subr.bf16.mxu0 0
        %1898 = vmatpush1.bf16.msra.mxu0 0
        %1899 = vmatprep.subr.bf16.mxu0 0
        %1900 = vmatpush1.bf16.msra.mxu0 0
        %1901 = vmatprep.subr.bf16.mxu0 0
        %1902 = vmatpush1.bf16.msra.mxu0 0
        %1903 = vmatprep.subr.bf16.mxu0 0
        %1904 = vmatpush1.bf16.msra.mxu0 0
        %1905 = vmatprep.subr.bf16.mxu0 0
        %1906 = vmatpush1.bf16.msra.mxu0 0
        %1907 = vmatprep.mubr.bf16.mxu0 0
        %1908 = vmatmul.mubr.bf16.gmra.mrb[0].mxu0 %v1873
        %v1909 = vpop.f32.mrb[0].mxu0
        %v1910 = vadd.f32 0.0, %v1909
        %v1911 = vpop.f32.mrb[0].mxu0
        %v1912 = vpop.f32.mrb[0].mxu0
        %v1913 = vadd.f32 0.0, %v1912
        %v1914 = vpop.f32.mrb[0].mxu0
        %1915 = vdwg.mxu0
        %1916 = vrot.lane.b32.xlu0 %v1000, 32
        %v1917 = vpop.permute.xlu0 %1916
        %v1920 = vsel %vm1096, %v1868, 0
        %1922 = vmatprep.subr.bf16.mxu0 0
        %1923 = vmatpush1.bf16.msra.mxu0 %v1917
        %1924 = vmatprep.subr.bf16.mxu0 0
        %1925 = vmatpush1.bf16.msra.mxu0 0
        %1926 = vmatprep.subr.bf16.mxu0 0
        %1927 = vmatpush1.bf16.msra.mxu0 0
        %1928 = vmatprep.subr.bf16.mxu0 0
        %1929 = vmatpush1.bf16.msra.mxu0 0
        %1930 = vmatprep.subr.bf16.mxu0 0
        %1931 = vmatpush1.bf16.msra.mxu0 0
        %1932 = vmatprep.subr.bf16.mxu0 0
        %1933 = vmatpush1.bf16.msra.mxu0 0
        %1934 = vmatprep.subr.bf16.mxu0 0
        %1935 = vmatpush1.bf16.msra.mxu0 0
        %1936 = vmatprep.subr.bf16.mxu0 0
        %1937 = vmatpush1.bf16.msra.mxu0 0
        %1938 = vmatprep.subr.bf16.mxu0 0
        %1939 = vmatpush1.bf16.msra.mxu0 0
        %1940 = vmatprep.subr.bf16.mxu0 0
        %1941 = vmatpush1.bf16.msra.mxu0 0
        %1942 = vmatprep.subr.bf16.mxu0 0
        %1943 = vmatpush1.bf16.msra.mxu0 0
        %1944 = vmatprep.subr.bf16.mxu0 0
        %1945 = vmatpush1.bf16.msra.mxu0 0
        %1946 = vmatprep.subr.bf16.mxu0 0
        %1947 = vmatpush1.bf16.msra.mxu0 0
        %1948 = vmatprep.subr.bf16.mxu0 0
        %1949 = vmatpush1.bf16.msra.mxu0 0
        %1950 = vmatprep.subr.bf16.mxu0 0
        %1951 = vmatpush1.bf16.msra.mxu0 0
        %1952 = vmatprep.subr.bf16.mxu0 0
        %1953 = vmatpush1.bf16.msra.mxu0 0
        %1954 = vmatprep.mubr.bf16.mxu0 0
        %1955 = vmatmul.mubr.bf16.gmra.mrb[0].mxu0 %v1920
        %v1956 = vpop.f32.mrb[0].mxu0
        %v1957 = vadd.f32 0.0, %v1956
        %v1958 = vpop.f32.mrb[0].mxu0
        %v1959 = vpop.f32.mrb[0].mxu0
        %v1960 = vadd.f32 0.0, %v1959
        %v1961 = vpop.f32.mrb[0].mxu0
        %1962 = vdwg.mxu0
        %1967 = vrot.lane.b32.xlu0 %v1425, 32
        %v1968 = vpop.permute.xlu0 %1967
        %1969 = vrot.lane.b32.xlu0 %v1428, 32
        %v1970 = vpop.permute.xlu0 %1969
        %1971 = vrot.lane.b32.xlu0 %v1473, 32
        %v1972 = vpop.permute.xlu0 %1971
        %1973 = vrot.lane.b32.xlu0 %v1476, 32
        %v1974 = vpop.permute.xlu0 %1973
        %1983 = vrot.lane.b32.xlu0 %v1668, 64
        %v1984 = vpop.permute.xlu0 %1983
        %1985 = vrot.lane.b32.xlu0 %v1671, 64
        %v1986 = vpop.permute.xlu0 %1985
        %1987 = vrot.lane.b32.xlu0 %v1715, 64
        %v1988 = vpop.permute.xlu0 %1987
        %1989 = vrot.lane.b32.xlu0 %v1718, 64
        %v1990 = vpop.permute.xlu0 %1989
        %1999 = vrot.lane.b32.xlu0 %v1910, 96
        %v2000 = vpop.permute.xlu0 %1999
        %2001 = vrot.lane.b32.xlu0 %v1913, 96
        %v2002 = vpop.permute.xlu0 %2001
        %2003 = vrot.lane.b32.xlu0 %v1957, 96
        %v2004 = vpop.permute.xlu0 %2003
        %2005 = vrot.lane.b32.xlu0 %v1960, 96
        %v2006 = vpop.permute.xlu0 %2005
        %v2011 = vsel %vm1001, %v1181, %v1968
        %v2012 = vsel %vm1001, %v1184, %v1970
        %v2013 = vsel %vm1001, %v1225, %v1972
        %v2014 = vsel %vm1001, %v1228, %v1974
        %vm2015 = vcmask 523264
        %v2016 = vsel %vm2015, %v2011, %v1984
        %v2017 = vsel %vm2015, %v2012, %v1986
        %v2018 = vsel %vm2015, %v2013, %v1988
        %v2019 = vsel %vm2015, %v2014, %v1990
        %vm2020 = vcmask 785408
        %v2021 = vsel %vm2020, %v2016, %v2000
        %v2022 = vsel %vm2020, %v2017, %v2002
        %v2023 = vsel %vm2020, %v2018, %v2004
        %v2024 = vsel %vm2020, %v2019, %v2006
        %v2025 = vpack.c.bf16 %v2022, %v2021
        %v2026 = vpack.c.bf16 %v2024, %v2023
        %2027 = vst [vmem:[#allocation3] sm:$0xff] %v2025
        %2028 = vst [vmem:[#allocation3 + $0x8] sm:$0xff] %v2026
        %v2029 = vld [vmem:[#allocation3] sm:$0xff]
        %v2030 = vld [vmem:[#allocation3 + $0x8] sm:$0xff]
        %v2031 = vld [vmem:[#allocation10] sm:$0xf]
        %v2032 = vld [vmem:[#allocation10 + $0x4] sm:$0xf]
        %v2033 = vld [vmem:[#allocation10 + $0x8] sm:$0xf]
        %v2034 = vld [vmem:[#allocation10 + $0xc] sm:$0xf]
        %v2035 = vld [vmem:[#allocation10 + $0x10] sm:$0xf]
        %v2036 = vld [vmem:[#allocation10 + $0x14] sm:$0xf]
        %v2037 = vld [vmem:[#allocation10 + $0x18] sm:$0xf]
        %v2038 = vld [vmem:[#allocation10 + $0x1c] sm:$0xf]
        %v2039 = vld [vmem:[#allocation10 + $0x20] sm:$0xf]
        %v2040 = vld [vmem:[#allocation10 + $0x24] sm:$0xf]
        %v2041 = vld [vmem:[#allocation10 + $0x28] sm:$0xf]
        %v2042 = vld [vmem:[#allocation10 + $0x2c] sm:$0xf]
        %v2043 = vld [vmem:[#allocation10 + $0x30] sm:$0xf]
        %v2044 = vld [vmem:[#allocation10 + $0x34] sm:$0xf]
        %v2045 = vld [vmem:[#allocation10 + $0x38] sm:$0xf]
        %v2046 = vld [vmem:[#allocation10 + $0x3c] sm:$0xf]
        %v2047 = vld [vmem:[%s6] sm:$0x1]
        %v2049 = vlaneseq
        %v2050 = vshrl.u32 %v2049, 7
        %v2051 = vsub.s32 0, %v2050
        %v2052 = vrot.slane %v2047, %v2051
        %v2070 = vunpack.c.l.b16 %v2031
        %v2071 = vunpack.c.l.b16 %v2032
        %v2072 = vunpack.c.l.b16 %v2033
        %v2073 = vunpack.c.l.b16 %v2034
        %v2074 = vunpack.c.l.b16 %v2035
        %v2075 = vunpack.c.l.b16 %v2036
        %v2076 = vunpack.c.l.b16 %v2037
        %v2077 = vunpack.c.l.b16 %v2038
        %v2078 = vunpack.c.l.b16 %v2039
        %v2079 = vunpack.c.l.b16 %v2040
        %v2080 = vunpack.c.l.b16 %v2041
        %v2081 = vunpack.c.l.b16 %v2042
        %v2082 = vunpack.c.l.b16 %v2043
        %v2083 = vunpack.c.l.b16 %v2044
        %v2084 = vunpack.c.l.b16 %v2045
        %v2085 = vunpack.c.l.b16 %v2046
        %v2086 = vpack.c.b16 %v2071, %v2070
        %v2087 = vpack.c.b16 %v2073, %v2072
        %v2088 = vpack.c.b16 %v2075, %v2074
        %v2089 = vpack.c.b16 %v2077, %v2076
        %v2090 = vpack.c.b16 %v2079, %v2078
        %v2091 = vpack.c.b16 %v2081, %v2080
        %v2092 = vpack.c.b16 %v2083, %v2082
        %v2093 = vpack.c.b16 %v2085, %v2084
        %2102 = vmatprep.subr.bf16.mxu0 0
        %2103 = vmatpush1.bf16.msra.mxu0 %v2086
        %2104 = vmatprep.subr.bf16.mxu0 0
        %2105 = vmatpush1.bf16.msra.mxu0 %v2087
        %2106 = vmatprep.subr.bf16.mxu0 0
        %2107 = vmatpush1.bf16.msra.mxu0 %v2088
        %2108 = vmatprep.subr.bf16.mxu0 0
        %2109 = vmatpush1.bf16.msra.mxu0 %v2089
        %2110 = vmatprep.subr.bf16.mxu0 0
        %2111 = vmatpush1.bf16.msra.mxu0 %v2090
        %2112 = vmatprep.subr.bf16.mxu0 0
        %2113 = vmatpush1.bf16.msra.mxu0 %v2091
        %2114 = vmatprep.subr.bf16.mxu0 0
        %2115 = vmatpush1.bf16.msra.mxu0 %v2092
        %2116 = vmatprep.subr.bf16.mxu0 0
        %2117 = vmatpush1.bf16.msra.mxu0 %v2093
        %2118 = vmatprep.subr.bf16.mxu0 0
        %2119 = vmatpush1.bf16.msra.mxu0 0
        %2120 = vmatprep.subr.bf16.mxu0 0
        %2121 = vmatpush1.bf16.msra.mxu0 0
        %2122 = vmatprep.subr.bf16.mxu0 0
        %2123 = vmatpush1.bf16.msra.mxu0 0
        %2124 = vmatprep.subr.bf16.mxu0 0
        %2125 = vmatpush1.bf16.msra.mxu0 0
        %2126 = vmatprep.subr.bf16.mxu0 0
        %2127 = vmatpush1.bf16.msra.mxu0 0
        %2128 = vmatprep.subr.bf16.mxu0 0
        %2129 = vmatpush1.bf16.msra.mxu0 0
        %2130 = vmatprep.subr.bf16.mxu0 0
        %2131 = vmatpush1.bf16.msra.mxu0 0
        %2132 = vmatprep.subr.bf16.mxu0 0
        %2133 = vmatpush1.bf16.msra.mxu0 0
        %2134 = vmatprep.mubr.bf16.mxu0 0
        %2135 = vmatmul.mubr.bf16.gmra.mrb[0].mxu0 %v2029
        %v2136 = vpop.f32.mrb[0].mxu0
        %v2137 = vadd.f32 %v2052, %v2136
        %v2138 = vpop.f32.mrb[0].mxu0
        %v2139 = vpop.f32.mrb[0].mxu0
        %v2140 = vadd.f32 %v2052, %v2139
        %v2141 = vpop.f32.mrb[0].mxu0
        %2142 = vmatprep.mubr.bf16.mxu0 0
        %2143 = vmatmul.mubr.bf16.gmra.mrb[0].mxu0 %v2030
        %v2144 = vpop.f32.mrb[0].mxu0
        %v2145 = vadd.f32 %v2052, %v2144
        %v2146 = vpop.f32.mrb[0].mxu0
        %v2147 = vpop.f32.mrb[0].mxu0
        %v2148 = vadd.f32 %v2052, %v2147
        %v2149 = vpop.f32.mrb[0].mxu0
        %2150 = vdwg.mxu0
        %v2151 = vadd.f32 %v571, %v2137
        %v2152 = vadd.f32 %v572, %v2140
        %v2153 = vadd.f32 %v573, %v2145
        %v2154 = vadd.f32 %v574, %v2148
        %v2155 = vld [vmem:[%s7] sm:$0x1]
        %v2156 = vld [vmem:[%s8] sm:$0x1]
        %2157 = vadd.xlane.f32.xlu0 %v2151
        %v2158 = vpop.xlane.xlu0 %2157
        %2159 = vadd.xlane.f32.xlu0 %v2152
        %v2160 = vpop.xlane.xlu0 %2159
        %2161 = vadd.xlane.f32.xlu0 %v2153
        %v2162 = vpop.xlane.xlu0 %2161
        %2163 = vadd.xlane.f32.xlu0 %v2154
        %v2164 = vpop.xlane.xlu0 %2163
        %v2165 = vmul.f32 %v2158, %v585
        %v2166 = vmul.f32 %v2160, %v585
        %v2167 = vmul.f32 %v2162, %v585
        %v2168 = vmul.f32 %v2164, %v585
        %v2169 = vsub.f32 %v2151, %v2165
        %v2170 = vsub.f32 %v2152, %v2166
        %v2171 = vsub.f32 %v2153, %v2167
        %v2172 = vsub.f32 %v2154, %v2168
        %v2173 = vmul.f32 %v2169, %v2169
        %v2174 = vmul.f32 %v2170, %v2170
        %v2175 = vmul.f32 %v2171, %v2171
        %v2176 = vmul.f32 %v2172, %v2172
        %2177 = vadd.xlane.f32.xlu0 %v2173
        %v2178 = vpop.xlane.xlu0 %2177
        %2179 = vadd.xlane.f32.xlu0 %v2174
        %v2180 = vpop.xlane.xlu0 %2179
        %2181 = vadd.xlane.f32.xlu0 %v2175
        %v2182 = vpop.xlane.xlu0 %2181
        %2183 = vadd.xlane.f32.xlu0 %v2176
        %v2184 = vpop.xlane.xlu0 %2183
        %v2185 = vmul.f32 %v2178, %v585
        %v2186 = vmul.f32 %v2180, %v585
        %v2187 = vmul.f32 %v2182, %v585
        %v2188 = vmul.f32 %v2184, %v585
        %v2189 = vadd.f32 %v2185, 1e-05
        %v2190 = vadd.f32 %v2186, 1e-05
        %v2191 = vadd.f32 %v2187, 1e-05
        %v2192 = vadd.f32 %v2188, 1e-05
        %v2193 = vrsqrt.pop %v2189
        %v2194 = vrsqrt.pop %v2190
        %v2195 = vrsqrt.pop %v2191
        %v2196 = vrsqrt.pop %v2192
        %v2197 = vmul.f32 %v2169, %v2193
        %v2198 = vmul.f32 %v2170, %v2194
        %v2199 = vmul.f32 %v2171, %v2195
        %v2200 = vmul.f32 %v2172, %v2196
        %v2202 = vlaneseq
        %v2203 = vshrl.u32 %v2202, 7
        %v2204 = vsub.s32 0, %v2203
        %v2205 = vrot.slane %v2155, %v2204
        %v2207 = vmul.f32 %v2197, %v2205
        %v2208 = vmul.f32 %v2198, %v2205
        %v2209 = vmul.f32 %v2199, %v2205
        %v2210 = vmul.f32 %v2200, %v2205
        %v2212 = vlaneseq
        %v2213 = vshrl.u32 %v2212, 7
        %v2214 = vsub.s32 0, %v2213
        %v2215 = vrot.slane %v2156, %v2214
        %v2217 = vadd.f32 %v2207, %v2215
        %v2218 = vadd.f32 %v2208, %v2215
        %v2219 = vadd.f32 %v2209, %v2215
        %v2220 = vadd.f32 %v2210, %v2215
        %v2221 = vpack.c.bf16 %v2218, %v2217
        %v2222 = vpack.c.bf16 %v2220, %v2219
        %v2223 = vld [vmem:[#allocation12] sm:$0xff]
        %v2224 = vld [vmem:[#allocation12 + $0x8] sm:$0xff]
        %v2225 = vld [vmem:[#allocation12 + $0x10] sm:$0xff]
        %v2226 = vld [vmem:[#allocation12 + $0x18] sm:$0xff]
        %v2227 = vld [vmem:[#allocation12 + $0x20] sm:$0xff]
        %v2228 = vld [vmem:[#allocation12 + $0x28] sm:$0xff]
        %v2229 = vld [vmem:[#allocation12 + $0x30] sm:$0xff]
        %v2230 = vld [vmem:[#allocation12 + $0x38] sm:$0xff]
        %v2231 = vld [vmem:[#allocation12 + $0x40] sm:$0xff]
        %v2232 = vld [vmem:[#allocation12 + $0x48] sm:$0xff]
        %v2233 = vld [vmem:[#allocation12 + $0x50] sm:$0xff]
        %v2234 = vld [vmem:[#allocation12 + $0x58] sm:$0xff]
        %v2235 = vld [vmem:[#allocation12 + $0x60] sm:$0xff]
        %v2236 = vld [vmem:[#allocation12 + $0x68] sm:$0xff]
        %v2237 = vld [vmem:[#allocation12 + $0x70] sm:$0xff]
        %v2238 = vld [vmem:[#allocation12 + $0x78] sm:$0xff]
        %v2239 = vld [vmem:[#allocation12 + $0x80] sm:$0xff]
        %v2240 = vld [vmem:[#allocation12 + $0x88] sm:$0xff]
        %v2241 = vld [vmem:[#allocation12 + $0x90] sm:$0xff]
        %v2242 = vld [vmem:[#allocation12 + $0x98] sm:$0xff]
        %v2243 = vld [vmem:[#allocation12 + $0xa0] sm:$0xff]
        %v2244 = vld [vmem:[#allocation12 + $0xa8] sm:$0xff]
        %v2245 = vld [vmem:[#allocation12 + $0xb0] sm:$0xff]
        %v2246 = vld [vmem:[#allocation12 + $0xb8] sm:$0xff]
        %v2247 = vld [vmem:[#allocation12 + $0xc0] sm:$0xff]
        %v2248 = vld [vmem:[#allocation12 + $0xc8] sm:$0xff]
        %v2249 = vld [vmem:[#allocation12 + $0xd0] sm:$0xff]
        %v2250 = vld [vmem:[#allocation12 + $0xd8] sm:$0xff]
        %v2251 = vld [vmem:[#allocation12 + $0xe0] sm:$0xff]
        %v2252 = vld [vmem:[#allocation12 + $0xe8] sm:$0xff]
        %v2253 = vld [vmem:[#allocation12 + $0xf0] sm:$0xff]
        %v2254 = vld [vmem:[#allocation12 + $0xf8] sm:$0xff]
        %v2255 = vld [vmem:[%s10] sm:$0xf]
        %v2257 = vlaneseq
        %v2258 = vshrl.u32 %v2257, 7
        %v2259 = vsub.s32 0, %v2258
        %v2260 = vrot.slane %v2255, %v2259
        %v2261 = vlaneseq
        %v2262 = vshrl.u32 %v2261, 7
        %v2263 = vsub.s32 1, %v2262
        %v2264 = vrot.slane %v2255, %v2263
        %v2265 = vlaneseq
        %v2266 = vshrl.u32 %v2265, 7
        %v2267 = vsub.s32 2, %v2266
        %v2268 = vrot.slane %v2255, %v2267
        %v2269 = vlaneseq
        %v2270 = vshrl.u32 %v2269, 7
        %v2271 = vsub.s32 3, %v2270
        %v2272 = vrot.slane %v2255, %v2271
        %v2309 = vunpack.c.l.b16 %v2223
        %v2310 = vunpack.c.h.b16 %v2223
        %v2311 = vunpack.c.l.b16 %v2224
        %v2312 = vunpack.c.h.b16 %v2224
        %v2313 = vunpack.c.l.b16 %v2225
        %v2314 = vunpack.c.h.b16 %v2225
        %v2315 = vunpack.c.l.b16 %v2226
        %v2316 = vunpack.c.h.b16 %v2226
        %v2317 = vunpack.c.l.b16 %v2227
        %v2318 = vunpack.c.h.b16 %v2227
        %v2319 = vunpack.c.l.b16 %v2228
        %v2320 = vunpack.c.h.b16 %v2228
        %v2321 = vunpack.c.l.b16 %v2229
        %v2322 = vunpack.c.h.b16 %v2229
        %v2323 = vunpack.c.l.b16 %v2230
        %v2324 = vunpack.c.h.b16 %v2230
        %v2325 = vunpack.c.l.b16 %v2231
        %v2326 = vunpack.c.h.b16 %v2231
        %v2327 = vunpack.c.l.b16 %v2232
        %v2328 = vunpack.c.h.b16 %v2232
        %v2329 = vunpack.c.l.b16 %v2233
        %v2330 = vunpack.c.h.b16 %v2233
        %v2331 = vunpack.c.l.b16 %v2234
        %v2332 = vunpack.c.h.b16 %v2234
        %v2333 = vunpack.c.l.b16 %v2235
        %v2334 = vunpack.c.h.b16 %v2235
        %v2335 = vunpack.c.l.b16 %v2236
        %v2336 = vunpack.c.h.b16 %v2236
        %v2337 = vunpack.c.l.b16 %v2237
        %v2338 = vunpack.c.h.b16 %v2237
        %v2339 = vunpack.c.l.b16 %v2238
        %v2340 = vunpack.c.h.b16 %v2238
        %v2341 = vunpack.c.l.b16 %v2239
        %v2342 = vunpack.c.h.b16 %v2239
        %v2343 = vunpack.c.l.b16 %v2240
        %v2344 = vunpack.c.h.b16 %v2240
        %v2345 = vunpack.c.l.b16 %v2241
        %v2346 = vunpack.c.h.b16 %v2241
        %v2347 = vunpack.c.l.b16 %v2242
        %v2348 = vunpack.c.h.b16 %v2242
        %v2349 = vunpack.c.l.b16 %v2243
        %v2350 = vunpack.c.h.b16 %v2243
        %v2351 = vunpack.c.l.b16 %v2244
        %v2352 = vunpack.c.h.b16 %v2244
        %v2353 = vunpack.c.l.b16 %v2245
        %v2354 = vunpack.c.h.b16 %v2245
        %v2355 = vunpack.c.l.b16 %v2246
        %v2356 = vunpack.c.h.b16 %v2246
        %v2357 = vunpack.c.l.b16 %v2247
        %v2358 = vunpack.c.h.b16 %v2247
        %v2359 = vunpack.c.l.b16 %v2248
        %v2360 = vunpack.c.h.b16 %v2248
        %v2361 = vunpack.c.l.b16 %v2249
        %v2362 = vunpack.c.h.b16 %v2249
        %v2363 = vunpack.c.l.b16 %v2250
        %v2364 = vunpack.c.h.b16 %v2250
        %v2365 = vunpack.c.l.b16 %v2251
        %v2366 = vunpack.c.h.b16 %v2251
        %v2367 = vunpack.c.l.b16 %v2252
        %v2368 = vunpack.c.h.b16 %v2252
        %v2369 = vunpack.c.l.b16 %v2253
        %v2370 = vunpack.c.h.b16 %v2253
        %v2371 = vunpack.c.l.b16 %v2254
        %v2372 = vunpack.c.h.b16 %v2254
        %v2373 = vpack.c.b16 %v2313, %v2309
        %v2374 = vpack.c.b16 %v2314, %v2310
        %v2375 = vpack.c.b16 %v2315, %v2311
        %v2376 = vpack.c.b16 %v2316, %v2312
        %v2377 = vpack.c.b16 %v2321, %v2317
        %v2378 = vpack.c.b16 %v2322, %v2318
        %v2379 = vpack.c.b16 %v2323, %v2319
        %v2380 = vpack.c.b16 %v2324, %v2320
        %v2381 = vpack.c.b16 %v2329, %v2325
        %v2382 = vpack.c.b16 %v2330, %v2326
        %v2383 = vpack.c.b16 %v2331, %v2327
        %v2384 = vpack.c.b16 %v2332, %v2328
        %v2385 = vpack.c.b16 %v2337, %v2333
        %v2386 = vpack.c.b16 %v2338, %v2334
        %v2387 = vpack.c.b16 %v2339, %v2335
        %v2388 = vpack.c.b16 %v2340, %v2336
        %v2389 = vpack.c.b16 %v2345, %v2341
        %v2390 = vpack.c.b16 %v2346, %v2342
        %v2391 = vpack.c.b16 %v2347, %v2343
        %v2392 = vpack.c.b16 %v2348, %v2344
        %v2393 = vpack.c.b16 %v2353, %v2349
        %v2394 = vpack.c.b16 %v2354, %v2350
        %v2395 = vpack.c.b16 %v2355, %v2351
        %v2396 = vpack.c.b16 %v2356, %v2352
        %v2397 = vpack.c.b16 %v2361, %v2357
        %v2398 = vpack.c.b16 %v2362, %v2358
        %v2399 = vpack.c.b16 %v2363, %v2359
        %v2400 = vpack.c.b16 %v2364, %v2360
        %v2401 = vpack.c.b16 %v2369, %v2365
        %v2402 = vpack.c.b16 %v2370, %v2366
        %v2403 = vpack.c.b16 %v2371, %v2367
        %v2404 = vpack.c.b16 %v2372, %v2368
        %2437 = vmatprep.subr.bf16.mxu0 %v2374
        %2438 = vmatpush1.bf16.msra.mxu0 %v2373
        %2439 = vmatprep.subr.bf16.mxu0 %v2378
        %2440 = vmatpush1.bf16.msra.mxu0 %v2377
        %2441 = vmatprep.subr.bf16.mxu0 %v2382
        %2442 = vmatpush1.bf16.msra.mxu0 %v2381
        %2443 = vmatprep.subr.bf16.mxu0 %v2386
        %2444 = vmatpush1.bf16.msra.mxu0 %v2385
        %2445 = vmatprep.subr.bf16.mxu0 %v2390
        %2446 = vmatpush1.bf16.msra.mxu0 %v2389
        %2447 = vmatprep.subr.bf16.mxu0 %v2394
        %2448 = vmatpush1.bf16.msra.mxu0 %v2393
        %2449 = vmatprep.subr.bf16.mxu0 %v2398
        %2450 = vmatpush1.bf16.msra.mxu0 %v2397
        %2451 = vmatprep.subr.bf16.mxu0 %v2402
        %2452 = vmatpush1.bf16.msra.mxu0 %v2401
        %2453 = vmatprep.subr.bf16.mxu0 0
        %2454 = vmatpush1.bf16.msra.mxu0 0
        %2455 = vmatprep.subr.bf16.mxu0 0
        %2456 = vmatpush1.bf16.msra.mxu0 0
        %2457 = vmatprep.subr.bf16.mxu0 0
        %2458 = vmatpush1.bf16.msra.mxu0 0
        %2459 = vmatprep.subr.bf16.mxu0 0
        %2460 = vmatpush1.bf16.msra.mxu0 0
        %2461 = vmatprep.subr.bf16.mxu0 0
        %2462 = vmatpush1.bf16.msra.mxu0 0
        %2463 = vmatprep.subr.bf16.mxu0 0
        %2464 = vmatpush1.bf16.msra.mxu0 0
        %2465 = vmatprep.subr.bf16.mxu0 0
        %2466 = vmatpush1.bf16.msra.mxu0 0
        %2467 = vmatprep.subr.bf16.mxu0 0
        %2468 = vmatpush1.bf16.msra.mxu0 0
        %2469 = vmatprep.mubr.bf16.mxu0 0
        %2470 = vmatmul.mubr.bf16.gmra.mrb[0].mxu0 %v2221
        %v2471 = vpop.f32.mrb[0].mxu0
        %v2472 = vadd.f32 %v2260, %v2471
        %v2473 = vpop.f32.mrb[0].mxu0
        %v2474 = vadd.f32 %v2264, %v2473
        %v2475 = vpop.f32.mrb[0].mxu0
        %v2476 = vadd.f32 %v2260, %v2475
        %v2477 = vpop.f32.mrb[0].mxu0
        %v2478 = vadd.f32 %v2264, %v2477
        %2479 = vmatprep.mubr.bf16.mxu0 0
        %2480 = vmatmul.mubr.bf16.gmra.mrb[0].mxu0 %v2222
        %v2481 = vpop.f32.mrb[0].mxu0
        %v2482 = vadd.f32 %v2260, %v2481
        %v2483 = vpop.f32.mrb[0].mxu0
        %v2484 = vadd.f32 %v2264, %v2483
        %v2485 = vpop.f32.mrb[0].mxu0
        %v2486 = vadd.f32 %v2260, %v2485
        %v2487 = vpop.f32.mrb[0].mxu0
        %v2488 = vadd.f32 %v2264, %v2487
        %2489 = vdwg.mxu0
        %2490 = vmatprep.subr.bf16.mxu0 %v2376
        %2491 = vmatpush1.bf16.msra.mxu0 %v2375
        %2492 = vmatprep.subr.bf16.mxu0 %v2380
        %2493 = vmatpush1.bf16.msra.mxu0 %v2379
        %2494 = vmatprep.subr.bf16.mxu0 %v2384
        %2495 = vmatpush1.bf16.msra.mxu0 %v2383
        %2496 = vmatprep.subr.bf16.mxu0 %v2388
        %2497 = vmatpush1.bf16.msra.mxu0 %v2387
        %2498 = vmatprep.subr.bf16.mxu0 %v2392
        %2499 = vmatpush1.bf16.msra.mxu0 %v2391
        %2500 = vmatprep.subr.bf16.mxu0 %v2396
        %2501 = vmatpush1.bf16.msra.mxu0 %v2395
        %2502 = vmatprep.subr.bf16.mxu0 %v2400
        %2503 = vmatpush1.bf16.msra.mxu0 %v2399
        %2504 = vmatprep.subr.bf16.mxu0 %v2404
        %2505 = vmatpush1.bf16.msra.mxu0 %v2403
        %2506 = vmatprep.subr.bf16.mxu0 0
        %2507 = vmatpush1.bf16.msra.mxu0 0
        %2508 = vmatprep.subr.bf16.mxu0 0
        %2509 = vmatpush1.bf16.msra.mxu0 0
        %2510 = vmatprep.subr.bf16.mxu0 0
        %2511 = vmatpush1.bf16.msra.mxu0 0
        %2512 = vmatprep.subr.bf16.mxu0 0
        %2513 = vmatpush1.bf16.msra.mxu0 0
        %2514 = vmatprep.subr.bf16.mxu0 0
        %2515 = vmatpush1.bf16.msra.mxu0 0
        %2516 = vmatprep.subr.bf16.mxu0 0
        %2517 = vmatpush1.bf16.msra.mxu0 0
        %2518 = vmatprep.subr.bf16.mxu0 0
        %2519 = vmatpush1.bf16.msra.mxu0 0
        %2520 = vmatprep.subr.bf16.mxu0 0
        %2521 = vmatpush1.bf16.msra.mxu0 0
        %2522 = vmatprep.mubr.bf16.mxu0 0
        %2523 = vmatmul.mubr.bf16.gmra.mrb[0].mxu0 %v2221
        %v2524 = vpop.f32.mrb[0].mxu0
        %v2525 = vadd.f32 %v2268, %v2524
        %v2526 = vpop.f32.mrb[0].mxu0
        %v2527 = vadd.f32 %v2272, %v2526
        %v2528 = vpop.f32.mrb[0].mxu0
        %v2529 = vadd.f32 %v2268, %v2528
        %v2530 = vpop.f32.mrb[0].mxu0
        %v2531 = vadd.f32 %v2272, %v2530
        %2532 = vmatprep.mubr.bf16.mxu0 0
        %2533 = vmatmul.mubr.bf16.gmra.mrb[0].mxu0 %v2222
        %v2534 = vpop.f32.mrb[0].mxu0
        %v2535 = vadd.f32 %v2268, %v2534
        %v2536 = vpop.f32.mrb[0].mxu0
        %v2537 = vadd.f32 %v2272, %v2536
        %v2538 = vpop.f32.mrb[0].mxu0
        %v2539 = vadd.f32 %v2268, %v2538
        %v2540 = vpop.f32.mrb[0].mxu0
        %v2541 = vadd.f32 %v2272, %v2540
        %2542 = vdwg.mxu0
        %v2543 = vmul.f32 %v2472, 0.5
        %v2544 = vmul.f32 %v2474, 0.5
        %v2545 = vmul.f32 %v2525, 0.5
        %v2546 = vmul.f32 %v2527, 0.5
        %v2547 = vmul.f32 %v2476, 0.5
        %v2548 = vmul.f32 %v2478, 0.5
        %v2549 = vmul.f32 %v2529, 0.5
        %v2550 = vmul.f32 %v2531, 0.5
        %v2551 = vmul.f32 %v2482, 0.5
        %v2552 = vmul.f32 %v2484, 0.5
        %v2553 = vmul.f32 %v2535, 0.5
        %v2554 = vmul.f32 %v2537, 0.5
        %v2555 = vmul.f32 %v2486, 0.5
        %v2556 = vmul.f32 %v2488, 0.5
        %v2557 = vmul.f32 %v2539, 0.5
        %v2558 = vmul.f32 %v2541, 0.5
        %v2559 = vmul.f32 %v2472, 0.70710677
        %v2560 = vmul.f32 %v2474, 0.70710677
        %v2561 = vmul.f32 %v2525, 0.70710677
        %v2562 = vmul.f32 %v2527, 0.70710677
        %v2563 = vmul.f32 %v2476, 0.70710677
        %v2564 = vmul.f32 %v2478, 0.70710677
        %v2565 = vmul.f32 %v2529, 0.70710677
        %v2566 = vmul.f32 %v2531, 0.70710677
        %v2567 = vmul.f32 %v2482, 0.70710677
        %v2568 = vmul.f32 %v2484, 0.70710677
        %v2569 = vmul.f32 %v2535, 0.70710677
        %v2570 = vmul.f32 %v2537, 0.70710677
        %v2571 = vmul.f32 %v2486, 0.70710677
        %v2572 = vmul.f32 %v2488, 0.70710677
        %v2573 = vmul.f32 %v2539, 0.70710677
        %v2574 = vmul.f32 %v2541, 0.70710677
        %v2575 = verf.f32.pop %v2559
        %v2576 = verf.f32.pop %v2560
        %v2577 = verf.f32.pop %v2561
        %v2578 = verf.f32.pop %v2562
        %v2579 = verf.f32.pop %v2563
        %v2580 = verf.f32.pop %v2564
        %v2581 = verf.f32.pop %v2565
        %v2582 = verf.f32.pop %v2566
        %v2583 = verf.f32.pop %v2567
        %v2584 = verf.f32.pop %v2568
        %v2585 = verf.f32.pop %v2569
        %v2586 = verf.f32.pop %v2570
        %v2587 = verf.f32.pop %v2571
        %v2588 = verf.f32.pop %v2572
        %v2589 = verf.f32.pop %v2573
        %v2590 = verf.f32.pop %v2574
        %v2591 = vadd.f32 %v2575, 1.0
        %v2592 = vadd.f32 %v2576, 1.0
        %v2593 = vadd.f32 %v2577, 1.0
        %v2594 = vadd.f32 %v2578, 1.0
        %v2595 = vadd.f32 %v2579, 1.0
        %v2596 = vadd.f32 %v2580, 1.0
        %v2597 = vadd.f32 %v2581, 1.0
        %v2598 = vadd.f32 %v2582, 1.0
        %v2599 = vadd.f32 %v2583, 1.0
        %v2600 = vadd.f32 %v2584, 1.0
        %v2601 = vadd.f32 %v2585, 1.0
        %v2602 = vadd.f32 %v2586, 1.0
        %v2603 = vadd.f32 %v2587, 1.0
        %v2604 = vadd.f32 %v2588, 1.0
        %v2605 = vadd.f32 %v2589, 1.0
        %v2606 = vadd.f32 %v2590, 1.0
        %v2607 = vmul.f32 %v2543, %v2591
        %v2608 = vmul.f32 %v2544, %v2592
        %v2609 = vmul.f32 %v2545, %v2593
        %v2610 = vmul.f32 %v2546, %v2594
        %v2611 = vmul.f32 %v2547, %v2595
        %v2612 = vmul.f32 %v2548, %v2596
        %v2613 = vmul.f32 %v2549, %v2597
        %v2614 = vmul.f32 %v2550, %v2598
        %v2615 = vmul.f32 %v2551, %v2599
        %v2616 = vmul.f32 %v2552, %v2600
        %v2617 = vmul.f32 %v2553, %v2601
        %v2618 = vmul.f32 %v2554, %v2602
        %v2619 = vmul.f32 %v2555, %v2603
        %v2620 = vmul.f32 %v2556, %v2604
        %v2621 = vmul.f32 %v2557, %v2605
        %v2622 = vmul.f32 %v2558, %v2606
        %v2623 = vpack.c.bf16 %v2611, %v2607
        %v2624 = vpack.c.bf16 %v2612, %v2608
        %v2625 = vpack.c.bf16 %v2613, %v2609
        %v2626 = vpack.c.bf16 %v2614, %v2610
        %v2627 = vpack.c.bf16 %v2619, %v2615
        %v2628 = vpack.c.bf16 %v2620, %v2616
        %v2629 = vpack.c.bf16 %v2621, %v2617
        %v2630 = vpack.c.bf16 %v2622, %v2618
        %v2631 = vld [vmem:[#allocation13] sm:$0xf]
        %v2632 = vld [vmem:[#allocation13 + $0x4] sm:$0xf]
        %v2633 = vld [vmem:[#allocation13 + $0x8] sm:$0xf]
        %v2634 = vld [vmem:[#allocation13 + $0xc] sm:$0xf]
        %v2635 = vld [vmem:[#allocation13 + $0x10] sm:$0xf]
        %v2636 = vld [vmem:[#allocation13 + $0x14] sm:$0xf]
        %v2637 = vld [vmem:[#allocation13 + $0x18] sm:$0xf]
        %v2638 = vld [vmem:[#allocation13 + $0x1c] sm:$0xf]
        %v2639 = vld [vmem:[#allocation13 + $0x20] sm:$0xf]
        %v2640 = vld [vmem:[#allocation13 + $0x24] sm:$0xf]
        %v2641 = vld [vmem:[#allocation13 + $0x28] sm:$0xf]
        %v2642 = vld [vmem:[#allocation13 + $0x2c] sm:$0xf]
        %v2643 = vld [vmem:[#allocation13 + $0x30] sm:$0xf]
        %v2644 = vld [vmem:[#allocation13 + $0x34] sm:$0xf]
        %v2645 = vld [vmem:[#allocation13 + $0x38] sm:$0xf]
        %v2646 = vld [vmem:[#allocation13 + $0x3c] sm:$0xf]
        %v2647 = vld [vmem:[#allocation13 + $0x40] sm:$0xf]
        %v2648 = vld [vmem:[#allocation13 + $0x44] sm:$0xf]
        %v2649 = vld [vmem:[#allocation13 + $0x48] sm:$0xf]
        %v2650 = vld [vmem:[#allocation13 + $0x4c] sm:$0xf]
        %v2651 = vld [vmem:[#allocation13 + $0x50] sm:$0xf]
        %v2652 = vld [vmem:[#allocation13 + $0x54] sm:$0xf]
        %v2653 = vld [vmem:[#allocation13 + $0x58] sm:$0xf]
        %v2654 = vld [vmem:[#allocation13 + $0x5c] sm:$0xf]
        %v2655 = vld [vmem:[#allocation13 + $0x60] sm:$0xf]
        %v2656 = vld [vmem:[#allocation13 + $0x64] sm:$0xf]
        %v2657 = vld [vmem:[#allocation13 + $0x68] sm:$0xf]
        %v2658 = vld [vmem:[#allocation13 + $0x6c] sm:$0xf]
        %v2659 = vld [vmem:[#allocation13 + $0x70] sm:$0xf]
        %v2660 = vld [vmem:[#allocation13 + $0x74] sm:$0xf]
        %v2661 = vld [vmem:[#allocation13 + $0x78] sm:$0xf]
        %v2662 = vld [vmem:[#allocation13 + $0x7c] sm:$0xf]
        %v2663 = vld [vmem:[#allocation13 + $0x80] sm:$0xf]
        %v2664 = vld [vmem:[#allocation13 + $0x84] sm:$0xf]
        %v2665 = vld [vmem:[#allocation13 + $0x88] sm:$0xf]
        %v2666 = vld [vmem:[#allocation13 + $0x8c] sm:$0xf]
        %v2667 = vld [vmem:[#allocation13 + $0x90] sm:$0xf]
        %v2668 = vld [vmem:[#allocation13 + $0x94] sm:$0xf]
        %v2669 = vld [vmem:[#allocation13 + $0x98] sm:$0xf]
        %v2670 = vld [vmem:[#allocation13 + $0x9c] sm:$0xf]
        %v2671 = vld [vmem:[#allocation13 + $0xa0] sm:$0xf]
        %v2672 = vld [vmem:[#allocation13 + $0xa4] sm:$0xf]
        %v2673 = vld [vmem:[#allocation13 + $0xa8] sm:$0xf]
        %v2674 = vld [vmem:[#allocation13 + $0xac] sm:$0xf]
        %v2675 = vld [vmem:[#allocation13 + $0xb0] sm:$0xf]
        %v2676 = vld [vmem:[#allocation13 + $0xb4] sm:$0xf]
        %v2677 = vld [vmem:[#allocation13 + $0xb8] sm:$0xf]
        %v2678 = vld [vmem:[#allocation13 + $0xbc] sm:$0xf]
        %v2679 = vld [vmem:[#allocation13 + $0xc0] sm:$0xf]
        %v2680 = vld [vmem:[#allocation13 + $0xc4] sm:$0xf]
        %v2681 = vld [vmem:[#allocation13 + $0xc8] sm:$0xf]
        %v2682 = vld [vmem:[#allocation13 + $0xcc] sm:$0xf]
        %v2683 = vld [vmem:[#allocation13 + $0xd0] sm:$0xf]
        %v2684 = vld [vmem:[#allocation13 + $0xd4] sm:$0xf]
        %v2685 = vld [vmem:[#allocation13 + $0xd8] sm:$0xf]
        %v2686 = vld [vmem:[#allocation13 + $0xdc] sm:$0xf]
        %v2687 = vld [vmem:[#allocation13 + $0xe0] sm:$0xf]
        %v2688 = vld [vmem:[#allocation13 + $0xe4] sm:$0xf]
        %v2689 = vld [vmem:[#allocation13 + $0xe8] sm:$0xf]
        %v2690 = vld [vmem:[#allocation13 + $0xec] sm:$0xf]
        %v2691 = vld [vmem:[#allocation13 + $0xf0] sm:$0xf]
        %v2692 = vld [vmem:[#allocation13 + $0xf4] sm:$0xf]
        %v2693 = vld [vmem:[#allocation13 + $0xf8] sm:$0xf]
        %v2694 = vld [vmem:[#allocation13 + $0xfc] sm:$0xf]
        %v2759 = vunpack.c.l.b16 %v2631
        %v2760 = vunpack.c.l.b16 %v2632
        %v2761 = vunpack.c.l.b16 %v2633
        %v2762 = vunpack.c.l.b16 %v2634
        %v2763 = vunpack.c.l.b16 %v2635
        %v2764 = vunpack.c.l.b16 %v2636
        %v2765 = vunpack.c.l.b16 %v2637
        %v2766 = vunpack.c.l.b16 %v2638
        %v2767 = vunpack.c.l.b16 %v2639
        %v2768 = vunpack.c.l.b16 %v2640
        %v2769 = vunpack.c.l.b16 %v2641
        %v2770 = vunpack.c.l.b16 %v2642
        %v2771 = vunpack.c.l.b16 %v2643
        %v2772 = vunpack.c.l.b16 %v2644
        %v2773 = vunpack.c.l.b16 %v2645
        %v2774 = vunpack.c.l.b16 %v2646
        %v2775 = vunpack.c.l.b16 %v2647
        %v2776 = vunpack.c.l.b16 %v2648
        %v2777 = vunpack.c.l.b16 %v2649
        %v2778 = vunpack.c.l.b16 %v2650
        %v2779 = vunpack.c.l.b16 %v2651
        %v2780 = vunpack.c.l.b16 %v2652
        %v2781 = vunpack.c.l.b16 %v2653
        %v2782 = vunpack.c.l.b16 %v2654
        %v2783 = vunpack.c.l.b16 %v2655
        %v2784 = vunpack.c.l.b16 %v2656
        %v2785 = vunpack.c.l.b16 %v2657
        %v2786 = vunpack.c.l.b16 %v2658
        %v2787 = vunpack.c.l.b16 %v2659
        %v2788 = vunpack.c.l.b16 %v2660
        %v2789 = vunpack.c.l.b16 %v2661
        %v2790 = vunpack.c.l.b16 %v2662
        %v2791 = vunpack.c.l.b16 %v2663
        %v2792 = vunpack.c.l.b16 %v2664
        %v2793 = vunpack.c.l.b16 %v2665
        %v2794 = vunpack.c.l.b16 %v2666
        %v2795 = vunpack.c.l.b16 %v2667
        %v2796 = vunpack.c.l.b16 %v2668
        %v2797 = vunpack.c.l.b16 %v2669
        %v2798 = vunpack.c.l.b16 %v2670
        %v2799 = vunpack.c.l.b16 %v2671
        %v2800 = vunpack.c.l.b16 %v2672
        %v2801 = vunpack.c.l.b16 %v2673
        %v2802 = vunpack.c.l.b16 %v2674
        %v2803 = vunpack.c.l.b16 %v2675
        %v2804 = vunpack.c.l.b16 %v2676
        %v2805 = vunpack.c.l.b16 %v2677
        %v2806 = vunpack.c.l.b16 %v2678
        %v2807 = vunpack.c.l.b16 %v2679
        %v2808 = vunpack.c.l.b16 %v2680
        %v2809 = vunpack.c.l.b16 %v2681
        %v2810 = vunpack.c.l.b16 %v2682
        %v2811 = vunpack.c.l.b16 %v2683
        %v2812 = vunpack.c.l.b16 %v2684
        %v2813 = vunpack.c.l.b16 %v2685
        %v2814 = vunpack.c.l.b16 %v2686
        %v2815 = vunpack.c.l.b16 %v2687
        %v2816 = vunpack.c.l.b16 %v2688
        %v2817 = vunpack.c.l.b16 %v2689
        %v2818 = vunpack.c.l.b16 %v2690
        %v2819 = vunpack.c.l.b16 %v2691
        %v2820 = vunpack.c.l.b16 %v2692
        %v2821 = vunpack.c.l.b16 %v2693
        %v2822 = vunpack.c.l.b16 %v2694
        %v2823 = vpack.c.b16 %v2760, %v2759
        %v2824 = vpack.c.b16 %v2762, %v2761
        %v2825 = vpack.c.b16 %v2764, %v2763
        %v2826 = vpack.c.b16 %v2766, %v2765
        %v2827 = vpack.c.b16 %v2768, %v2767
        %v2828 = vpack.c.b16 %v2770, %v2769
        %v2829 = vpack.c.b16 %v2772, %v2771
        %v2830 = vpack.c.b16 %v2774, %v2773
        %v2831 = vpack.c.b16 %v2776, %v2775
        %v2832 = vpack.c.b16 %v2778, %v2777
        %v2833 = vpack.c.b16 %v2780, %v2779
        %v2834 = vpack.c.b16 %v2782, %v2781
        %v2835 = vpack.c.b16 %v2784, %v2783
        %v2836 = vpack.c.b16 %v2786, %v2785
        %v2837 = vpack.c.b16 %v2788, %v2787
        %v2838 = vpack.c.b16 %v2790, %v2789
        %v2839 = vpack.c.b16 %v2792, %v2791
        %v2840 = vpack.c.b16 %v2794, %v2793
        %v2841 = vpack.c.b16 %v2796, %v2795
        %v2842 = vpack.c.b16 %v2798, %v2797
        %v2843 = vpack.c.b16 %v2800, %v2799
        %v2844 = vpack.c.b16 %v2802, %v2801
        %v2845 = vpack.c.b16 %v2804, %v2803
        %v2846 = vpack.c.b16 %v2806, %v2805
        %v2847 = vpack.c.b16 %v2808, %v2807
        %v2848 = vpack.c.b16 %v2810, %v2809
        %v2849 = vpack.c.b16 %v2812, %v2811
        %v2850 = vpack.c.b16 %v2814, %v2813
        %v2851 = vpack.c.b16 %v2816, %v2815
        %v2852 = vpack.c.b16 %v2818, %v2817
        %v2853 = vpack.c.b16 %v2820, %v2819
        %v2854 = vpack.c.b16 %v2822, %v2821
        %2887 = vmatprep.subr.bf16.mxu0 0
        %2888 = vmatpush1.bf16.msra.mxu0 %v2823
        %2889 = vmatprep.subr.bf16.mxu0 0
        %2890 = vmatpush1.bf16.msra.mxu0 %v2824
        %2891 = vmatprep.subr.bf16.mxu0 0
        %2892 = vmatpush1.bf16.msra.mxu0 %v2825
        %2893 = vmatprep.subr.bf16.mxu0 0
        %2894 = vmatpush1.bf16.msra.mxu0 %v2826
        %2895 = vmatprep.subr.bf16.mxu0 0
        %2896 = vmatpush1.bf16.msra.mxu0 %v2827
        %2897 = vmatprep.subr.bf16.mxu0 0
        %2898 = vmatpush1.bf16.msra.mxu0 %v2828
        %2899 = vmatprep.subr.bf16.mxu0 0
        %2900 = vmatpush1.bf16.msra.mxu0 %v2829
        %2901 = vmatprep.subr.bf16.mxu0 0
        %2902 = vmatpush1.bf16.msra.mxu0 %v2830
        %2903 = vmatprep.subr.bf16.mxu0 0
        %2904 = vmatpush1.bf16.msra.mxu0 %v2831
        %2905 = vmatprep.subr.bf16.mxu0 0
        %2906 = vmatpush1.bf16.msra.mxu0 %v2832
        %2907 = vmatprep.subr.bf16.mxu0 0
        %2908 = vmatpush1.bf16.msra.mxu0 %v2833
        %2909 = vmatprep.subr.bf16.mxu0 0
        %2910 = vmatpush1.bf16.msra.mxu0 %v2834
        %2911 = vmatprep.subr.bf16.mxu0 0
        %2912 = vmatpush1.bf16.msra.mxu0 %v2835
        %2913 = vmatprep.subr.bf16.mxu0 0
        %2914 = vmatpush1.bf16.msra.mxu0 %v2836
        %2915 = vmatprep.subr.bf16.mxu0 0
        %2916 = vmatpush1.bf16.msra.mxu0 %v2837
        %2917 = vmatprep.subr.bf16.mxu0 0
        %2918 = vmatpush1.bf16.msra.mxu0 %v2838
        %2919 = vmatprep.mubr.bf16.mxu0 %v2624
        %2920 = vmatmul.mubr.bf16.gmra.mrb[0].mxu0 %v2623
        %v2921 = vpop.f32.mrb[0].mxu0
        %v2922 = vadd.f32 0.0, %v2921
        %v2923 = vpop.f32.mrb[0].mxu0
        %v2924 = vpop.f32.mrb[0].mxu0
        %v2925 = vadd.f32 0.0, %v2924
        %v2926 = vpop.f32.mrb[0].mxu0
        %2927 = vmatprep.mubr.bf16.mxu0 %v2628
        %2928 = vmatmul.mubr.bf16.gmra.mrb[0].mxu0 %v2627
        %v2929 = vpop.f32.mrb[0].mxu0
        %v2930 = vadd.f32 0.0, %v2929
        %v2931 = vpop.f32.mrb[0].mxu0
        %v2932 = vpop.f32.mrb[0].mxu0
        %v2933 = vadd.f32 0.0, %v2932
        %v2934 = vpop.f32.mrb[0].mxu0
        %2935 = vdwg.mxu0
        %2936 = vmatprep.subr.bf16.mxu0 0
        %2937 = vmatpush1.bf16.msra.mxu0 %v2839
        %2938 = vmatprep.subr.bf16.mxu0 0
        %2939 = vmatpush1.bf16.msra.mxu0 %v2840
        %2940 = vmatprep.subr.bf16.mxu0 0
        %2941 = vmatpush1.bf16.msra.mxu0 %v2841
        %2942 = vmatprep.subr.bf16.mxu0 0
        %2943 = vmatpush1.bf16.msra.mxu0 %v2842
        %2944 = vmatprep.subr.bf16.mxu0 0
        %2945 = vmatpush1.bf16.msra.mxu0 %v2843
        %2946 = vmatprep.subr.bf16.mxu0 0
        %2947 = vmatpush1.bf16.msra.mxu0 %v2844
        %2948 = vmatprep.subr.bf16.mxu0 0
        %2949 = vmatpush1.bf16.msra.mxu0 %v2845
        %2950 = vmatprep.subr.bf16.mxu0 0
        %2951 = vmatpush1.bf16.msra.mxu0 %v2846
        %2952 = vmatprep.subr.bf16.mxu0 0
        %2953 = vmatpush1.bf16.msra.mxu0 %v2847
        %2954 = vmatprep.subr.bf16.mxu0 0
        %2955 = vmatpush1.bf16.msra.mxu0 %v2848
        %2956 = vmatprep.subr.bf16.mxu0 0
        %2957 = vmatpush1.bf16.msra.mxu0 %v2849
        %2958 = vmatprep.subr.bf16.mxu0 0
        %2959 = vmatpush1.bf16.msra.mxu0 %v2850
        %2960 = vmatprep.subr.bf16.mxu0 0
        %2961 = vmatpush1.bf16.msra.mxu0 %v2851
        %2962 = vmatprep.subr.bf16.mxu0 0
        %2963 = vmatpush1.bf16.msra.mxu0 %v2852
        %2964 = vmatprep.subr.bf16.mxu0 0
        %2965 = vmatpush1.bf16.msra.mxu0 %v2853
        %2966 = vmatprep.subr.bf16.mxu0 0
        %2967 = vmatpush1.bf16.msra.mxu0 %v2854
        %2968 = vmatprep.mubr.bf16.mxu0 %v2626
        %2969 = vmatmul.mubr.bf16.gmra.mrb[0].mxu0 %v2625
        %v2970 = vpop.f32.mrb[0].mxu0
        %v2971 = vadd.f32 %v2922, %v2970
        %v2972 = vpop.f32.mrb[0].mxu0
        %v2973 = vpop.f32.mrb[0].mxu0
        %v2974 = vadd.f32 %v2925, %v2973
        %v2975 = vpop.f32.mrb[0].mxu0
        %2976 = vmatprep.mubr.bf16.mxu0 %v2630
        %2977 = vmatmul.mubr.bf16.gmra.mrb[0].mxu0 %v2629
        %v2978 = vpop.f32.mrb[0].mxu0
        %v2979 = vadd.f32 %v2930, %v2978
        %v2980 = vpop.f32.mrb[0].mxu0
        %v2981 = vpop.f32.mrb[0].mxu0
        %v2982 = vadd.f32 %v2933, %v2981
        %v2983 = vpop.f32.mrb[0].mxu0
        %2984 = vdwg.mxu0
        %v2985 = vadd.f32 %v2151, %v2971
        %v2986 = vadd.f32 %v2152, %v2974
        %v2987 = vadd.f32 %v2153, %v2979
        %v2988 = vadd.f32 %v2154, %v2982
        %v2989 = vld [vmem:[%s12] sm:$0x1]
        %v2991 = vlaneseq
        %v2992 = vshrl.u32 %v2991, 7
        %v2993 = vsub.s32 0, %v2992
        %v2994 = vrot.slane %v2989, %v2993
        %v2996 = vadd.f32 %v2985, %v2994
        %v2997 = vadd.f32 %v2986, %v2994
        %v2998 = vadd.f32 %v2987, %v2994
        %v2999 = vadd.f32 %v2988, %v2994
        %3000 = vst [vmem:[%s558] sm:$0xff] %v2996
        %3001 = vst [vmem:[%s558 + $0x8] sm:$0xff] %v2997
        %3002 = vst [vmem:[%s558 + $0x10] sm:$0xff] %v2998
        %3003 = vst [vmem:[%s558 + $0x18] sm:$0xff] %v2999
        %s3004 = sand.u32 %s326, 1
        %s3005 = scalar_lea.sflag [#allocation6], %s3004
        %s3006 = sand.u32 %s326, 1
        %s3007 = smul.addr %s3006, 32
        %s3008 = scalar_lea.vmem [#allocation15], %s3007
        // Predicated region
        $region97: #{tpu_custom_call.1} parent=71 // pred_check
          %p3009 = pneg %p336
        $region98: #{tpu_custom_call.1} parent=71 // pred_check_branch
          %3011 = sbr.rel (%p3009) target = $region100
        $region99: #{tpu_custom_call.1} parent=71 // pred_region
          %s3012 = smul.u32 2, %s35
          %s3014 = ssub.s32 512, 512
          %3015 = vsyncadd %s3005, %s3014
          %s3016 = smul.addr %s3012, 2
          %s3017 = smul.addr %s3016, 128
          %s3018 = scalar_lea.hbm %s13, %s3017
          %s3019 = sshll.u32 %s3008, 4
          %s3020 = int_to_ptr.vmem [resolvable:$true] %s3019
          %3025 = dma.vmem_to_hbm [thread:$0]  %s3020, 512, %s3018, %s3005, 128, 128, 8
        $region100: #{tpu_custom_call.1} parent=71 // pred_fallthru
          _
      $region72: #{tpu_custom_call.1} parent=5 // pred_fallthru
        _
      %p3026 = scmp.le.s32.totalorder 2, %s30
      // Predicated region
      $region101: #{tpu_custom_call.1} parent=5 // pred_check
        %p3027 = pneg %p3026
      $region102: #{tpu_custom_call.1} parent=5 // pred_check_branch
        %3029 = sbr.rel (%p3027) target = $region104
      $region103: #{tpu_custom_call.1} parent=5 // pred_region
        %s3030 = ssub.s32 %s30, 2
        // Predicated region
        $region105: #{tpu_custom_call.1} parent=103 // pred_check
          %p3031 = pneg %p342
        $region106: #{tpu_custom_call.1} parent=103 // pred_check_branch
          %3033 = sbr.rel (%p3031) target = $region108
        $region107: #{tpu_custom_call.1} parent=103 // pred_region
          %s3034 = sand.u32 %s327, 1
          %s3035 = scalar_lea.sflag [#allocation6], %s3034
          %s3036 = sand.u32 %s327, 1
          %s3037 = smul.addr %s3036, 32
          %s3038 = scalar_lea.vmem [#allocation15], %s3037
          %3039 = dma.done %s3035, 512
        $region108: #{tpu_custom_call.1} parent=103 // pred_fallthru
          _
      $region104: #{tpu_custom_call.1} parent=5 // pred_fallthru
        _
    $region6: #{tpu_custom_call.1} parent=1 // loop_footer
      %s34 = sadd.s32 1, %s30
    $region7: #{tpu_custom_call.1} parent=1 // loop_footer_branch
      %29 = sbr.rel target = $region3
    $region8: #{tpu_custom_call.1} parent=1 // loop_exit
      _
    %3040 = vsyncpa [#allocation5], 1
    %s3041 = scalar_lea.sflag [#allocation5], 1
    %3042 = vsyncpa %s3041, 1
    %3043 = vsyncpa [#allocation8], 1
    %s3044 = scalar_lea.sflag [#allocation8], 1
    %3045 = vsyncpa %s3044, 1
    %3046 = vsyncpa [#allocation11], 1
    %3047 = vsyncpa [#allocation14], 1
    %3048 = vsyncpa [#allocation6], 1
    %s3049 = scalar_lea.sflag [#allocation6], 1
    %3050 = vsyncpa %s3049, 1

</llo_original>
